<compile_context>
chip_gen: v5e
topology: v5e:2x2
jax: 0.10.0
libtpu: 0.0.40
codegen_flags: <defaults>
</compile_context>

<pallas_src>
import math

import jax
import jax.numpy as jnp
import numpy as np
from jax.experimental import pallas as pl
from jax.experimental.pallas import tpu as pltpu


# ----------------------------------------------------------------------------
# Config (mirrors the fields MuAtMotif.__init__ reads)
# ----------------------------------------------------------------------------
class Config:
    motif_size = 16                 # vocab size of motif tokens
    n_embd = 32                     # e (also per-head dim in this model)
    n_head = 4                      # h  -> h*e = 128 lanes
    n_layer = 2                     # L
    mutation_sampling_size = 8      # t (sequence length)
    num_class = 5                   # C
    attn_pdrop = 0.0
    embd_pdrop = 0.0


MM_DTYPE = jnp.bfloat16             # matmul operand dtype (f32 accumulation)
M_TARGET_ROWS = 2048                # rows per grid step; sweep 1024-4096
VMEM_LIMIT_BYTES = 48 * 1024 * 1024 # v7x-safe; raise to ~96 MiB on v5e/v6e


def _round_up(v, m):
    return ((v + m - 1) // m) * m


# ----------------------------------------------------------------------------
# Pallas kernel: full transformer stack + mean pool + classifier for Bblk rows
# ----------------------------------------------------------------------------
def make_muat_kernel(n_layer, n_head, t, e, bblk, mm_dtype=MM_DTYPE):
    h = n_head
    he = h * e
    m = bblk * t
    eps = 1e-5  # torch.nn.LayerNorm default

    def layernorm(v, g, b):
        # one-pass mean / E[x^2] -> half the cross-lane reductions
        mu = jnp.mean(v, axis=-1, keepdims=True)
        ms = jnp.mean(v * v, axis=-1, keepdims=True)
        var = jnp.maximum(ms - mu * mu, 0.0)
        return (v - mu) * jax.lax.rsqrt(var + eps) * g + b

    def kernel(x_ref,
               wqkv_ref, wu_ref, bu_ref,
               ln1g_ref, ln1b_ref,
               w1_ref, b1_ref, w2_ref, b2_ref,
               ln2g_ref, ln2b_ref,
               wp_ref, bp_ref,
               o_ref):
        # input streamed as bf16, upcast once; LN/residual math stays f32
        x = x_ref[...].astype(jnp.float32)                        # (M, E)

        for l in range(n_layer):                                  # static layer loop
            # --- fused QKV projection: one (M,E) x (E,3HE) matmul ------------
            qkv = jnp.dot(x.astype(mm_dtype), wqkv_ref[l],
                          preferred_element_type=jnp.float32)     # (M, 3*H*E)
            q3 = qkv[:, 0:he].reshape(bblk, t, he)                # 128-aligned slices
            k3 = qkv[:, he:2 * he].reshape(bblk, t, he)
            v3 = qkv[:, 2 * he:3 * he].reshape(bblk, t, he)

            # --- attention: per-head scores/softmax/AV, then ONE unify matmul
            head_outs = []
            for hh in range(h):                                   # static head loop
                sl = slice(hh * e, (hh + 1) * e)
                qh = q3[:, :, sl]                                 # (Bblk, T, e)
                kh = k3[:, :, sl]
                vh = v3[:, :, sl]
                # 1/sqrt(e) already folded into the Q weights.
                s = jnp.einsum('bqd,bkd->bqk', qh, kh,
                               preferred_element_type=jnp.float32)    # (Bblk,T,T)
                s = s - jnp.max(s, axis=-1, keepdims=True)
                p = jnp.exp(s)
                p = p * pl.reciprocal(jnp.sum(p, axis=-1, keepdims=True),
                                      approx=True)
                head_outs.append(
                    jnp.einsum('bqk,bkd->bqd', p, vh,
                               preferred_element_type=jnp.float32))   # (Bblk,T,e)
            # lane-contiguous head concat (matches torch transpose+view layout)
            slab = jnp.concatenate(head_outs, axis=-1).reshape(m, he)  # (M, H*E)
            attended = jnp.dot(slab.astype(mm_dtype), wu_ref[l],
                               preferred_element_type=jnp.float32) + bu_ref[l]

            # --- norm1(attended + x) -----------------------------------------
            x = layernorm(attended + x, ln1g_ref[l], ln1b_ref[l])

            # --- feed forward --------------------------------------------------
            ff = jnp.dot(x.astype(mm_dtype), w1_ref[l],
                         preferred_element_type=jnp.float32) + b1_ref[l]
            ff = jnp.maximum(ff, 0.0)
            ff = jnp.dot(ff.astype(mm_dtype), w2_ref[l],
                         preferred_element_type=jnp.float32) + b2_ref[l]

            # --- norm2(ff + x) -------------------------------------------------
            x = layernorm(ff + x, ln2g_ref[l], ln2b_ref[l])

        # --- mean pool over T and classifier (narrow padded output) -----------
        pooled = jnp.mean(x.reshape(bblk, t, e), axis=1)          # (Bblk, E)
        logits = jnp.dot(pooled.astype(mm_dtype), wp_ref[...],
                         preferred_element_type=jnp.float32) + bp_ref[...]
        o_ref[...] = logits                                       # (Bblk, C_pad)

    return kernel


# ----------------------------------------------------------------------------
# Wrapper: batch blocking, padding, BlockSpecs
# ----------------------------------------------------------------------------
def muat_motif_forward(tokens_emb, kparams, cfg):
    """tokens_emb: (B, T, E) float32 embedded tokens. Returns logits (B, C)."""
    b, t, e = tokens_emb.shape
    C = cfg.num_class
    c_pad = kparams["wp"].shape[-1]

    # VMEM-budgeted batch block: target M_TARGET_ROWS rows per step, but never
    # inflate tiny batches; large batches split into >= 2 steps (megacore).
    bblk_cap = max(8, _round_up(max(1, M_TARGET_ROWS // t), 8))
    n_steps = max(1, -(-b // bblk_cap))            # cdiv
    bblk = _round_up(-(-b // n_steps), 8)          # multiple of 8 (sublane align)
    b_pad = n_steps * bblk
    if b_pad != b:
        tokens_emb = jnp.pad(tokens_emb, ((0, b_pad - b), (0, 0), (0, 0)))
    # bf16 activation streaming: the input tile is the only per-step HBM read.
    x2d = tokens_emb.reshape(b_pad * t, e).astype(jnp.bfloat16)   # (B_pad*T, E)

    kernel = make_muat_kernel(cfg.n_layer, cfg.n_head, t, e, bblk)

    weight_order = ["wqkv", "wu", "bu",
                    "ln1g", "ln1b", "w1", "b1", "w2", "b2",
                    "ln2g", "ln2b", "wp", "bp"]
    weight_args = [kparams[k] for k in weight_order]

    # Weights are full-shape blocks (constant index map -> fetched once).
    # TODO(synk): at larger n_layer/n_embd, single-buffer these with
    # pipeline_mode=pl.Buffered(1) and stream per-layer via a trailing
    # "arbitrary" layer grid axis (lambda i, l: (l, 0, 0)) to keep only 1-2
    # layers of weights VMEM-resident (v7x has 64 MiB VMEM).
    def full_spec(arr):
        nd = arr.ndim
        return pl.BlockSpec(arr.shape, lambda i, _nd=nd: (0,) * _nd)

    in_specs = [pl.BlockSpec((bblk * t, e), lambda i: (i, 0))]
    in_specs += [full_spec(w) for w in weight_args]

    out = pl.pallas_call(
        kernel,
        out_shape=jax.ShapeDtypeStruct((b_pad, c_pad), jnp.float32),
        grid=(n_steps,),
        in_specs=in_specs,
        out_specs=pl.BlockSpec((bblk, c_pad), lambda i: (i, 0)),
        compiler_params=pltpu.CompilerParams(
            dimension_semantics=("parallel",),
            vmem_limit_bytes=VMEM_LIMIT_BYTES),
    )(x2d, *weight_args)
    return out[:b, :C]                                            # (B, C)


# ----------------------------------------------------------------------------
# Deterministic parameter construction (synthetic init, "torch-style", f32)
# ----------------------------------------------------------------------------
def init_params(cfg, key):
    e, h, L, C = cfg.n_embd, cfg.n_head, cfg.n_layer, cfg.num_class
    ffh = 4 * e
    ks = jax.random.split(key, 16)

    def rnd(k, shape, scale):
        return jax.random.normal(k, shape, dtype=jnp.float32) * scale

    params = {
        # embedding table, padding_idx=0 -> row 0 zeroed
        "emb": rnd(ks[0], (cfg.motif_size, e), 0.02).at[0].set(0.0),
        # attention projections, stored (in, out) so y = x @ W
        "wq": rnd(ks[1], (L, e, h * e), 1.0 / math.sqrt(e)),
        "wk": rnd(ks[2], (L, e, h * e), 1.0 / math.sqrt(e)),
        "wv": rnd(ks[3], (L, e, h * e), 1.0 / math.sqrt(e)),
        "wu": rnd(ks[4], (L, h * e, e), 1.0 / math.sqrt(h * e)),
        "bu": rnd(ks[5], (L, e), 0.01),
        # layernorms
        "ln1g": jnp.ones((L, e), jnp.float32),
        "ln1b": jnp.zeros((L, e), jnp.float32),
        "ln2g": jnp.ones((L, e), jnp.float32),
        "ln2b": jnp.zeros((L, e), jnp.float32),
        # feed-forward
        "w1": rnd(ks[6], (L, e, ffh), 1.0 / math.sqrt(e)),
        "b1": rnd(ks[7], (L, ffh), 0.01),
        "w2": rnd(ks[8], (L, ffh, e), 1.0 / math.sqrt(ffh)),
        "b2": rnd(ks[9], (L, e), 0.01),
        # classifier
        "wp": rnd(ks[10], (e, C), 1.0 / math.sqrt(e)),
        "bp": rnd(ks[11], (C,), 0.01),
    }
    return params


def pack_kernel_params(params, cfg, mm_dtype=MM_DTYPE):
    """Static weight transforms: QKV fusion, scale folding, narrow padded
    classifier, bf16 weight storage."""
    e, h, L, C = cfg.n_embd, cfg.n_head, cfg.n_layer, cfg.num_class
    c_pad = _round_up(C, 8)                                       # narrow writeback
    scale = 1.0 / math.sqrt(e)
    wq_scaled = params["wq"] * scale                              # fold 1/sqrt(e)
    wqkv = jnp.concatenate([wq_scaled, params["wk"], params["wv"]], axis=-1)
    wp = jnp.zeros((e, c_pad), jnp.float32).at[:, :C].set(params["wp"])
    bp = jnp.zeros((1, c_pad), jnp.float32).at[:, :C].set(params["bp"])
    return {
        "wqkv": wqkv.astype(mm_dtype),                            # (L, e, 3*h*e)
        "wu": params["wu"].astype(mm_dtype),                      # (L, h*e, e)
        "bu": params["bu"][:, None, :],                           # (L, 1, e) f32
        "ln1g": params["ln1g"][:, None, :],
        "ln1b": params["ln1b"][:, None, :],
        "w1": params["w1"].astype(mm_dtype),                      # (L, e, 4e)
        "b1": params["b1"][:, None, :],                           # (L, 1, 4e)
        "w2": params["w2"].astype(mm_dtype),                      # (L, 4e, e)
        "b2": params["b2"][:, None, :],                           # (L, 1, e)
        "ln2g": params["ln2g"][:, None, :],
        "ln2b": params["ln2b"][:, None, :],
        "wp": wp.astype(mm_dtype),                                # (e, c_pad)
        "bp": bp,                                                 # (1, c_pad)
    }


# ----------------------------------------------------------------------------
# Pure-JAX f32 reference (mirrors the PyTorch forward) for a correctness check
# ----------------------------------------------------------------------------
def reference_forward(tokens_emb, params, cfg):
    e, h, L = cfg.n_embd, cfg.n_head, cfg.n_layer
    x = tokens_emb.astype(jnp.float32)
    eps = 1e-5

    def ln(v, g, b):
        mu = v.mean(-1, keepdims=True)
        var = ((v - mu) ** 2).mean(-1, keepdims=True)
        return (v - mu) / jnp.sqrt(var + eps) * g + b

    for l in range(L):
        b_, t_, _ = x.shape
        q = (x @ params["wq"][l]).reshape(b_, t_, h, e).transpose(0, 2, 1, 3)
        k = (x @ params["wk"][l]).reshape(b_, t_, h, e).transpose(0, 2, 1, 3)
        v = (x @ params["wv"][l]).reshape(b_, t_, h, e).transpose(0, 2, 1, 3)
        dot = jnp.einsum("bhqe,bhke->bhqk", q, k) / math.sqrt(e)
        dot = jax.nn.softmax(dot, axis=-1)
        out = jnp.einsum("bhqk,bhke->bhqe", dot, v)
        out = out.transpose(0, 2, 1, 3).reshape(b_, t_, h * e)
        attended = out @ params["wu"][l] + params["bu"][l]
        x = ln(attended + x, params["ln1g"][l], params["ln1b"][l])
        ff = jnp.maximum(x @ params["w1"][l] + params["b1"][l], 0.0)
        ff = ff @ params["w2"][l] + params["b2"][l]
        x = ln(ff + x, params["ln2g"][l], params["ln2b"][l])
    pooled = x.mean(axis=1)
    return pooled @ params["wp"] + params["bp"]


# ----------------------------------------------------------------------------
if __name__ == "__main__":
    cfg = Config()
    key = jax.random.PRNGKey(0)
    k_param, k_tok, k_tok2 = jax.random.split(key, 3)

    params = init_params(cfg, k_param)
    kparams = pack_kernel_params(params, cfg)

    T = cfg.mutation_sampling_size

    def run_case(k, B):
        # MuAtMotif input: integer token tensor, forward uses x[:, 0, :]
        x_int = jax.random.randint(k, (B, 2, T), 0, cfg.motif_size, dtype=jnp.int32)
        # Glue in plain JAX: embedding lookup (gather); dropout = identity (eval).
        motif = x_int[:, 0, :]                                    # (B, T)
        tokens_emb = params["emb"][motif]                         # (B, T, E)
        logits = muat_motif_forward(tokens_emb, kparams, cfg)
        logits = jax.block_until_ready(logits)
        ref = reference_forward(tokens_emb, params, cfg)
        # bf16 matmul operands + bf16 streamed activations + approx reciprocal
        # -> loosened tolerance vs the f32 reference.
        np.testing.assert_allclose(np.asarray(logits), np.asarray(ref),
                                   rtol=6e-2, atol=6e-2)
        return logits

    logits = run_case(k_tok, 2)                                   # small demo batch
    _ = run_case(k_tok2, 37)                                      # exercises zero-padded rows

    logits_feats = {"first_logits": logits}                       # (loss None: no targets)
    assert logits_feats["first_logits"].shape == (2, cfg.num_class)
    print("KERNEL_OK")
</pallas_src>

<mosaic_0001>
module attributes {stable_mosaic.version = 11 : i64} {
  func.func @kernel(%arg0: i32, %arg1: memref<64x32xbf16, #tpu.memory_space<vmem>>, %arg2: memref<2x32x384xbf16, #tpu.memory_space<vmem>>, %arg3: memref<2x128x32xbf16, #tpu.memory_space<vmem>>, %arg4: memref<2x1x32xf32, #tpu.memory_space<vmem>>, %arg5: memref<2x1x32xf32, #tpu.memory_space<vmem>>, %arg6: memref<2x1x32xf32, #tpu.memory_space<vmem>>, %arg7: memref<2x32x128xbf16, #tpu.memory_space<vmem>>, %arg8: memref<2x1x128xf32, #tpu.memory_space<vmem>>, %arg9: memref<2x128x32xbf16, #tpu.memory_space<vmem>>, %arg10: memref<2x1x32xf32, #tpu.memory_space<vmem>>, %arg11: memref<2x1x32xf32, #tpu.memory_space<vmem>>, %arg12: memref<2x1x32xf32, #tpu.memory_space<vmem>>, %arg13: memref<32x8xbf16, #tpu.memory_space<vmem>>, %arg14: memref<1x8xf32, #tpu.memory_space<vmem>>, %arg15: memref<8x8xf32, #tpu.memory_space<vmem>>) attributes {dimension_semantics = [#tpu.dimension_semantics<parallel>], iteration_bounds = array<i64: 1>, scalar_prefetch = 0 : i64, scratch_operands = 0 : i64, tpu.core_type = #tpu.core_type<tc>, window_params = [{transform_indices = @transform_0, window_bounds = array<i64: 64, 32>}, {pipeline_mode = #tpu.pipeline_mode<synchronous>, transform_indices = @transform_1, window_bounds = array<i64: 2, 32, 384>}, {pipeline_mode = #tpu.pipeline_mode<synchronous>, transform_indices = @transform_2, window_bounds = array<i64: 2, 128, 32>}, {pipeline_mode = #tpu.pipeline_mode<synchronous>, transform_indices = @transform_3, window_bounds = array<i64: 2, 1, 32>}, {pipeline_mode = #tpu.pipeline_mode<synchronous>, transform_indices = @transform_4, window_bounds = array<i64: 2, 1, 32>}, {pipeline_mode = #tpu.pipeline_mode<synchronous>, transform_indices = @transform_5, window_bounds = array<i64: 2, 1, 32>}, {pipeline_mode = #tpu.pipeline_mode<synchronous>, transform_indices = @transform_6, window_bounds = array<i64: 2, 32, 128>}, {pipeline_mode = #tpu.pipeline_mode<synchronous>, transform_indices = @transform_7, window_bounds = array<i64: 2, 1, 128>}, {pipeline_mode = #tpu.pipeline_mode<synchronous>, transform_indices = @transform_8, window_bounds = array<i64: 2, 128, 32>}, {pipeline_mode = #tpu.pipeline_mode<synchronous>, transform_indices = @transform_9, window_bounds = array<i64: 2, 1, 32>}, {pipeline_mode = #tpu.pipeline_mode<synchronous>, transform_indices = @transform_10, window_bounds = array<i64: 2, 1, 32>}, {pipeline_mode = #tpu.pipeline_mode<synchronous>, transform_indices = @transform_11, window_bounds = array<i64: 2, 1, 32>}, {pipeline_mode = #tpu.pipeline_mode<synchronous>, transform_indices = @transform_12, window_bounds = array<i64: 32, 8>}, {pipeline_mode = #tpu.pipeline_mode<synchronous>, transform_indices = @transform_13, window_bounds = array<i64: 1, 8>}, {transform_indices = @transform_14, window_bounds = array<i64: 8, 8>}]} {
    %c0 = arith.constant 0 : index
    %c0_0 = arith.constant 0 : index
    %0 = vector.load %arg1[%c0, %c0_0] : memref<64x32xbf16, #tpu.memory_space<vmem>>, vector<64x32xbf16>
    %1 = arith.extf %0 : vector<64x32xbf16> to vector<64x32xf32>
    %2 = arith.truncf %1 : vector<64x32xf32> to vector<64x32xbf16>
    %c0_1 = arith.constant 0 : index
    %c0_2 = arith.constant 0 : index
    %c0_3 = arith.constant 0 : index
    %3 = vector.load %arg2[%c0_1, %c0_2, %c0_3] : memref<2x32x384xbf16, #tpu.memory_space<vmem>>, vector<1x32x384xbf16>
    %4 = vector.shape_cast %3 : vector<1x32x384xbf16> to vector<32x384xbf16>
    %cst = arith.constant dense<0.000000e+00> : vector<64x384xf32>
    %5 = tpu.matmul %2, %4, %cst {dimension_numbers = #tpu.dot_dimension_numbers<[1], [0], [0], [1], [0, 0, 1, 1], [], []>} : vector<64x32xbf16>, vector<32x384xbf16>, vector<64x384xf32> -> vector<64x384xf32>
    %6 = vector.extract_strided_slice %5 {offsets = [0, 0], sizes = [64, 128], strides = [1, 1]} : vector<64x384xf32> to vector<64x128xf32>
    %7 = vector.shape_cast %6 : vector<64x128xf32> to vector<8x8x128xf32>
    %8 = vector.extract_strided_slice %5 {offsets = [0, 128], sizes = [64, 128], strides = [1, 1]} : vector<64x384xf32> to vector<64x128xf32>
    %9 = vector.shape_cast %8 : vector<64x128xf32> to vector<8x8x128xf32>
    %10 = vector.extract_strided_slice %5 {offsets = [0, 256], sizes = [64, 128], strides = [1, 1]} : vector<64x384xf32> to vector<64x128xf32>
    %11 = vector.shape_cast %10 : vector<64x128xf32> to vector<8x8x128xf32>
    %12 = vector.extract_strided_slice %7 {offsets = [0, 0, 0], sizes = [8, 8, 32], strides = [1, 1, 1]} : vector<8x8x128xf32> to vector<8x8x32xf32>
    %13 = vector.extract_strided_slice %9 {offsets = [0, 0, 0], sizes = [8, 8, 32], strides = [1, 1, 1]} : vector<8x8x128xf32> to vector<8x8x32xf32>
    %14 = vector.extract_strided_slice %11 {offsets = [0, 0, 0], sizes = [8, 8, 32], strides = [1, 1, 1]} : vector<8x8x128xf32> to vector<8x8x32xf32>
    "tpu.trace_start"() <{level = 10 : i32, message = "bqd,bkd->bqk"}> : () -> ()
    %cst_4 = arith.constant dense<0.000000e+00> : vector<8x8x8xf32>
    %15 = tpu.matmul %12, %13, %cst_4 {dimension_numbers = #tpu.dot_dimension_numbers<[2], [2], [1], [1], [0, 0, 0, 1, 1, 1], [0], [0]>} : vector<8x8x32xf32>, vector<8x8x32xf32>, vector<8x8x8xf32> -> vector<8x8x8xf32>
    "tpu.trace_stop"() : () -> ()
    %cst_5 = arith.constant dense<0xFF800000> : vector<8x8xf32>
    %16 = vector.multi_reduction <maximumf>, %15, %cst_5 [2] : vector<8x8x8xf32> to vector<8x8xf32>
    %17 = vector.shape_cast %16 : vector<8x8xf32> to vector<8x8x1xf32>
    %18 = vector.broadcast %17 : vector<8x8x1xf32> to vector<8x8x8xf32>
    %19 = arith.subf %15, %18 : vector<8x8x8xf32>
    %20 = math.exp %19 : vector<8x8x8xf32>
    %cst_6 = arith.constant dense<0.000000e+00> : vector<8x8xf32>
    %21 = vector.multi_reduction <add>, %20, %cst_6 [2] : vector<8x8x8xf32> to vector<8x8xf32>
    %22 = vector.shape_cast %21 : vector<8x8xf32> to vector<8x8x1xf32>
    %23 = tpu.reciprocal %22 {approx = true} : vector<8x8x1xf32> -> vector<8x8x1xf32>
    %24 = vector.broadcast %23 : vector<8x8x1xf32> to vector<8x8x8xf32>
    %25 = arith.mulf %20, %24 : vector<8x8x8xf32>
    "tpu.trace_start"() <{level = 10 : i32, message = "bqk,bkd->bqd"}> : () -> ()
    %cst_7 = arith.constant dense<0.000000e+00> : vector<8x8x32xf32>
    %26 = tpu.matmul %25, %14, %cst_7 {dimension_numbers = #tpu.dot_dimension_numbers<[2], [1], [1], [2], [0, 0, 0, 1, 1, 2], [0], [0]>} : vector<8x8x8xf32>, vector<8x8x32xf32>, vector<8x8x32xf32> -> vector<8x8x32xf32>
    "tpu.trace_stop"() : () -> ()
    %27 = vector.extract_strided_slice %7 {offsets = [0, 0, 32], sizes = [8, 8, 32], strides = [1, 1, 1]} : vector<8x8x128xf32> to vector<8x8x32xf32>
    %28 = vector.extract_strided_slice %9 {offsets = [0, 0, 32], sizes = [8, 8, 32], strides = [1, 1, 1]} : vector<8x8x128xf32> to vector<8x8x32xf32>
    %29 = vector.extract_strided_slice %11 {offsets = [0, 0, 32], sizes = [8, 8, 32], strides = [1, 1, 1]} : vector<8x8x128xf32> to vector<8x8x32xf32>
    "tpu.trace_start"() <{level = 10 : i32, message = "bqd,bkd->bqk"}> : () -> ()
    %cst_8 = arith.constant dense<0.000000e+00> : vector<8x8x8xf32>
    %30 = tpu.matmul %27, %28, %cst_8 {dimension_numbers = #tpu.dot_dimension_numbers<[2], [2], [1], [1], [0, 0, 0, 1, 1, 1], [0], [0]>} : vector<8x8x32xf32>, vector<8x8x32xf32>, vector<8x8x8xf32> -> vector<8x8x8xf32>
    "tpu.trace_stop"() : () -> ()
    %cst_9 = arith.constant dense<0xFF800000> : vector<8x8xf32>
    %31 = vector.multi_reduction <maximumf>, %30, %cst_9 [2] : vector<8x8x8xf32> to vector<8x8xf32>
    %32 = vector.shape_cast %31 : vector<8x8xf32> to vector<8x8x1xf32>
    %33 = vector.broadcast %32 : vector<8x8x1xf32> to vector<8x8x8xf32>
    %34 = arith.subf %30, %33 : vector<8x8x8xf32>
    %35 = math.exp %34 : vector<8x8x8xf32>
    %cst_10 = arith.constant dense<0.000000e+00> : vector<8x8xf32>
    %36 = vector.multi_reduction <add>, %35, %cst_10 [2] : vector<8x8x8xf32> to vector<8x8xf32>
    %37 = vector.shape_cast %36 : vector<8x8xf32> to vector<8x8x1xf32>
    %38 = tpu.reciprocal %37 {approx = true} : vector<8x8x1xf32> -> vector<8x8x1xf32>
    %39 = vector.broadcast %38 : vector<8x8x1xf32> to vector<8x8x8xf32>
    %40 = arith.mulf %35, %39 : vector<8x8x8xf32>
    "tpu.trace_start"() <{level = 10 : i32, message = "bqk,bkd->bqd"}> : () -> ()
    %cst_11 = arith.constant dense<0.000000e+00> : vector<8x8x32xf32>
    %41 = tpu.matmul %40, %29, %cst_11 {dimension_numbers = #tpu.dot_dimension_numbers<[2], [1], [1], [2], [0, 0, 0, 1, 1, 2], [0], [0]>} : vector<8x8x8xf32>, vector<8x8x32xf32>, vector<8x8x32xf32> -> vector<8x8x32xf32>
    "tpu.trace_stop"() : () -> ()
    %42 = vector.extract_strided_slice %7 {offsets = [0, 0, 64], sizes = [8, 8, 32], strides = [1, 1, 1]} : vector<8x8x128xf32> to vector<8x8x32xf32>
    %43 = vector.extract_strided_slice %9 {offsets = [0, 0, 64], sizes = [8, 8, 32], strides = [1, 1, 1]} : vector<8x8x128xf32> to vector<8x8x32xf32>
    %44 = vector.extract_strided_slice %11 {offsets = [0, 0, 64], sizes = [8, 8, 32], strides = [1, 1, 1]} : vector<8x8x128xf32> to vector<8x8x32xf32>
    "tpu.trace_start"() <{level = 10 : i32, message = "bqd,bkd->bqk"}> : () -> ()
    %cst_12 = arith.constant dense<0.000000e+00> : vector<8x8x8xf32>
    %45 = tpu.matmul %42, %43, %cst_12 {dimension_numbers = #tpu.dot_dimension_numbers<[2], [2], [1], [1], [0, 0, 0, 1, 1, 1], [0], [0]>} : vector<8x8x32xf32>, vector<8x8x32xf32>, vector<8x8x8xf32> -> vector<8x8x8xf32>
    "tpu.trace_stop"() : () -> ()
    %cst_13 = arith.constant dense<0xFF800000> : vector<8x8xf32>
    %46 = vector.multi_reduction <maximumf>, %45, %cst_13 [2] : vector<8x8x8xf32> to vector<8x8xf32>
    %47 = vector.shape_cast %46 : vector<8x8xf32> to vector<8x8x1xf32>
    %48 = vector.broadcast %47 : vector<8x8x1xf32> to vector<8x8x8xf32>
    %49 = arith.subf %45, %48 : vector<8x8x8xf32>
    %50 = math.exp %49 : vector<8x8x8xf32>
    %cst_14 = arith.constant dense<0.000000e+00> : vector<8x8xf32>
    %51 = vector.multi_reduction <add>, %50, %cst_14 [2] : vector<8x8x8xf32> to vector<8x8xf32>
    %52 = vector.shape_cast %51 : vector<8x8xf32> to vector<8x8x1xf32>
    %53 = tpu.reciprocal %52 {approx = true} : vector<8x8x1xf32> -> vector<8x8x1xf32>
    %54 = vector.broadcast %53 : vector<8x8x1xf32> to vector<8x8x8xf32>
    %55 = arith.mulf %50, %54 : vector<8x8x8xf32>
    "tpu.trace_start"() <{level = 10 : i32, message = "bqk,bkd->bqd"}> : () -> ()
    %cst_15 = arith.constant dense<0.000000e+00> : vector<8x8x32xf32>
    %56 = tpu.matmul %55, %44, %cst_15 {dimension_numbers = #tpu.dot_dimension_numbers<[2], [1], [1], [2], [0, 0, 0, 1, 1, 2], [0], [0]>} : vector<8x8x8xf32>, vector<8x8x32xf32>, vector<8x8x32xf32> -> vector<8x8x32xf32>
    "tpu.trace_stop"() : () -> ()
    %57 = vector.extract_strided_slice %7 {offsets = [0, 0, 96], sizes = [8, 8, 32], strides = [1, 1, 1]} : vector<8x8x128xf32> to vector<8x8x32xf32>
    %58 = vector.extract_strided_slice %9 {offsets = [0, 0, 96], sizes = [8, 8, 32], strides = [1, 1, 1]} : vector<8x8x128xf32> to vector<8x8x32xf32>
    %59 = vector.extract_strided_slice %11 {offsets = [0, 0, 96], sizes = [8, 8, 32], strides = [1, 1, 1]} : vector<8x8x128xf32> to vector<8x8x32xf32>
    "tpu.trace_start"() <{level = 10 : i32, message = "bqd,bkd->bqk"}> : () -> ()
    %cst_16 = arith.constant dense<0.000000e+00> : vector<8x8x8xf32>
    %60 = tpu.matmul %57, %58, %cst_16 {dimension_numbers = #tpu.dot_dimension_numbers<[2], [2], [1], [1], [0, 0, 0, 1, 1, 1], [0], [0]>} : vector<8x8x32xf32>, vector<8x8x32xf32>, vector<8x8x8xf32> -> vector<8x8x8xf32>
    "tpu.trace_stop"() : () -> ()
    %cst_17 = arith.constant dense<0xFF800000> : vector<8x8xf32>
    %61 = vector.multi_reduction <maximumf>, %60, %cst_17 [2] : vector<8x8x8xf32> to vector<8x8xf32>
    %62 = vector.shape_cast %61 : vector<8x8xf32> to vector<8x8x1xf32>
    %63 = vector.broadcast %62 : vector<8x8x1xf32> to vector<8x8x8xf32>
    %64 = arith.subf %60, %63 : vector<8x8x8xf32>
    %65 = math.exp %64 : vector<8x8x8xf32>
    %cst_18 = arith.constant dense<0.000000e+00> : vector<8x8xf32>
    %66 = vector.multi_reduction <add>, %65, %cst_18 [2] : vector<8x8x8xf32> to vector<8x8xf32>
    %67 = vector.shape_cast %66 : vector<8x8xf32> to vector<8x8x1xf32>
    %68 = tpu.reciprocal %67 {approx = true} : vector<8x8x1xf32> -> vector<8x8x1xf32>
    %69 = vector.broadcast %68 : vector<8x8x1xf32> to vector<8x8x8xf32>
    %70 = arith.mulf %65, %69 : vector<8x8x8xf32>
    "tpu.trace_start"() <{level = 10 : i32, message = "bqk,bkd->bqd"}> : () -> ()
    %cst_19 = arith.constant dense<0.000000e+00> : vector<8x8x32xf32>
    %71 = tpu.matmul %70, %59, %cst_19 {dimension_numbers = #tpu.dot_dimension_numbers<[2], [1], [1], [2], [0, 0, 0, 1, 1, 2], [0], [0]>} : vector<8x8x8xf32>, vector<8x8x32xf32>, vector<8x8x32xf32> -> vector<8x8x32xf32>
    "tpu.trace_stop"() : () -> ()
    %72 = tpu.concatenate %26, %41, %56, %71 in 2 : vector<8x8x32xf32>, vector<8x8x32xf32>, vector<8x8x32xf32>, vector<8x8x32xf32> -> vector<8x8x128xf32>
    %73 = vector.shape_cast %72 : vector<8x8x128xf32> to vector<64x128xf32>
    %74 = arith.truncf %73 : vector<64x128xf32> to vector<64x128xbf16>
    %c0_20 = arith.constant 0 : index
    %c0_21 = arith.constant 0 : index
    %c0_22 = arith.constant 0 : index
    %75 = vector.load %arg3[%c0_20, %c0_21, %c0_22] : memref<2x128x32xbf16, #tpu.memory_space<vmem>>, vector<1x128x32xbf16>
    %76 = vector.shape_cast %75 : vector<1x128x32xbf16> to vector<128x32xbf16>
    %cst_23 = arith.constant dense<0.000000e+00> : vector<64x32xf32>
    %77 = tpu.matmul %74, %76, %cst_23 {dimension_numbers = #tpu.dot_dimension_numbers<[1], [0], [0], [1], [0, 0, 1, 1], [], []>} : vector<64x128xbf16>, vector<128x32xbf16>, vector<64x32xf32> -> vector<64x32xf32>
    %c0_24 = arith.constant 0 : index
    %c0_25 = arith.constant 0 : index
    %c0_26 = arith.constant 0 : index
    %78 = vector.load %arg4[%c0_24, %c0_25, %c0_26] : memref<2x1x32xf32, #tpu.memory_space<vmem>>, vector<1x1x32xf32>
    %79 = vector.shape_cast %78 : vector<1x1x32xf32> to vector<1x32xf32>
    %80 = vector.broadcast %79 : vector<1x32xf32> to vector<64x32xf32>
    %81 = arith.addf %77, %80 : vector<64x32xf32>
    %82 = arith.addf %81, %1 : vector<64x32xf32>
    %c0_27 = arith.constant 0 : index
    %c0_28 = arith.constant 0 : index
    %c0_29 = arith.constant 0 : index
    %83 = vector.load %arg5[%c0_27, %c0_28, %c0_29] : memref<2x1x32xf32, #tpu.memory_space<vmem>>, vector<1x1x32xf32>
    %84 = vector.shape_cast %83 : vector<1x1x32xf32> to vector<1x32xf32>
    %c0_30 = arith.constant 0 : index
    %c0_31 = arith.constant 0 : index
    %c0_32 = arith.constant 0 : index
    %85 = vector.load %arg6[%c0_30, %c0_31, %c0_32] : memref<2x1x32xf32, #tpu.memory_space<vmem>>, vector<1x1x32xf32>
    %86 = vector.shape_cast %85 : vector<1x1x32xf32> to vector<1x32xf32>
    %cst_33 = arith.constant dense<0.000000e+00> : vector<64xf32>
    %87 = vector.multi_reduction <add>, %82, %cst_33 [1] : vector<64x32xf32> to vector<64xf32>
    %88 = vector.shape_cast %87 : vector<64xf32> to vector<64x1xf32>
    %cst_34 = arith.constant 3.200000e+01 : f32
    %89 = vector.broadcast %cst_34 : f32 to vector<64x1xf32>
    %90 = arith.divf %88, %89 : vector<64x1xf32>
    %91 = arith.mulf %82, %82 : vector<64x32xf32>
    %cst_35 = arith.constant dense<0.000000e+00> : vector<64xf32>
    %92 = vector.multi_reduction <add>, %91, %cst_35 [1] : vector<64x32xf32> to vector<64xf32>
    %93 = vector.shape_cast %92 : vector<64xf32> to vector<64x1xf32>
    %cst_36 = arith.constant 3.200000e+01 : f32
    %94 = vector.broadcast %cst_36 : f32 to vector<64x1xf32>
    %95 = arith.divf %93, %94 : vector<64x1xf32>
    %96 = arith.mulf %90, %90 : vector<64x1xf32>
    %97 = arith.subf %95, %96 : vector<64x1xf32>
    %cst_37 = arith.constant 0.000000e+00 : f32
    %98 = vector.broadcast %cst_37 : f32 to vector<64x1xf32>
    %99 = arith.maximumf %97, %98 : vector<64x1xf32>
    %100 = vector.broadcast %90 : vector<64x1xf32> to vector<64x32xf32>
    %101 = arith.subf %82, %100 : vector<64x32xf32>
    %cst_38 = arith.constant 9.99999974E-6 : f32
    %102 = vector.broadcast %cst_38 : f32 to vector<64x1xf32>
    %103 = arith.addf %99, %102 : vector<64x1xf32>
    %104 = math.rsqrt %103 : vector<64x1xf32>
    %105 = vector.broadcast %104 : vector<64x1xf32> to vector<64x32xf32>
    %106 = arith.mulf %101, %105 : vector<64x32xf32>
    %107 = vector.broadcast %84 : vector<1x32xf32> to vector<64x32xf32>
    %108 = arith.mulf %106, %107 : vector<64x32xf32>
    %109 = vector.broadcast %86 : vector<1x32xf32> to vector<64x32xf32>
    %110 = arith.addf %108, %109 : vector<64x32xf32>
    %111 = arith.truncf %110 : vector<64x32xf32> to vector<64x32xbf16>
    %c0_39 = arith.constant 0 : index
    %c0_40 = arith.constant 0 : index
    %c0_41 = arith.constant 0 : index
    %112 = vector.load %arg7[%c0_39, %c0_40, %c0_41] : memref<2x32x128xbf16, #tpu.memory_space<vmem>>, vector<1x32x128xbf16>
    %113 = vector.shape_cast %112 : vector<1x32x128xbf16> to vector<32x128xbf16>
    %cst_42 = arith.constant dense<0.000000e+00> : vector<64x128xf32>
    %114 = tpu.matmul %111, %113, %cst_42 {dimension_numbers = #tpu.dot_dimension_numbers<[1], [0], [0], [1], [0, 0, 1, 1], [], []>} : vector<64x32xbf16>, vector<32x128xbf16>, vector<64x128xf32> -> vector<64x128xf32>
    %c0_43 = arith.constant 0 : index
    %c0_44 = arith.constant 0 : index
    %c0_45 = arith.constant 0 : index
    %115 = vector.load %arg8[%c0_43, %c0_44, %c0_45] : memref<2x1x128xf32, #tpu.memory_space<vmem>>, vector<1x1x128xf32>
    %116 = vector.shape_cast %115 : vector<1x1x128xf32> to vector<1x128xf32>
    %117 = vector.broadcast %116 : vector<1x128xf32> to vector<64x128xf32>
    %118 = arith.addf %114, %117 : vector<64x128xf32>
    %cst_46 = arith.constant 0.000000e+00 : f32
    %119 = vector.broadcast %cst_46 : f32 to vector<64x128xf32>
    %120 = arith.maximumf %118, %119 : vector<64x128xf32>
    %121 = arith.truncf %120 : vector<64x128xf32> to vector<64x128xbf16>
    %c0_47 = arith.constant 0 : index
    %c0_48 = arith.constant 0 : index
    %c0_49 = arith.constant 0 : index
    %122 = vector.load %arg9[%c0_47, %c0_48, %c0_49] : memref<2x128x32xbf16, #tpu.memory_space<vmem>>, vector<1x128x32xbf16>
    %123 = vector.shape_cast %122 : vector<1x128x32xbf16> to vector<128x32xbf16>
    %cst_50 = arith.constant dense<0.000000e+00> : vector<64x32xf32>
    %124 = tpu.matmul %121, %123, %cst_50 {dimension_numbers = #tpu.dot_dimension_numbers<[1], [0], [0], [1], [0, 0, 1, 1], [], []>} : vector<64x128xbf16>, vector<128x32xbf16>, vector<64x32xf32> -> vector<64x32xf32>
    %c0_51 = arith.constant 0 : index
    %c0_52 = arith.constant 0 : index
    %c0_53 = arith.constant 0 : index
    %125 = vector.load %arg10[%c0_51, %c0_52, %c0_53] : memref<2x1x32xf32, #tpu.memory_space<vmem>>, vector<1x1x32xf32>
    %126 = vector.shape_cast %125 : vector<1x1x32xf32> to vector<1x32xf32>
    %127 = vector.broadcast %126 : vector<1x32xf32> to vector<64x32xf32>
    %128 = arith.addf %124, %127 : vector<64x32xf32>
    %129 = arith.addf %128, %110 : vector<64x32xf32>
    %c0_54 = arith.constant 0 : index
    %c0_55 = arith.constant 0 : index
    %c0_56 = arith.constant 0 : index
    %130 = vector.load %arg11[%c0_54, %c0_55, %c0_56] : memref<2x1x32xf32, #tpu.memory_space<vmem>>, vector<1x1x32xf32>
    %131 = vector.shape_cast %130 : vector<1x1x32xf32> to vector<1x32xf32>
    %c0_57 = arith.constant 0 : index
    %c0_58 = arith.constant 0 : index
    %c0_59 = arith.constant 0 : index
    %132 = vector.load %arg12[%c0_57, %c0_58, %c0_59] : memref<2x1x32xf32, #tpu.memory_space<vmem>>, vector<1x1x32xf32>
    %133 = vector.shape_cast %132 : vector<1x1x32xf32> to vector<1x32xf32>
    %cst_60 = arith.constant dense<0.000000e+00> : vector<64xf32>
    %134 = vector.multi_reduction <add>, %129, %cst_60 [1] : vector<64x32xf32> to vector<64xf32>
    %135 = vector.shape_cast %134 : vector<64xf32> to vector<64x1xf32>
    %cst_61 = arith.constant 3.200000e+01 : f32
    %136 = vector.broadcast %cst_61 : f32 to vector<64x1xf32>
    %137 = arith.divf %135, %136 : vector<64x1xf32>
    %138 = arith.mulf %129, %129 : vector<64x32xf32>
    %cst_62 = arith.constant dense<0.000000e+00> : vector<64xf32>
    %139 = vector.multi_reduction <add>, %138, %cst_62 [1] : vector<64x32xf32> to vector<64xf32>
    %140 = vector.shape_cast %139 : vector<64xf32> to vector<64x1xf32>
    %cst_63 = arith.constant 3.200000e+01 : f32
    %141 = vector.broadcast %cst_63 : f32 to vector<64x1xf32>
    %142 = arith.divf %140, %141 : vector<64x1xf32>
    %143 = arith.mulf %137, %137 : vector<64x1xf32>
    %144 = arith.subf %142, %143 : vector<64x1xf32>
    %cst_64 = arith.constant 0.000000e+00 : f32
    %145 = vector.broadcast %cst_64 : f32 to vector<64x1xf32>
    %146 = arith.maximumf %144, %145 : vector<64x1xf32>
    %147 = vector.broadcast %137 : vector<64x1xf32> to vector<64x32xf32>
    %148 = arith.subf %129, %147 : vector<64x32xf32>
    %cst_65 = arith.constant 9.99999974E-6 : f32
    %149 = vector.broadcast %cst_65 : f32 to vector<64x1xf32>
    %150 = arith.addf %146, %149 : vector<64x1xf32>
    %151 = math.rsqrt %150 : vector<64x1xf32>
    %152 = vector.broadcast %151 : vector<64x1xf32> to vector<64x32xf32>
    %153 = arith.mulf %148, %152 : vector<64x32xf32>
    %154 = vector.broadcast %131 : vector<1x32xf32> to vector<64x32xf32>
    %155 = arith.mulf %153, %154 : vector<64x32xf32>
    %156 = vector.broadcast %133 : vector<1x32xf32> to vector<64x32xf32>
    %157 = arith.addf %155, %156 : vector<64x32xf32>
    %158 = arith.truncf %157 : vector<64x32xf32> to vector<64x32xbf16>
    %c1 = arith.constant 1 : index
    %c0_66 = arith.constant 0 : index
    %c0_67 = arith.constant 0 : index
    %159 = vector.load %arg2[%c1, %c0_66, %c0_67] : memref<2x32x384xbf16, #tpu.memory_space<vmem>>, vector<1x32x384xbf16>
    %160 = vector.shape_cast %159 : vector<1x32x384xbf16> to vector<32x384xbf16>
    %cst_68 = arith.constant dense<0.000000e+00> : vector<64x384xf32>
    %161 = tpu.matmul %158, %160, %cst_68 {dimension_numbers = #tpu.dot_dimension_numbers<[1], [0], [0], [1], [0, 0, 1, 1], [], []>} : vector<64x32xbf16>, vector<32x384xbf16>, vector<64x384xf32> -> vector<64x384xf32>
    %162 = vector.extract_strided_slice %161 {offsets = [0, 0], sizes = [64, 128], strides = [1, 1]} : vector<64x384xf32> to vector<64x128xf32>
    %163 = vector.shape_cast %162 : vector<64x128xf32> to vector<8x8x128xf32>
    %164 = vector.extract_strided_slice %161 {offsets = [0, 128], sizes = [64, 128], strides = [1, 1]} : vector<64x384xf32> to vector<64x128xf32>
    %165 = vector.shape_cast %164 : vector<64x128xf32> to vector<8x8x128xf32>
    %166 = vector.extract_strided_slice %161 {offsets = [0, 256], sizes = [64, 128], strides = [1, 1]} : vector<64x384xf32> to vector<64x128xf32>
    %167 = vector.shape_cast %166 : vector<64x128xf32> to vector<8x8x128xf32>
    %168 = vector.extract_strided_slice %163 {offsets = [0, 0, 0], sizes = [8, 8, 32], strides = [1, 1, 1]} : vector<8x8x128xf32> to vector<8x8x32xf32>
    %169 = vector.extract_strided_slice %165 {offsets = [0, 0, 0], sizes = [8, 8, 32], strides = [1, 1, 1]} : vector<8x8x128xf32> to vector<8x8x32xf32>
    %170 = vector.extract_strided_slice %167 {offsets = [0, 0, 0], sizes = [8, 8, 32], strides = [1, 1, 1]} : vector<8x8x128xf32> to vector<8x8x32xf32>
    "tpu.trace_start"() <{level = 10 : i32, message = "bqd,bkd->bqk"}> : () -> ()
    %cst_69 = arith.constant dense<0.000000e+00> : vector<8x8x8xf32>
    %171 = tpu.matmul %168, %169, %cst_69 {dimension_numbers = #tpu.dot_dimension_numbers<[2], [2], [1], [1], [0, 0, 0, 1, 1, 1], [0], [0]>} : vector<8x8x32xf32>, vector<8x8x32xf32>, vector<8x8x8xf32> -> vector<8x8x8xf32>
    "tpu.trace_stop"() : () -> ()
    %cst_70 = arith.constant dense<0xFF800000> : vector<8x8xf32>
    %172 = vector.multi_reduction <maximumf>, %171, %cst_70 [2] : vector<8x8x8xf32> to vector<8x8xf32>
    %173 = vector.shape_cast %172 : vector<8x8xf32> to vector<8x8x1xf32>
    %174 = vector.broadcast %173 : vector<8x8x1xf32> to vector<8x8x8xf32>
    %175 = arith.subf %171, %174 : vector<8x8x8xf32>
    %176 = math.exp %175 : vector<8x8x8xf32>
    %cst_71 = arith.constant dense<0.000000e+00> : vector<8x8xf32>
    %177 = vector.multi_reduction <add>, %176, %cst_71 [2] : vector<8x8x8xf32> to vector<8x8xf32>
    %178 = vector.shape_cast %177 : vector<8x8xf32> to vector<8x8x1xf32>
    %179 = tpu.reciprocal %178 {approx = true} : vector<8x8x1xf32> -> vector<8x8x1xf32>
    %180 = vector.broadcast %179 : vector<8x8x1xf32> to vector<8x8x8xf32>
    %181 = arith.mulf %176, %180 : vector<8x8x8xf32>
    "tpu.trace_start"() <{level = 10 : i32, message = "bqk,bkd->bqd"}> : () -> ()
    %cst_72 = arith.constant dense<0.000000e+00> : vector<8x8x32xf32>
    %182 = tpu.matmul %181, %170, %cst_72 {dimension_numbers = #tpu.dot_dimension_numbers<[2], [1], [1], [2], [0, 0, 0, 1, 1, 2], [0], [0]>} : vector<8x8x8xf32>, vector<8x8x32xf32>, vector<8x8x32xf32> -> vector<8x8x32xf32>
    "tpu.trace_stop"() : () -> ()
    %183 = vector.extract_strided_slice %163 {offsets = [0, 0, 32], sizes = [8, 8, 32], strides = [1, 1, 1]} : vector<8x8x128xf32> to vector<8x8x32xf32>
    %184 = vector.extract_strided_slice %165 {offsets = [0, 0, 32], sizes = [8, 8, 32], strides = [1, 1, 1]} : vector<8x8x128xf32> to vector<8x8x32xf32>
    %185 = vector.extract_strided_slice %167 {offsets = [0, 0, 32], sizes = [8, 8, 32], strides = [1, 1, 1]} : vector<8x8x128xf32> to vector<8x8x32xf32>
    "tpu.trace_start"() <{level = 10 : i32, message = "bqd,bkd->bqk"}> : () -> ()
    %cst_73 = arith.constant dense<0.000000e+00> : vector<8x8x8xf32>
    %186 = tpu.matmul %183, %184, %cst_73 {dimension_numbers = #tpu.dot_dimension_numbers<[2], [2], [1], [1], [0, 0, 0, 1, 1, 1], [0], [0]>} : vector<8x8x32xf32>, vector<8x8x32xf32>, vector<8x8x8xf32> -> vector<8x8x8xf32>
    "tpu.trace_stop"() : () -> ()
    %cst_74 = arith.constant dense<0xFF800000> : vector<8x8xf32>
    %187 = vector.multi_reduction <maximumf>, %186, %cst_74 [2] : vector<8x8x8xf32> to vector<8x8xf32>
    %188 = vector.shape_cast %187 : vector<8x8xf32> to vector<8x8x1xf32>
    %189 = vector.broadcast %188 : vector<8x8x1xf32> to vector<8x8x8xf32>
    %190 = arith.subf %186, %189 : vector<8x8x8xf32>
    %191 = math.exp %190 : vector<8x8x8xf32>
    %cst_75 = arith.constant dense<0.000000e+00> : vector<8x8xf32>
    %192 = vector.multi_reduction <add>, %191, %cst_75 [2] : vector<8x8x8xf32> to vector<8x8xf32>
    %193 = vector.shape_cast %192 : vector<8x8xf32> to vector<8x8x1xf32>
    %194 = tpu.reciprocal %193 {approx = true} : vector<8x8x1xf32> -> vector<8x8x1xf32>
    %195 = vector.broadcast %194 : vector<8x8x1xf32> to vector<8x8x8xf32>
    %196 = arith.mulf %191, %195 : vector<8x8x8xf32>
    "tpu.trace_start"() <{level = 10 : i32, message = "bqk,bkd->bqd"}> : () -> ()
    %cst_76 = arith.constant dense<0.000000e+00> : vector<8x8x32xf32>
    %197 = tpu.matmul %196, %185, %cst_76 {dimension_numbers = #tpu.dot_dimension_numbers<[2], [1], [1], [2], [0, 0, 0, 1, 1, 2], [0], [0]>} : vector<8x8x8xf32>, vector<8x8x32xf32>, vector<8x8x32xf32> -> vector<8x8x32xf32>
    "tpu.trace_stop"() : () -> ()
    %198 = vector.extract_strided_slice %163 {offsets = [0, 0, 64], sizes = [8, 8, 32], strides = [1, 1, 1]} : vector<8x8x128xf32> to vector<8x8x32xf32>
    %199 = vector.extract_strided_slice %165 {offsets = [0, 0, 64], sizes = [8, 8, 32], strides = [1, 1, 1]} : vector<8x8x128xf32> to vector<8x8x32xf32>
    %200 = vector.extract_strided_slice %167 {offsets = [0, 0, 64], sizes = [8, 8, 32], strides = [1, 1, 1]} : vector<8x8x128xf32> to vector<8x8x32xf32>
    "tpu.trace_start"() <{level = 10 : i32, message = "bqd,bkd->bqk"}> : () -> ()
    %cst_77 = arith.constant dense<0.000000e+00> : vector<8x8x8xf32>
    %201 = tpu.matmul %198, %199, %cst_77 {dimension_numbers = #tpu.dot_dimension_numbers<[2], [2], [1], [1], [0, 0, 0, 1, 1, 1], [0], [0]>} : vector<8x8x32xf32>, vector<8x8x32xf32>, vector<8x8x8xf32> -> vector<8x8x8xf32>
    "tpu.trace_stop"() : () -> ()
    %cst_78 = arith.constant dense<0xFF800000> : vector<8x8xf32>
    %202 = vector.multi_reduction <maximumf>, %201, %cst_78 [2] : vector<8x8x8xf32> to vector<8x8xf32>
    %203 = vector.shape_cast %202 : vector<8x8xf32> to vector<8x8x1xf32>
    %204 = vector.broadcast %203 : vector<8x8x1xf32> to vector<8x8x8xf32>
    %205 = arith.subf %201, %204 : vector<8x8x8xf32>
    %206 = math.exp %205 : vector<8x8x8xf32>
    %cst_79 = arith.constant dense<0.000000e+00> : vector<8x8xf32>
    %207 = vector.multi_reduction <add>, %206, %cst_79 [2] : vector<8x8x8xf32> to vector<8x8xf32>
    %208 = vector.shape_cast %207 : vector<8x8xf32> to vector<8x8x1xf32>
    %209 = tpu.reciprocal %208 {approx = true} : vector<8x8x1xf32> -> vector<8x8x1xf32>
    %210 = vector.broadcast %209 : vector<8x8x1xf32> to vector<8x8x8xf32>
    %211 = arith.mulf %206, %210 : vector<8x8x8xf32>
    "tpu.trace_start"() <{level = 10 : i32, message = "bqk,bkd->bqd"}> : () -> ()
    %cst_80 = arith.constant dense<0.000000e+00> : vector<8x8x32xf32>
    %212 = tpu.matmul %211, %200, %cst_80 {dimension_numbers = #tpu.dot_dimension_numbers<[2], [1], [1], [2], [0, 0, 0, 1, 1, 2], [0], [0]>} : vector<8x8x8xf32>, vector<8x8x32xf32>, vector<8x8x32xf32> -> vector<8x8x32xf32>
    "tpu.trace_stop"() : () -> ()
    %213 = vector.extract_strided_slice %163 {offsets = [0, 0, 96], sizes = [8, 8, 32], strides = [1, 1, 1]} : vector<8x8x128xf32> to vector<8x8x32xf32>
    %214 = vector.extract_strided_slice %165 {offsets = [0, 0, 96], sizes = [8, 8, 32], strides = [1, 1, 1]} : vector<8x8x128xf32> to vector<8x8x32xf32>
    %215 = vector.extract_strided_slice %167 {offsets = [0, 0, 96], sizes = [8, 8, 32], strides = [1, 1, 1]} : vector<8x8x128xf32> to vector<8x8x32xf32>
    "tpu.trace_start"() <{level = 10 : i32, message = "bqd,bkd->bqk"}> : () -> ()
    %cst_81 = arith.constant dense<0.000000e+00> : vector<8x8x8xf32>
    %216 = tpu.matmul %213, %214, %cst_81 {dimension_numbers = #tpu.dot_dimension_numbers<[2], [2], [1], [1], [0, 0, 0, 1, 1, 1], [0], [0]>} : vector<8x8x32xf32>, vector<8x8x32xf32>, vector<8x8x8xf32> -> vector<8x8x8xf32>
    "tpu.trace_stop"() : () -> ()
    %cst_82 = arith.constant dense<0xFF800000> : vector<8x8xf32>
    %217 = vector.multi_reduction <maximumf>, %216, %cst_82 [2] : vector<8x8x8xf32> to vector<8x8xf32>
    %218 = vector.shape_cast %217 : vector<8x8xf32> to vector<8x8x1xf32>
    %219 = vector.broadcast %218 : vector<8x8x1xf32> to vector<8x8x8xf32>
    %220 = arith.subf %216, %219 : vector<8x8x8xf32>
    %221 = math.exp %220 : vector<8x8x8xf32>
    %cst_83 = arith.constant dense<0.000000e+00> : vector<8x8xf32>
    %222 = vector.multi_reduction <add>, %221, %cst_83 [2] : vector<8x8x8xf32> to vector<8x8xf32>
    %223 = vector.shape_cast %222 : vector<8x8xf32> to vector<8x8x1xf32>
    %224 = tpu.reciprocal %223 {approx = true} : vector<8x8x1xf32> -> vector<8x8x1xf32>
    %225 = vector.broadcast %224 : vector<8x8x1xf32> to vector<8x8x8xf32>
    %226 = arith.mulf %221, %225 : vector<8x8x8xf32>
    "tpu.trace_start"() <{level = 10 : i32, message = "bqk,bkd->bqd"}> : () -> ()
    %cst_84 = arith.constant dense<0.000000e+00> : vector<8x8x32xf32>
    %227 = tpu.matmul %226, %215, %cst_84 {dimension_numbers = #tpu.dot_dimension_numbers<[2], [1], [1], [2], [0, 0, 0, 1, 1, 2], [0], [0]>} : vector<8x8x8xf32>, vector<8x8x32xf32>, vector<8x8x32xf32> -> vector<8x8x32xf32>
    "tpu.trace_stop"() : () -> ()
    %228 = tpu.concatenate %182, %197, %212, %227 in 2 : vector<8x8x32xf32>, vector<8x8x32xf32>, vector<8x8x32xf32>, vector<8x8x32xf32> -> vector<8x8x128xf32>
    %229 = vector.shape_cast %228 : vector<8x8x128xf32> to vector<64x128xf32>
    %230 = arith.truncf %229 : vector<64x128xf32> to vector<64x128xbf16>
    %c1_85 = arith.constant 1 : index
    %c0_86 = arith.constant 0 : index
    %c0_87 = arith.constant 0 : index
    %231 = vector.load %arg3[%c1_85, %c0_86, %c0_87] : memref<2x128x32xbf16, #tpu.memory_space<vmem>>, vector<1x128x32xbf16>
    %232 = vector.shape_cast %231 : vector<1x128x32xbf16> to vector<128x32xbf16>
    %cst_88 = arith.constant dense<0.000000e+00> : vector<64x32xf32>
    %233 = tpu.matmul %230, %232, %cst_88 {dimension_numbers = #tpu.dot_dimension_numbers<[1], [0], [0], [1], [0, 0, 1, 1], [], []>} : vector<64x128xbf16>, vector<128x32xbf16>, vector<64x32xf32> -> vector<64x32xf32>
    %c1_89 = arith.constant 1 : index
    %c0_90 = arith.constant 0 : index
    %c0_91 = arith.constant 0 : index
    %234 = vector.load %arg4[%c1_89, %c0_90, %c0_91] : memref<2x1x32xf32, #tpu.memory_space<vmem>>, vector<1x1x32xf32>
    %235 = vector.shape_cast %234 : vector<1x1x32xf32> to vector<1x32xf32>
    %236 = vector.broadcast %235 : vector<1x32xf32> to vector<64x32xf32>
    %237 = arith.addf %233, %236 : vector<64x32xf32>
    %238 = arith.addf %237, %157 : vector<64x32xf32>
    %c1_92 = arith.constant 1 : index
    %c0_93 = arith.constant 0 : index
    %c0_94 = arith.constant 0 : index
    %239 = vector.load %arg5[%c1_92, %c0_93, %c0_94] : memref<2x1x32xf32, #tpu.memory_space<vmem>>, vector<1x1x32xf32>
    %240 = vector.shape_cast %239 : vector<1x1x32xf32> to vector<1x32xf32>
    %c1_95 = arith.constant 1 : index
    %c0_96 = arith.constant 0 : index
    %c0_97 = arith.constant 0 : index
    %241 = vector.load %arg6[%c1_95, %c0_96, %c0_97] : memref<2x1x32xf32, #tpu.memory_space<vmem>>, vector<1x1x32xf32>
    %242 = vector.shape_cast %241 : vector<1x1x32xf32> to vector<1x32xf32>
    %cst_98 = arith.constant dense<0.000000e+00> : vector<64xf32>
    %243 = vector.multi_reduction <add>, %238, %cst_98 [1] : vector<64x32xf32> to vector<64xf32>
    %244 = vector.shape_cast %243 : vector<64xf32> to vector<64x1xf32>
    %cst_99 = arith.constant 3.200000e+01 : f32
    %245 = vector.broadcast %cst_99 : f32 to vector<64x1xf32>
    %246 = arith.divf %244, %245 : vector<64x1xf32>
    %247 = arith.mulf %238, %238 : vector<64x32xf32>
    %cst_100 = arith.constant dense<0.000000e+00> : vector<64xf32>
    %248 = vector.multi_reduction <add>, %247, %cst_100 [1] : vector<64x32xf32> to vector<64xf32>
    %249 = vector.shape_cast %248 : vector<64xf32> to vector<64x1xf32>
    %cst_101 = arith.constant 3.200000e+01 : f32
    %250 = vector.broadcast %cst_101 : f32 to vector<64x1xf32>
    %251 = arith.divf %249, %250 : vector<64x1xf32>
    %252 = arith.mulf %246, %246 : vector<64x1xf32>
    %253 = arith.subf %251, %252 : vector<64x1xf32>
    %cst_102 = arith.constant 0.000000e+00 : f32
    %254 = vector.broadcast %cst_102 : f32 to vector<64x1xf32>
    %255 = arith.maximumf %253, %254 : vector<64x1xf32>
    %256 = vector.broadcast %246 : vector<64x1xf32> to vector<64x32xf32>
    %257 = arith.subf %238, %256 : vector<64x32xf32>
    %cst_103 = arith.constant 9.99999974E-6 : f32
    %258 = vector.broadcast %cst_103 : f32 to vector<64x1xf32>
    %259 = arith.addf %255, %258 : vector<64x1xf32>
    %260 = math.rsqrt %259 : vector<64x1xf32>
    %261 = vector.broadcast %260 : vector<64x1xf32> to vector<64x32xf32>
    %262 = arith.mulf %257, %261 : vector<64x32xf32>
    %263 = vector.broadcast %240 : vector<1x32xf32> to vector<64x32xf32>
    %264 = arith.mulf %262, %263 : vector<64x32xf32>
    %265 = vector.broadcast %242 : vector<1x32xf32> to vector<64x32xf32>
    %266 = arith.addf %264, %265 : vector<64x32xf32>
    %267 = arith.truncf %266 : vector<64x32xf32> to vector<64x32xbf16>
    %c1_104 = arith.constant 1 : index
    %c0_105 = arith.constant 0 : index
    %c0_106 = arith.constant 0 : index
    %268 = vector.load %arg7[%c1_104, %c0_105, %c0_106] : memref<2x32x128xbf16, #tpu.memory_space<vmem>>, vector<1x32x128xbf16>
    %269 = vector.shape_cast %268 : vector<1x32x128xbf16> to vector<32x128xbf16>
    %cst_107 = arith.constant dense<0.000000e+00> : vector<64x128xf32>
    %270 = tpu.matmul %267, %269, %cst_107 {dimension_numbers = #tpu.dot_dimension_numbers<[1], [0], [0], [1], [0, 0, 1, 1], [], []>} : vector<64x32xbf16>, vector<32x128xbf16>, vector<64x128xf32> -> vector<64x128xf32>
    %c1_108 = arith.constant 1 : index
    %c0_109 = arith.constant 0 : index
    %c0_110 = arith.constant 0 : index
    %271 = vector.load %arg8[%c1_108, %c0_109, %c0_110] : memref<2x1x128xf32, #tpu.memory_space<vmem>>, vector<1x1x128xf32>
    %272 = vector.shape_cast %271 : vector<1x1x128xf32> to vector<1x128xf32>
    %273 = vector.broadcast %272 : vector<1x128xf32> to vector<64x128xf32>
    %274 = arith.addf %270, %273 : vector<64x128xf32>
    %cst_111 = arith.constant 0.000000e+00 : f32
    %275 = vector.broadcast %cst_111 : f32 to vector<64x128xf32>
    %276 = arith.maximumf %274, %275 : vector<64x128xf32>
    %277 = arith.truncf %276 : vector<64x128xf32> to vector<64x128xbf16>
    %c1_112 = arith.constant 1 : index
    %c0_113 = arith.constant 0 : index
    %c0_114 = arith.constant 0 : index
    %278 = vector.load %arg9[%c1_112, %c0_113, %c0_114] : memref<2x128x32xbf16, #tpu.memory_space<vmem>>, vector<1x128x32xbf16>
    %279 = vector.shape_cast %278 : vector<1x128x32xbf16> to vector<128x32xbf16>
    %cst_115 = arith.constant dense<0.000000e+00> : vector<64x32xf32>
    %280 = tpu.matmul %277, %279, %cst_115 {dimension_numbers = #tpu.dot_dimension_numbers<[1], [0], [0], [1], [0, 0, 1, 1], [], []>} : vector<64x128xbf16>, vector<128x32xbf16>, vector<64x32xf32> -> vector<64x32xf32>
    %c1_116 = arith.constant 1 : index
    %c0_117 = arith.constant 0 : index
    %c0_118 = arith.constant 0 : index
    %281 = vector.load %arg10[%c1_116, %c0_117, %c0_118] : memref<2x1x32xf32, #tpu.memory_space<vmem>>, vector<1x1x32xf32>
    %282 = vector.shape_cast %281 : vector<1x1x32xf32> to vector<1x32xf32>
    %283 = vector.broadcast %282 : vector<1x32xf32> to vector<64x32xf32>
    %284 = arith.addf %280, %283 : vector<64x32xf32>
    %285 = arith.addf %284, %266 : vector<64x32xf32>
    %c1_119 = arith.constant 1 : index
    %c0_120 = arith.constant 0 : index
    %c0_121 = arith.constant 0 : index
    %286 = vector.load %arg11[%c1_119, %c0_120, %c0_121] : memref<2x1x32xf32, #tpu.memory_space<vmem>>, vector<1x1x32xf32>
    %287 = vector.shape_cast %286 : vector<1x1x32xf32> to vector<1x32xf32>
    %c1_122 = arith.constant 1 : index
    %c0_123 = arith.constant 0 : index
    %c0_124 = arith.constant 0 : index
    %288 = vector.load %arg12[%c1_122, %c0_123, %c0_124] : memref<2x1x32xf32, #tpu.memory_space<vmem>>, vector<1x1x32xf32>
    %289 = vector.shape_cast %288 : vector<1x1x32xf32> to vector<1x32xf32>
    %cst_125 = arith.constant dense<0.000000e+00> : vector<64xf32>
    %290 = vector.multi_reduction <add>, %285, %cst_125 [1] : vector<64x32xf32> to vector<64xf32>
    %291 = vector.shape_cast %290 : vector<64xf32> to vector<64x1xf32>
    %cst_126 = arith.constant 3.200000e+01 : f32
    %292 = vector.broadcast %cst_126 : f32 to vector<64x1xf32>
    %293 = arith.divf %291, %292 : vector<64x1xf32>
    %294 = arith.mulf %285, %285 : vector<64x32xf32>
    %cst_127 = arith.constant dense<0.000000e+00> : vector<64xf32>
    %295 = vector.multi_reduction <add>, %294, %cst_127 [1] : vector<64x32xf32> to vector<64xf32>
    %296 = vector.shape_cast %295 : vector<64xf32> to vector<64x1xf32>
    %cst_128 = arith.constant 3.200000e+01 : f32
    %297 = vector.broadcast %cst_128 : f32 to vector<64x1xf32>
    %298 = arith.divf %296, %297 : vector<64x1xf32>
    %299 = arith.mulf %293, %293 : vector<64x1xf32>
    %300 = arith.subf %298, %299 : vector<64x1xf32>
    %cst_129 = arith.constant 0.000000e+00 : f32
    %301 = vector.broadcast %cst_129 : f32 to vector<64x1xf32>
    %302 = arith.maximumf %300, %301 : vector<64x1xf32>
    %303 = vector.broadcast %293 : vector<64x1xf32> to vector<64x32xf32>
    %304 = arith.subf %285, %303 : vector<64x32xf32>
    %cst_130 = arith.constant 9.99999974E-6 : f32
    %305 = vector.broadcast %cst_130 : f32 to vector<64x1xf32>
    %306 = arith.addf %302, %305 : vector<64x1xf32>
    %307 = math.rsqrt %306 : vector<64x1xf32>
    %308 = vector.broadcast %307 : vector<64x1xf32> to vector<64x32xf32>
    %309 = arith.mulf %304, %308 : vector<64x32xf32>
    %310 = vector.broadcast %287 : vector<1x32xf32> to vector<64x32xf32>
    %311 = arith.mulf %309, %310 : vector<64x32xf32>
    %312 = vector.broadcast %289 : vector<1x32xf32> to vector<64x32xf32>
    %313 = arith.addf %311, %312 : vector<64x32xf32>
    %314 = vector.shape_cast %313 : vector<64x32xf32> to vector<8x8x32xf32>
    %cst_131 = arith.constant dense<0.000000e+00> : vector<8x32xf32>
    %315 = vector.multi_reduction <add>, %314, %cst_131 [1] : vector<8x8x32xf32> to vector<8x32xf32>
    %cst_132 = arith.constant 8.000000e+00 : f32
    %316 = vector.broadcast %cst_132 : f32 to vector<8x32xf32>
    %317 = arith.divf %315, %316 : vector<8x32xf32>
    %318 = arith.truncf %317 : vector<8x32xf32> to vector<8x32xbf16>
    %c0_133 = arith.constant 0 : index
    %c0_134 = arith.constant 0 : index
    %319 = vector.load %arg13[%c0_133, %c0_134] : memref<32x8xbf16, #tpu.memory_space<vmem>>, vector<32x8xbf16>
    %cst_135 = arith.constant dense<0.000000e+00> : vector<8x8xf32>
    %320 = tpu.matmul %318, %319, %cst_135 {dimension_numbers = #tpu.dot_dimension_numbers<[1], [0], [0], [1], [0, 0, 1, 1], [], []>} : vector<8x32xbf16>, vector<32x8xbf16>, vector<8x8xf32> -> vector<8x8xf32>
    %c0_136 = arith.constant 0 : index
    %c0_137 = arith.constant 0 : index
    %321 = vector.load %arg14[%c0_136, %c0_137] : memref<1x8xf32, #tpu.memory_space<vmem>>, vector<1x8xf32>
    %322 = vector.broadcast %321 : vector<1x8xf32> to vector<8x8xf32>
    %323 = arith.addf %320, %322 : vector<8x8xf32>
    %c0_138 = arith.constant 0 : index
    %c0_139 = arith.constant 0 : index
    %324 = vector.load %arg15[%c0_138, %c0_139] : memref<8x8xf32, #tpu.memory_space<vmem>>, vector<8x8xf32>
    tpu.vector_store %arg15[%c0_138, %c0_139], %323 {strides = array<i32>} : memref<8x8xf32, #tpu.memory_space<vmem>>, vector<8x8xf32>,
    return
  }
  func.func @transform_0(%arg0: i32) -> (i32, i32) {
    %c0_i32 = arith.constant 0 : i32
    %c0_i32_0 = arith.constant 0 : i32
    return %arg0, %c0_i32 : i32, i32
  }
  func.func @transform_1(%arg0: i32) -> (i32, i32, i32) {
    %c0_i32 = arith.constant 0 : i32
    %c0_i32_0 = arith.constant 0 : i32
    %c0_i32_1 = arith.constant 0 : i32
    %c0_i32_2 = arith.constant 0 : i32
    return %c0_i32, %c0_i32_0, %c0_i32_1 : i32, i32, i32
  }
  func.func @transform_2(%arg0: i32) -> (i32, i32, i32) {
    %c0_i32 = arith.constant 0 : i32
    %c0_i32_0 = arith.constant 0 : i32
    %c0_i32_1 = arith.constant 0 : i32
    %c0_i32_2 = arith.constant 0 : i32
    return %c0_i32, %c0_i32_0, %c0_i32_1 : i32, i32, i32
  }
  func.func @transform_3(%arg0: i32) -> (i32, i32, i32) {
    %c0_i32 = arith.constant 0 : i32
    %c0_i32_0 = arith.constant 0 : i32
    %c0_i32_1 = arith.constant 0 : i32
    %c0_i32_2 = arith.constant 0 : i32
    return %c0_i32, %c0_i32_0, %c0_i32_1 : i32, i32, i32
  }
  func.func @transform_4(%arg0: i32) -> (i32, i32, i32) {
    %c0_i32 = arith.constant 0 : i32
    %c0_i32_0 = arith.constant 0 : i32
    %c0_i32_1 = arith.constant 0 : i32
    %c0_i32_2 = arith.constant 0 : i32
    return %c0_i32, %c0_i32_0, %c0_i32_1 : i32, i32, i32
  }
  func.func @transform_5(%arg0: i32) -> (i32, i32, i32) {
    %c0_i32 = arith.constant 0 : i32
    %c0_i32_0 = arith.constant 0 : i32
    %c0_i32_1 = arith.constant 0 : i32
    %c0_i32_2 = arith.constant 0 : i32
    return %c0_i32, %c0_i32_0, %c0_i32_1 : i32, i32, i32
  }
  func.func @transform_6(%arg0: i32) -> (i32, i32, i32) {
    %c0_i32 = arith.constant 0 : i32
    %c0_i32_0 = arith.constant 0 : i32
    %c0_i32_1 = arith.constant 0 : i32
    %c0_i32_2 = arith.constant 0 : i32
    return %c0_i32, %c0_i32_0, %c0_i32_1 : i32, i32, i32
  }
  func.func @transform_7(%arg0: i32) -> (i32, i32, i32) {
    %c0_i32 = arith.constant 0 : i32
    %c0_i32_0 = arith.constant 0 : i32
    %c0_i32_1 = arith.constant 0 : i32
    %c0_i32_2 = arith.constant 0 : i32
    return %c0_i32, %c0_i32_0, %c0_i32_1 : i32, i32, i32
  }
  func.func @transform_8(%arg0: i32) -> (i32, i32, i32) {
    %c0_i32 = arith.constant 0 : i32
    %c0_i32_0 = arith.constant 0 : i32
    %c0_i32_1 = arith.constant 0 : i32
    %c0_i32_2 = arith.constant 0 : i32
    return %c0_i32, %c0_i32_0, %c0_i32_1 : i32, i32, i32
  }
  func.func @transform_9(%arg0: i32) -> (i32, i32, i32) {
    %c0_i32 = arith.constant 0 : i32
    %c0_i32_0 = arith.constant 0 : i32
    %c0_i32_1 = arith.constant 0 : i32
    %c0_i32_2 = arith.constant 0 : i32
    return %c0_i32, %c0_i32_0, %c0_i32_1 : i32, i32, i32
  }
  func.func @transform_10(%arg0: i32) -> (i32, i32, i32) {
    %c0_i32 = arith.constant 0 : i32
    %c0_i32_0 = arith.constant 0 : i32
    %c0_i32_1 = arith.constant 0 : i32
    %c0_i32_2 = arith.constant 0 : i32
    return %c0_i32, %c0_i32_0, %c0_i32_1 : i32, i32, i32
  }
  func.func @transform_11(%arg0: i32) -> (i32, i32, i32) {
    %c0_i32 = arith.constant 0 : i32
    %c0_i32_0 = arith.constant 0 : i32
    %c0_i32_1 = arith.constant 0 : i32
    %c0_i32_2 = arith.constant 0 : i32
    return %c0_i32, %c0_i32_0, %c0_i32_1 : i32, i32, i32
  }
  func.func @transform_12(%arg0: i32) -> (i32, i32) {
    %c0_i32 = arith.constant 0 : i32
    %c0_i32_0 = arith.constant 0 : i32
    %c0_i32_1 = arith.constant 0 : i32
    return %c0_i32, %c0_i32_0 : i32, i32
  }
  func.func @transform_13(%arg0: i32) -> (i32, i32) {
    %c0_i32 = arith.constant 0 : i32
    %c0_i32_0 = arith.constant 0 : i32
    %c0_i32_1 = arith.constant 0 : i32
    return %c0_i32, %c0_i32_0 : i32, i32
  }
  func.func @transform_14(%arg0: i32) -> (i32, i32) {
    %c0_i32 = arith.constant 0 : i32
    %c0_i32_0 = arith.constant 0 : i32
    return %arg0, %c0_i32 : i32, i32
  }
}

</mosaic_0001>

<llo_original>
// kernel: tpu_custom_call.1
$region0: #{tpu_custom_call.1}
  #allocation0 [shape = 'u32[]', space=smem, size = 0x4, offset = 0x4, fixed_abs, tag = 'smem constant byte address 0x4 - core index']
  #allocation1 [shape = 'u32[72,128]{1,0:T(1,128)}', space=vmem, size = 0x9000, scoped, tag = 'internal scratch']
  %s0 = inlined_call_operand.vmem [shape: bf16[64,32], index: 0, kind: input, shape index: {}]
  %s1 = inlined_call_operand.vmem [shape: bf16[2,32,384], index: 1, kind: input, shape index: {}]
  %s2 = inlined_call_operand.vmem [shape: bf16[2,128,32], index: 2, kind: input, shape index: {}]
  %s3 = inlined_call_operand.vmem [shape: f32[2,1,32], index: 3, kind: input, shape index: {}]
  %s4 = inlined_call_operand.vmem [shape: f32[2,1,32], index: 4, kind: input, shape index: {}]
  %s5 = inlined_call_operand.vmem [shape: f32[2,1,32], index: 5, kind: input, shape index: {}]
  %s6 = inlined_call_operand.vmem [shape: bf16[2,32,128], index: 6, kind: input, shape index: {}]
  %s7 = inlined_call_operand.vmem [shape: f32[2,1,128], index: 7, kind: input, shape index: {}]
  %s8 = inlined_call_operand.vmem [shape: bf16[2,128,32], index: 8, kind: input, shape index: {}]
  %s9 = inlined_call_operand.vmem [shape: f32[2,1,32], index: 9, kind: input, shape index: {}]
  %s10 = inlined_call_operand.vmem [shape: f32[2,1,32], index: 10, kind: input, shape index: {}]
  %s11 = inlined_call_operand.vmem [shape: f32[2,1,32], index: 11, kind: input, shape index: {}]
  %s12 = inlined_call_operand.vmem [shape: bf16[32,8], index: 12, kind: input, shape index: {}]
  %s13 = inlined_call_operand.vmem [shape: f32[1,8], index: 13, kind: input, shape index: {}]
  %s14 = inlined_call_operand.hbm [shape: f32[8,8], index: 14, kind: output, shape index: {}]
  %s15 = sld [smem:[#allocation0]]
  $region66: #{tpu_custom_call.1} parent=0
    _
  %s17 = ssub.s32 1, %s15
  %s18 = scalar_select 0, %s17, %s15
  $region1: #{tpu_custom_call.1} parent=0
    #allocation2 [shape = 'u8[4096]{0}', space=vmem, size = 0x1000, scoped, tag = 'output window, operand 0, single buffered']
    #allocation3 [shape = 's32[1]{0}', space=sflag, size = 0x4, scoped, tag = 'scoped memory for tpu_custom_call.1']
    %19 = vsyncpa [#allocation3], 0
    // Predicated region
    $region2: #{tpu_custom_call.1} parent=1 // pred_check
      _
    $region3: #{tpu_custom_call.1} parent=1 // pred_check_branch
      %21 = sbr.rel (0) target = $region5
    $region4: #{tpu_custom_call.1} parent=1 // pred_region
      _
    $region5: #{tpu_custom_call.1} parent=1 // pred_fallthru
      _
    // Predicated region
    $region6: #{tpu_custom_call.1} parent=1 // pred_check
      _
    $region7: #{tpu_custom_call.1} parent=1 // pred_check_branch
      %23 = sbr.rel (0) target = $region9
    $region8: #{tpu_custom_call.1} parent=1 // pred_region
      _
    $region9: #{tpu_custom_call.1} parent=1 // pred_fallthru
      _
    // Predicated region
    $region10: #{tpu_custom_call.1} parent=1 // pred_check
      _
    $region11: #{tpu_custom_call.1} parent=1 // pred_check_branch
      %25 = sbr.rel (0) target = $region13
    $region12: #{tpu_custom_call.1} parent=1 // pred_region
      _
    $region13: #{tpu_custom_call.1} parent=1 // pred_fallthru
      _
    // Predicated region
    $region14: #{tpu_custom_call.1} parent=1 // pred_check
      _
    $region15: #{tpu_custom_call.1} parent=1 // pred_check_branch
      %27 = sbr.rel (0) target = $region17
    $region16: #{tpu_custom_call.1} parent=1 // pred_region
      _
    $region17: #{tpu_custom_call.1} parent=1 // pred_fallthru
      _
    // Predicated region
    $region18: #{tpu_custom_call.1} parent=1 // pred_check
      _
    $region19: #{tpu_custom_call.1} parent=1 // pred_check_branch
      %29 = sbr.rel (0) target = $region21
    $region20: #{tpu_custom_call.1} parent=1 // pred_region
      _
    $region21: #{tpu_custom_call.1} parent=1 // pred_fallthru
      _
    // Predicated region
    $region22: #{tpu_custom_call.1} parent=1 // pred_check
      _
    $region23: #{tpu_custom_call.1} parent=1 // pred_check_branch
      %31 = sbr.rel (0) target = $region25
    $region24: #{tpu_custom_call.1} parent=1 // pred_region
      _
    $region25: #{tpu_custom_call.1} parent=1 // pred_fallthru
      _
    // Predicated region
    $region26: #{tpu_custom_call.1} parent=1 // pred_check
      _
    $region27: #{tpu_custom_call.1} parent=1 // pred_check_branch
      %33 = sbr.rel (0) target = $region29
    $region28: #{tpu_custom_call.1} parent=1 // pred_region
      _
    $region29: #{tpu_custom_call.1} parent=1 // pred_fallthru
      _
    // Predicated region
    $region30: #{tpu_custom_call.1} parent=1 // pred_check
      _
    $region31: #{tpu_custom_call.1} parent=1 // pred_check_branch
      %35 = sbr.rel (0) target = $region33
    $region32: #{tpu_custom_call.1} parent=1 // pred_region
      _
    $region33: #{tpu_custom_call.1} parent=1 // pred_fallthru
      _
    // Predicated region
    $region34: #{tpu_custom_call.1} parent=1 // pred_check
      _
    $region35: #{tpu_custom_call.1} parent=1 // pred_check_branch
      %37 = sbr.rel (0) target = $region37
    $region36: #{tpu_custom_call.1} parent=1 // pred_region
      _
    $region37: #{tpu_custom_call.1} parent=1 // pred_fallthru
      _
    // Predicated region
    $region38: #{tpu_custom_call.1} parent=1 // pred_check
      _
    $region39: #{tpu_custom_call.1} parent=1 // pred_check_branch
      %39 = sbr.rel (0) target = $region41
    $region40: #{tpu_custom_call.1} parent=1 // pred_region
      _
    $region41: #{tpu_custom_call.1} parent=1 // pred_fallthru
      _
    // Predicated region
    $region42: #{tpu_custom_call.1} parent=1 // pred_check
      _
    $region43: #{tpu_custom_call.1} parent=1 // pred_check_branch
      %41 = sbr.rel (0) target = $region45
    $region44: #{tpu_custom_call.1} parent=1 // pred_region
      _
    $region45: #{tpu_custom_call.1} parent=1 // pred_fallthru
      _
    // Predicated region
    $region46: #{tpu_custom_call.1} parent=1 // pred_check
      _
    $region47: #{tpu_custom_call.1} parent=1 // pred_check_branch
      %43 = sbr.rel (0) target = $region49
    $region48: #{tpu_custom_call.1} parent=1 // pred_region
      _
    $region49: #{tpu_custom_call.1} parent=1 // pred_fallthru
      _
    // Predicated region
    $region50: #{tpu_custom_call.1} parent=1 // pred_check
      _
    $region51: #{tpu_custom_call.1} parent=1 // pred_check_branch
      %45 = sbr.rel (0) target = $region53
    $region52: #{tpu_custom_call.1} parent=1 // pred_region
      _
    $region53: #{tpu_custom_call.1} parent=1 // pred_fallthru
      _
    // Predicated region
    $region54: #{tpu_custom_call.1} parent=1 // pred_check
      _
    $region55: #{tpu_custom_call.1} parent=1 // pred_check_branch
      %47 = sbr.rel (0) target = $region57
    $region56: #{tpu_custom_call.1} parent=1 // pred_region
      _
    $region57: #{tpu_custom_call.1} parent=1 // pred_fallthru
      _
    %v49 = vld [vmem:[%s0] sm:$0xf]
    %v50 = vld [vmem:[%s0 + $0x4] sm:$0xf]
    %v51 = vld [vmem:[%s0 + $0x8] sm:$0xf]
    %v52 = vld [vmem:[%s0 + $0xc] sm:$0xf]
    %v53 = vld [vmem:[%s0 + $0x10] sm:$0xf]
    %v54 = vld [vmem:[%s0 + $0x14] sm:$0xf]
    %v55 = vld [vmem:[%s0 + $0x18] sm:$0xf]
    %v56 = vld [vmem:[%s0 + $0x1c] sm:$0xf]
    %v57 = vunpack.c.l.bf16 %v49
    %v58 = vunpack.c.l.bf16 %v50
    %v59 = vunpack.c.l.bf16 %v51
    %v60 = vunpack.c.l.bf16 %v52
    %v61 = vunpack.c.l.bf16 %v53
    %v62 = vunpack.c.l.bf16 %v54
    %v63 = vunpack.c.l.bf16 %v55
    %v64 = vunpack.c.l.bf16 %v56
    %v65 = vld [vmem:[%s1] sm:$0xff]
    %v66 = vld [vmem:[%s1 + $0x8] sm:$0xf]
    %v67 = vld [vmem:[%s1 + $0xc] sm:$0xff]
    %v68 = vld [vmem:[%s1 + $0x14] sm:$0xf]
    %v69 = vld [vmem:[%s1 + $0x18] sm:$0xff]
    %v70 = vld [vmem:[%s1 + $0x20] sm:$0xf]
    %v71 = vld [vmem:[%s1 + $0x24] sm:$0xff]
    %v72 = vld [vmem:[%s1 + $0x2c] sm:$0xf]
    %v81 = vunpack.c.l.b16 %v49
    %v82 = vunpack.c.l.b16 %v50
    %v83 = vunpack.c.l.b16 %v51
    %v84 = vunpack.c.l.b16 %v52
    %v85 = vunpack.c.l.b16 %v53
    %v86 = vunpack.c.l.b16 %v54
    %v87 = vunpack.c.l.b16 %v55
    %v88 = vunpack.c.l.b16 %v56
    %v89 = vpack.c.b16 %v82, %v81
    %v90 = vpack.c.b16 %v84, %v83
    %v91 = vpack.c.b16 %v86, %v85
    %v92 = vpack.c.b16 %v88, %v87
    %v101 = vunpack.c.l.b16 %v65
    %v102 = vunpack.c.h.b16 %v65
    %v103 = vunpack.c.l.b16 %v66
    %v104 = vunpack.c.l.b16 %v67
    %v105 = vunpack.c.h.b16 %v67
    %v106 = vunpack.c.l.b16 %v68
    %v107 = vunpack.c.l.b16 %v69
    %v108 = vunpack.c.h.b16 %v69
    %v109 = vunpack.c.l.b16 %v70
    %v110 = vunpack.c.l.b16 %v71
    %v111 = vunpack.c.h.b16 %v71
    %v112 = vunpack.c.l.b16 %v72
    %v113 = vpack.c.b16 %v104, %v101
    %v114 = vpack.c.b16 %v105, %v102
    %v115 = vpack.c.b16 %v106, %v103
    %v116 = vpack.c.b16 %v110, %v107
    %v117 = vpack.c.b16 %v111, %v108
    %v118 = vpack.c.b16 %v112, %v109
    %vm125 = vcmask 261120
    %v127 = vsel %vm125, %v89, 0
    %v130 = vsel %vm125, %v90, 0
    %v133 = vsel %vm125, %v91, 0
    %v136 = vsel %vm125, %v92, 0
    %138 = vmatpush.bf16.msra.mxu0 0
    %139 = vmatpush.bf16.msra.mxu0 0
    %140 = vmatpush.bf16.msra.mxu0 0
    %141 = vmatpush.bf16.msra.mxu0 0
    %142 = vmatpush.bf16.msra.mxu0 0
    %143 = vmatpush.bf16.msra.mxu0 0
    %144 = vmatpush.bf16.msra.mxu0 %v116
    %145 = vmatpush.bf16.msra.mxu0 %v113
    %146 = vmatmul.bf16.gmra.mxu0 %v127
    %v147 = vpop.f32.mrf.mxu0
    %v148 = vadd.f32 0.0, %v147
    %v149 = vpop.f32.mrf.mxu0
    %v150 = vadd.f32 0.0, %v149
    %151 = vmatmul.bf16.gmra.mxu0 %v130
    %v152 = vpop.f32.mrf.mxu0
    %v153 = vadd.f32 0.0, %v152
    %v154 = vpop.f32.mrf.mxu0
    %v155 = vadd.f32 0.0, %v154
    %156 = vmatmul.bf16.gmra.mxu0 %v133
    %v157 = vpop.f32.mrf.mxu0
    %v158 = vadd.f32 0.0, %v157
    %v159 = vpop.f32.mrf.mxu0
    %v160 = vadd.f32 0.0, %v159
    %161 = vmatmul.bf16.gmra.mxu0 %v136
    %v162 = vpop.f32.mrf.mxu0
    %v163 = vadd.f32 0.0, %v162
    %v164 = vpop.f32.mrf.mxu0
    %v165 = vadd.f32 0.0, %v164
    %166 = vdwg.mxu0
    %167 = vmatpush.bf16.msra.mxu0 0
    %168 = vmatpush.bf16.msra.mxu0 0
    %169 = vmatpush.bf16.msra.mxu0 0
    %170 = vmatpush.bf16.msra.mxu0 0
    %171 = vmatpush.bf16.msra.mxu0 0
    %172 = vmatpush.bf16.msra.mxu0 0
    %173 = vmatpush.bf16.msra.mxu0 %v117
    %174 = vmatpush.bf16.msra.mxu0 %v114
    %175 = vmatmul.bf16.gmra.mxu0 %v127
    %v176 = vpop.f32.mrf.mxu0
    %v177 = vadd.f32 0.0, %v176
    %v178 = vpop.f32.mrf.mxu0
    %v179 = vadd.f32 0.0, %v178
    %180 = vmatmul.bf16.gmra.mxu0 %v130
    %v181 = vpop.f32.mrf.mxu0
    %v182 = vadd.f32 0.0, %v181
    %v183 = vpop.f32.mrf.mxu0
    %v184 = vadd.f32 0.0, %v183
    %185 = vmatmul.bf16.gmra.mxu0 %v133
    %v186 = vpop.f32.mrf.mxu0
    %v187 = vadd.f32 0.0, %v186
    %v188 = vpop.f32.mrf.mxu0
    %v189 = vadd.f32 0.0, %v188
    %190 = vmatmul.bf16.gmra.mxu0 %v136
    %v191 = vpop.f32.mrf.mxu0
    %v192 = vadd.f32 0.0, %v191
    %v193 = vpop.f32.mrf.mxu0
    %v194 = vadd.f32 0.0, %v193
    %195 = vdwg.mxu0
    %196 = vmatpush.bf16.msra.mxu0 0
    %197 = vmatpush.bf16.msra.mxu0 0
    %198 = vmatpush.bf16.msra.mxu0 0
    %199 = vmatpush.bf16.msra.mxu0 0
    %200 = vmatpush.bf16.msra.mxu0 0
    %201 = vmatpush.bf16.msra.mxu0 0
    %202 = vmatpush.bf16.msra.mxu0 %v118
    %203 = vmatpush.bf16.msra.mxu0 %v115
    %204 = vmatmul.bf16.gmra.mxu0 %v127
    %v205 = vpop.f32.mrf.mxu0
    %v206 = vadd.f32 0.0, %v205
    %v207 = vpop.f32.mrf.mxu0
    %v208 = vadd.f32 0.0, %v207
    %209 = vmatmul.bf16.gmra.mxu0 %v130
    %v210 = vpop.f32.mrf.mxu0
    %v211 = vadd.f32 0.0, %v210
    %v212 = vpop.f32.mrf.mxu0
    %v213 = vadd.f32 0.0, %v212
    %214 = vmatmul.bf16.gmra.mxu0 %v133
    %v215 = vpop.f32.mrf.mxu0
    %v216 = vadd.f32 0.0, %v215
    %v217 = vpop.f32.mrf.mxu0
    %v218 = vadd.f32 0.0, %v217
    %219 = vmatmul.bf16.gmra.mxu0 %v136
    %v220 = vpop.f32.mrf.mxu0
    %v221 = vadd.f32 0.0, %v220
    %v222 = vpop.f32.mrf.mxu0
    %v223 = vadd.f32 0.0, %v222
    %224 = vdwg.mxu0
    %v226 = vsel %vm125, %v148, 0
    %v229 = vsel %vm125, %v177, 0
    %231 = vmatpush.xpose.msra.mxu0 0.0
    %232 = vmatpush.xpose.msra.mxu0 0.0
    %233 = vmatpush.xpose.msra.mxu0 0.0
    %234 = vmatpush.xpose.msra.mxu0 0.0
    %235 = vmatpush.xpose.msra.mxu0 0.0
    %236 = vmatpush.xpose.msra.mxu0 0.0
    %237 = vmatpush.xpose.msra.mxu0 0.0
    %238 = vmatpush.xpose.msra.mxu0 0.0
    %239 = vmatpush.xpose.msra.mxu0 0.0
    %240 = vmatpush.xpose.msra.mxu0 0.0
    %241 = vmatpush.xpose.msra.mxu0 0.0
    %242 = vmatpush.xpose.msra.mxu0 0.0
    %243 = vmatpush.xpose.msra.mxu0 0.0
    %244 = vmatpush.xpose.msra.mxu0 0.0
    %245 = vmatpush.xpose.msra.mxu0 0.0
    %246 = vmatpush.xpose.msra.mxu0 %v229
    %247 = vmatmul.f32.gmra.mxu0 %v226
    %v248 = vpop.f32.mrf.mxu0
    %v249 = vadd.f32 0.0, %v248
    %250 = vdwg.mxu0
    %v252 = vsel %vm125, %v150, 0
    %v255 = vsel %vm125, %v179, 0
    %257 = vmatpush.xpose.msra.mxu0 0.0
    %258 = vmatpush.xpose.msra.mxu0 0.0
    %259 = vmatpush.xpose.msra.mxu0 0.0
    %260 = vmatpush.xpose.msra.mxu0 0.0
    %261 = vmatpush.xpose.msra.mxu0 0.0
    %262 = vmatpush.xpose.msra.mxu0 0.0
    %263 = vmatpush.xpose.msra.mxu0 0.0
    %264 = vmatpush.xpose.msra.mxu0 0.0
    %265 = vmatpush.xpose.msra.mxu0 0.0
    %266 = vmatpush.xpose.msra.mxu0 0.0
    %267 = vmatpush.xpose.msra.mxu0 0.0
    %268 = vmatpush.xpose.msra.mxu0 0.0
    %269 = vmatpush.xpose.msra.mxu0 0.0
    %270 = vmatpush.xpose.msra.mxu0 0.0
    %271 = vmatpush.xpose.msra.mxu0 0.0
    %272 = vmatpush.xpose.msra.mxu0 %v255
    %273 = vmatmul.f32.gmra.mxu0 %v252
    %v274 = vpop.f32.mrf.mxu0
    %v275 = vadd.f32 0.0, %v274
    %276 = vdwg.mxu0
    %v278 = vsel %vm125, %v153, 0
    %v281 = vsel %vm125, %v182, 0
    %283 = vmatpush.xpose.msra.mxu0 0.0
    %284 = vmatpush.xpose.msra.mxu0 0.0
    %285 = vmatpush.xpose.msra.mxu0 0.0
    %286 = vmatpush.xpose.msra.mxu0 0.0
    %287 = vmatpush.xpose.msra.mxu0 0.0
    %288 = vmatpush.xpose.msra.mxu0 0.0
    %289 = vmatpush.xpose.msra.mxu0 0.0
    %290 = vmatpush.xpose.msra.mxu0 0.0
    %291 = vmatpush.xpose.msra.mxu0 0.0
    %292 = vmatpush.xpose.msra.mxu0 0.0
    %293 = vmatpush.xpose.msra.mxu0 0.0
    %294 = vmatpush.xpose.msra.mxu0 0.0
    %295 = vmatpush.xpose.msra.mxu0 0.0
    %296 = vmatpush.xpose.msra.mxu0 0.0
    %297 = vmatpush.xpose.msra.mxu0 0.0
    %298 = vmatpush.xpose.msra.mxu0 %v281
    %299 = vmatmul.f32.gmra.mxu0 %v278
    %v300 = vpop.f32.mrf.mxu0
    %v301 = vadd.f32 0.0, %v300
    %302 = vdwg.mxu0
    %v304 = vsel %vm125, %v155, 0
    %v307 = vsel %vm125, %v184, 0
    %309 = vmatpush.xpose.msra.mxu0 0.0
    %310 = vmatpush.xpose.msra.mxu0 0.0
    %311 = vmatpush.xpose.msra.mxu0 0.0
    %312 = vmatpush.xpose.msra.mxu0 0.0
    %313 = vmatpush.xpose.msra.mxu0 0.0
    %314 = vmatpush.xpose.msra.mxu0 0.0
    %315 = vmatpush.xpose.msra.mxu0 0.0
    %316 = vmatpush.xpose.msra.mxu0 0.0
    %317 = vmatpush.xpose.msra.mxu0 0.0
    %318 = vmatpush.xpose.msra.mxu0 0.0
    %319 = vmatpush.xpose.msra.mxu0 0.0
    %320 = vmatpush.xpose.msra.mxu0 0.0
    %321 = vmatpush.xpose.msra.mxu0 0.0
    %322 = vmatpush.xpose.msra.mxu0 0.0
    %323 = vmatpush.xpose.msra.mxu0 0.0
    %324 = vmatpush.xpose.msra.mxu0 %v307
    %325 = vmatmul.f32.gmra.mxu0 %v304
    %v326 = vpop.f32.mrf.mxu0
    %v327 = vadd.f32 0.0, %v326
    %328 = vdwg.mxu0
    %v330 = vsel %vm125, %v158, 0
    %v333 = vsel %vm125, %v187, 0
    %335 = vmatpush.xpose.msra.mxu0 0.0
    %336 = vmatpush.xpose.msra.mxu0 0.0
    %337 = vmatpush.xpose.msra.mxu0 0.0
    %338 = vmatpush.xpose.msra.mxu0 0.0
    %339 = vmatpush.xpose.msra.mxu0 0.0
    %340 = vmatpush.xpose.msra.mxu0 0.0
    %341 = vmatpush.xpose.msra.mxu0 0.0
    %342 = vmatpush.xpose.msra.mxu0 0.0
    %343 = vmatpush.xpose.msra.mxu0 0.0
    %344 = vmatpush.xpose.msra.mxu0 0.0
    %345 = vmatpush.xpose.msra.mxu0 0.0
    %346 = vmatpush.xpose.msra.mxu0 0.0
    %347 = vmatpush.xpose.msra.mxu0 0.0
    %348 = vmatpush.xpose.msra.mxu0 0.0
    %349 = vmatpush.xpose.msra.mxu0 0.0
    %350 = vmatpush.xpose.msra.mxu0 %v333
    %351 = vmatmul.f32.gmra.mxu0 %v330
    %v352 = vpop.f32.mrf.mxu0
    %v353 = vadd.f32 0.0, %v352
    %354 = vdwg.mxu0
    %v356 = vsel %vm125, %v160, 0
    %v359 = vsel %vm125, %v189, 0
    %361 = vmatpush.xpose.msra.mxu0 0.0
    %362 = vmatpush.xpose.msra.mxu0 0.0
    %363 = vmatpush.xpose.msra.mxu0 0.0
    %364 = vmatpush.xpose.msra.mxu0 0.0
    %365 = vmatpush.xpose.msra.mxu0 0.0
    %366 = vmatpush.xpose.msra.mxu0 0.0
    %367 = vmatpush.xpose.msra.mxu0 0.0
    %368 = vmatpush.xpose.msra.mxu0 0.0
    %369 = vmatpush.xpose.msra.mxu0 0.0
    %370 = vmatpush.xpose.msra.mxu0 0.0
    %371 = vmatpush.xpose.msra.mxu0 0.0
    %372 = vmatpush.xpose.msra.mxu0 0.0
    %373 = vmatpush.xpose.msra.mxu0 0.0
    %374 = vmatpush.xpose.msra.mxu0 0.0
    %375 = vmatpush.xpose.msra.mxu0 0.0
    %376 = vmatpush.xpose.msra.mxu0 %v359
    %377 = vmatmul.f32.gmra.mxu0 %v356
    %v378 = vpop.f32.mrf.mxu0
    %v379 = vadd.f32 0.0, %v378
    %380 = vdwg.mxu0
    %v382 = vsel %vm125, %v163, 0
    %v385 = vsel %vm125, %v192, 0
    %387 = vmatpush.xpose.msra.mxu0 0.0
    %388 = vmatpush.xpose.msra.mxu0 0.0
    %389 = vmatpush.xpose.msra.mxu0 0.0
    %390 = vmatpush.xpose.msra.mxu0 0.0
    %391 = vmatpush.xpose.msra.mxu0 0.0
    %392 = vmatpush.xpose.msra.mxu0 0.0
    %393 = vmatpush.xpose.msra.mxu0 0.0
    %394 = vmatpush.xpose.msra.mxu0 0.0
    %395 = vmatpush.xpose.msra.mxu0 0.0
    %396 = vmatpush.xpose.msra.mxu0 0.0
    %397 = vmatpush.xpose.msra.mxu0 0.0
    %398 = vmatpush.xpose.msra.mxu0 0.0
    %399 = vmatpush.xpose.msra.mxu0 0.0
    %400 = vmatpush.xpose.msra.mxu0 0.0
    %401 = vmatpush.xpose.msra.mxu0 0.0
    %402 = vmatpush.xpose.msra.mxu0 %v385
    %403 = vmatmul.f32.gmra.mxu0 %v382
    %v404 = vpop.f32.mrf.mxu0
    %v405 = vadd.f32 0.0, %v404
    %406 = vdwg.mxu0
    %v408 = vsel %vm125, %v165, 0
    %v411 = vsel %vm125, %v194, 0
    %413 = vmatpush.xpose.msra.mxu0 0.0
    %414 = vmatpush.xpose.msra.mxu0 0.0
    %415 = vmatpush.xpose.msra.mxu0 0.0
    %416 = vmatpush.xpose.msra.mxu0 0.0
    %417 = vmatpush.xpose.msra.mxu0 0.0
    %418 = vmatpush.xpose.msra.mxu0 0.0
    %419 = vmatpush.xpose.msra.mxu0 0.0
    %420 = vmatpush.xpose.msra.mxu0 0.0
    %421 = vmatpush.xpose.msra.mxu0 0.0
    %422 = vmatpush.xpose.msra.mxu0 0.0
    %423 = vmatpush.xpose.msra.mxu0 0.0
    %424 = vmatpush.xpose.msra.mxu0 0.0
    %425 = vmatpush.xpose.msra.mxu0 0.0
    %426 = vmatpush.xpose.msra.mxu0 0.0
    %427 = vmatpush.xpose.msra.mxu0 0.0
    %428 = vmatpush.xpose.msra.mxu0 %v411
    %429 = vmatmul.f32.gmra.mxu0 %v408
    %v430 = vpop.f32.mrf.mxu0
    %v431 = vadd.f32 0.0, %v430
    %432 = vdwg.mxu0
    %vm433 = vcmask 64512
    %v434 = vsel %vm433, %v249, -inf
    %435 = vmax.xlane.f32.xlu0 %v434
    %v436 = vpop.xlane.xlu0 %435
    %v437 = vsel %vm433, %v275, -inf
    %438 = vmax.xlane.f32.xlu0 %v437
    %v439 = vpop.xlane.xlu0 %438
    %v440 = vsel %vm433, %v301, -inf
    %441 = vmax.xlane.f32.xlu0 %v440
    %v442 = vpop.xlane.xlu0 %441
    %v443 = vsel %vm433, %v327, -inf
    %444 = vmax.xlane.f32.xlu0 %v443
    %v445 = vpop.xlane.xlu0 %444
    %v446 = vsel %vm433, %v353, -inf
    %447 = vmax.xlane.f32.xlu0 %v446
    %v448 = vpop.xlane.xlu0 %447
    %v449 = vsel %vm433, %v379, -inf
    %450 = vmax.xlane.f32.xlu0 %v449
    %v451 = vpop.xlane.xlu0 %450
    %v452 = vsel %vm433, %v405, -inf
    %453 = vmax.xlane.f32.xlu0 %v452
    %v454 = vpop.xlane.xlu0 %453
    %v455 = vsel %vm433, %v431, -inf
    %456 = vmax.xlane.f32.xlu0 %v455
    %v457 = vpop.xlane.xlu0 %456
    %v458 = vsub.f32 %v249, %v436
    %v459 = vsub.f32 %v275, %v439
    %v460 = vsub.f32 %v301, %v442
    %v461 = vsub.f32 %v327, %v445
    %v462 = vsub.f32 %v353, %v448
    %v463 = vsub.f32 %v379, %v451
    %v464 = vsub.f32 %v405, %v454
    %v465 = vsub.f32 %v431, %v457
    %v466 = vmul.f32 %v458, 1.442695
    %v467 = vpow.pop %v466
    %v468 = vmul.f32 %v459, 1.442695
    %v469 = vpow.pop %v468
    %v470 = vmul.f32 %v460, 1.442695
    %v471 = vpow.pop %v470
    %v472 = vmul.f32 %v461, 1.442695
    %v473 = vpow.pop %v472
    %v474 = vmul.f32 %v462, 1.442695
    %v475 = vpow.pop %v474
    %v476 = vmul.f32 %v463, 1.442695
    %v477 = vpow.pop %v476
    %v478 = vmul.f32 %v464, 1.442695
    %v479 = vpow.pop %v478
    %v480 = vmul.f32 %v465, 1.442695
    %v481 = vpow.pop %v480
    %v482 = vsel %vm433, %v467, 0.0
    %483 = vadd.xlane.f32.xlu0 %v482
    %v484 = vpop.xlane.xlu0 %483
    %v485 = vsel %vm433, %v469, 0.0
    %486 = vadd.xlane.f32.xlu0 %v485
    %v487 = vpop.xlane.xlu0 %486
    %v488 = vsel %vm433, %v471, 0.0
    %489 = vadd.xlane.f32.xlu0 %v488
    %v490 = vpop.xlane.xlu0 %489
    %v491 = vsel %vm433, %v473, 0.0
    %492 = vadd.xlane.f32.xlu0 %v491
    %v493 = vpop.xlane.xlu0 %492
    %v494 = vsel %vm433, %v475, 0.0
    %495 = vadd.xlane.f32.xlu0 %v494
    %v496 = vpop.xlane.xlu0 %495
    %v497 = vsel %vm433, %v477, 0.0
    %498 = vadd.xlane.f32.xlu0 %v497
    %v499 = vpop.xlane.xlu0 %498
    %v500 = vsel %vm433, %v479, 0.0
    %501 = vadd.xlane.f32.xlu0 %v500
    %v502 = vpop.xlane.xlu0 %501
    %v503 = vsel %vm433, %v481, 0.0
    %504 = vadd.xlane.f32.xlu0 %v503
    %v505 = vpop.xlane.xlu0 %504
    %v506 = vrcp.pop %v484
    %v507 = vrcp.pop %v487
    %v508 = vrcp.pop %v490
    %v509 = vrcp.pop %v493
    %v510 = vrcp.pop %v496
    %v511 = vrcp.pop %v499
    %v512 = vrcp.pop %v502
    %v513 = vrcp.pop %v505
    %v514 = vmul.f32 %v467, %v506
    %v515 = vmul.f32 %v469, %v507
    %v516 = vmul.f32 %v471, %v508
    %v517 = vmul.f32 %v473, %v509
    %v518 = vmul.f32 %v475, %v510
    %v519 = vmul.f32 %v477, %v511
    %v520 = vmul.f32 %v479, %v512
    %v521 = vmul.f32 %v481, %v513
    %v523 = vsel %vm433, %v514, 0
    %525 = vmatpush.msra.mxu0 0.0
    %526 = vmatpush.msra.mxu0 0.0
    %527 = vmatpush.msra.mxu0 0.0
    %528 = vmatpush.msra.mxu0 0.0
    %529 = vmatpush.msra.mxu0 0.0
    %530 = vmatpush.msra.mxu0 0.0
    %531 = vmatpush.msra.mxu0 0.0
    %532 = vmatpush.msra.mxu0 0.0
    %533 = vmatpush.msra.mxu0 0.0
    %534 = vmatpush.msra.mxu0 0.0
    %535 = vmatpush.msra.mxu0 0.0
    %536 = vmatpush.msra.mxu0 0.0
    %537 = vmatpush.msra.mxu0 0.0
    %538 = vmatpush.msra.mxu0 0.0
    %539 = vmatpush.msra.mxu0 0.0
    %540 = vmatpush.msra.mxu0 %v206
    %541 = vmatmul.f32.gmra.mxu0 %v523
    %v542 = vpop.f32.mrf.mxu0
    %v543 = vadd.f32 0.0, %v542
    %544 = vdwg.mxu0
    %v546 = vsel %vm433, %v515, 0
    %548 = vmatpush.msra.mxu0 0.0
    %549 = vmatpush.msra.mxu0 0.0
    %550 = vmatpush.msra.mxu0 0.0
    %551 = vmatpush.msra.mxu0 0.0
    %552 = vmatpush.msra.mxu0 0.0
    %553 = vmatpush.msra.mxu0 0.0
    %554 = vmatpush.msra.mxu0 0.0
    %555 = vmatpush.msra.mxu0 0.0
    %556 = vmatpush.msra.mxu0 0.0
    %557 = vmatpush.msra.mxu0 0.0
    %558 = vmatpush.msra.mxu0 0.0
    %559 = vmatpush.msra.mxu0 0.0
    %560 = vmatpush.msra.mxu0 0.0
    %561 = vmatpush.msra.mxu0 0.0
    %562 = vmatpush.msra.mxu0 0.0
    %563 = vmatpush.msra.mxu0 %v208
    %564 = vmatmul.f32.gmra.mxu0 %v546
    %v565 = vpop.f32.mrf.mxu0
    %v566 = vadd.f32 0.0, %v565
    %567 = vdwg.mxu0
    %v569 = vsel %vm433, %v516, 0
    %571 = vmatpush.msra.mxu0 0.0
    %572 = vmatpush.msra.mxu0 0.0
    %573 = vmatpush.msra.mxu0 0.0
    %574 = vmatpush.msra.mxu0 0.0
    %575 = vmatpush.msra.mxu0 0.0
    %576 = vmatpush.msra.mxu0 0.0
    %577 = vmatpush.msra.mxu0 0.0
    %578 = vmatpush.msra.mxu0 0.0
    %579 = vmatpush.msra.mxu0 0.0
    %580 = vmatpush.msra.mxu0 0.0
    %581 = vmatpush.msra.mxu0 0.0
    %582 = vmatpush.msra.mxu0 0.0
    %583 = vmatpush.msra.mxu0 0.0
    %584 = vmatpush.msra.mxu0 0.0
    %585 = vmatpush.msra.mxu0 0.0
    %586 = vmatpush.msra.mxu0 %v211
    %587 = vmatmul.f32.gmra.mxu0 %v569
    %v588 = vpop.f32.mrf.mxu0
    %v589 = vadd.f32 0.0, %v588
    %590 = vdwg.mxu0
    %v592 = vsel %vm433, %v517, 0
    %594 = vmatpush.msra.mxu0 0.0
    %595 = vmatpush.msra.mxu0 0.0
    %596 = vmatpush.msra.mxu0 0.0
    %597 = vmatpush.msra.mxu0 0.0
    %598 = vmatpush.msra.mxu0 0.0
    %599 = vmatpush.msra.mxu0 0.0
    %600 = vmatpush.msra.mxu0 0.0
    %601 = vmatpush.msra.mxu0 0.0
    %602 = vmatpush.msra.mxu0 0.0
    %603 = vmatpush.msra.mxu0 0.0
    %604 = vmatpush.msra.mxu0 0.0
    %605 = vmatpush.msra.mxu0 0.0
    %606 = vmatpush.msra.mxu0 0.0
    %607 = vmatpush.msra.mxu0 0.0
    %608 = vmatpush.msra.mxu0 0.0
    %609 = vmatpush.msra.mxu0 %v213
    %610 = vmatmul.f32.gmra.mxu0 %v592
    %v611 = vpop.f32.mrf.mxu0
    %v612 = vadd.f32 0.0, %v611
    %613 = vdwg.mxu0
    %v615 = vsel %vm433, %v518, 0
    %617 = vmatpush.msra.mxu0 0.0
    %618 = vmatpush.msra.mxu0 0.0
    %619 = vmatpush.msra.mxu0 0.0
    %620 = vmatpush.msra.mxu0 0.0
    %621 = vmatpush.msra.mxu0 0.0
    %622 = vmatpush.msra.mxu0 0.0
    %623 = vmatpush.msra.mxu0 0.0
    %624 = vmatpush.msra.mxu0 0.0
    %625 = vmatpush.msra.mxu0 0.0
    %626 = vmatpush.msra.mxu0 0.0
    %627 = vmatpush.msra.mxu0 0.0
    %628 = vmatpush.msra.mxu0 0.0
    %629 = vmatpush.msra.mxu0 0.0
    %630 = vmatpush.msra.mxu0 0.0
    %631 = vmatpush.msra.mxu0 0.0
    %632 = vmatpush.msra.mxu0 %v216
    %633 = vmatmul.f32.gmra.mxu0 %v615
    %v634 = vpop.f32.mrf.mxu0
    %v635 = vadd.f32 0.0, %v634
    %636 = vdwg.mxu0
    %v638 = vsel %vm433, %v519, 0
    %640 = vmatpush.msra.mxu0 0.0
    %641 = vmatpush.msra.mxu0 0.0
    %642 = vmatpush.msra.mxu0 0.0
    %643 = vmatpush.msra.mxu0 0.0
    %644 = vmatpush.msra.mxu0 0.0
    %645 = vmatpush.msra.mxu0 0.0
    %646 = vmatpush.msra.mxu0 0.0
    %647 = vmatpush.msra.mxu0 0.0
    %648 = vmatpush.msra.mxu0 0.0
    %649 = vmatpush.msra.mxu0 0.0
    %650 = vmatpush.msra.mxu0 0.0
    %651 = vmatpush.msra.mxu0 0.0
    %652 = vmatpush.msra.mxu0 0.0
    %653 = vmatpush.msra.mxu0 0.0
    %654 = vmatpush.msra.mxu0 0.0
    %655 = vmatpush.msra.mxu0 %v218
    %656 = vmatmul.f32.gmra.mxu0 %v638
    %v657 = vpop.f32.mrf.mxu0
    %v658 = vadd.f32 0.0, %v657
    %659 = vdwg.mxu0
    %v661 = vsel %vm433, %v520, 0
    %663 = vmatpush.msra.mxu0 0.0
    %664 = vmatpush.msra.mxu0 0.0
    %665 = vmatpush.msra.mxu0 0.0
    %666 = vmatpush.msra.mxu0 0.0
    %667 = vmatpush.msra.mxu0 0.0
    %668 = vmatpush.msra.mxu0 0.0
    %669 = vmatpush.msra.mxu0 0.0
    %670 = vmatpush.msra.mxu0 0.0
    %671 = vmatpush.msra.mxu0 0.0
    %672 = vmatpush.msra.mxu0 0.0
    %673 = vmatpush.msra.mxu0 0.0
    %674 = vmatpush.msra.mxu0 0.0
    %675 = vmatpush.msra.mxu0 0.0
    %676 = vmatpush.msra.mxu0 0.0
    %677 = vmatpush.msra.mxu0 0.0
    %678 = vmatpush.msra.mxu0 %v221
    %679 = vmatmul.f32.gmra.mxu0 %v661
    %v680 = vpop.f32.mrf.mxu0
    %v681 = vadd.f32 0.0, %v680
    %682 = vdwg.mxu0
    %v684 = vsel %vm433, %v521, 0
    %686 = vmatpush.msra.mxu0 0.0
    %687 = vmatpush.msra.mxu0 0.0
    %688 = vmatpush.msra.mxu0 0.0
    %689 = vmatpush.msra.mxu0 0.0
    %690 = vmatpush.msra.mxu0 0.0
    %691 = vmatpush.msra.mxu0 0.0
    %692 = vmatpush.msra.mxu0 0.0
    %693 = vmatpush.msra.mxu0 0.0
    %694 = vmatpush.msra.mxu0 0.0
    %695 = vmatpush.msra.mxu0 0.0
    %696 = vmatpush.msra.mxu0 0.0
    %697 = vmatpush.msra.mxu0 0.0
    %698 = vmatpush.msra.mxu0 0.0
    %699 = vmatpush.msra.mxu0 0.0
    %700 = vmatpush.msra.mxu0 0.0
    %701 = vmatpush.msra.mxu0 %v223
    %702 = vmatmul.f32.gmra.mxu0 %v684
    %v703 = vpop.f32.mrf.mxu0
    %v704 = vadd.f32 0.0, %v703
    %705 = vdwg.mxu0
    %706 = vrot.lane.b32.xlu0 %v148, 96
    %v707 = vpop.permute.xlu0 %706
    %708 = vrot.lane.b32.xlu0 %v177, 96
    %v709 = vpop.permute.xlu0 %708
    %v710 = vsel %vm125, %v707, 0
    %v712 = vsel %vm125, %v709, 0
    %714 = vmatpush.xpose.msra.mxu0 0.0
    %715 = vmatpush.xpose.msra.mxu0 0.0
    %716 = vmatpush.xpose.msra.mxu0 0.0
    %717 = vmatpush.xpose.msra.mxu0 0.0
    %718 = vmatpush.xpose.msra.mxu0 0.0
    %719 = vmatpush.xpose.msra.mxu0 0.0
    %720 = vmatpush.xpose.msra.mxu0 0.0
    %721 = vmatpush.xpose.msra.mxu0 0.0
    %722 = vmatpush.xpose.msra.mxu0 0.0
    %723 = vmatpush.xpose.msra.mxu0 0.0
    %724 = vmatpush.xpose.msra.mxu0 0.0
    %725 = vmatpush.xpose.msra.mxu0 0.0
    %726 = vmatpush.xpose.msra.mxu0 0.0
    %727 = vmatpush.xpose.msra.mxu0 0.0
    %728 = vmatpush.xpose.msra.mxu0 0.0
    %729 = vmatpush.xpose.msra.mxu0 %v712
    %730 = vmatmul.f32.gmra.mxu0 %v710
    %v731 = vpop.f32.mrf.mxu0
    %v732 = vadd.f32 0.0, %v731
    %733 = vdwg.mxu0
    %734 = vrot.lane.b32.xlu0 %v150, 96
    %v735 = vpop.permute.xlu0 %734
    %736 = vrot.lane.b32.xlu0 %v179, 96
    %v737 = vpop.permute.xlu0 %736
    %v738 = vsel %vm125, %v735, 0
    %v740 = vsel %vm125, %v737, 0
    %742 = vmatpush.xpose.msra.mxu0 0.0
    %743 = vmatpush.xpose.msra.mxu0 0.0
    %744 = vmatpush.xpose.msra.mxu0 0.0
    %745 = vmatpush.xpose.msra.mxu0 0.0
    %746 = vmatpush.xpose.msra.mxu0 0.0
    %747 = vmatpush.xpose.msra.mxu0 0.0
    %748 = vmatpush.xpose.msra.mxu0 0.0
    %749 = vmatpush.xpose.msra.mxu0 0.0
    %750 = vmatpush.xpose.msra.mxu0 0.0
    %751 = vmatpush.xpose.msra.mxu0 0.0
    %752 = vmatpush.xpose.msra.mxu0 0.0
    %753 = vmatpush.xpose.msra.mxu0 0.0
    %754 = vmatpush.xpose.msra.mxu0 0.0
    %755 = vmatpush.xpose.msra.mxu0 0.0
    %756 = vmatpush.xpose.msra.mxu0 0.0
    %757 = vmatpush.xpose.msra.mxu0 %v740
    %758 = vmatmul.f32.gmra.mxu0 %v738
    %v759 = vpop.f32.mrf.mxu0
    %v760 = vadd.f32 0.0, %v759
    %761 = vdwg.mxu0
    %762 = vrot.lane.b32.xlu0 %v153, 96
    %v763 = vpop.permute.xlu0 %762
    %764 = vrot.lane.b32.xlu0 %v182, 96
    %v765 = vpop.permute.xlu0 %764
    %v766 = vsel %vm125, %v763, 0
    %v768 = vsel %vm125, %v765, 0
    %770 = vmatpush.xpose.msra.mxu0 0.0
    %771 = vmatpush.xpose.msra.mxu0 0.0
    %772 = vmatpush.xpose.msra.mxu0 0.0
    %773 = vmatpush.xpose.msra.mxu0 0.0
    %774 = vmatpush.xpose.msra.mxu0 0.0
    %775 = vmatpush.xpose.msra.mxu0 0.0
    %776 = vmatpush.xpose.msra.mxu0 0.0
    %777 = vmatpush.xpose.msra.mxu0 0.0
    %778 = vmatpush.xpose.msra.mxu0 0.0
    %779 = vmatpush.xpose.msra.mxu0 0.0
    %780 = vmatpush.xpose.msra.mxu0 0.0
    %781 = vmatpush.xpose.msra.mxu0 0.0
    %782 = vmatpush.xpose.msra.mxu0 0.0
    %783 = vmatpush.xpose.msra.mxu0 0.0
    %784 = vmatpush.xpose.msra.mxu0 0.0
    %785 = vmatpush.xpose.msra.mxu0 %v768
    %786 = vmatmul.f32.gmra.mxu0 %v766
    %v787 = vpop.f32.mrf.mxu0
    %v788 = vadd.f32 0.0, %v787
    %789 = vdwg.mxu0
    %790 = vrot.lane.b32.xlu0 %v155, 96
    %v791 = vpop.permute.xlu0 %790
    %792 = vrot.lane.b32.xlu0 %v184, 96
    %v793 = vpop.permute.xlu0 %792
    %v794 = vsel %vm125, %v791, 0
    %v796 = vsel %vm125, %v793, 0
    %798 = vmatpush.xpose.msra.mxu0 0.0
    %799 = vmatpush.xpose.msra.mxu0 0.0
    %800 = vmatpush.xpose.msra.mxu0 0.0
    %801 = vmatpush.xpose.msra.mxu0 0.0
    %802 = vmatpush.xpose.msra.mxu0 0.0
    %803 = vmatpush.xpose.msra.mxu0 0.0
    %804 = vmatpush.xpose.msra.mxu0 0.0
    %805 = vmatpush.xpose.msra.mxu0 0.0
    %806 = vmatpush.xpose.msra.mxu0 0.0
    %807 = vmatpush.xpose.msra.mxu0 0.0
    %808 = vmatpush.xpose.msra.mxu0 0.0
    %809 = vmatpush.xpose.msra.mxu0 0.0
    %810 = vmatpush.xpose.msra.mxu0 0.0
    %811 = vmatpush.xpose.msra.mxu0 0.0
    %812 = vmatpush.xpose.msra.mxu0 0.0
    %813 = vmatpush.xpose.msra.mxu0 %v796
    %814 = vmatmul.f32.gmra.mxu0 %v794
    %v815 = vpop.f32.mrf.mxu0
    %v816 = vadd.f32 0.0, %v815
    %817 = vdwg.mxu0
    %818 = vrot.lane.b32.xlu0 %v158, 96
    %v819 = vpop.permute.xlu0 %818
    %820 = vrot.lane.b32.xlu0 %v187, 96
    %v821 = vpop.permute.xlu0 %820
    %v822 = vsel %vm125, %v819, 0
    %v824 = vsel %vm125, %v821, 0
    %826 = vmatpush.xpose.msra.mxu0 0.0
    %827 = vmatpush.xpose.msra.mxu0 0.0
    %828 = vmatpush.xpose.msra.mxu0 0.0
    %829 = vmatpush.xpose.msra.mxu0 0.0
    %830 = vmatpush.xpose.msra.mxu0 0.0
    %831 = vmatpush.xpose.msra.mxu0 0.0
    %832 = vmatpush.xpose.msra.mxu0 0.0
    %833 = vmatpush.xpose.msra.mxu0 0.0
    %834 = vmatpush.xpose.msra.mxu0 0.0
    %835 = vmatpush.xpose.msra.mxu0 0.0
    %836 = vmatpush.xpose.msra.mxu0 0.0
    %837 = vmatpush.xpose.msra.mxu0 0.0
    %838 = vmatpush.xpose.msra.mxu0 0.0
    %839 = vmatpush.xpose.msra.mxu0 0.0
    %840 = vmatpush.xpose.msra.mxu0 0.0
    %841 = vmatpush.xpose.msra.mxu0 %v824
    %842 = vmatmul.f32.gmra.mxu0 %v822
    %v843 = vpop.f32.mrf.mxu0
    %v844 = vadd.f32 0.0, %v843
    %845 = vdwg.mxu0
    %846 = vrot.lane.b32.xlu0 %v160, 96
    %v847 = vpop.permute.xlu0 %846
    %848 = vrot.lane.b32.xlu0 %v189, 96
    %v849 = vpop.permute.xlu0 %848
    %v850 = vsel %vm125, %v847, 0
    %v852 = vsel %vm125, %v849, 0
    %854 = vmatpush.xpose.msra.mxu0 0.0
    %855 = vmatpush.xpose.msra.mxu0 0.0
    %856 = vmatpush.xpose.msra.mxu0 0.0
    %857 = vmatpush.xpose.msra.mxu0 0.0
    %858 = vmatpush.xpose.msra.mxu0 0.0
    %859 = vmatpush.xpose.msra.mxu0 0.0
    %860 = vmatpush.xpose.msra.mxu0 0.0
    %861 = vmatpush.xpose.msra.mxu0 0.0
    %862 = vmatpush.xpose.msra.mxu0 0.0
    %863 = vmatpush.xpose.msra.mxu0 0.0
    %864 = vmatpush.xpose.msra.mxu0 0.0
    %865 = vmatpush.xpose.msra.mxu0 0.0
    %866 = vmatpush.xpose.msra.mxu0 0.0
    %867 = vmatpush.xpose.msra.mxu0 0.0
    %868 = vmatpush.xpose.msra.mxu0 0.0
    %869 = vmatpush.xpose.msra.mxu0 %v852
    %870 = vmatmul.f32.gmra.mxu0 %v850
    %v871 = vpop.f32.mrf.mxu0
    %v872 = vadd.f32 0.0, %v871
    %873 = vdwg.mxu0
    %874 = vrot.lane.b32.xlu0 %v163, 96
    %v875 = vpop.permute.xlu0 %874
    %876 = vrot.lane.b32.xlu0 %v192, 96
    %v877 = vpop.permute.xlu0 %876
    %v878 = vsel %vm125, %v875, 0
    %v880 = vsel %vm125, %v877, 0
    %882 = vmatpush.xpose.msra.mxu0 0.0
    %883 = vmatpush.xpose.msra.mxu0 0.0
    %884 = vmatpush.xpose.msra.mxu0 0.0
    %885 = vmatpush.xpose.msra.mxu0 0.0
    %886 = vmatpush.xpose.msra.mxu0 0.0
    %887 = vmatpush.xpose.msra.mxu0 0.0
    %888 = vmatpush.xpose.msra.mxu0 0.0
    %889 = vmatpush.xpose.msra.mxu0 0.0
    %890 = vmatpush.xpose.msra.mxu0 0.0
    %891 = vmatpush.xpose.msra.mxu0 0.0
    %892 = vmatpush.xpose.msra.mxu0 0.0
    %893 = vmatpush.xpose.msra.mxu0 0.0
    %894 = vmatpush.xpose.msra.mxu0 0.0
    %895 = vmatpush.xpose.msra.mxu0 0.0
    %896 = vmatpush.xpose.msra.mxu0 0.0
    %897 = vmatpush.xpose.msra.mxu0 %v880
    %898 = vmatmul.f32.gmra.mxu0 %v878
    %v899 = vpop.f32.mrf.mxu0
    %v900 = vadd.f32 0.0, %v899
    %901 = vdwg.mxu0
    %902 = vrot.lane.b32.xlu0 %v165, 96
    %v903 = vpop.permute.xlu0 %902
    %904 = vrot.lane.b32.xlu0 %v194, 96
    %v905 = vpop.permute.xlu0 %904
    %v906 = vsel %vm125, %v903, 0
    %v908 = vsel %vm125, %v905, 0
    %910 = vmatpush.xpose.msra.mxu0 0.0
    %911 = vmatpush.xpose.msra.mxu0 0.0
    %912 = vmatpush.xpose.msra.mxu0 0.0
    %913 = vmatpush.xpose.msra.mxu0 0.0
    %914 = vmatpush.xpose.msra.mxu0 0.0
    %915 = vmatpush.xpose.msra.mxu0 0.0
    %916 = vmatpush.xpose.msra.mxu0 0.0
    %917 = vmatpush.xpose.msra.mxu0 0.0
    %918 = vmatpush.xpose.msra.mxu0 0.0
    %919 = vmatpush.xpose.msra.mxu0 0.0
    %920 = vmatpush.xpose.msra.mxu0 0.0
    %921 = vmatpush.xpose.msra.mxu0 0.0
    %922 = vmatpush.xpose.msra.mxu0 0.0
    %923 = vmatpush.xpose.msra.mxu0 0.0
    %924 = vmatpush.xpose.msra.mxu0 0.0
    %925 = vmatpush.xpose.msra.mxu0 %v908
    %926 = vmatmul.f32.gmra.mxu0 %v906
    %v927 = vpop.f32.mrf.mxu0
    %v928 = vadd.f32 0.0, %v927
    %929 = vdwg.mxu0
    %v930 = vsel %vm433, %v732, -inf
    %931 = vmax.xlane.f32.xlu0 %v930
    %v932 = vpop.xlane.xlu0 %931
    %v933 = vsel %vm433, %v760, -inf
    %934 = vmax.xlane.f32.xlu0 %v933
    %v935 = vpop.xlane.xlu0 %934
    %v936 = vsel %vm433, %v788, -inf
    %937 = vmax.xlane.f32.xlu0 %v936
    %v938 = vpop.xlane.xlu0 %937
    %v939 = vsel %vm433, %v816, -inf
    %940 = vmax.xlane.f32.xlu0 %v939
    %v941 = vpop.xlane.xlu0 %940
    %v942 = vsel %vm433, %v844, -inf
    %943 = vmax.xlane.f32.xlu0 %v942
    %v944 = vpop.xlane.xlu0 %943
    %v945 = vsel %vm433, %v872, -inf
    %946 = vmax.xlane.f32.xlu0 %v945
    %v947 = vpop.xlane.xlu0 %946
    %v948 = vsel %vm433, %v900, -inf
    %949 = vmax.xlane.f32.xlu0 %v948
    %v950 = vpop.xlane.xlu0 %949
    %v951 = vsel %vm433, %v928, -inf
    %952 = vmax.xlane.f32.xlu0 %v951
    %v953 = vpop.xlane.xlu0 %952
    %v954 = vsub.f32 %v732, %v932
    %v955 = vsub.f32 %v760, %v935
    %v956 = vsub.f32 %v788, %v938
    %v957 = vsub.f32 %v816, %v941
    %v958 = vsub.f32 %v844, %v944
    %v959 = vsub.f32 %v872, %v947
    %v960 = vsub.f32 %v900, %v950
    %v961 = vsub.f32 %v928, %v953
    %v962 = vmul.f32 %v954, 1.442695
    %v963 = vpow.pop %v962
    %v964 = vmul.f32 %v955, 1.442695
    %v965 = vpow.pop %v964
    %v966 = vmul.f32 %v956, 1.442695
    %v967 = vpow.pop %v966
    %v968 = vmul.f32 %v957, 1.442695
    %v969 = vpow.pop %v968
    %v970 = vmul.f32 %v958, 1.442695
    %v971 = vpow.pop %v970
    %v972 = vmul.f32 %v959, 1.442695
    %v973 = vpow.pop %v972
    %v974 = vmul.f32 %v960, 1.442695
    %v975 = vpow.pop %v974
    %v976 = vmul.f32 %v961, 1.442695
    %v977 = vpow.pop %v976
    %v978 = vsel %vm433, %v963, 0.0
    %979 = vadd.xlane.f32.xlu0 %v978
    %v980 = vpop.xlane.xlu0 %979
    %v981 = vsel %vm433, %v965, 0.0
    %982 = vadd.xlane.f32.xlu0 %v981
    %v983 = vpop.xlane.xlu0 %982
    %v984 = vsel %vm433, %v967, 0.0
    %985 = vadd.xlane.f32.xlu0 %v984
    %v986 = vpop.xlane.xlu0 %985
    %v987 = vsel %vm433, %v969, 0.0
    %988 = vadd.xlane.f32.xlu0 %v987
    %v989 = vpop.xlane.xlu0 %988
    %v990 = vsel %vm433, %v971, 0.0
    %991 = vadd.xlane.f32.xlu0 %v990
    %v992 = vpop.xlane.xlu0 %991
    %v993 = vsel %vm433, %v973, 0.0
    %994 = vadd.xlane.f32.xlu0 %v993
    %v995 = vpop.xlane.xlu0 %994
    %v996 = vsel %vm433, %v975, 0.0
    %997 = vadd.xlane.f32.xlu0 %v996
    %v998 = vpop.xlane.xlu0 %997
    %v999 = vsel %vm433, %v977, 0.0
    %1000 = vadd.xlane.f32.xlu0 %v999
    %v1001 = vpop.xlane.xlu0 %1000
    %v1002 = vrcp.pop %v980
    %v1003 = vrcp.pop %v983
    %v1004 = vrcp.pop %v986
    %v1005 = vrcp.pop %v989
    %v1006 = vrcp.pop %v992
    %v1007 = vrcp.pop %v995
    %v1008 = vrcp.pop %v998
    %v1009 = vrcp.pop %v1001
    %v1010 = vmul.f32 %v963, %v1002
    %v1011 = vmul.f32 %v965, %v1003
    %v1012 = vmul.f32 %v967, %v1004
    %v1013 = vmul.f32 %v969, %v1005
    %v1014 = vmul.f32 %v971, %v1006
    %v1015 = vmul.f32 %v973, %v1007
    %v1016 = vmul.f32 %v975, %v1008
    %v1017 = vmul.f32 %v977, %v1009
    %1019 = vrot.lane.b32.xlu0 %v206, 96
    %v1020 = vpop.permute.xlu0 %1019
    %v1023 = vsel %vm433, %v1010, 0
    %1025 = vmatpush.msra.mxu0 0.0
    %1026 = vmatpush.msra.mxu0 0.0
    %1027 = vmatpush.msra.mxu0 0.0
    %1028 = vmatpush.msra.mxu0 0.0
    %1029 = vmatpush.msra.mxu0 0.0
    %1030 = vmatpush.msra.mxu0 0.0
    %1031 = vmatpush.msra.mxu0 0.0
    %1032 = vmatpush.msra.mxu0 0.0
    %1033 = vmatpush.msra.mxu0 0.0
    %1034 = vmatpush.msra.mxu0 0.0
    %1035 = vmatpush.msra.mxu0 0.0
    %1036 = vmatpush.msra.mxu0 0.0
    %1037 = vmatpush.msra.mxu0 0.0
    %1038 = vmatpush.msra.mxu0 0.0
    %1039 = vmatpush.msra.mxu0 0.0
    %1040 = vmatpush.msra.mxu0 %v1020
    %1041 = vmatmul.f32.gmra.mxu0 %v1023
    %v1042 = vpop.f32.mrf.mxu0
    %v1043 = vadd.f32 0.0, %v1042
    %1044 = vdwg.mxu0
    %1046 = vrot.lane.b32.xlu0 %v208, 96
    %v1047 = vpop.permute.xlu0 %1046
    %v1050 = vsel %vm433, %v1011, 0
    %1052 = vmatpush.msra.mxu0 0.0
    %1053 = vmatpush.msra.mxu0 0.0
    %1054 = vmatpush.msra.mxu0 0.0
    %1055 = vmatpush.msra.mxu0 0.0
    %1056 = vmatpush.msra.mxu0 0.0
    %1057 = vmatpush.msra.mxu0 0.0
    %1058 = vmatpush.msra.mxu0 0.0
    %1059 = vmatpush.msra.mxu0 0.0
    %1060 = vmatpush.msra.mxu0 0.0
    %1061 = vmatpush.msra.mxu0 0.0
    %1062 = vmatpush.msra.mxu0 0.0
    %1063 = vmatpush.msra.mxu0 0.0
    %1064 = vmatpush.msra.mxu0 0.0
    %1065 = vmatpush.msra.mxu0 0.0
    %1066 = vmatpush.msra.mxu0 0.0
    %1067 = vmatpush.msra.mxu0 %v1047
    %1068 = vmatmul.f32.gmra.mxu0 %v1050
    %v1069 = vpop.f32.mrf.mxu0
    %v1070 = vadd.f32 0.0, %v1069
    %1071 = vdwg.mxu0
    %1073 = vrot.lane.b32.xlu0 %v211, 96
    %v1074 = vpop.permute.xlu0 %1073
    %v1077 = vsel %vm433, %v1012, 0
    %1079 = vmatpush.msra.mxu0 0.0
    %1080 = vmatpush.msra.mxu0 0.0
    %1081 = vmatpush.msra.mxu0 0.0
    %1082 = vmatpush.msra.mxu0 0.0
    %1083 = vmatpush.msra.mxu0 0.0
    %1084 = vmatpush.msra.mxu0 0.0
    %1085 = vmatpush.msra.mxu0 0.0
    %1086 = vmatpush.msra.mxu0 0.0
    %1087 = vmatpush.msra.mxu0 0.0
    %1088 = vmatpush.msra.mxu0 0.0
    %1089 = vmatpush.msra.mxu0 0.0
    %1090 = vmatpush.msra.mxu0 0.0
    %1091 = vmatpush.msra.mxu0 0.0
    %1092 = vmatpush.msra.mxu0 0.0
    %1093 = vmatpush.msra.mxu0 0.0
    %1094 = vmatpush.msra.mxu0 %v1074
    %1095 = vmatmul.f32.gmra.mxu0 %v1077
    %v1096 = vpop.f32.mrf.mxu0
    %v1097 = vadd.f32 0.0, %v1096
    %1098 = vdwg.mxu0
    %1100 = vrot.lane.b32.xlu0 %v213, 96
    %v1101 = vpop.permute.xlu0 %1100
    %v1104 = vsel %vm433, %v1013, 0
    %1106 = vmatpush.msra.mxu0 0.0
    %1107 = vmatpush.msra.mxu0 0.0
    %1108 = vmatpush.msra.mxu0 0.0
    %1109 = vmatpush.msra.mxu0 0.0
    %1110 = vmatpush.msra.mxu0 0.0
    %1111 = vmatpush.msra.mxu0 0.0
    %1112 = vmatpush.msra.mxu0 0.0
    %1113 = vmatpush.msra.mxu0 0.0
    %1114 = vmatpush.msra.mxu0 0.0
    %1115 = vmatpush.msra.mxu0 0.0
    %1116 = vmatpush.msra.mxu0 0.0
    %1117 = vmatpush.msra.mxu0 0.0
    %1118 = vmatpush.msra.mxu0 0.0
    %1119 = vmatpush.msra.mxu0 0.0
    %1120 = vmatpush.msra.mxu0 0.0
    %1121 = vmatpush.msra.mxu0 %v1101
    %1122 = vmatmul.f32.gmra.mxu0 %v1104
    %v1123 = vpop.f32.mrf.mxu0
    %v1124 = vadd.f32 0.0, %v1123
    %1125 = vdwg.mxu0
    %1127 = vrot.lane.b32.xlu0 %v216, 96
    %v1128 = vpop.permute.xlu0 %1127
    %v1131 = vsel %vm433, %v1014, 0
    %1133 = vmatpush.msra.mxu0 0.0
    %1134 = vmatpush.msra.mxu0 0.0
    %1135 = vmatpush.msra.mxu0 0.0
    %1136 = vmatpush.msra.mxu0 0.0
    %1137 = vmatpush.msra.mxu0 0.0
    %1138 = vmatpush.msra.mxu0 0.0
    %1139 = vmatpush.msra.mxu0 0.0
    %1140 = vmatpush.msra.mxu0 0.0
    %1141 = vmatpush.msra.mxu0 0.0
    %1142 = vmatpush.msra.mxu0 0.0
    %1143 = vmatpush.msra.mxu0 0.0
    %1144 = vmatpush.msra.mxu0 0.0
    %1145 = vmatpush.msra.mxu0 0.0
    %1146 = vmatpush.msra.mxu0 0.0
    %1147 = vmatpush.msra.mxu0 0.0
    %1148 = vmatpush.msra.mxu0 %v1128
    %1149 = vmatmul.f32.gmra.mxu0 %v1131
    %v1150 = vpop.f32.mrf.mxu0
    %v1151 = vadd.f32 0.0, %v1150
    %1152 = vdwg.mxu0
    %1154 = vrot.lane.b32.xlu0 %v218, 96
    %v1155 = vpop.permute.xlu0 %1154
    %v1158 = vsel %vm433, %v1015, 0
    %1160 = vmatpush.msra.mxu0 0.0
    %1161 = vmatpush.msra.mxu0 0.0
    %1162 = vmatpush.msra.mxu0 0.0
    %1163 = vmatpush.msra.mxu0 0.0
    %1164 = vmatpush.msra.mxu0 0.0
    %1165 = vmatpush.msra.mxu0 0.0
    %1166 = vmatpush.msra.mxu0 0.0
    %1167 = vmatpush.msra.mxu0 0.0
    %1168 = vmatpush.msra.mxu0 0.0
    %1169 = vmatpush.msra.mxu0 0.0
    %1170 = vmatpush.msra.mxu0 0.0
    %1171 = vmatpush.msra.mxu0 0.0
    %1172 = vmatpush.msra.mxu0 0.0
    %1173 = vmatpush.msra.mxu0 0.0
    %1174 = vmatpush.msra.mxu0 0.0
    %1175 = vmatpush.msra.mxu0 %v1155
    %1176 = vmatmul.f32.gmra.mxu0 %v1158
    %v1177 = vpop.f32.mrf.mxu0
    %v1178 = vadd.f32 0.0, %v1177
    %1179 = vdwg.mxu0
    %1181 = vrot.lane.b32.xlu0 %v221, 96
    %v1182 = vpop.permute.xlu0 %1181
    %v1185 = vsel %vm433, %v1016, 0
    %1187 = vmatpush.msra.mxu0 0.0
    %1188 = vmatpush.msra.mxu0 0.0
    %1189 = vmatpush.msra.mxu0 0.0
    %1190 = vmatpush.msra.mxu0 0.0
    %1191 = vmatpush.msra.mxu0 0.0
    %1192 = vmatpush.msra.mxu0 0.0
    %1193 = vmatpush.msra.mxu0 0.0
    %1194 = vmatpush.msra.mxu0 0.0
    %1195 = vmatpush.msra.mxu0 0.0
    %1196 = vmatpush.msra.mxu0 0.0
    %1197 = vmatpush.msra.mxu0 0.0
    %1198 = vmatpush.msra.mxu0 0.0
    %1199 = vmatpush.msra.mxu0 0.0
    %1200 = vmatpush.msra.mxu0 0.0
    %1201 = vmatpush.msra.mxu0 0.0
    %1202 = vmatpush.msra.mxu0 %v1182
    %1203 = vmatmul.f32.gmra.mxu0 %v1185
    %v1204 = vpop.f32.mrf.mxu0
    %v1205 = vadd.f32 0.0, %v1204
    %1206 = vdwg.mxu0
    %1208 = vrot.lane.b32.xlu0 %v223, 96
    %v1209 = vpop.permute.xlu0 %1208
    %v1212 = vsel %vm433, %v1017, 0
    %1214 = vmatpush.msra.mxu0 0.0
    %1215 = vmatpush.msra.mxu0 0.0
    %1216 = vmatpush.msra.mxu0 0.0
    %1217 = vmatpush.msra.mxu0 0.0
    %1218 = vmatpush.msra.mxu0 0.0
    %1219 = vmatpush.msra.mxu0 0.0
    %1220 = vmatpush.msra.mxu0 0.0
    %1221 = vmatpush.msra.mxu0 0.0
    %1222 = vmatpush.msra.mxu0 0.0
    %1223 = vmatpush.msra.mxu0 0.0
    %1224 = vmatpush.msra.mxu0 0.0
    %1225 = vmatpush.msra.mxu0 0.0
    %1226 = vmatpush.msra.mxu0 0.0
    %1227 = vmatpush.msra.mxu0 0.0
    %1228 = vmatpush.msra.mxu0 0.0
    %1229 = vmatpush.msra.mxu0 %v1209
    %1230 = vmatmul.f32.gmra.mxu0 %v1212
    %v1231 = vpop.f32.mrf.mxu0
    %v1232 = vadd.f32 0.0, %v1231
    %1233 = vdwg.mxu0
    %1234 = vrot.lane.b32.xlu0 %v148, 64
    %v1235 = vpop.permute.xlu0 %1234
    %1236 = vrot.lane.b32.xlu0 %v177, 64
    %v1237 = vpop.permute.xlu0 %1236
    %v1238 = vsel %vm125, %v1235, 0
    %v1240 = vsel %vm125, %v1237, 0
    %1242 = vmatpush.xpose.msra.mxu0 0.0
    %1243 = vmatpush.xpose.msra.mxu0 0.0
    %1244 = vmatpush.xpose.msra.mxu0 0.0
    %1245 = vmatpush.xpose.msra.mxu0 0.0
    %1246 = vmatpush.xpose.msra.mxu0 0.0
    %1247 = vmatpush.xpose.msra.mxu0 0.0
    %1248 = vmatpush.xpose.msra.mxu0 0.0
    %1249 = vmatpush.xpose.msra.mxu0 0.0
    %1250 = vmatpush.xpose.msra.mxu0 0.0
    %1251 = vmatpush.xpose.msra.mxu0 0.0
    %1252 = vmatpush.xpose.msra.mxu0 0.0
    %1253 = vmatpush.xpose.msra.mxu0 0.0
    %1254 = vmatpush.xpose.msra.mxu0 0.0
    %1255 = vmatpush.xpose.msra.mxu0 0.0
    %1256 = vmatpush.xpose.msra.mxu0 0.0
    %1257 = vmatpush.xpose.msra.mxu0 %v1240
    %1258 = vmatmul.f32.gmra.mxu0 %v1238
    %v1259 = vpop.f32.mrf.mxu0
    %v1260 = vadd.f32 0.0, %v1259
    %1261 = vdwg.mxu0
    %1262 = vrot.lane.b32.xlu0 %v150, 64
    %v1263 = vpop.permute.xlu0 %1262
    %1264 = vrot.lane.b32.xlu0 %v179, 64
    %v1265 = vpop.permute.xlu0 %1264
    %v1266 = vsel %vm125, %v1263, 0
    %v1268 = vsel %vm125, %v1265, 0
    %1270 = vmatpush.xpose.msra.mxu0 0.0
    %1271 = vmatpush.xpose.msra.mxu0 0.0
    %1272 = vmatpush.xpose.msra.mxu0 0.0
    %1273 = vmatpush.xpose.msra.mxu0 0.0
    %1274 = vmatpush.xpose.msra.mxu0 0.0
    %1275 = vmatpush.xpose.msra.mxu0 0.0
    %1276 = vmatpush.xpose.msra.mxu0 0.0
    %1277 = vmatpush.xpose.msra.mxu0 0.0
    %1278 = vmatpush.xpose.msra.mxu0 0.0
    %1279 = vmatpush.xpose.msra.mxu0 0.0
    %1280 = vmatpush.xpose.msra.mxu0 0.0
    %1281 = vmatpush.xpose.msra.mxu0 0.0
    %1282 = vmatpush.xpose.msra.mxu0 0.0
    %1283 = vmatpush.xpose.msra.mxu0 0.0
    %1284 = vmatpush.xpose.msra.mxu0 0.0
    %1285 = vmatpush.xpose.msra.mxu0 %v1268
    %1286 = vmatmul.f32.gmra.mxu0 %v1266
    %v1287 = vpop.f32.mrf.mxu0
    %v1288 = vadd.f32 0.0, %v1287
    %1289 = vdwg.mxu0
    %1290 = vrot.lane.b32.xlu0 %v153, 64
    %v1291 = vpop.permute.xlu0 %1290
    %1292 = vrot.lane.b32.xlu0 %v182, 64
    %v1293 = vpop.permute.xlu0 %1292
    %v1294 = vsel %vm125, %v1291, 0
    %v1296 = vsel %vm125, %v1293, 0
    %1298 = vmatpush.xpose.msra.mxu0 0.0
    %1299 = vmatpush.xpose.msra.mxu0 0.0
    %1300 = vmatpush.xpose.msra.mxu0 0.0
    %1301 = vmatpush.xpose.msra.mxu0 0.0
    %1302 = vmatpush.xpose.msra.mxu0 0.0
    %1303 = vmatpush.xpose.msra.mxu0 0.0
    %1304 = vmatpush.xpose.msra.mxu0 0.0
    %1305 = vmatpush.xpose.msra.mxu0 0.0
    %1306 = vmatpush.xpose.msra.mxu0 0.0
    %1307 = vmatpush.xpose.msra.mxu0 0.0
    %1308 = vmatpush.xpose.msra.mxu0 0.0
    %1309 = vmatpush.xpose.msra.mxu0 0.0
    %1310 = vmatpush.xpose.msra.mxu0 0.0
    %1311 = vmatpush.xpose.msra.mxu0 0.0
    %1312 = vmatpush.xpose.msra.mxu0 0.0
    %1313 = vmatpush.xpose.msra.mxu0 %v1296
    %1314 = vmatmul.f32.gmra.mxu0 %v1294
    %v1315 = vpop.f32.mrf.mxu0
    %v1316 = vadd.f32 0.0, %v1315
    %1317 = vdwg.mxu0
    %1318 = vrot.lane.b32.xlu0 %v155, 64
    %v1319 = vpop.permute.xlu0 %1318
    %1320 = vrot.lane.b32.xlu0 %v184, 64
    %v1321 = vpop.permute.xlu0 %1320
    %v1322 = vsel %vm125, %v1319, 0
    %v1324 = vsel %vm125, %v1321, 0
    %1326 = vmatpush.xpose.msra.mxu0 0.0
    %1327 = vmatpush.xpose.msra.mxu0 0.0
    %1328 = vmatpush.xpose.msra.mxu0 0.0
    %1329 = vmatpush.xpose.msra.mxu0 0.0
    %1330 = vmatpush.xpose.msra.mxu0 0.0
    %1331 = vmatpush.xpose.msra.mxu0 0.0
    %1332 = vmatpush.xpose.msra.mxu0 0.0
    %1333 = vmatpush.xpose.msra.mxu0 0.0
    %1334 = vmatpush.xpose.msra.mxu0 0.0
    %1335 = vmatpush.xpose.msra.mxu0 0.0
    %1336 = vmatpush.xpose.msra.mxu0 0.0
    %1337 = vmatpush.xpose.msra.mxu0 0.0
    %1338 = vmatpush.xpose.msra.mxu0 0.0
    %1339 = vmatpush.xpose.msra.mxu0 0.0
    %1340 = vmatpush.xpose.msra.mxu0 0.0
    %1341 = vmatpush.xpose.msra.mxu0 %v1324
    %1342 = vmatmul.f32.gmra.mxu0 %v1322
    %v1343 = vpop.f32.mrf.mxu0
    %v1344 = vadd.f32 0.0, %v1343
    %1345 = vdwg.mxu0
    %1346 = vrot.lane.b32.xlu0 %v158, 64
    %v1347 = vpop.permute.xlu0 %1346
    %1348 = vrot.lane.b32.xlu0 %v187, 64
    %v1349 = vpop.permute.xlu0 %1348
    %v1350 = vsel %vm125, %v1347, 0
    %v1352 = vsel %vm125, %v1349, 0
    %1354 = vmatpush.xpose.msra.mxu0 0.0
    %1355 = vmatpush.xpose.msra.mxu0 0.0
    %1356 = vmatpush.xpose.msra.mxu0 0.0
    %1357 = vmatpush.xpose.msra.mxu0 0.0
    %1358 = vmatpush.xpose.msra.mxu0 0.0
    %1359 = vmatpush.xpose.msra.mxu0 0.0
    %1360 = vmatpush.xpose.msra.mxu0 0.0
    %1361 = vmatpush.xpose.msra.mxu0 0.0
    %1362 = vmatpush.xpose.msra.mxu0 0.0
    %1363 = vmatpush.xpose.msra.mxu0 0.0
    %1364 = vmatpush.xpose.msra.mxu0 0.0
    %1365 = vmatpush.xpose.msra.mxu0 0.0
    %1366 = vmatpush.xpose.msra.mxu0 0.0
    %1367 = vmatpush.xpose.msra.mxu0 0.0
    %1368 = vmatpush.xpose.msra.mxu0 0.0
    %1369 = vmatpush.xpose.msra.mxu0 %v1352
    %1370 = vmatmul.f32.gmra.mxu0 %v1350
    %v1371 = vpop.f32.mrf.mxu0
    %v1372 = vadd.f32 0.0, %v1371
    %1373 = vdwg.mxu0
    %1374 = vrot.lane.b32.xlu0 %v160, 64
    %v1375 = vpop.permute.xlu0 %1374
    %1376 = vrot.lane.b32.xlu0 %v189, 64
    %v1377 = vpop.permute.xlu0 %1376
    %v1378 = vsel %vm125, %v1375, 0
    %v1380 = vsel %vm125, %v1377, 0
    %1382 = vmatpush.xpose.msra.mxu0 0.0
    %1383 = vmatpush.xpose.msra.mxu0 0.0
    %1384 = vmatpush.xpose.msra.mxu0 0.0
    %1385 = vmatpush.xpose.msra.mxu0 0.0
    %1386 = vmatpush.xpose.msra.mxu0 0.0
    %1387 = vmatpush.xpose.msra.mxu0 0.0
    %1388 = vmatpush.xpose.msra.mxu0 0.0
    %1389 = vmatpush.xpose.msra.mxu0 0.0
    %1390 = vmatpush.xpose.msra.mxu0 0.0
    %1391 = vmatpush.xpose.msra.mxu0 0.0
    %1392 = vmatpush.xpose.msra.mxu0 0.0
    %1393 = vmatpush.xpose.msra.mxu0 0.0
    %1394 = vmatpush.xpose.msra.mxu0 0.0
    %1395 = vmatpush.xpose.msra.mxu0 0.0
    %1396 = vmatpush.xpose.msra.mxu0 0.0
    %1397 = vmatpush.xpose.msra.mxu0 %v1380
    %1398 = vmatmul.f32.gmra.mxu0 %v1378
    %v1399 = vpop.f32.mrf.mxu0
    %v1400 = vadd.f32 0.0, %v1399
    %1401 = vdwg.mxu0
    %1402 = vrot.lane.b32.xlu0 %v163, 64
    %v1403 = vpop.permute.xlu0 %1402
    %1404 = vrot.lane.b32.xlu0 %v192, 64
    %v1405 = vpop.permute.xlu0 %1404
    %v1406 = vsel %vm125, %v1403, 0
    %v1408 = vsel %vm125, %v1405, 0
    %1410 = vmatpush.xpose.msra.mxu0 0.0
    %1411 = vmatpush.xpose.msra.mxu0 0.0
    %1412 = vmatpush.xpose.msra.mxu0 0.0
    %1413 = vmatpush.xpose.msra.mxu0 0.0
    %1414 = vmatpush.xpose.msra.mxu0 0.0
    %1415 = vmatpush.xpose.msra.mxu0 0.0
    %1416 = vmatpush.xpose.msra.mxu0 0.0
    %1417 = vmatpush.xpose.msra.mxu0 0.0
    %1418 = vmatpush.xpose.msra.mxu0 0.0
    %1419 = vmatpush.xpose.msra.mxu0 0.0
    %1420 = vmatpush.xpose.msra.mxu0 0.0
    %1421 = vmatpush.xpose.msra.mxu0 0.0
    %1422 = vmatpush.xpose.msra.mxu0 0.0
    %1423 = vmatpush.xpose.msra.mxu0 0.0
    %1424 = vmatpush.xpose.msra.mxu0 0.0
    %1425 = vmatpush.xpose.msra.mxu0 %v1408
    %1426 = vmatmul.f32.gmra.mxu0 %v1406
    %v1427 = vpop.f32.mrf.mxu0
    %v1428 = vadd.f32 0.0, %v1427
    %1429 = vdwg.mxu0
    %1430 = vrot.lane.b32.xlu0 %v165, 64
    %v1431 = vpop.permute.xlu0 %1430
    %1432 = vrot.lane.b32.xlu0 %v194, 64
    %v1433 = vpop.permute.xlu0 %1432
    %v1434 = vsel %vm125, %v1431, 0
    %v1436 = vsel %vm125, %v1433, 0
    %1438 = vmatpush.xpose.msra.mxu0 0.0
    %1439 = vmatpush.xpose.msra.mxu0 0.0
    %1440 = vmatpush.xpose.msra.mxu0 0.0
    %1441 = vmatpush.xpose.msra.mxu0 0.0
    %1442 = vmatpush.xpose.msra.mxu0 0.0
    %1443 = vmatpush.xpose.msra.mxu0 0.0
    %1444 = vmatpush.xpose.msra.mxu0 0.0
    %1445 = vmatpush.xpose.msra.mxu0 0.0
    %1446 = vmatpush.xpose.msra.mxu0 0.0
    %1447 = vmatpush.xpose.msra.mxu0 0.0
    %1448 = vmatpush.xpose.msra.mxu0 0.0
    %1449 = vmatpush.xpose.msra.mxu0 0.0
    %1450 = vmatpush.xpose.msra.mxu0 0.0
    %1451 = vmatpush.xpose.msra.mxu0 0.0
    %1452 = vmatpush.xpose.msra.mxu0 0.0
    %1453 = vmatpush.xpose.msra.mxu0 %v1436
    %1454 = vmatmul.f32.gmra.mxu0 %v1434
    %v1455 = vpop.f32.mrf.mxu0
    %v1456 = vadd.f32 0.0, %v1455
    %1457 = vdwg.mxu0
    %v1458 = vsel %vm433, %v1260, -inf
    %1459 = vmax.xlane.f32.xlu0 %v1458
    %v1460 = vpop.xlane.xlu0 %1459
    %v1461 = vsel %vm433, %v1288, -inf
    %1462 = vmax.xlane.f32.xlu0 %v1461
    %v1463 = vpop.xlane.xlu0 %1462
    %v1464 = vsel %vm433, %v1316, -inf
    %1465 = vmax.xlane.f32.xlu0 %v1464
    %v1466 = vpop.xlane.xlu0 %1465
    %v1467 = vsel %vm433, %v1344, -inf
    %1468 = vmax.xlane.f32.xlu0 %v1467
    %v1469 = vpop.xlane.xlu0 %1468
    %v1470 = vsel %vm433, %v1372, -inf
    %1471 = vmax.xlane.f32.xlu0 %v1470
    %v1472 = vpop.xlane.xlu0 %1471
    %v1473 = vsel %vm433, %v1400, -inf
    %1474 = vmax.xlane.f32.xlu0 %v1473
    %v1475 = vpop.xlane.xlu0 %1474
    %v1476 = vsel %vm433, %v1428, -inf
    %1477 = vmax.xlane.f32.xlu0 %v1476
    %v1478 = vpop.xlane.xlu0 %1477
    %v1479 = vsel %vm433, %v1456, -inf
    %1480 = vmax.xlane.f32.xlu0 %v1479
    %v1481 = vpop.xlane.xlu0 %1480
    %v1482 = vsub.f32 %v1260, %v1460
    %v1483 = vsub.f32 %v1288, %v1463
    %v1484 = vsub.f32 %v1316, %v1466
    %v1485 = vsub.f32 %v1344, %v1469
    %v1486 = vsub.f32 %v1372, %v1472
    %v1487 = vsub.f32 %v1400, %v1475
    %v1488 = vsub.f32 %v1428, %v1478
    %v1489 = vsub.f32 %v1456, %v1481
    %v1490 = vmul.f32 %v1482, 1.442695
    %v1491 = vpow.pop %v1490
    %v1492 = vmul.f32 %v1483, 1.442695
    %v1493 = vpow.pop %v1492
    %v1494 = vmul.f32 %v1484, 1.442695
    %v1495 = vpow.pop %v1494
    %v1496 = vmul.f32 %v1485, 1.442695
    %v1497 = vpow.pop %v1496
    %v1498 = vmul.f32 %v1486, 1.442695
    %v1499 = vpow.pop %v1498
    %v1500 = vmul.f32 %v1487, 1.442695
    %v1501 = vpow.pop %v1500
    %v1502 = vmul.f32 %v1488, 1.442695
    %v1503 = vpow.pop %v1502
    %v1504 = vmul.f32 %v1489, 1.442695
    %v1505 = vpow.pop %v1504
    %v1506 = vsel %vm433, %v1491, 0.0
    %1507 = vadd.xlane.f32.xlu0 %v1506
    %v1508 = vpop.xlane.xlu0 %1507
    %v1509 = vsel %vm433, %v1493, 0.0
    %1510 = vadd.xlane.f32.xlu0 %v1509
    %v1511 = vpop.xlane.xlu0 %1510
    %v1512 = vsel %vm433, %v1495, 0.0
    %1513 = vadd.xlane.f32.xlu0 %v1512
    %v1514 = vpop.xlane.xlu0 %1513
    %v1515 = vsel %vm433, %v1497, 0.0
    %1516 = vadd.xlane.f32.xlu0 %v1515
    %v1517 = vpop.xlane.xlu0 %1516
    %v1518 = vsel %vm433, %v1499, 0.0
    %1519 = vadd.xlane.f32.xlu0 %v1518
    %v1520 = vpop.xlane.xlu0 %1519
    %v1521 = vsel %vm433, %v1501, 0.0
    %1522 = vadd.xlane.f32.xlu0 %v1521
    %v1523 = vpop.xlane.xlu0 %1522
    %v1524 = vsel %vm433, %v1503, 0.0
    %1525 = vadd.xlane.f32.xlu0 %v1524
    %v1526 = vpop.xlane.xlu0 %1525
    %v1527 = vsel %vm433, %v1505, 0.0
    %1528 = vadd.xlane.f32.xlu0 %v1527
    %v1529 = vpop.xlane.xlu0 %1528
    %v1530 = vrcp.pop %v1508
    %v1531 = vrcp.pop %v1511
    %v1532 = vrcp.pop %v1514
    %v1533 = vrcp.pop %v1517
    %v1534 = vrcp.pop %v1520
    %v1535 = vrcp.pop %v1523
    %v1536 = vrcp.pop %v1526
    %v1537 = vrcp.pop %v1529
    %v1538 = vmul.f32 %v1491, %v1530
    %v1539 = vmul.f32 %v1493, %v1531
    %v1540 = vmul.f32 %v1495, %v1532
    %v1541 = vmul.f32 %v1497, %v1533
    %v1542 = vmul.f32 %v1499, %v1534
    %v1543 = vmul.f32 %v1501, %v1535
    %v1544 = vmul.f32 %v1503, %v1536
    %v1545 = vmul.f32 %v1505, %v1537
    %1546 = vrot.lane.b32.xlu0 %v206, 64
    %v1547 = vpop.permute.xlu0 %1546
    %v1550 = vsel %vm433, %v1538, 0
    %1552 = vmatpush.msra.mxu0 0.0
    %1553 = vmatpush.msra.mxu0 0.0
    %1554 = vmatpush.msra.mxu0 0.0
    %1555 = vmatpush.msra.mxu0 0.0
    %1556 = vmatpush.msra.mxu0 0.0
    %1557 = vmatpush.msra.mxu0 0.0
    %1558 = vmatpush.msra.mxu0 0.0
    %1559 = vmatpush.msra.mxu0 0.0
    %1560 = vmatpush.msra.mxu0 0.0
    %1561 = vmatpush.msra.mxu0 0.0
    %1562 = vmatpush.msra.mxu0 0.0
    %1563 = vmatpush.msra.mxu0 0.0
    %1564 = vmatpush.msra.mxu0 0.0
    %1565 = vmatpush.msra.mxu0 0.0
    %1566 = vmatpush.msra.mxu0 0.0
    %1567 = vmatpush.msra.mxu0 %v1547
    %1568 = vmatmul.f32.gmra.mxu0 %v1550
    %v1569 = vpop.f32.mrf.mxu0
    %v1570 = vadd.f32 0.0, %v1569
    %1571 = vdwg.mxu0
    %1572 = vrot.lane.b32.xlu0 %v208, 64
    %v1573 = vpop.permute.xlu0 %1572
    %v1576 = vsel %vm433, %v1539, 0
    %1578 = vmatpush.msra.mxu0 0.0
    %1579 = vmatpush.msra.mxu0 0.0
    %1580 = vmatpush.msra.mxu0 0.0
    %1581 = vmatpush.msra.mxu0 0.0
    %1582 = vmatpush.msra.mxu0 0.0
    %1583 = vmatpush.msra.mxu0 0.0
    %1584 = vmatpush.msra.mxu0 0.0
    %1585 = vmatpush.msra.mxu0 0.0
    %1586 = vmatpush.msra.mxu0 0.0
    %1587 = vmatpush.msra.mxu0 0.0
    %1588 = vmatpush.msra.mxu0 0.0
    %1589 = vmatpush.msra.mxu0 0.0
    %1590 = vmatpush.msra.mxu0 0.0
    %1591 = vmatpush.msra.mxu0 0.0
    %1592 = vmatpush.msra.mxu0 0.0
    %1593 = vmatpush.msra.mxu0 %v1573
    %1594 = vmatmul.f32.gmra.mxu0 %v1576
    %v1595 = vpop.f32.mrf.mxu0
    %v1596 = vadd.f32 0.0, %v1595
    %1597 = vdwg.mxu0
    %1598 = vrot.lane.b32.xlu0 %v211, 64
    %v1599 = vpop.permute.xlu0 %1598
    %v1602 = vsel %vm433, %v1540, 0
    %1604 = vmatpush.msra.mxu0 0.0
    %1605 = vmatpush.msra.mxu0 0.0
    %1606 = vmatpush.msra.mxu0 0.0
    %1607 = vmatpush.msra.mxu0 0.0
    %1608 = vmatpush.msra.mxu0 0.0
    %1609 = vmatpush.msra.mxu0 0.0
    %1610 = vmatpush.msra.mxu0 0.0
    %1611 = vmatpush.msra.mxu0 0.0
    %1612 = vmatpush.msra.mxu0 0.0
    %1613 = vmatpush.msra.mxu0 0.0
    %1614 = vmatpush.msra.mxu0 0.0
    %1615 = vmatpush.msra.mxu0 0.0
    %1616 = vmatpush.msra.mxu0 0.0
    %1617 = vmatpush.msra.mxu0 0.0
    %1618 = vmatpush.msra.mxu0 0.0
    %1619 = vmatpush.msra.mxu0 %v1599
    %1620 = vmatmul.f32.gmra.mxu0 %v1602
    %v1621 = vpop.f32.mrf.mxu0
    %v1622 = vadd.f32 0.0, %v1621
    %1623 = vdwg.mxu0
    %1624 = vrot.lane.b32.xlu0 %v213, 64
    %v1625 = vpop.permute.xlu0 %1624
    %v1628 = vsel %vm433, %v1541, 0
    %1630 = vmatpush.msra.mxu0 0.0
    %1631 = vmatpush.msra.mxu0 0.0
    %1632 = vmatpush.msra.mxu0 0.0
    %1633 = vmatpush.msra.mxu0 0.0
    %1634 = vmatpush.msra.mxu0 0.0
    %1635 = vmatpush.msra.mxu0 0.0
    %1636 = vmatpush.msra.mxu0 0.0
    %1637 = vmatpush.msra.mxu0 0.0
    %1638 = vmatpush.msra.mxu0 0.0
    %1639 = vmatpush.msra.mxu0 0.0
    %1640 = vmatpush.msra.mxu0 0.0
    %1641 = vmatpush.msra.mxu0 0.0
    %1642 = vmatpush.msra.mxu0 0.0
    %1643 = vmatpush.msra.mxu0 0.0
    %1644 = vmatpush.msra.mxu0 0.0
    %1645 = vmatpush.msra.mxu0 %v1625
    %1646 = vmatmul.f32.gmra.mxu0 %v1628
    %v1647 = vpop.f32.mrf.mxu0
    %v1648 = vadd.f32 0.0, %v1647
    %1649 = vdwg.mxu0
    %1650 = vrot.lane.b32.xlu0 %v216, 64
    %v1651 = vpop.permute.xlu0 %1650
    %v1654 = vsel %vm433, %v1542, 0
    %1656 = vmatpush.msra.mxu0 0.0
    %1657 = vmatpush.msra.mxu0 0.0
    %1658 = vmatpush.msra.mxu0 0.0
    %1659 = vmatpush.msra.mxu0 0.0
    %1660 = vmatpush.msra.mxu0 0.0
    %1661 = vmatpush.msra.mxu0 0.0
    %1662 = vmatpush.msra.mxu0 0.0
    %1663 = vmatpush.msra.mxu0 0.0
    %1664 = vmatpush.msra.mxu0 0.0
    %1665 = vmatpush.msra.mxu0 0.0
    %1666 = vmatpush.msra.mxu0 0.0
    %1667 = vmatpush.msra.mxu0 0.0
    %1668 = vmatpush.msra.mxu0 0.0
    %1669 = vmatpush.msra.mxu0 0.0
    %1670 = vmatpush.msra.mxu0 0.0
    %1671 = vmatpush.msra.mxu0 %v1651
    %1672 = vmatmul.f32.gmra.mxu0 %v1654
    %v1673 = vpop.f32.mrf.mxu0
    %v1674 = vadd.f32 0.0, %v1673
    %1675 = vdwg.mxu0
    %1676 = vrot.lane.b32.xlu0 %v218, 64
    %v1677 = vpop.permute.xlu0 %1676
    %v1680 = vsel %vm433, %v1543, 0
    %1682 = vmatpush.msra.mxu0 0.0
    %1683 = vmatpush.msra.mxu0 0.0
    %1684 = vmatpush.msra.mxu0 0.0
    %1685 = vmatpush.msra.mxu0 0.0
    %1686 = vmatpush.msra.mxu0 0.0
    %1687 = vmatpush.msra.mxu0 0.0
    %1688 = vmatpush.msra.mxu0 0.0
    %1689 = vmatpush.msra.mxu0 0.0
    %1690 = vmatpush.msra.mxu0 0.0
    %1691 = vmatpush.msra.mxu0 0.0
    %1692 = vmatpush.msra.mxu0 0.0
    %1693 = vmatpush.msra.mxu0 0.0
    %1694 = vmatpush.msra.mxu0 0.0
    %1695 = vmatpush.msra.mxu0 0.0
    %1696 = vmatpush.msra.mxu0 0.0
    %1697 = vmatpush.msra.mxu0 %v1677
    %1698 = vmatmul.f32.gmra.mxu0 %v1680
    %v1699 = vpop.f32.mrf.mxu0
    %v1700 = vadd.f32 0.0, %v1699
    %1701 = vdwg.mxu0
    %1702 = vrot.lane.b32.xlu0 %v221, 64
    %v1703 = vpop.permute.xlu0 %1702
    %v1706 = vsel %vm433, %v1544, 0
    %1708 = vmatpush.msra.mxu0 0.0
    %1709 = vmatpush.msra.mxu0 0.0
    %1710 = vmatpush.msra.mxu0 0.0
    %1711 = vmatpush.msra.mxu0 0.0
    %1712 = vmatpush.msra.mxu0 0.0
    %1713 = vmatpush.msra.mxu0 0.0
    %1714 = vmatpush.msra.mxu0 0.0
    %1715 = vmatpush.msra.mxu0 0.0
    %1716 = vmatpush.msra.mxu0 0.0
    %1717 = vmatpush.msra.mxu0 0.0
    %1718 = vmatpush.msra.mxu0 0.0
    %1719 = vmatpush.msra.mxu0 0.0
    %1720 = vmatpush.msra.mxu0 0.0
    %1721 = vmatpush.msra.mxu0 0.0
    %1722 = vmatpush.msra.mxu0 0.0
    %1723 = vmatpush.msra.mxu0 %v1703
    %1724 = vmatmul.f32.gmra.mxu0 %v1706
    %v1725 = vpop.f32.mrf.mxu0
    %v1726 = vadd.f32 0.0, %v1725
    %1727 = vdwg.mxu0
    %1728 = vrot.lane.b32.xlu0 %v223, 64
    %v1729 = vpop.permute.xlu0 %1728
    %v1732 = vsel %vm433, %v1545, 0
    %1734 = vmatpush.msra.mxu0 0.0
    %1735 = vmatpush.msra.mxu0 0.0
    %1736 = vmatpush.msra.mxu0 0.0
    %1737 = vmatpush.msra.mxu0 0.0
    %1738 = vmatpush.msra.mxu0 0.0
    %1739 = vmatpush.msra.mxu0 0.0
    %1740 = vmatpush.msra.mxu0 0.0
    %1741 = vmatpush.msra.mxu0 0.0
    %1742 = vmatpush.msra.mxu0 0.0
    %1743 = vmatpush.msra.mxu0 0.0
    %1744 = vmatpush.msra.mxu0 0.0
    %1745 = vmatpush.msra.mxu0 0.0
    %1746 = vmatpush.msra.mxu0 0.0
    %1747 = vmatpush.msra.mxu0 0.0
    %1748 = vmatpush.msra.mxu0 0.0
    %1749 = vmatpush.msra.mxu0 %v1729
    %1750 = vmatmul.f32.gmra.mxu0 %v1732
    %v1751 = vpop.f32.mrf.mxu0
    %v1752 = vadd.f32 0.0, %v1751
    %1753 = vdwg.mxu0
    %1754 = vrot.lane.b32.xlu0 %v148, 32
    %v1755 = vpop.permute.xlu0 %1754
    %1756 = vrot.lane.b32.xlu0 %v177, 32
    %v1757 = vpop.permute.xlu0 %1756
    %v1758 = vsel %vm125, %v1755, 0
    %v1760 = vsel %vm125, %v1757, 0
    %1762 = vmatpush.xpose.msra.mxu0 0.0
    %1763 = vmatpush.xpose.msra.mxu0 0.0
    %1764 = vmatpush.xpose.msra.mxu0 0.0
    %1765 = vmatpush.xpose.msra.mxu0 0.0
    %1766 = vmatpush.xpose.msra.mxu0 0.0
    %1767 = vmatpush.xpose.msra.mxu0 0.0
    %1768 = vmatpush.xpose.msra.mxu0 0.0
    %1769 = vmatpush.xpose.msra.mxu0 0.0
    %1770 = vmatpush.xpose.msra.mxu0 0.0
    %1771 = vmatpush.xpose.msra.mxu0 0.0
    %1772 = vmatpush.xpose.msra.mxu0 0.0
    %1773 = vmatpush.xpose.msra.mxu0 0.0
    %1774 = vmatpush.xpose.msra.mxu0 0.0
    %1775 = vmatpush.xpose.msra.mxu0 0.0
    %1776 = vmatpush.xpose.msra.mxu0 0.0
    %1777 = vmatpush.xpose.msra.mxu0 %v1760
    %1778 = vmatmul.f32.gmra.mxu0 %v1758
    %v1779 = vpop.f32.mrf.mxu0
    %v1780 = vadd.f32 0.0, %v1779
    %1781 = vdwg.mxu0
    %1782 = vrot.lane.b32.xlu0 %v150, 32
    %v1783 = vpop.permute.xlu0 %1782
    %1784 = vrot.lane.b32.xlu0 %v179, 32
    %v1785 = vpop.permute.xlu0 %1784
    %v1786 = vsel %vm125, %v1783, 0
    %v1788 = vsel %vm125, %v1785, 0
    %1790 = vmatpush.xpose.msra.mxu0 0.0
    %1791 = vmatpush.xpose.msra.mxu0 0.0
    %1792 = vmatpush.xpose.msra.mxu0 0.0
    %1793 = vmatpush.xpose.msra.mxu0 0.0
    %1794 = vmatpush.xpose.msra.mxu0 0.0
    %1795 = vmatpush.xpose.msra.mxu0 0.0
    %1796 = vmatpush.xpose.msra.mxu0 0.0
    %1797 = vmatpush.xpose.msra.mxu0 0.0
    %1798 = vmatpush.xpose.msra.mxu0 0.0
    %1799 = vmatpush.xpose.msra.mxu0 0.0
    %1800 = vmatpush.xpose.msra.mxu0 0.0
    %1801 = vmatpush.xpose.msra.mxu0 0.0
    %1802 = vmatpush.xpose.msra.mxu0 0.0
    %1803 = vmatpush.xpose.msra.mxu0 0.0
    %1804 = vmatpush.xpose.msra.mxu0 0.0
    %1805 = vmatpush.xpose.msra.mxu0 %v1788
    %1806 = vmatmul.f32.gmra.mxu0 %v1786
    %v1807 = vpop.f32.mrf.mxu0
    %v1808 = vadd.f32 0.0, %v1807
    %1809 = vdwg.mxu0
    %1810 = vrot.lane.b32.xlu0 %v153, 32
    %v1811 = vpop.permute.xlu0 %1810
    %1812 = vrot.lane.b32.xlu0 %v182, 32
    %v1813 = vpop.permute.xlu0 %1812
    %v1814 = vsel %vm125, %v1811, 0
    %v1816 = vsel %vm125, %v1813, 0
    %1818 = vmatpush.xpose.msra.mxu0 0.0
    %1819 = vmatpush.xpose.msra.mxu0 0.0
    %1820 = vmatpush.xpose.msra.mxu0 0.0
    %1821 = vmatpush.xpose.msra.mxu0 0.0
    %1822 = vmatpush.xpose.msra.mxu0 0.0
    %1823 = vmatpush.xpose.msra.mxu0 0.0
    %1824 = vmatpush.xpose.msra.mxu0 0.0
    %1825 = vmatpush.xpose.msra.mxu0 0.0
    %1826 = vmatpush.xpose.msra.mxu0 0.0
    %1827 = vmatpush.xpose.msra.mxu0 0.0
    %1828 = vmatpush.xpose.msra.mxu0 0.0
    %1829 = vmatpush.xpose.msra.mxu0 0.0
    %1830 = vmatpush.xpose.msra.mxu0 0.0
    %1831 = vmatpush.xpose.msra.mxu0 0.0
    %1832 = vmatpush.xpose.msra.mxu0 0.0
    %1833 = vmatpush.xpose.msra.mxu0 %v1816
    %1834 = vmatmul.f32.gmra.mxu0 %v1814
    %v1835 = vpop.f32.mrf.mxu0
    %v1836 = vadd.f32 0.0, %v1835
    %1837 = vdwg.mxu0
    %1838 = vrot.lane.b32.xlu0 %v155, 32
    %v1839 = vpop.permute.xlu0 %1838
    %1840 = vrot.lane.b32.xlu0 %v184, 32
    %v1841 = vpop.permute.xlu0 %1840
    %v1842 = vsel %vm125, %v1839, 0
    %v1844 = vsel %vm125, %v1841, 0
    %1846 = vmatpush.xpose.msra.mxu0 0.0
    %1847 = vmatpush.xpose.msra.mxu0 0.0
    %1848 = vmatpush.xpose.msra.mxu0 0.0
    %1849 = vmatpush.xpose.msra.mxu0 0.0
    %1850 = vmatpush.xpose.msra.mxu0 0.0
    %1851 = vmatpush.xpose.msra.mxu0 0.0
    %1852 = vmatpush.xpose.msra.mxu0 0.0
    %1853 = vmatpush.xpose.msra.mxu0 0.0
    %1854 = vmatpush.xpose.msra.mxu0 0.0
    %1855 = vmatpush.xpose.msra.mxu0 0.0
    %1856 = vmatpush.xpose.msra.mxu0 0.0
    %1857 = vmatpush.xpose.msra.mxu0 0.0
    %1858 = vmatpush.xpose.msra.mxu0 0.0
    %1859 = vmatpush.xpose.msra.mxu0 0.0
    %1860 = vmatpush.xpose.msra.mxu0 0.0
    %1861 = vmatpush.xpose.msra.mxu0 %v1844
    %1862 = vmatmul.f32.gmra.mxu0 %v1842
    %v1863 = vpop.f32.mrf.mxu0
    %v1864 = vadd.f32 0.0, %v1863
    %1865 = vdwg.mxu0
    %1866 = vrot.lane.b32.xlu0 %v158, 32
    %v1867 = vpop.permute.xlu0 %1866
    %1868 = vrot.lane.b32.xlu0 %v187, 32
    %v1869 = vpop.permute.xlu0 %1868
    %v1870 = vsel %vm125, %v1867, 0
    %v1872 = vsel %vm125, %v1869, 0
    %1874 = vmatpush.xpose.msra.mxu0 0.0
    %1875 = vmatpush.xpose.msra.mxu0 0.0
    %1876 = vmatpush.xpose.msra.mxu0 0.0
    %1877 = vmatpush.xpose.msra.mxu0 0.0
    %1878 = vmatpush.xpose.msra.mxu0 0.0
    %1879 = vmatpush.xpose.msra.mxu0 0.0
    %1880 = vmatpush.xpose.msra.mxu0 0.0
    %1881 = vmatpush.xpose.msra.mxu0 0.0
    %1882 = vmatpush.xpose.msra.mxu0 0.0
    %1883 = vmatpush.xpose.msra.mxu0 0.0
    %1884 = vmatpush.xpose.msra.mxu0 0.0
    %1885 = vmatpush.xpose.msra.mxu0 0.0
    %1886 = vmatpush.xpose.msra.mxu0 0.0
    %1887 = vmatpush.xpose.msra.mxu0 0.0
    %1888 = vmatpush.xpose.msra.mxu0 0.0
    %1889 = vmatpush.xpose.msra.mxu0 %v1872
    %1890 = vmatmul.f32.gmra.mxu0 %v1870
    %v1891 = vpop.f32.mrf.mxu0
    %v1892 = vadd.f32 0.0, %v1891
    %1893 = vdwg.mxu0
    %1894 = vrot.lane.b32.xlu0 %v160, 32
    %v1895 = vpop.permute.xlu0 %1894
    %1896 = vrot.lane.b32.xlu0 %v189, 32
    %v1897 = vpop.permute.xlu0 %1896
    %v1898 = vsel %vm125, %v1895, 0
    %v1900 = vsel %vm125, %v1897, 0
    %1902 = vmatpush.xpose.msra.mxu0 0.0
    %1903 = vmatpush.xpose.msra.mxu0 0.0
    %1904 = vmatpush.xpose.msra.mxu0 0.0
    %1905 = vmatpush.xpose.msra.mxu0 0.0
    %1906 = vmatpush.xpose.msra.mxu0 0.0
    %1907 = vmatpush.xpose.msra.mxu0 0.0
    %1908 = vmatpush.xpose.msra.mxu0 0.0
    %1909 = vmatpush.xpose.msra.mxu0 0.0
    %1910 = vmatpush.xpose.msra.mxu0 0.0
    %1911 = vmatpush.xpose.msra.mxu0 0.0
    %1912 = vmatpush.xpose.msra.mxu0 0.0
    %1913 = vmatpush.xpose.msra.mxu0 0.0
    %1914 = vmatpush.xpose.msra.mxu0 0.0
    %1915 = vmatpush.xpose.msra.mxu0 0.0
    %1916 = vmatpush.xpose.msra.mxu0 0.0
    %1917 = vmatpush.xpose.msra.mxu0 %v1900
    %1918 = vmatmul.f32.gmra.mxu0 %v1898
    %v1919 = vpop.f32.mrf.mxu0
    %v1920 = vadd.f32 0.0, %v1919
    %1921 = vdwg.mxu0
    %1922 = vrot.lane.b32.xlu0 %v163, 32
    %v1923 = vpop.permute.xlu0 %1922
    %1924 = vrot.lane.b32.xlu0 %v192, 32
    %v1925 = vpop.permute.xlu0 %1924
    %v1926 = vsel %vm125, %v1923, 0
    %v1928 = vsel %vm125, %v1925, 0
    %1930 = vmatpush.xpose.msra.mxu0 0.0
    %1931 = vmatpush.xpose.msra.mxu0 0.0
    %1932 = vmatpush.xpose.msra.mxu0 0.0
    %1933 = vmatpush.xpose.msra.mxu0 0.0
    %1934 = vmatpush.xpose.msra.mxu0 0.0
    %1935 = vmatpush.xpose.msra.mxu0 0.0
    %1936 = vmatpush.xpose.msra.mxu0 0.0
    %1937 = vmatpush.xpose.msra.mxu0 0.0
    %1938 = vmatpush.xpose.msra.mxu0 0.0
    %1939 = vmatpush.xpose.msra.mxu0 0.0
    %1940 = vmatpush.xpose.msra.mxu0 0.0
    %1941 = vmatpush.xpose.msra.mxu0 0.0
    %1942 = vmatpush.xpose.msra.mxu0 0.0
    %1943 = vmatpush.xpose.msra.mxu0 0.0
    %1944 = vmatpush.xpose.msra.mxu0 0.0
    %1945 = vmatpush.xpose.msra.mxu0 %v1928
    %1946 = vmatmul.f32.gmra.mxu0 %v1926
    %v1947 = vpop.f32.mrf.mxu0
    %v1948 = vadd.f32 0.0, %v1947
    %1949 = vdwg.mxu0
    %1950 = vrot.lane.b32.xlu0 %v165, 32
    %v1951 = vpop.permute.xlu0 %1950
    %1952 = vrot.lane.b32.xlu0 %v194, 32
    %v1953 = vpop.permute.xlu0 %1952
    %v1954 = vsel %vm125, %v1951, 0
    %v1956 = vsel %vm125, %v1953, 0
    %1958 = vmatpush.xpose.msra.mxu0 0.0
    %1959 = vmatpush.xpose.msra.mxu0 0.0
    %1960 = vmatpush.xpose.msra.mxu0 0.0
    %1961 = vmatpush.xpose.msra.mxu0 0.0
    %1962 = vmatpush.xpose.msra.mxu0 0.0
    %1963 = vmatpush.xpose.msra.mxu0 0.0
    %1964 = vmatpush.xpose.msra.mxu0 0.0
    %1965 = vmatpush.xpose.msra.mxu0 0.0
    %1966 = vmatpush.xpose.msra.mxu0 0.0
    %1967 = vmatpush.xpose.msra.mxu0 0.0
    %1968 = vmatpush.xpose.msra.mxu0 0.0
    %1969 = vmatpush.xpose.msra.mxu0 0.0
    %1970 = vmatpush.xpose.msra.mxu0 0.0
    %1971 = vmatpush.xpose.msra.mxu0 0.0
    %1972 = vmatpush.xpose.msra.mxu0 0.0
    %1973 = vmatpush.xpose.msra.mxu0 %v1956
    %1974 = vmatmul.f32.gmra.mxu0 %v1954
    %v1975 = vpop.f32.mrf.mxu0
    %v1976 = vadd.f32 0.0, %v1975
    %1977 = vdwg.mxu0
    %v1978 = vsel %vm433, %v1780, -inf
    %1979 = vmax.xlane.f32.xlu0 %v1978
    %v1980 = vpop.xlane.xlu0 %1979
    %v1981 = vsel %vm433, %v1808, -inf
    %1982 = vmax.xlane.f32.xlu0 %v1981
    %v1983 = vpop.xlane.xlu0 %1982
    %v1984 = vsel %vm433, %v1836, -inf
    %1985 = vmax.xlane.f32.xlu0 %v1984
    %v1986 = vpop.xlane.xlu0 %1985
    %v1987 = vsel %vm433, %v1864, -inf
    %1988 = vmax.xlane.f32.xlu0 %v1987
    %v1989 = vpop.xlane.xlu0 %1988
    %v1990 = vsel %vm433, %v1892, -inf
    %1991 = vmax.xlane.f32.xlu0 %v1990
    %v1992 = vpop.xlane.xlu0 %1991
    %v1993 = vsel %vm433, %v1920, -inf
    %1994 = vmax.xlane.f32.xlu0 %v1993
    %v1995 = vpop.xlane.xlu0 %1994
    %v1996 = vsel %vm433, %v1948, -inf
    %1997 = vmax.xlane.f32.xlu0 %v1996
    %v1998 = vpop.xlane.xlu0 %1997
    %v1999 = vsel %vm433, %v1976, -inf
    %2000 = vmax.xlane.f32.xlu0 %v1999
    %v2001 = vpop.xlane.xlu0 %2000
    %v2002 = vsub.f32 %v1780, %v1980
    %v2003 = vsub.f32 %v1808, %v1983
    %v2004 = vsub.f32 %v1836, %v1986
    %v2005 = vsub.f32 %v1864, %v1989
    %v2006 = vsub.f32 %v1892, %v1992
    %v2007 = vsub.f32 %v1920, %v1995
    %v2008 = vsub.f32 %v1948, %v1998
    %v2009 = vsub.f32 %v1976, %v2001
    %v2010 = vmul.f32 %v2002, 1.442695
    %v2011 = vpow.pop %v2010
    %v2012 = vmul.f32 %v2003, 1.442695
    %v2013 = vpow.pop %v2012
    %v2014 = vmul.f32 %v2004, 1.442695
    %v2015 = vpow.pop %v2014
    %v2016 = vmul.f32 %v2005, 1.442695
    %v2017 = vpow.pop %v2016
    %v2018 = vmul.f32 %v2006, 1.442695
    %v2019 = vpow.pop %v2018
    %v2020 = vmul.f32 %v2007, 1.442695
    %v2021 = vpow.pop %v2020
    %v2022 = vmul.f32 %v2008, 1.442695
    %v2023 = vpow.pop %v2022
    %v2024 = vmul.f32 %v2009, 1.442695
    %v2025 = vpow.pop %v2024
    %v2026 = vsel %vm433, %v2011, 0.0
    %2027 = vadd.xlane.f32.xlu0 %v2026
    %v2028 = vpop.xlane.xlu0 %2027
    %v2029 = vsel %vm433, %v2013, 0.0
    %2030 = vadd.xlane.f32.xlu0 %v2029
    %v2031 = vpop.xlane.xlu0 %2030
    %v2032 = vsel %vm433, %v2015, 0.0
    %2033 = vadd.xlane.f32.xlu0 %v2032
    %v2034 = vpop.xlane.xlu0 %2033
    %v2035 = vsel %vm433, %v2017, 0.0
    %2036 = vadd.xlane.f32.xlu0 %v2035
    %v2037 = vpop.xlane.xlu0 %2036
    %v2038 = vsel %vm433, %v2019, 0.0
    %2039 = vadd.xlane.f32.xlu0 %v2038
    %v2040 = vpop.xlane.xlu0 %2039
    %v2041 = vsel %vm433, %v2021, 0.0
    %2042 = vadd.xlane.f32.xlu0 %v2041
    %v2043 = vpop.xlane.xlu0 %2042
    %v2044 = vsel %vm433, %v2023, 0.0
    %2045 = vadd.xlane.f32.xlu0 %v2044
    %v2046 = vpop.xlane.xlu0 %2045
    %v2047 = vsel %vm433, %v2025, 0.0
    %2048 = vadd.xlane.f32.xlu0 %v2047
    %v2049 = vpop.xlane.xlu0 %2048
    %v2050 = vrcp.pop %v2028
    %v2051 = vrcp.pop %v2031
    %v2052 = vrcp.pop %v2034
    %v2053 = vrcp.pop %v2037
    %v2054 = vrcp.pop %v2040
    %v2055 = vrcp.pop %v2043
    %v2056 = vrcp.pop %v2046
    %v2057 = vrcp.pop %v2049
    %v2058 = vmul.f32 %v2011, %v2050
    %v2059 = vmul.f32 %v2013, %v2051
    %v2060 = vmul.f32 %v2015, %v2052
    %v2061 = vmul.f32 %v2017, %v2053
    %v2062 = vmul.f32 %v2019, %v2054
    %v2063 = vmul.f32 %v2021, %v2055
    %v2064 = vmul.f32 %v2023, %v2056
    %v2065 = vmul.f32 %v2025, %v2057
    %2066 = vrot.lane.b32.xlu0 %v206, 32
    %v2067 = vpop.permute.xlu0 %2066
    %v2070 = vsel %vm433, %v2058, 0
    %2072 = vmatpush.msra.mxu0 0.0
    %2073 = vmatpush.msra.mxu0 0.0
    %2074 = vmatpush.msra.mxu0 0.0
    %2075 = vmatpush.msra.mxu0 0.0
    %2076 = vmatpush.msra.mxu0 0.0
    %2077 = vmatpush.msra.mxu0 0.0
    %2078 = vmatpush.msra.mxu0 0.0
    %2079 = vmatpush.msra.mxu0 0.0
    %2080 = vmatpush.msra.mxu0 0.0
    %2081 = vmatpush.msra.mxu0 0.0
    %2082 = vmatpush.msra.mxu0 0.0
    %2083 = vmatpush.msra.mxu0 0.0
    %2084 = vmatpush.msra.mxu0 0.0
    %2085 = vmatpush.msra.mxu0 0.0
    %2086 = vmatpush.msra.mxu0 0.0
    %2087 = vmatpush.msra.mxu0 %v2067
    %2088 = vmatmul.f32.gmra.mxu0 %v2070
    %v2089 = vpop.f32.mrf.mxu0
    %v2090 = vadd.f32 0.0, %v2089
    %2091 = vdwg.mxu0
    %2092 = vrot.lane.b32.xlu0 %v208, 32
    %v2093 = vpop.permute.xlu0 %2092
    %v2096 = vsel %vm433, %v2059, 0
    %2098 = vmatpush.msra.mxu0 0.0
    %2099 = vmatpush.msra.mxu0 0.0
    %2100 = vmatpush.msra.mxu0 0.0
    %2101 = vmatpush.msra.mxu0 0.0
    %2102 = vmatpush.msra.mxu0 0.0
    %2103 = vmatpush.msra.mxu0 0.0
    %2104 = vmatpush.msra.mxu0 0.0
    %2105 = vmatpush.msra.mxu0 0.0
    %2106 = vmatpush.msra.mxu0 0.0
    %2107 = vmatpush.msra.mxu0 0.0
    %2108 = vmatpush.msra.mxu0 0.0
    %2109 = vmatpush.msra.mxu0 0.0
    %2110 = vmatpush.msra.mxu0 0.0
    %2111 = vmatpush.msra.mxu0 0.0
    %2112 = vmatpush.msra.mxu0 0.0
    %2113 = vmatpush.msra.mxu0 %v2093
    %2114 = vmatmul.f32.gmra.mxu0 %v2096
    %v2115 = vpop.f32.mrf.mxu0
    %v2116 = vadd.f32 0.0, %v2115
    %2117 = vdwg.mxu0
    %2118 = vrot.lane.b32.xlu0 %v211, 32
    %v2119 = vpop.permute.xlu0 %2118
    %v2122 = vsel %vm433, %v2060, 0
    %2124 = vmatpush.msra.mxu0 0.0
    %2125 = vmatpush.msra.mxu0 0.0
    %2126 = vmatpush.msra.mxu0 0.0
    %2127 = vmatpush.msra.mxu0 0.0
    %2128 = vmatpush.msra.mxu0 0.0
    %2129 = vmatpush.msra.mxu0 0.0
    %2130 = vmatpush.msra.mxu0 0.0
    %2131 = vmatpush.msra.mxu0 0.0
    %2132 = vmatpush.msra.mxu0 0.0
    %2133 = vmatpush.msra.mxu0 0.0
    %2134 = vmatpush.msra.mxu0 0.0
    %2135 = vmatpush.msra.mxu0 0.0
    %2136 = vmatpush.msra.mxu0 0.0
    %2137 = vmatpush.msra.mxu0 0.0
    %2138 = vmatpush.msra.mxu0 0.0
    %2139 = vmatpush.msra.mxu0 %v2119
    %2140 = vmatmul.f32.gmra.mxu0 %v2122
    %v2141 = vpop.f32.mrf.mxu0
    %v2142 = vadd.f32 0.0, %v2141
    %2143 = vdwg.mxu0
    %2144 = vrot.lane.b32.xlu0 %v213, 32
    %v2145 = vpop.permute.xlu0 %2144
    %v2148 = vsel %vm433, %v2061, 0
    %2150 = vmatpush.msra.mxu0 0.0
    %2151 = vmatpush.msra.mxu0 0.0
    %2152 = vmatpush.msra.mxu0 0.0
    %2153 = vmatpush.msra.mxu0 0.0
    %2154 = vmatpush.msra.mxu0 0.0
    %2155 = vmatpush.msra.mxu0 0.0
    %2156 = vmatpush.msra.mxu0 0.0
    %2157 = vmatpush.msra.mxu0 0.0
    %2158 = vmatpush.msra.mxu0 0.0
    %2159 = vmatpush.msra.mxu0 0.0
    %2160 = vmatpush.msra.mxu0 0.0
    %2161 = vmatpush.msra.mxu0 0.0
    %2162 = vmatpush.msra.mxu0 0.0
    %2163 = vmatpush.msra.mxu0 0.0
    %2164 = vmatpush.msra.mxu0 0.0
    %2165 = vmatpush.msra.mxu0 %v2145
    %2166 = vmatmul.f32.gmra.mxu0 %v2148
    %v2167 = vpop.f32.mrf.mxu0
    %v2168 = vadd.f32 0.0, %v2167
    %2169 = vdwg.mxu0
    %2170 = vrot.lane.b32.xlu0 %v216, 32
    %v2171 = vpop.permute.xlu0 %2170
    %v2174 = vsel %vm433, %v2062, 0
    %2176 = vmatpush.msra.mxu0 0.0
    %2177 = vmatpush.msra.mxu0 0.0
    %2178 = vmatpush.msra.mxu0 0.0
    %2179 = vmatpush.msra.mxu0 0.0
    %2180 = vmatpush.msra.mxu0 0.0
    %2181 = vmatpush.msra.mxu0 0.0
    %2182 = vmatpush.msra.mxu0 0.0
    %2183 = vmatpush.msra.mxu0 0.0
    %2184 = vmatpush.msra.mxu0 0.0
    %2185 = vmatpush.msra.mxu0 0.0
    %2186 = vmatpush.msra.mxu0 0.0
    %2187 = vmatpush.msra.mxu0 0.0
    %2188 = vmatpush.msra.mxu0 0.0
    %2189 = vmatpush.msra.mxu0 0.0
    %2190 = vmatpush.msra.mxu0 0.0
    %2191 = vmatpush.msra.mxu0 %v2171
    %2192 = vmatmul.f32.gmra.mxu0 %v2174
    %v2193 = vpop.f32.mrf.mxu0
    %v2194 = vadd.f32 0.0, %v2193
    %2195 = vdwg.mxu0
    %2196 = vrot.lane.b32.xlu0 %v218, 32
    %v2197 = vpop.permute.xlu0 %2196
    %v2200 = vsel %vm433, %v2063, 0
    %2202 = vmatpush.msra.mxu0 0.0
    %2203 = vmatpush.msra.mxu0 0.0
    %2204 = vmatpush.msra.mxu0 0.0
    %2205 = vmatpush.msra.mxu0 0.0
    %2206 = vmatpush.msra.mxu0 0.0
    %2207 = vmatpush.msra.mxu0 0.0
    %2208 = vmatpush.msra.mxu0 0.0
    %2209 = vmatpush.msra.mxu0 0.0
    %2210 = vmatpush.msra.mxu0 0.0
    %2211 = vmatpush.msra.mxu0 0.0
    %2212 = vmatpush.msra.mxu0 0.0
    %2213 = vmatpush.msra.mxu0 0.0
    %2214 = vmatpush.msra.mxu0 0.0
    %2215 = vmatpush.msra.mxu0 0.0
    %2216 = vmatpush.msra.mxu0 0.0
    %2217 = vmatpush.msra.mxu0 %v2197
    %2218 = vmatmul.f32.gmra.mxu0 %v2200
    %v2219 = vpop.f32.mrf.mxu0
    %v2220 = vadd.f32 0.0, %v2219
    %2221 = vdwg.mxu0
    %2222 = vrot.lane.b32.xlu0 %v221, 32
    %v2223 = vpop.permute.xlu0 %2222
    %v2226 = vsel %vm433, %v2064, 0
    %2228 = vmatpush.msra.mxu0 0.0
    %2229 = vmatpush.msra.mxu0 0.0
    %2230 = vmatpush.msra.mxu0 0.0
    %2231 = vmatpush.msra.mxu0 0.0
    %2232 = vmatpush.msra.mxu0 0.0
    %2233 = vmatpush.msra.mxu0 0.0
    %2234 = vmatpush.msra.mxu0 0.0
    %2235 = vmatpush.msra.mxu0 0.0
    %2236 = vmatpush.msra.mxu0 0.0
    %2237 = vmatpush.msra.mxu0 0.0
    %2238 = vmatpush.msra.mxu0 0.0
    %2239 = vmatpush.msra.mxu0 0.0
    %2240 = vmatpush.msra.mxu0 0.0
    %2241 = vmatpush.msra.mxu0 0.0
    %2242 = vmatpush.msra.mxu0 0.0
    %2243 = vmatpush.msra.mxu0 %v2223
    %2244 = vmatmul.f32.gmra.mxu0 %v2226
    %v2245 = vpop.f32.mrf.mxu0
    %v2246 = vadd.f32 0.0, %v2245
    %2247 = vdwg.mxu0
    %2248 = vrot.lane.b32.xlu0 %v223, 32
    %v2249 = vpop.permute.xlu0 %2248
    %v2252 = vsel %vm433, %v2065, 0
    %2254 = vmatpush.msra.mxu0 0.0
    %2255 = vmatpush.msra.mxu0 0.0
    %2256 = vmatpush.msra.mxu0 0.0
    %2257 = vmatpush.msra.mxu0 0.0
    %2258 = vmatpush.msra.mxu0 0.0
    %2259 = vmatpush.msra.mxu0 0.0
    %2260 = vmatpush.msra.mxu0 0.0
    %2261 = vmatpush.msra.mxu0 0.0
    %2262 = vmatpush.msra.mxu0 0.0
    %2263 = vmatpush.msra.mxu0 0.0
    %2264 = vmatpush.msra.mxu0 0.0
    %2265 = vmatpush.msra.mxu0 0.0
    %2266 = vmatpush.msra.mxu0 0.0
    %2267 = vmatpush.msra.mxu0 0.0
    %2268 = vmatpush.msra.mxu0 0.0
    %2269 = vmatpush.msra.mxu0 %v2249
    %2270 = vmatmul.f32.gmra.mxu0 %v2252
    %v2271 = vpop.f32.mrf.mxu0
    %v2272 = vadd.f32 0.0, %v2271
    %2273 = vdwg.mxu0
    %2282 = vrot.lane.b32.xlu0 %v1043, 32
    %v2283 = vpop.permute.xlu0 %2282
    %2284 = vrot.lane.b32.xlu0 %v1070, 32
    %v2285 = vpop.permute.xlu0 %2284
    %2286 = vrot.lane.b32.xlu0 %v1097, 32
    %v2287 = vpop.permute.xlu0 %2286
    %2288 = vrot.lane.b32.xlu0 %v1124, 32
    %v2289 = vpop.permute.xlu0 %2288
    %2290 = vrot.lane.b32.xlu0 %v1151, 32
    %v2291 = vpop.permute.xlu0 %2290
    %2292 = vrot.lane.b32.xlu0 %v1178, 32
    %v2293 = vpop.permute.xlu0 %2292
    %2294 = vrot.lane.b32.xlu0 %v1205, 32
    %v2295 = vpop.permute.xlu0 %2294
    %2296 = vrot.lane.b32.xlu0 %v1232, 32
    %v2297 = vpop.permute.xlu0 %2296
    %2314 = vrot.lane.b32.xlu0 %v1570, 64
    %v2315 = vpop.permute.xlu0 %2314
    %2316 = vrot.lane.b32.xlu0 %v1596, 64
    %v2317 = vpop.permute.xlu0 %2316
    %2318 = vrot.lane.b32.xlu0 %v1622, 64
    %v2319 = vpop.permute.xlu0 %2318
    %2320 = vrot.lane.b32.xlu0 %v1648, 64
    %v2321 = vpop.permute.xlu0 %2320
    %2322 = vrot.lane.b32.xlu0 %v1674, 64
    %v2323 = vpop.permute.xlu0 %2322
    %2324 = vrot.lane.b32.xlu0 %v1700, 64
    %v2325 = vpop.permute.xlu0 %2324
    %2326 = vrot.lane.b32.xlu0 %v1726, 64
    %v2327 = vpop.permute.xlu0 %2326
    %2328 = vrot.lane.b32.xlu0 %v1752, 64
    %v2329 = vpop.permute.xlu0 %2328
    %2346 = vrot.lane.b32.xlu0 %v2090, 96
    %v2347 = vpop.permute.xlu0 %2346
    %2348 = vrot.lane.b32.xlu0 %v2116, 96
    %v2349 = vpop.permute.xlu0 %2348
    %2350 = vrot.lane.b32.xlu0 %v2142, 96
    %v2351 = vpop.permute.xlu0 %2350
    %2352 = vrot.lane.b32.xlu0 %v2168, 96
    %v2353 = vpop.permute.xlu0 %2352
    %2354 = vrot.lane.b32.xlu0 %v2194, 96
    %v2355 = vpop.permute.xlu0 %2354
    %2356 = vrot.lane.b32.xlu0 %v2220, 96
    %v2357 = vpop.permute.xlu0 %2356
    %2358 = vrot.lane.b32.xlu0 %v2246, 96
    %v2359 = vpop.permute.xlu0 %2358
    %2360 = vrot.lane.b32.xlu0 %v2272, 96
    %v2361 = vpop.permute.xlu0 %2360
    %v2370 = vsel %vm125, %v543, %v2283
    %v2371 = vsel %vm125, %v566, %v2285
    %v2372 = vsel %vm125, %v589, %v2287
    %v2373 = vsel %vm125, %v612, %v2289
    %v2374 = vsel %vm125, %v635, %v2291
    %v2375 = vsel %vm125, %v658, %v2293
    %v2376 = vsel %vm125, %v681, %v2295
    %v2377 = vsel %vm125, %v704, %v2297
    %vm2378 = vcmask 523264
    %v2379 = vsel %vm2378, %v2370, %v2315
    %v2380 = vsel %vm2378, %v2371, %v2317
    %v2381 = vsel %vm2378, %v2372, %v2319
    %v2382 = vsel %vm2378, %v2373, %v2321
    %v2383 = vsel %vm2378, %v2374, %v2323
    %v2384 = vsel %vm2378, %v2375, %v2325
    %v2385 = vsel %vm2378, %v2376, %v2327
    %v2386 = vsel %vm2378, %v2377, %v2329
    %vm2387 = vcmask 785408
    %v2388 = vsel %vm2387, %v2379, %v2347
    %v2389 = vsel %vm2387, %v2380, %v2349
    %v2390 = vsel %vm2387, %v2381, %v2351
    %v2391 = vsel %vm2387, %v2382, %v2353
    %v2392 = vsel %vm2387, %v2383, %v2355
    %v2393 = vsel %vm2387, %v2384, %v2357
    %v2394 = vsel %vm2387, %v2385, %v2359
    %v2395 = vsel %vm2387, %v2386, %v2361
    %v2396 = vpack.c.bf16 %v2389, %v2388
    %v2397 = vpack.c.bf16 %v2391, %v2390
    %v2398 = vpack.c.bf16 %v2393, %v2392
    %v2399 = vpack.c.bf16 %v2395, %v2394
    %v2400 = vld [vmem:[%s2] sm:$0xf]
    %v2401 = vld [vmem:[%s2 + $0x4] sm:$0xf]
    %v2402 = vld [vmem:[%s2 + $0x8] sm:$0xf]
    %v2403 = vld [vmem:[%s2 + $0xc] sm:$0xf]
    %v2404 = vld [vmem:[%s2 + $0x10] sm:$0xf]
    %v2405 = vld [vmem:[%s2 + $0x14] sm:$0xf]
    %v2406 = vld [vmem:[%s2 + $0x18] sm:$0xf]
    %v2407 = vld [vmem:[%s2 + $0x1c] sm:$0xf]
    %v2408 = vld [vmem:[%s2 + $0x20] sm:$0xf]
    %v2409 = vld [vmem:[%s2 + $0x24] sm:$0xf]
    %v2410 = vld [vmem:[%s2 + $0x28] sm:$0xf]
    %v2411 = vld [vmem:[%s2 + $0x2c] sm:$0xf]
    %v2412 = vld [vmem:[%s2 + $0x30] sm:$0xf]
    %v2413 = vld [vmem:[%s2 + $0x34] sm:$0xf]
    %v2414 = vld [vmem:[%s2 + $0x38] sm:$0xf]
    %v2415 = vld [vmem:[%s2 + $0x3c] sm:$0xf]
    %v2416 = vld [vmem:[%s3] sm:$0x1]
    %v2418 = vperm.slane %v2416, 0
    %v2436 = vunpack.c.l.b16 %v2400
    %v2437 = vunpack.c.l.b16 %v2401
    %v2438 = vunpack.c.l.b16 %v2402
    %v2439 = vunpack.c.l.b16 %v2403
    %v2440 = vunpack.c.l.b16 %v2404
    %v2441 = vunpack.c.l.b16 %v2405
    %v2442 = vunpack.c.l.b16 %v2406
    %v2443 = vunpack.c.l.b16 %v2407
    %v2444 = vunpack.c.l.b16 %v2408
    %v2445 = vunpack.c.l.b16 %v2409
    %v2446 = vunpack.c.l.b16 %v2410
    %v2447 = vunpack.c.l.b16 %v2411
    %v2448 = vunpack.c.l.b16 %v2412
    %v2449 = vunpack.c.l.b16 %v2413
    %v2450 = vunpack.c.l.b16 %v2414
    %v2451 = vunpack.c.l.b16 %v2415
    %v2452 = vpack.c.b16 %v2437, %v2436
    %v2453 = vpack.c.b16 %v2439, %v2438
    %v2454 = vpack.c.b16 %v2441, %v2440
    %v2455 = vpack.c.b16 %v2443, %v2442
    %v2456 = vpack.c.b16 %v2445, %v2444
    %v2457 = vpack.c.b16 %v2447, %v2446
    %v2458 = vpack.c.b16 %v2449, %v2448
    %v2459 = vpack.c.b16 %v2451, %v2450
    %2468 = vmatpush.bf16.msra.mxu0 %v2459
    %2469 = vmatpush.bf16.msra.mxu0 %v2458
    %2470 = vmatpush.bf16.msra.mxu0 %v2457
    %2471 = vmatpush.bf16.msra.mxu0 %v2456
    %2472 = vmatpush.bf16.msra.mxu0 %v2455
    %2473 = vmatpush.bf16.msra.mxu0 %v2454
    %2474 = vmatpush.bf16.msra.mxu0 %v2453
    %2475 = vmatpush.bf16.msra.mxu0 %v2452
    %2476 = vmatmul.bf16.gmra.mxu0 %v2396
    %v2477 = vpop.f32.mrf.mxu0
    %v2478 = vadd.f32 %v2418, %v2477
    %v2479 = vpop.f32.mrf.mxu0
    %v2480 = vadd.f32 %v2418, %v2479
    %2481 = vmatmul.bf16.gmra.mxu0 %v2397
    %v2482 = vpop.f32.mrf.mxu0
    %v2483 = vadd.f32 %v2418, %v2482
    %v2484 = vpop.f32.mrf.mxu0
    %v2485 = vadd.f32 %v2418, %v2484
    %2486 = vmatmul.bf16.gmra.mxu0 %v2398
    %v2487 = vpop.f32.mrf.mxu0
    %v2488 = vadd.f32 %v2418, %v2487
    %v2489 = vpop.f32.mrf.mxu0
    %v2490 = vadd.f32 %v2418, %v2489
    %2491 = vmatmul.bf16.gmra.mxu0 %v2399
    %v2492 = vpop.f32.mrf.mxu0
    %v2493 = vadd.f32 %v2418, %v2492
    %v2494 = vpop.f32.mrf.mxu0
    %v2495 = vadd.f32 %v2418, %v2494
    %2496 = vdwg.mxu0
    %v2497 = vadd.f32 %v2478, %v57
    %v2498 = vadd.f32 %v2480, %v58
    %v2499 = vadd.f32 %v2483, %v59
    %v2500 = vadd.f32 %v2485, %v60
    %v2501 = vadd.f32 %v2488, %v61
    %v2502 = vadd.f32 %v2490, %v62
    %v2503 = vadd.f32 %v2493, %v63
    %v2504 = vadd.f32 %v2495, %v64
    %v2505 = vld [vmem:[%s4] sm:$0x1]
    %v2506 = vld [vmem:[%s5] sm:$0x1]
    %v2507 = vsel %vm125, %v2497, 0.0
    %2508 = vadd.xlane.f32.xlu0 %v2507
    %v2509 = vpop.xlane.xlu0 %2508
    %v2510 = vsel %vm125, %v2498, 0.0
    %2511 = vadd.xlane.f32.xlu0 %v2510
    %v2512 = vpop.xlane.xlu0 %2511
    %v2513 = vsel %vm125, %v2499, 0.0
    %2514 = vadd.xlane.f32.xlu0 %v2513
    %v2515 = vpop.xlane.xlu0 %2514
    %v2516 = vsel %vm125, %v2500, 0.0
    %2517 = vadd.xlane.f32.xlu0 %v2516
    %v2518 = vpop.xlane.xlu0 %2517
    %v2519 = vsel %vm125, %v2501, 0.0
    %2520 = vadd.xlane.f32.xlu0 %v2519
    %v2521 = vpop.xlane.xlu0 %2520
    %v2522 = vsel %vm125, %v2502, 0.0
    %2523 = vadd.xlane.f32.xlu0 %v2522
    %v2524 = vpop.xlane.xlu0 %2523
    %v2525 = vsel %vm125, %v2503, 0.0
    %2526 = vadd.xlane.f32.xlu0 %v2525
    %v2527 = vpop.xlane.xlu0 %2526
    %v2528 = vsel %vm125, %v2504, 0.0
    %2529 = vadd.xlane.f32.xlu0 %v2528
    %v2530 = vpop.xlane.xlu0 %2529
    %v2531 = vrcp.pop 32.0
    %v2532 = vmul.f32 32.0, %v2531
    %v2533 = vsub.f32 1.0, %v2532
    %v2534 = vmul.f32 %v2531, %v2533
    %v2535 = vadd.f32 %v2531, %v2534
    %vm2536 = vweird.f32 %v2531
    %v2537 = vsel %vm2536, %v2531, %v2535
    %v2538 = vmul.f32 %v2509, %v2537
    %v2539 = vmul.f32 %v2512, %v2537
    %v2540 = vmul.f32 %v2515, %v2537
    %v2541 = vmul.f32 %v2518, %v2537
    %v2542 = vmul.f32 %v2521, %v2537
    %v2543 = vmul.f32 %v2524, %v2537
    %v2544 = vmul.f32 %v2527, %v2537
    %v2545 = vmul.f32 %v2530, %v2537
    %v2546 = vmul.f32 %v2497, %v2497
    %v2547 = vmul.f32 %v2498, %v2498
    %v2548 = vmul.f32 %v2499, %v2499
    %v2549 = vmul.f32 %v2500, %v2500
    %v2550 = vmul.f32 %v2501, %v2501
    %v2551 = vmul.f32 %v2502, %v2502
    %v2552 = vmul.f32 %v2503, %v2503
    %v2553 = vmul.f32 %v2504, %v2504
    %v2554 = vsel %vm125, %v2546, 0.0
    %2555 = vadd.xlane.f32.xlu0 %v2554
    %v2556 = vpop.xlane.xlu0 %2555
    %v2557 = vsel %vm125, %v2547, 0.0
    %2558 = vadd.xlane.f32.xlu0 %v2557
    %v2559 = vpop.xlane.xlu0 %2558
    %v2560 = vsel %vm125, %v2548, 0.0
    %2561 = vadd.xlane.f32.xlu0 %v2560
    %v2562 = vpop.xlane.xlu0 %2561
    %v2563 = vsel %vm125, %v2549, 0.0
    %2564 = vadd.xlane.f32.xlu0 %v2563
    %v2565 = vpop.xlane.xlu0 %2564
    %v2566 = vsel %vm125, %v2550, 0.0
    %2567 = vadd.xlane.f32.xlu0 %v2566
    %v2568 = vpop.xlane.xlu0 %2567
    %v2569 = vsel %vm125, %v2551, 0.0
    %2570 = vadd.xlane.f32.xlu0 %v2569
    %v2571 = vpop.xlane.xlu0 %2570
    %v2572 = vsel %vm125, %v2552, 0.0
    %2573 = vadd.xlane.f32.xlu0 %v2572
    %v2574 = vpop.xlane.xlu0 %2573
    %v2575 = vsel %vm125, %v2553, 0.0
    %2576 = vadd.xlane.f32.xlu0 %v2575
    %v2577 = vpop.xlane.xlu0 %2576
    %v2578 = vmul.f32 %v2556, %v2537
    %v2579 = vmul.f32 %v2559, %v2537
    %v2580 = vmul.f32 %v2562, %v2537
    %v2581 = vmul.f32 %v2565, %v2537
    %v2582 = vmul.f32 %v2568, %v2537
    %v2583 = vmul.f32 %v2571, %v2537
    %v2584 = vmul.f32 %v2574, %v2537
    %v2585 = vmul.f32 %v2577, %v2537
    %v2586 = vmul.f32 %v2538, %v2538
    %v2587 = vmul.f32 %v2539, %v2539
    %v2588 = vmul.f32 %v2540, %v2540
    %v2589 = vmul.f32 %v2541, %v2541
    %v2590 = vmul.f32 %v2542, %v2542
    %v2591 = vmul.f32 %v2543, %v2543
    %v2592 = vmul.f32 %v2544, %v2544
    %v2593 = vmul.f32 %v2545, %v2545
    %v2594 = vsub.f32 %v2578, %v2586
    %v2595 = vsub.f32 %v2579, %v2587
    %v2596 = vsub.f32 %v2580, %v2588
    %v2597 = vsub.f32 %v2581, %v2589
    %v2598 = vsub.f32 %v2582, %v2590
    %v2599 = vsub.f32 %v2583, %v2591
    %v2600 = vsub.f32 %v2584, %v2592
    %v2601 = vsub.f32 %v2585, %v2593
    %v2602 = vmax.f32 %v2594, 0.0
    %v2603 = vmax.f32 %v2595, 0.0
    %v2604 = vmax.f32 %v2596, 0.0
    %v2605 = vmax.f32 %v2597, 0.0
    %v2606 = vmax.f32 %v2598, 0.0
    %v2607 = vmax.f32 %v2599, 0.0
    %v2608 = vmax.f32 %v2600, 0.0
    %v2609 = vmax.f32 %v2601, 0.0
    %v2610 = vsub.f32 %v2497, %v2538
    %v2611 = vsub.f32 %v2498, %v2539
    %v2612 = vsub.f32 %v2499, %v2540
    %v2613 = vsub.f32 %v2500, %v2541
    %v2614 = vsub.f32 %v2501, %v2542
    %v2615 = vsub.f32 %v2502, %v2543
    %v2616 = vsub.f32 %v2503, %v2544
    %v2617 = vsub.f32 %v2504, %v2545
    %v2618 = vadd.f32 %v2602, 1e-05
    %v2619 = vadd.f32 %v2603, 1e-05
    %v2620 = vadd.f32 %v2604, 1e-05
    %v2621 = vadd.f32 %v2605, 1e-05
    %v2622 = vadd.f32 %v2606, 1e-05
    %v2623 = vadd.f32 %v2607, 1e-05
    %v2624 = vadd.f32 %v2608, 1e-05
    %v2625 = vadd.f32 %v2609, 1e-05
    %v2626 = vrsqrt.pop %v2618
    %v2627 = vmul.f32 %v2626, %v2618
    %v2628 = vmul.f32 %v2627, %v2626
    %v2629 = vmul.f32 0.5, %v2628
    %v2630 = vsub.f32 1.5, %v2629
    %v2631 = vmul.f32 %v2626, %v2630
    %vm2632 = vweird.f32 %v2618
    %vm2633 = vweird.f32 %v2626
    %vm2634 = vmor %vm2632, %vm2633
    %v2635 = vsel %vm2634, %v2626, %v2631
    %v2636 = vrsqrt.pop %v2619
    %v2637 = vmul.f32 %v2636, %v2619
    %v2638 = vmul.f32 %v2637, %v2636
    %v2639 = vmul.f32 0.5, %v2638
    %v2640 = vsub.f32 1.5, %v2639
    %v2641 = vmul.f32 %v2636, %v2640
    %vm2642 = vweird.f32 %v2619
    %vm2643 = vweird.f32 %v2636
    %vm2644 = vmor %vm2642, %vm2643
    %v2645 = vsel %vm2644, %v2636, %v2641
    %v2646 = vrsqrt.pop %v2620
    %v2647 = vmul.f32 %v2646, %v2620
    %v2648 = vmul.f32 %v2647, %v2646
    %v2649 = vmul.f32 0.5, %v2648
    %v2650 = vsub.f32 1.5, %v2649
    %v2651 = vmul.f32 %v2646, %v2650
    %vm2652 = vweird.f32 %v2620
    %vm2653 = vweird.f32 %v2646
    %vm2654 = vmor %vm2652, %vm2653
    %v2655 = vsel %vm2654, %v2646, %v2651
    %v2656 = vrsqrt.pop %v2621
    %v2657 = vmul.f32 %v2656, %v2621
    %v2658 = vmul.f32 %v2657, %v2656
    %v2659 = vmul.f32 0.5, %v2658
    %v2660 = vsub.f32 1.5, %v2659
    %v2661 = vmul.f32 %v2656, %v2660
    %vm2662 = vweird.f32 %v2621
    %vm2663 = vweird.f32 %v2656
    %vm2664 = vmor %vm2662, %vm2663
    %v2665 = vsel %vm2664, %v2656, %v2661
    %v2666 = vrsqrt.pop %v2622
    %v2667 = vmul.f32 %v2666, %v2622
    %v2668 = vmul.f32 %v2667, %v2666
    %v2669 = vmul.f32 0.5, %v2668
    %v2670 = vsub.f32 1.5, %v2669
    %v2671 = vmul.f32 %v2666, %v2670
    %vm2672 = vweird.f32 %v2622
    %vm2673 = vweird.f32 %v2666
    %vm2674 = vmor %vm2672, %vm2673
    %v2675 = vsel %vm2674, %v2666, %v2671
    %v2676 = vrsqrt.pop %v2623
    %v2677 = vmul.f32 %v2676, %v2623
    %v2678 = vmul.f32 %v2677, %v2676
    %v2679 = vmul.f32 0.5, %v2678
    %v2680 = vsub.f32 1.5, %v2679
    %v2681 = vmul.f32 %v2676, %v2680
    %vm2682 = vweird.f32 %v2623
    %vm2683 = vweird.f32 %v2676
    %vm2684 = vmor %vm2682, %vm2683
    %v2685 = vsel %vm2684, %v2676, %v2681
    %v2686 = vrsqrt.pop %v2624
    %v2687 = vmul.f32 %v2686, %v2624
    %v2688 = vmul.f32 %v2687, %v2686
    %v2689 = vmul.f32 0.5, %v2688
    %v2690 = vsub.f32 1.5, %v2689
    %v2691 = vmul.f32 %v2686, %v2690
    %vm2692 = vweird.f32 %v2624
    %vm2693 = vweird.f32 %v2686
    %vm2694 = vmor %vm2692, %vm2693
    %v2695 = vsel %vm2694, %v2686, %v2691
    %v2696 = vrsqrt.pop %v2625
    %v2697 = vmul.f32 %v2696, %v2625
    %v2698 = vmul.f32 %v2697, %v2696
    %v2699 = vmul.f32 0.5, %v2698
    %v2700 = vsub.f32 1.5, %v2699
    %v2701 = vmul.f32 %v2696, %v2700
    %vm2702 = vweird.f32 %v2625
    %vm2703 = vweird.f32 %v2696
    %vm2704 = vmor %vm2702, %vm2703
    %v2705 = vsel %vm2704, %v2696, %v2701
    %v2706 = vmul.f32 %v2610, %v2635
    %v2707 = vmul.f32 %v2611, %v2645
    %v2708 = vmul.f32 %v2612, %v2655
    %v2709 = vmul.f32 %v2613, %v2665
    %v2710 = vmul.f32 %v2614, %v2675
    %v2711 = vmul.f32 %v2615, %v2685
    %v2712 = vmul.f32 %v2616, %v2695
    %v2713 = vmul.f32 %v2617, %v2705
    %v2715 = vperm.slane %v2505, 0
    %v2717 = vmul.f32 %v2706, %v2715
    %v2718 = vmul.f32 %v2707, %v2715
    %v2719 = vmul.f32 %v2708, %v2715
    %v2720 = vmul.f32 %v2709, %v2715
    %v2721 = vmul.f32 %v2710, %v2715
    %v2722 = vmul.f32 %v2711, %v2715
    %v2723 = vmul.f32 %v2712, %v2715
    %v2724 = vmul.f32 %v2713, %v2715
    %v2726 = vperm.slane %v2506, 0
    %v2728 = vadd.f32 %v2717, %v2726
    %v2729 = vadd.f32 %v2718, %v2726
    %v2730 = vadd.f32 %v2719, %v2726
    %v2731 = vadd.f32 %v2720, %v2726
    %v2732 = vadd.f32 %v2721, %v2726
    %v2733 = vadd.f32 %v2722, %v2726
    %v2734 = vadd.f32 %v2723, %v2726
    %v2735 = vadd.f32 %v2724, %v2726
    %v2736 = vpack.c.bf16 %v2729, %v2728
    %v2737 = vpack.c.bf16 %v2731, %v2730
    %v2738 = vpack.c.bf16 %v2733, %v2732
    %v2739 = vpack.c.bf16 %v2735, %v2734
    %v2740 = vld [vmem:[%s6] sm:$0xf]
    %v2741 = vld [vmem:[%s6 + $0x4] sm:$0xf]
    %v2742 = vld [vmem:[%s6 + $0x8] sm:$0xf]
    %v2743 = vld [vmem:[%s6 + $0xc] sm:$0xf]
    %v2744 = vld [vmem:[%s7] sm:$0x1]
    %v2746 = vperm.slane %v2744, 0
    %v2752 = vunpack.c.l.b16 %v2740
    %v2753 = vunpack.c.l.b16 %v2741
    %v2754 = vunpack.c.l.b16 %v2742
    %v2755 = vunpack.c.l.b16 %v2743
    %v2756 = vpack.c.b16 %v2753, %v2752
    %v2757 = vpack.c.b16 %v2755, %v2754
    %v2761 = vsel %vm125, %v2736, 0
    %v2764 = vsel %vm125, %v2737, 0
    %v2767 = vsel %vm125, %v2738, 0
    %v2770 = vsel %vm125, %v2739, 0
    %2772 = vmatpush.bf16.msra.mxu0 0
    %2773 = vmatpush.bf16.msra.mxu0 0
    %2774 = vmatpush.bf16.msra.mxu0 0
    %2775 = vmatpush.bf16.msra.mxu0 0
    %2776 = vmatpush.bf16.msra.mxu0 0
    %2777 = vmatpush.bf16.msra.mxu0 0
    %2778 = vmatpush.bf16.msra.mxu0 %v2757
    %2779 = vmatpush.bf16.msra.mxu0 %v2756
    %2780 = vmatmul.bf16.gmra.mxu0 %v2761
    %v2781 = vpop.f32.mrf.mxu0
    %v2782 = vadd.f32 %v2746, %v2781
    %v2783 = vpop.f32.mrf.mxu0
    %v2784 = vadd.f32 %v2746, %v2783
    %2785 = vmatmul.bf16.gmra.mxu0 %v2764
    %v2786 = vpop.f32.mrf.mxu0
    %v2787 = vadd.f32 %v2746, %v2786
    %v2788 = vpop.f32.mrf.mxu0
    %v2789 = vadd.f32 %v2746, %v2788
    %2790 = vmatmul.bf16.gmra.mxu0 %v2767
    %v2791 = vpop.f32.mrf.mxu0
    %v2792 = vadd.f32 %v2746, %v2791
    %v2793 = vpop.f32.mrf.mxu0
    %v2794 = vadd.f32 %v2746, %v2793
    %2795 = vmatmul.bf16.gmra.mxu0 %v2770
    %v2796 = vpop.f32.mrf.mxu0
    %v2797 = vadd.f32 %v2746, %v2796
    %v2798 = vpop.f32.mrf.mxu0
    %v2799 = vadd.f32 %v2746, %v2798
    %2800 = vdwg.mxu0
    %v2801 = vmax.f32 %v2782, 0.0
    %v2802 = vmax.f32 %v2784, 0.0
    %v2803 = vmax.f32 %v2787, 0.0
    %v2804 = vmax.f32 %v2789, 0.0
    %v2805 = vmax.f32 %v2792, 0.0
    %v2806 = vmax.f32 %v2794, 0.0
    %v2807 = vmax.f32 %v2797, 0.0
    %v2808 = vmax.f32 %v2799, 0.0
    %v2809 = vpack.c.bf16 %v2802, %v2801
    %v2810 = vpack.c.bf16 %v2804, %v2803
    %v2811 = vpack.c.bf16 %v2806, %v2805
    %v2812 = vpack.c.bf16 %v2808, %v2807
    %v2813 = vld [vmem:[%s8] sm:$0xf]
    %v2814 = vld [vmem:[%s8 + $0x4] sm:$0xf]
    %v2815 = vld [vmem:[%s8 + $0x8] sm:$0xf]
    %v2816 = vld [vmem:[%s8 + $0xc] sm:$0xf]
    %v2817 = vld [vmem:[%s8 + $0x10] sm:$0xf]
    %v2818 = vld [vmem:[%s8 + $0x14] sm:$0xf]
    %v2819 = vld [vmem:[%s8 + $0x18] sm:$0xf]
    %v2820 = vld [vmem:[%s8 + $0x1c] sm:$0xf]
    %v2821 = vld [vmem:[%s8 + $0x20] sm:$0xf]
    %v2822 = vld [vmem:[%s8 + $0x24] sm:$0xf]
    %v2823 = vld [vmem:[%s8 + $0x28] sm:$0xf]
    %v2824 = vld [vmem:[%s8 + $0x2c] sm:$0xf]
    %v2825 = vld [vmem:[%s8 + $0x30] sm:$0xf]
    %v2826 = vld [vmem:[%s8 + $0x34] sm:$0xf]
    %v2827 = vld [vmem:[%s8 + $0x38] sm:$0xf]
    %v2828 = vld [vmem:[%s8 + $0x3c] sm:$0xf]
    %v2829 = vld [vmem:[%s9] sm:$0x1]
    %v2831 = vperm.slane %v2829, 0
    %v2849 = vunpack.c.l.b16 %v2813
    %v2850 = vunpack.c.l.b16 %v2814
    %v2851 = vunpack.c.l.b16 %v2815
    %v2852 = vunpack.c.l.b16 %v2816
    %v2853 = vunpack.c.l.b16 %v2817
    %v2854 = vunpack.c.l.b16 %v2818
    %v2855 = vunpack.c.l.b16 %v2819
    %v2856 = vunpack.c.l.b16 %v2820
    %v2857 = vunpack.c.l.b16 %v2821
    %v2858 = vunpack.c.l.b16 %v2822
    %v2859 = vunpack.c.l.b16 %v2823
    %v2860 = vunpack.c.l.b16 %v2824
    %v2861 = vunpack.c.l.b16 %v2825
    %v2862 = vunpack.c.l.b16 %v2826
    %v2863 = vunpack.c.l.b16 %v2827
    %v2864 = vunpack.c.l.b16 %v2828
    %v2865 = vpack.c.b16 %v2850, %v2849
    %v2866 = vpack.c.b16 %v2852, %v2851
    %v2867 = vpack.c.b16 %v2854, %v2853
    %v2868 = vpack.c.b16 %v2856, %v2855
    %v2869 = vpack.c.b16 %v2858, %v2857
    %v2870 = vpack.c.b16 %v2860, %v2859
    %v2871 = vpack.c.b16 %v2862, %v2861
    %v2872 = vpack.c.b16 %v2864, %v2863
    %2881 = vmatpush.bf16.msra.mxu0 %v2872
    %2882 = vmatpush.bf16.msra.mxu0 %v2871
    %2883 = vmatpush.bf16.msra.mxu0 %v2870
    %2884 = vmatpush.bf16.msra.mxu0 %v2869
    %2885 = vmatpush.bf16.msra.mxu0 %v2868
    %2886 = vmatpush.bf16.msra.mxu0 %v2867
    %2887 = vmatpush.bf16.msra.mxu0 %v2866
    %2888 = vmatpush.bf16.msra.mxu0 %v2865
    %2889 = vmatmul.bf16.gmra.mxu0 %v2809
    %v2890 = vpop.f32.mrf.mxu0
    %v2891 = vadd.f32 %v2831, %v2890
    %v2892 = vpop.f32.mrf.mxu0
    %v2893 = vadd.f32 %v2831, %v2892
    %2894 = vmatmul.bf16.gmra.mxu0 %v2810
    %v2895 = vpop.f32.mrf.mxu0
    %v2896 = vadd.f32 %v2831, %v2895
    %v2897 = vpop.f32.mrf.mxu0
    %v2898 = vadd.f32 %v2831, %v2897
    %2899 = vmatmul.bf16.gmra.mxu0 %v2811
    %v2900 = vpop.f32.mrf.mxu0
    %v2901 = vadd.f32 %v2831, %v2900
    %v2902 = vpop.f32.mrf.mxu0
    %v2903 = vadd.f32 %v2831, %v2902
    %2904 = vmatmul.bf16.gmra.mxu0 %v2812
    %v2905 = vpop.f32.mrf.mxu0
    %v2906 = vadd.f32 %v2831, %v2905
    %v2907 = vpop.f32.mrf.mxu0
    %v2908 = vadd.f32 %v2831, %v2907
    %2909 = vdwg.mxu0
    %v2910 = vadd.f32 %v2891, %v2728
    %v2911 = vadd.f32 %v2893, %v2729
    %v2912 = vadd.f32 %v2896, %v2730
    %v2913 = vadd.f32 %v2898, %v2731
    %v2914 = vadd.f32 %v2901, %v2732
    %v2915 = vadd.f32 %v2903, %v2733
    %v2916 = vadd.f32 %v2906, %v2734
    %v2917 = vadd.f32 %v2908, %v2735
    %v2918 = vld [vmem:[%s10] sm:$0x1]
    %v2919 = vld [vmem:[%s11] sm:$0x1]
    %v2920 = vsel %vm125, %v2910, 0.0
    %2921 = vadd.xlane.f32.xlu0 %v2920
    %v2922 = vpop.xlane.xlu0 %2921
    %v2923 = vsel %vm125, %v2911, 0.0
    %2924 = vadd.xlane.f32.xlu0 %v2923
    %v2925 = vpop.xlane.xlu0 %2924
    %v2926 = vsel %vm125, %v2912, 0.0
    %2927 = vadd.xlane.f32.xlu0 %v2926
    %v2928 = vpop.xlane.xlu0 %2927
    %v2929 = vsel %vm125, %v2913, 0.0
    %2930 = vadd.xlane.f32.xlu0 %v2929
    %v2931 = vpop.xlane.xlu0 %2930
    %v2932 = vsel %vm125, %v2914, 0.0
    %2933 = vadd.xlane.f32.xlu0 %v2932
    %v2934 = vpop.xlane.xlu0 %2933
    %v2935 = vsel %vm125, %v2915, 0.0
    %2936 = vadd.xlane.f32.xlu0 %v2935
    %v2937 = vpop.xlane.xlu0 %2936
    %v2938 = vsel %vm125, %v2916, 0.0
    %2939 = vadd.xlane.f32.xlu0 %v2938
    %v2940 = vpop.xlane.xlu0 %2939
    %v2941 = vsel %vm125, %v2917, 0.0
    %2942 = vadd.xlane.f32.xlu0 %v2941
    %v2943 = vpop.xlane.xlu0 %2942
    %v2944 = vmul.f32 %v2922, %v2537
    %v2945 = vmul.f32 %v2925, %v2537
    %v2946 = vmul.f32 %v2928, %v2537
    %v2947 = vmul.f32 %v2931, %v2537
    %v2948 = vmul.f32 %v2934, %v2537
    %v2949 = vmul.f32 %v2937, %v2537
    %v2950 = vmul.f32 %v2940, %v2537
    %v2951 = vmul.f32 %v2943, %v2537
    %v2952 = vmul.f32 %v2910, %v2910
    %v2953 = vmul.f32 %v2911, %v2911
    %v2954 = vmul.f32 %v2912, %v2912
    %v2955 = vmul.f32 %v2913, %v2913
    %v2956 = vmul.f32 %v2914, %v2914
    %v2957 = vmul.f32 %v2915, %v2915
    %v2958 = vmul.f32 %v2916, %v2916
    %v2959 = vmul.f32 %v2917, %v2917
    %v2960 = vsel %vm125, %v2952, 0.0
    %2961 = vadd.xlane.f32.xlu0 %v2960
    %v2962 = vpop.xlane.xlu0 %2961
    %v2963 = vsel %vm125, %v2953, 0.0
    %2964 = vadd.xlane.f32.xlu0 %v2963
    %v2965 = vpop.xlane.xlu0 %2964
    %v2966 = vsel %vm125, %v2954, 0.0
    %2967 = vadd.xlane.f32.xlu0 %v2966
    %v2968 = vpop.xlane.xlu0 %2967
    %v2969 = vsel %vm125, %v2955, 0.0
    %2970 = vadd.xlane.f32.xlu0 %v2969
    %v2971 = vpop.xlane.xlu0 %2970
    %v2972 = vsel %vm125, %v2956, 0.0
    %2973 = vadd.xlane.f32.xlu0 %v2972
    %v2974 = vpop.xlane.xlu0 %2973
    %v2975 = vsel %vm125, %v2957, 0.0
    %2976 = vadd.xlane.f32.xlu0 %v2975
    %v2977 = vpop.xlane.xlu0 %2976
    %v2978 = vsel %vm125, %v2958, 0.0
    %2979 = vadd.xlane.f32.xlu0 %v2978
    %v2980 = vpop.xlane.xlu0 %2979
    %v2981 = vsel %vm125, %v2959, 0.0
    %2982 = vadd.xlane.f32.xlu0 %v2981
    %v2983 = vpop.xlane.xlu0 %2982
    %v2984 = vmul.f32 %v2962, %v2537
    %v2985 = vmul.f32 %v2965, %v2537
    %v2986 = vmul.f32 %v2968, %v2537
    %v2987 = vmul.f32 %v2971, %v2537
    %v2988 = vmul.f32 %v2974, %v2537
    %v2989 = vmul.f32 %v2977, %v2537
    %v2990 = vmul.f32 %v2980, %v2537
    %v2991 = vmul.f32 %v2983, %v2537
    %v2992 = vmul.f32 %v2944, %v2944
    %v2993 = vmul.f32 %v2945, %v2945
    %v2994 = vmul.f32 %v2946, %v2946
    %v2995 = vmul.f32 %v2947, %v2947
    %v2996 = vmul.f32 %v2948, %v2948
    %v2997 = vmul.f32 %v2949, %v2949
    %v2998 = vmul.f32 %v2950, %v2950
    %v2999 = vmul.f32 %v2951, %v2951
    %v3000 = vsub.f32 %v2984, %v2992
    %v3001 = vsub.f32 %v2985, %v2993
    %v3002 = vsub.f32 %v2986, %v2994
    %v3003 = vsub.f32 %v2987, %v2995
    %v3004 = vsub.f32 %v2988, %v2996
    %v3005 = vsub.f32 %v2989, %v2997
    %v3006 = vsub.f32 %v2990, %v2998
    %v3007 = vsub.f32 %v2991, %v2999
    %v3008 = vmax.f32 %v3000, 0.0
    %v3009 = vmax.f32 %v3001, 0.0
    %v3010 = vmax.f32 %v3002, 0.0
    %v3011 = vmax.f32 %v3003, 0.0
    %v3012 = vmax.f32 %v3004, 0.0
    %v3013 = vmax.f32 %v3005, 0.0
    %v3014 = vmax.f32 %v3006, 0.0
    %v3015 = vmax.f32 %v3007, 0.0
    %v3016 = vsub.f32 %v2910, %v2944
    %v3017 = vsub.f32 %v2911, %v2945
    %v3018 = vsub.f32 %v2912, %v2946
    %v3019 = vsub.f32 %v2913, %v2947
    %v3020 = vsub.f32 %v2914, %v2948
    %v3021 = vsub.f32 %v2915, %v2949
    %v3022 = vsub.f32 %v2916, %v2950
    %v3023 = vsub.f32 %v2917, %v2951
    %v3024 = vadd.f32 %v3008, 1e-05
    %v3025 = vadd.f32 %v3009, 1e-05
    %v3026 = vadd.f32 %v3010, 1e-05
    %v3027 = vadd.f32 %v3011, 1e-05
    %v3028 = vadd.f32 %v3012, 1e-05
    %v3029 = vadd.f32 %v3013, 1e-05
    %v3030 = vadd.f32 %v3014, 1e-05
    %v3031 = vadd.f32 %v3015, 1e-05
    %v3032 = vrsqrt.pop %v3024
    %v3033 = vmul.f32 %v3032, %v3024
    %v3034 = vmul.f32 %v3033, %v3032
    %v3035 = vmul.f32 0.5, %v3034
    %v3036 = vsub.f32 1.5, %v3035
    %v3037 = vmul.f32 %v3032, %v3036
    %vm3038 = vweird.f32 %v3024
    %vm3039 = vweird.f32 %v3032
    %vm3040 = vmor %vm3038, %vm3039
    %v3041 = vsel %vm3040, %v3032, %v3037
    %v3042 = vrsqrt.pop %v3025
    %v3043 = vmul.f32 %v3042, %v3025
    %v3044 = vmul.f32 %v3043, %v3042
    %v3045 = vmul.f32 0.5, %v3044
    %v3046 = vsub.f32 1.5, %v3045
    %v3047 = vmul.f32 %v3042, %v3046
    %vm3048 = vweird.f32 %v3025
    %vm3049 = vweird.f32 %v3042
    %vm3050 = vmor %vm3048, %vm3049
    %v3051 = vsel %vm3050, %v3042, %v3047
    %v3052 = vrsqrt.pop %v3026
    %v3053 = vmul.f32 %v3052, %v3026
    %v3054 = vmul.f32 %v3053, %v3052
    %v3055 = vmul.f32 0.5, %v3054
    %v3056 = vsub.f32 1.5, %v3055
    %v3057 = vmul.f32 %v3052, %v3056
    %vm3058 = vweird.f32 %v3026
    %vm3059 = vweird.f32 %v3052
    %vm3060 = vmor %vm3058, %vm3059
    %v3061 = vsel %vm3060, %v3052, %v3057
    %v3062 = vrsqrt.pop %v3027
    %v3063 = vmul.f32 %v3062, %v3027
    %v3064 = vmul.f32 %v3063, %v3062
    %v3065 = vmul.f32 0.5, %v3064
    %v3066 = vsub.f32 1.5, %v3065
    %v3067 = vmul.f32 %v3062, %v3066
    %vm3068 = vweird.f32 %v3027
    %vm3069 = vweird.f32 %v3062
    %vm3070 = vmor %vm3068, %vm3069
    %v3071 = vsel %vm3070, %v3062, %v3067
    %v3072 = vrsqrt.pop %v3028
    %v3073 = vmul.f32 %v3072, %v3028
    %v3074 = vmul.f32 %v3073, %v3072
    %v3075 = vmul.f32 0.5, %v3074
    %v3076 = vsub.f32 1.5, %v3075
    %v3077 = vmul.f32 %v3072, %v3076
    %vm3078 = vweird.f32 %v3028
    %vm3079 = vweird.f32 %v3072
    %vm3080 = vmor %vm3078, %vm3079
    %v3081 = vsel %vm3080, %v3072, %v3077
    %v3082 = vrsqrt.pop %v3029
    %v3083 = vmul.f32 %v3082, %v3029
    %v3084 = vmul.f32 %v3083, %v3082
    %v3085 = vmul.f32 0.5, %v3084
    %v3086 = vsub.f32 1.5, %v3085
    %v3087 = vmul.f32 %v3082, %v3086
    %vm3088 = vweird.f32 %v3029
    %vm3089 = vweird.f32 %v3082
    %vm3090 = vmor %vm3088, %vm3089
    %v3091 = vsel %vm3090, %v3082, %v3087
    %v3092 = vrsqrt.pop %v3030
    %v3093 = vmul.f32 %v3092, %v3030
    %v3094 = vmul.f32 %v3093, %v3092
    %v3095 = vmul.f32 0.5, %v3094
    %v3096 = vsub.f32 1.5, %v3095
    %v3097 = vmul.f32 %v3092, %v3096
    %vm3098 = vweird.f32 %v3030
    %vm3099 = vweird.f32 %v3092
    %vm3100 = vmor %vm3098, %vm3099
    %v3101 = vsel %vm3100, %v3092, %v3097
    %v3102 = vrsqrt.pop %v3031
    %v3103 = vmul.f32 %v3102, %v3031
    %v3104 = vmul.f32 %v3103, %v3102
    %v3105 = vmul.f32 0.5, %v3104
    %v3106 = vsub.f32 1.5, %v3105
    %v3107 = vmul.f32 %v3102, %v3106
    %vm3108 = vweird.f32 %v3031
    %vm3109 = vweird.f32 %v3102
    %vm3110 = vmor %vm3108, %vm3109
    %v3111 = vsel %vm3110, %v3102, %v3107
    %v3112 = vmul.f32 %v3016, %v3041
    %v3113 = vmul.f32 %v3017, %v3051
    %v3114 = vmul.f32 %v3018, %v3061
    %v3115 = vmul.f32 %v3019, %v3071
    %v3116 = vmul.f32 %v3020, %v3081
    %v3117 = vmul.f32 %v3021, %v3091
    %v3118 = vmul.f32 %v3022, %v3101
    %v3119 = vmul.f32 %v3023, %v3111
    %v3121 = vperm.slane %v2918, 0
    %v3123 = vmul.f32 %v3112, %v3121
    %v3124 = vmul.f32 %v3113, %v3121
    %v3125 = vmul.f32 %v3114, %v3121
    %v3126 = vmul.f32 %v3115, %v3121
    %v3127 = vmul.f32 %v3116, %v3121
    %v3128 = vmul.f32 %v3117, %v3121
    %v3129 = vmul.f32 %v3118, %v3121
    %v3130 = vmul.f32 %v3119, %v3121
    %v3132 = vperm.slane %v2919, 0
    %v3134 = vadd.f32 %v3123, %v3132
    %v3135 = vadd.f32 %v3124, %v3132
    %v3136 = vadd.f32 %v3125, %v3132
    %v3137 = vadd.f32 %v3126, %v3132
    %v3138 = vadd.f32 %v3127, %v3132
    %v3139 = vadd.f32 %v3128, %v3132
    %v3140 = vadd.f32 %v3129, %v3132
    %v3141 = vadd.f32 %v3130, %v3132
    %v3142 = vpack.c.bf16 %v3135, %v3134
    %v3143 = vpack.c.bf16 %v3137, %v3136
    %v3144 = vpack.c.bf16 %v3139, %v3138
    %v3145 = vpack.c.bf16 %v3141, %v3140
    %s3146 = scalar_lea.vmem %s1, 48
    %v3147 = vld [vmem:[%s3146] sm:$0xff]
    %v3148 = vld [vmem:[%s3146 + $0x8] sm:$0xf]
    %v3149 = vld [vmem:[%s3146 + $0xc] sm:$0xff]
    %v3150 = vld [vmem:[%s3146 + $0x14] sm:$0xf]
    %v3151 = vld [vmem:[%s3146 + $0x18] sm:$0xff]
    %v3152 = vld [vmem:[%s3146 + $0x20] sm:$0xf]
    %v3153 = vld [vmem:[%s3146 + $0x24] sm:$0xff]
    %v3154 = vld [vmem:[%s3146 + $0x2c] sm:$0xf]
    %v3163 = vunpack.c.l.b16 %v3147
    %v3164 = vunpack.c.h.b16 %v3147
    %v3165 = vunpack.c.l.b16 %v3148
    %v3166 = vunpack.c.l.b16 %v3149
    %v3167 = vunpack.c.h.b16 %v3149
    %v3168 = vunpack.c.l.b16 %v3150
    %v3169 = vunpack.c.l.b16 %v3151
    %v3170 = vunpack.c.h.b16 %v3151
    %v3171 = vunpack.c.l.b16 %v3152
    %v3172 = vunpack.c.l.b16 %v3153
    %v3173 = vunpack.c.h.b16 %v3153
    %v3174 = vunpack.c.l.b16 %v3154
    %v3175 = vpack.c.b16 %v3166, %v3163
    %v3176 = vpack.c.b16 %v3167, %v3164
    %v3177 = vpack.c.b16 %v3168, %v3165
    %v3178 = vpack.c.b16 %v3172, %v3169
    %v3179 = vpack.c.b16 %v3173, %v3170
    %v3180 = vpack.c.b16 %v3174, %v3171
    %v3188 = vsel %vm125, %v3142, 0
    %v3191 = vsel %vm125, %v3143, 0
    %v3194 = vsel %vm125, %v3144, 0
    %v3197 = vsel %vm125, %v3145, 0
    %3199 = vmatpush.bf16.msra.mxu0 0
    %3200 = vmatpush.bf16.msra.mxu0 0
    %3201 = vmatpush.bf16.msra.mxu0 0
    %3202 = vmatpush.bf16.msra.mxu0 0
    %3203 = vmatpush.bf16.msra.mxu0 0
    %3204 = vmatpush.bf16.msra.mxu0 0
    %3205 = vmatpush.bf16.msra.mxu0 %v3178
    %3206 = vmatpush.bf16.msra.mxu0 %v3175
    %3207 = vmatmul.bf16.gmra.mxu0 %v3188
    %v3208 = vpop.f32.mrf.mxu0
    %v3209 = vadd.f32 0.0, %v3208
    %v3210 = vpop.f32.mrf.mxu0
    %v3211 = vadd.f32 0.0, %v3210
    %3212 = vmatmul.bf16.gmra.mxu0 %v3191
    %v3213 = vpop.f32.mrf.mxu0
    %v3214 = vadd.f32 0.0, %v3213
    %v3215 = vpop.f32.mrf.mxu0
    %v3216 = vadd.f32 0.0, %v3215
    %3217 = vmatmul.bf16.gmra.mxu0 %v3194
    %v3218 = vpop.f32.mrf.mxu0
    %v3219 = vadd.f32 0.0, %v3218
    %v3220 = vpop.f32.mrf.mxu0
    %v3221 = vadd.f32 0.0, %v3220
    %3222 = vmatmul.bf16.gmra.mxu0 %v3197
    %v3223 = vpop.f32.mrf.mxu0
    %v3224 = vadd.f32 0.0, %v3223
    %v3225 = vpop.f32.mrf.mxu0
    %v3226 = vadd.f32 0.0, %v3225
    %3227 = vdwg.mxu0
    %3228 = vmatpush.bf16.msra.mxu0 0
    %3229 = vmatpush.bf16.msra.mxu0 0
    %3230 = vmatpush.bf16.msra.mxu0 0
    %3231 = vmatpush.bf16.msra.mxu0 0
    %3232 = vmatpush.bf16.msra.mxu0 0
    %3233 = vmatpush.bf16.msra.mxu0 0
    %3234 = vmatpush.bf16.msra.mxu0 %v3179
    %3235 = vmatpush.bf16.msra.mxu0 %v3176
    %3236 = vmatmul.bf16.gmra.mxu0 %v3188
    %v3237 = vpop.f32.mrf.mxu0
    %v3238 = vadd.f32 0.0, %v3237
    %v3239 = vpop.f32.mrf.mxu0
    %v3240 = vadd.f32 0.0, %v3239
    %3241 = vmatmul.bf16.gmra.mxu0 %v3191
    %v3242 = vpop.f32.mrf.mxu0
    %v3243 = vadd.f32 0.0, %v3242
    %v3244 = vpop.f32.mrf.mxu0
    %v3245 = vadd.f32 0.0, %v3244
    %3246 = vmatmul.bf16.gmra.mxu0 %v3194
    %v3247 = vpop.f32.mrf.mxu0
    %v3248 = vadd.f32 0.0, %v3247
    %v3249 = vpop.f32.mrf.mxu0
    %v3250 = vadd.f32 0.0, %v3249
    %3251 = vmatmul.bf16.gmra.mxu0 %v3197
    %v3252 = vpop.f32.mrf.mxu0
    %v3253 = vadd.f32 0.0, %v3252
    %v3254 = vpop.f32.mrf.mxu0
    %v3255 = vadd.f32 0.0, %v3254
    %3256 = vdwg.mxu0
    %3257 = vmatpush.bf16.msra.mxu0 0
    %3258 = vmatpush.bf16.msra.mxu0 0
    %3259 = vmatpush.bf16.msra.mxu0 0
    %3260 = vmatpush.bf16.msra.mxu0 0
    %3261 = vmatpush.bf16.msra.mxu0 0
    %3262 = vmatpush.bf16.msra.mxu0 0
    %3263 = vmatpush.bf16.msra.mxu0 %v3180
    %3264 = vmatpush.bf16.msra.mxu0 %v3177
    %3265 = vmatmul.bf16.gmra.mxu0 %v3188
    %v3266 = vpop.f32.mrf.mxu0
    %v3267 = vadd.f32 0.0, %v3266
    %v3268 = vpop.f32.mrf.mxu0
    %v3269 = vadd.f32 0.0, %v3268
    %3270 = vmatmul.bf16.gmra.mxu0 %v3191
    %v3271 = vpop.f32.mrf.mxu0
    %v3272 = vadd.f32 0.0, %v3271
    %v3273 = vpop.f32.mrf.mxu0
    %v3274 = vadd.f32 0.0, %v3273
    %3275 = vmatmul.bf16.gmra.mxu0 %v3194
    %v3276 = vpop.f32.mrf.mxu0
    %v3277 = vadd.f32 0.0, %v3276
    %v3278 = vpop.f32.mrf.mxu0
    %v3279 = vadd.f32 0.0, %v3278
    %3280 = vmatmul.bf16.gmra.mxu0 %v3197
    %v3281 = vpop.f32.mrf.mxu0
    %v3282 = vadd.f32 0.0, %v3281
    %v3283 = vpop.f32.mrf.mxu0
    %v3284 = vadd.f32 0.0, %v3283
    %3285 = vdwg.mxu0
    %v3287 = vsel %vm125, %v3209, 0
    %v3290 = vsel %vm125, %v3238, 0
    %3292 = vmatpush.xpose.msra.mxu0 0.0
    %3293 = vmatpush.xpose.msra.mxu0 0.0
    %3294 = vmatpush.xpose.msra.mxu0 0.0
    %3295 = vmatpush.xpose.msra.mxu0 0.0
    %3296 = vmatpush.xpose.msra.mxu0 0.0
    %3297 = vmatpush.xpose.msra.mxu0 0.0
    %3298 = vmatpush.xpose.msra.mxu0 0.0
    %3299 = vmatpush.xpose.msra.mxu0 0.0
    %3300 = vmatpush.xpose.msra.mxu0 0.0
    %3301 = vmatpush.xpose.msra.mxu0 0.0
    %3302 = vmatpush.xpose.msra.mxu0 0.0
    %3303 = vmatpush.xpose.msra.mxu0 0.0
    %3304 = vmatpush.xpose.msra.mxu0 0.0
    %3305 = vmatpush.xpose.msra.mxu0 0.0
    %3306 = vmatpush.xpose.msra.mxu0 0.0
    %3307 = vmatpush.xpose.msra.mxu0 %v3290
    %3308 = vmatmul.f32.gmra.mxu0 %v3287
    %v3309 = vpop.f32.mrf.mxu0
    %v3310 = vadd.f32 0.0, %v3309
    %3311 = vdwg.mxu0
    %v3313 = vsel %vm125, %v3211, 0
    %v3316 = vsel %vm125, %v3240, 0
    %3318 = vmatpush.xpose.msra.mxu0 0.0
    %3319 = vmatpush.xpose.msra.mxu0 0.0
    %3320 = vmatpush.xpose.msra.mxu0 0.0
    %3321 = vmatpush.xpose.msra.mxu0 0.0
    %3322 = vmatpush.xpose.msra.mxu0 0.0
    %3323 = vmatpush.xpose.msra.mxu0 0.0
    %3324 = vmatpush.xpose.msra.mxu0 0.0
    %3325 = vmatpush.xpose.msra.mxu0 0.0
    %3326 = vmatpush.xpose.msra.mxu0 0.0
    %3327 = vmatpush.xpose.msra.mxu0 0.0
    %3328 = vmatpush.xpose.msra.mxu0 0.0
    %3329 = vmatpush.xpose.msra.mxu0 0.0
    %3330 = vmatpush.xpose.msra.mxu0 0.0
    %3331 = vmatpush.xpose.msra.mxu0 0.0
    %3332 = vmatpush.xpose.msra.mxu0 0.0
    %3333 = vmatpush.xpose.msra.mxu0 %v3316
    %3334 = vmatmul.f32.gmra.mxu0 %v3313
    %v3335 = vpop.f32.mrf.mxu0
    %v3336 = vadd.f32 0.0, %v3335
    %3337 = vdwg.mxu0
    %v3339 = vsel %vm125, %v3214, 0
    %v3342 = vsel %vm125, %v3243, 0
    %3344 = vmatpush.xpose.msra.mxu0 0.0
    %3345 = vmatpush.xpose.msra.mxu0 0.0
    %3346 = vmatpush.xpose.msra.mxu0 0.0
    %3347 = vmatpush.xpose.msra.mxu0 0.0
    %3348 = vmatpush.xpose.msra.mxu0 0.0
    %3349 = vmatpush.xpose.msra.mxu0 0.0
    %3350 = vmatpush.xpose.msra.mxu0 0.0
    %3351 = vmatpush.xpose.msra.mxu0 0.0
    %3352 = vmatpush.xpose.msra.mxu0 0.0
    %3353 = vmatpush.xpose.msra.mxu0 0.0
    %3354 = vmatpush.xpose.msra.mxu0 0.0
    %3355 = vmatpush.xpose.msra.mxu0 0.0
    %3356 = vmatpush.xpose.msra.mxu0 0.0
    %3357 = vmatpush.xpose.msra.mxu0 0.0
    %3358 = vmatpush.xpose.msra.mxu0 0.0
    %3359 = vmatpush.xpose.msra.mxu0 %v3342
    %3360 = vmatmul.f32.gmra.mxu0 %v3339
    %v3361 = vpop.f32.mrf.mxu0
    %v3362 = vadd.f32 0.0, %v3361
    %3363 = vdwg.mxu0
    %v3365 = vsel %vm125, %v3216, 0
    %v3368 = vsel %vm125, %v3245, 0
    %3370 = vmatpush.xpose.msra.mxu0 0.0
    %3371 = vmatpush.xpose.msra.mxu0 0.0
    %3372 = vmatpush.xpose.msra.mxu0 0.0
    %3373 = vmatpush.xpose.msra.mxu0 0.0
    %3374 = vmatpush.xpose.msra.mxu0 0.0
    %3375 = vmatpush.xpose.msra.mxu0 0.0
    %3376 = vmatpush.xpose.msra.mxu0 0.0
    %3377 = vmatpush.xpose.msra.mxu0 0.0
    %3378 = vmatpush.xpose.msra.mxu0 0.0
    %3379 = vmatpush.xpose.msra.mxu0 0.0
    %3380 = vmatpush.xpose.msra.mxu0 0.0
    %3381 = vmatpush.xpose.msra.mxu0 0.0
    %3382 = vmatpush.xpose.msra.mxu0 0.0
    %3383 = vmatpush.xpose.msra.mxu0 0.0
    %3384 = vmatpush.xpose.msra.mxu0 0.0
    %3385 = vmatpush.xpose.msra.mxu0 %v3368
    %3386 = vmatmul.f32.gmra.mxu0 %v3365
    %v3387 = vpop.f32.mrf.mxu0
    %v3388 = vadd.f32 0.0, %v3387
    %3389 = vdwg.mxu0
    %v3391 = vsel %vm125, %v3219, 0
    %v3394 = vsel %vm125, %v3248, 0
    %3396 = vmatpush.xpose.msra.mxu0 0.0
    %3397 = vmatpush.xpose.msra.mxu0 0.0
    %3398 = vmatpush.xpose.msra.mxu0 0.0
    %3399 = vmatpush.xpose.msra.mxu0 0.0
    %3400 = vmatpush.xpose.msra.mxu0 0.0
    %3401 = vmatpush.xpose.msra.mxu0 0.0
    %3402 = vmatpush.xpose.msra.mxu0 0.0
    %3403 = vmatpush.xpose.msra.mxu0 0.0
    %3404 = vmatpush.xpose.msra.mxu0 0.0
    %3405 = vmatpush.xpose.msra.mxu0 0.0
    %3406 = vmatpush.xpose.msra.mxu0 0.0
    %3407 = vmatpush.xpose.msra.mxu0 0.0
    %3408 = vmatpush.xpose.msra.mxu0 0.0
    %3409 = vmatpush.xpose.msra.mxu0 0.0
    %3410 = vmatpush.xpose.msra.mxu0 0.0
    %3411 = vmatpush.xpose.msra.mxu0 %v3394
    %3412 = vmatmul.f32.gmra.mxu0 %v3391
    %v3413 = vpop.f32.mrf.mxu0
    %v3414 = vadd.f32 0.0, %v3413
    %3415 = vdwg.mxu0
    %v3417 = vsel %vm125, %v3221, 0
    %v3420 = vsel %vm125, %v3250, 0
    %3422 = vmatpush.xpose.msra.mxu0 0.0
    %3423 = vmatpush.xpose.msra.mxu0 0.0
    %3424 = vmatpush.xpose.msra.mxu0 0.0
    %3425 = vmatpush.xpose.msra.mxu0 0.0
    %3426 = vmatpush.xpose.msra.mxu0 0.0
    %3427 = vmatpush.xpose.msra.mxu0 0.0
    %3428 = vmatpush.xpose.msra.mxu0 0.0
    %3429 = vmatpush.xpose.msra.mxu0 0.0
    %3430 = vmatpush.xpose.msra.mxu0 0.0
    %3431 = vmatpush.xpose.msra.mxu0 0.0
    %3432 = vmatpush.xpose.msra.mxu0 0.0
    %3433 = vmatpush.xpose.msra.mxu0 0.0
    %3434 = vmatpush.xpose.msra.mxu0 0.0
    %3435 = vmatpush.xpose.msra.mxu0 0.0
    %3436 = vmatpush.xpose.msra.mxu0 0.0
    %3437 = vmatpush.xpose.msra.mxu0 %v3420
    %3438 = vmatmul.f32.gmra.mxu0 %v3417
    %v3439 = vpop.f32.mrf.mxu0
    %v3440 = vadd.f32 0.0, %v3439
    %3441 = vdwg.mxu0
    %v3443 = vsel %vm125, %v3224, 0
    %v3446 = vsel %vm125, %v3253, 0
    %3448 = vmatpush.xpose.msra.mxu0 0.0
    %3449 = vmatpush.xpose.msra.mxu0 0.0
    %3450 = vmatpush.xpose.msra.mxu0 0.0
    %3451 = vmatpush.xpose.msra.mxu0 0.0
    %3452 = vmatpush.xpose.msra.mxu0 0.0
    %3453 = vmatpush.xpose.msra.mxu0 0.0
    %3454 = vmatpush.xpose.msra.mxu0 0.0
    %3455 = vmatpush.xpose.msra.mxu0 0.0
    %3456 = vmatpush.xpose.msra.mxu0 0.0
    %3457 = vmatpush.xpose.msra.mxu0 0.0
    %3458 = vmatpush.xpose.msra.mxu0 0.0
    %3459 = vmatpush.xpose.msra.mxu0 0.0
    %3460 = vmatpush.xpose.msra.mxu0 0.0
    %3461 = vmatpush.xpose.msra.mxu0 0.0
    %3462 = vmatpush.xpose.msra.mxu0 0.0
    %3463 = vmatpush.xpose.msra.mxu0 %v3446
    %3464 = vmatmul.f32.gmra.mxu0 %v3443
    %v3465 = vpop.f32.mrf.mxu0
    %v3466 = vadd.f32 0.0, %v3465
    %3467 = vdwg.mxu0
    %v3469 = vsel %vm125, %v3226, 0
    %v3472 = vsel %vm125, %v3255, 0
    %3474 = vmatpush.xpose.msra.mxu0 0.0
    %3475 = vmatpush.xpose.msra.mxu0 0.0
    %3476 = vmatpush.xpose.msra.mxu0 0.0
    %3477 = vmatpush.xpose.msra.mxu0 0.0
    %3478 = vmatpush.xpose.msra.mxu0 0.0
    %3479 = vmatpush.xpose.msra.mxu0 0.0
    %3480 = vmatpush.xpose.msra.mxu0 0.0
    %3481 = vmatpush.xpose.msra.mxu0 0.0
    %3482 = vmatpush.xpose.msra.mxu0 0.0
    %3483 = vmatpush.xpose.msra.mxu0 0.0
    %3484 = vmatpush.xpose.msra.mxu0 0.0
    %3485 = vmatpush.xpose.msra.mxu0 0.0
    %3486 = vmatpush.xpose.msra.mxu0 0.0
    %3487 = vmatpush.xpose.msra.mxu0 0.0
    %3488 = vmatpush.xpose.msra.mxu0 0.0
    %3489 = vmatpush.xpose.msra.mxu0 %v3472
    %3490 = vmatmul.f32.gmra.mxu0 %v3469
    %v3491 = vpop.f32.mrf.mxu0
    %v3492 = vadd.f32 0.0, %v3491
    %3493 = vdwg.mxu0
    %v3494 = vsel %vm433, %v3310, -inf
    %3495 = vmax.xlane.f32.xlu0 %v3494
    %v3496 = vpop.xlane.xlu0 %3495
    %v3497 = vsel %vm433, %v3336, -inf
    %3498 = vmax.xlane.f32.xlu0 %v3497
    %v3499 = vpop.xlane.xlu0 %3498
    %v3500 = vsel %vm433, %v3362, -inf
    %3501 = vmax.xlane.f32.xlu0 %v3500
    %v3502 = vpop.xlane.xlu0 %3501
    %v3503 = vsel %vm433, %v3388, -inf
    %3504 = vmax.xlane.f32.xlu0 %v3503
    %v3505 = vpop.xlane.xlu0 %3504
    %v3506 = vsel %vm433, %v3414, -inf
    %3507 = vmax.xlane.f32.xlu0 %v3506
    %v3508 = vpop.xlane.xlu0 %3507
    %v3509 = vsel %vm433, %v3440, -inf
    %3510 = vmax.xlane.f32.xlu0 %v3509
    %v3511 = vpop.xlane.xlu0 %3510
    %v3512 = vsel %vm433, %v3466, -inf
    %3513 = vmax.xlane.f32.xlu0 %v3512
    %v3514 = vpop.xlane.xlu0 %3513
    %v3515 = vsel %vm433, %v3492, -inf
    %3516 = vmax.xlane.f32.xlu0 %v3515
    %v3517 = vpop.xlane.xlu0 %3516
    %v3518 = vsub.f32 %v3310, %v3496
    %v3519 = vsub.f32 %v3336, %v3499
    %v3520 = vsub.f32 %v3362, %v3502
    %v3521 = vsub.f32 %v3388, %v3505
    %v3522 = vsub.f32 %v3414, %v3508
    %v3523 = vsub.f32 %v3440, %v3511
    %v3524 = vsub.f32 %v3466, %v3514
    %v3525 = vsub.f32 %v3492, %v3517
    %v3526 = vmul.f32 %v3518, 1.442695
    %v3527 = vpow.pop %v3526
    %v3528 = vmul.f32 %v3519, 1.442695
    %v3529 = vpow.pop %v3528
    %v3530 = vmul.f32 %v3520, 1.442695
    %v3531 = vpow.pop %v3530
    %v3532 = vmul.f32 %v3521, 1.442695
    %v3533 = vpow.pop %v3532
    %v3534 = vmul.f32 %v3522, 1.442695
    %v3535 = vpow.pop %v3534
    %v3536 = vmul.f32 %v3523, 1.442695
    %v3537 = vpow.pop %v3536
    %v3538 = vmul.f32 %v3524, 1.442695
    %v3539 = vpow.pop %v3538
    %v3540 = vmul.f32 %v3525, 1.442695
    %v3541 = vpow.pop %v3540
    %v3542 = vsel %vm433, %v3527, 0.0
    %3543 = vadd.xlane.f32.xlu0 %v3542
    %v3544 = vpop.xlane.xlu0 %3543
    %v3545 = vsel %vm433, %v3529, 0.0
    %3546 = vadd.xlane.f32.xlu0 %v3545
    %v3547 = vpop.xlane.xlu0 %3546
    %v3548 = vsel %vm433, %v3531, 0.0
    %3549 = vadd.xlane.f32.xlu0 %v3548
    %v3550 = vpop.xlane.xlu0 %3549
    %v3551 = vsel %vm433, %v3533, 0.0
    %3552 = vadd.xlane.f32.xlu0 %v3551
    %v3553 = vpop.xlane.xlu0 %3552
    %v3554 = vsel %vm433, %v3535, 0.0
    %3555 = vadd.xlane.f32.xlu0 %v3554
    %v3556 = vpop.xlane.xlu0 %3555
    %v3557 = vsel %vm433, %v3537, 0.0
    %3558 = vadd.xlane.f32.xlu0 %v3557
    %v3559 = vpop.xlane.xlu0 %3558
    %v3560 = vsel %vm433, %v3539, 0.0
    %3561 = vadd.xlane.f32.xlu0 %v3560
    %v3562 = vpop.xlane.xlu0 %3561
    %v3563 = vsel %vm433, %v3541, 0.0
    %3564 = vadd.xlane.f32.xlu0 %v3563
    %v3565 = vpop.xlane.xlu0 %3564
    %v3566 = vrcp.pop %v3544
    %v3567 = vrcp.pop %v3547
    %v3568 = vrcp.pop %v3550
    %v3569 = vrcp.pop %v3553
    %v3570 = vrcp.pop %v3556
    %v3571 = vrcp.pop %v3559
    %v3572 = vrcp.pop %v3562
    %v3573 = vrcp.pop %v3565
    %v3574 = vmul.f32 %v3527, %v3566
    %v3575 = vmul.f32 %v3529, %v3567
    %v3576 = vmul.f32 %v3531, %v3568
    %v3577 = vmul.f32 %v3533, %v3569
    %v3578 = vmul.f32 %v3535, %v3570
    %v3579 = vmul.f32 %v3537, %v3571
    %v3580 = vmul.f32 %v3539, %v3572
    %v3581 = vmul.f32 %v3541, %v3573
    %v3583 = vsel %vm433, %v3574, 0
    %3585 = vmatpush.msra.mxu0 0.0
    %3586 = vmatpush.msra.mxu0 0.0
    %3587 = vmatpush.msra.mxu0 0.0
    %3588 = vmatpush.msra.mxu0 0.0
    %3589 = vmatpush.msra.mxu0 0.0
    %3590 = vmatpush.msra.mxu0 0.0
    %3591 = vmatpush.msra.mxu0 0.0
    %3592 = vmatpush.msra.mxu0 0.0
    %3593 = vmatpush.msra.mxu0 0.0
    %3594 = vmatpush.msra.mxu0 0.0
    %3595 = vmatpush.msra.mxu0 0.0
    %3596 = vmatpush.msra.mxu0 0.0
    %3597 = vmatpush.msra.mxu0 0.0
    %3598 = vmatpush.msra.mxu0 0.0
    %3599 = vmatpush.msra.mxu0 0.0
    %3600 = vmatpush.msra.mxu0 %v3267
    %3601 = vmatmul.f32.gmra.mxu0 %v3583
    %v3602 = vpop.f32.mrf.mxu0
    %v3603 = vadd.f32 0.0, %v3602
    %3604 = vdwg.mxu0
    %v3606 = vsel %vm433, %v3575, 0
    %3608 = vmatpush.msra.mxu0 0.0
    %3609 = vmatpush.msra.mxu0 0.0
    %3610 = vmatpush.msra.mxu0 0.0
    %3611 = vmatpush.msra.mxu0 0.0
    %3612 = vmatpush.msra.mxu0 0.0
    %3613 = vmatpush.msra.mxu0 0.0
    %3614 = vmatpush.msra.mxu0 0.0
    %3615 = vmatpush.msra.mxu0 0.0
    %3616 = vmatpush.msra.mxu0 0.0
    %3617 = vmatpush.msra.mxu0 0.0
    %3618 = vmatpush.msra.mxu0 0.0
    %3619 = vmatpush.msra.mxu0 0.0
    %3620 = vmatpush.msra.mxu0 0.0
    %3621 = vmatpush.msra.mxu0 0.0
    %3622 = vmatpush.msra.mxu0 0.0
    %3623 = vmatpush.msra.mxu0 %v3269
    %3624 = vmatmul.f32.gmra.mxu0 %v3606
    %v3625 = vpop.f32.mrf.mxu0
    %v3626 = vadd.f32 0.0, %v3625
    %3627 = vdwg.mxu0
    %v3629 = vsel %vm433, %v3576, 0
    %3631 = vmatpush.msra.mxu0 0.0
    %3632 = vmatpush.msra.mxu0 0.0
    %3633 = vmatpush.msra.mxu0 0.0
    %3634 = vmatpush.msra.mxu0 0.0
    %3635 = vmatpush.msra.mxu0 0.0
    %3636 = vmatpush.msra.mxu0 0.0
    %3637 = vmatpush.msra.mxu0 0.0
    %3638 = vmatpush.msra.mxu0 0.0
    %3639 = vmatpush.msra.mxu0 0.0
    %3640 = vmatpush.msra.mxu0 0.0
    %3641 = vmatpush.msra.mxu0 0.0
    %3642 = vmatpush.msra.mxu0 0.0
    %3643 = vmatpush.msra.mxu0 0.0
    %3644 = vmatpush.msra.mxu0 0.0
    %3645 = vmatpush.msra.mxu0 0.0
    %3646 = vmatpush.msra.mxu0 %v3272
    %3647 = vmatmul.f32.gmra.mxu0 %v3629
    %v3648 = vpop.f32.mrf.mxu0
    %v3649 = vadd.f32 0.0, %v3648
    %3650 = vdwg.mxu0
    %v3652 = vsel %vm433, %v3577, 0
    %3654 = vmatpush.msra.mxu0 0.0
    %3655 = vmatpush.msra.mxu0 0.0
    %3656 = vmatpush.msra.mxu0 0.0
    %3657 = vmatpush.msra.mxu0 0.0
    %3658 = vmatpush.msra.mxu0 0.0
    %3659 = vmatpush.msra.mxu0 0.0
    %3660 = vmatpush.msra.mxu0 0.0
    %3661 = vmatpush.msra.mxu0 0.0
    %3662 = vmatpush.msra.mxu0 0.0
    %3663 = vmatpush.msra.mxu0 0.0
    %3664 = vmatpush.msra.mxu0 0.0
    %3665 = vmatpush.msra.mxu0 0.0
    %3666 = vmatpush.msra.mxu0 0.0
    %3667 = vmatpush.msra.mxu0 0.0
    %3668 = vmatpush.msra.mxu0 0.0
    %3669 = vmatpush.msra.mxu0 %v3274
    %3670 = vmatmul.f32.gmra.mxu0 %v3652
    %v3671 = vpop.f32.mrf.mxu0
    %v3672 = vadd.f32 0.0, %v3671
    %3673 = vdwg.mxu0
    %v3675 = vsel %vm433, %v3578, 0
    %3677 = vmatpush.msra.mxu0 0.0
    %3678 = vmatpush.msra.mxu0 0.0
    %3679 = vmatpush.msra.mxu0 0.0
    %3680 = vmatpush.msra.mxu0 0.0
    %3681 = vmatpush.msra.mxu0 0.0
    %3682 = vmatpush.msra.mxu0 0.0
    %3683 = vmatpush.msra.mxu0 0.0
    %3684 = vmatpush.msra.mxu0 0.0
    %3685 = vmatpush.msra.mxu0 0.0
    %3686 = vmatpush.msra.mxu0 0.0
    %3687 = vmatpush.msra.mxu0 0.0
    %3688 = vmatpush.msra.mxu0 0.0
    %3689 = vmatpush.msra.mxu0 0.0
    %3690 = vmatpush.msra.mxu0 0.0
    %3691 = vmatpush.msra.mxu0 0.0
    %3692 = vmatpush.msra.mxu0 %v3277
    %3693 = vmatmul.f32.gmra.mxu0 %v3675
    %v3694 = vpop.f32.mrf.mxu0
    %v3695 = vadd.f32 0.0, %v3694
    %3696 = vdwg.mxu0
    %v3698 = vsel %vm433, %v3579, 0
    %3700 = vmatpush.msra.mxu0 0.0
    %3701 = vmatpush.msra.mxu0 0.0
    %3702 = vmatpush.msra.mxu0 0.0
    %3703 = vmatpush.msra.mxu0 0.0
    %3704 = vmatpush.msra.mxu0 0.0
    %3705 = vmatpush.msra.mxu0 0.0
    %3706 = vmatpush.msra.mxu0 0.0
    %3707 = vmatpush.msra.mxu0 0.0
    %3708 = vmatpush.msra.mxu0 0.0
    %3709 = vmatpush.msra.mxu0 0.0
    %3710 = vmatpush.msra.mxu0 0.0
    %3711 = vmatpush.msra.mxu0 0.0
    %3712 = vmatpush.msra.mxu0 0.0
    %3713 = vmatpush.msra.mxu0 0.0
    %3714 = vmatpush.msra.mxu0 0.0
    %3715 = vmatpush.msra.mxu0 %v3279
    %3716 = vmatmul.f32.gmra.mxu0 %v3698
    %v3717 = vpop.f32.mrf.mxu0
    %v3718 = vadd.f32 0.0, %v3717
    %3719 = vdwg.mxu0
    %v3721 = vsel %vm433, %v3580, 0
    %3723 = vmatpush.msra.mxu0 0.0
    %3724 = vmatpush.msra.mxu0 0.0
    %3725 = vmatpush.msra.mxu0 0.0
    %3726 = vmatpush.msra.mxu0 0.0
    %3727 = vmatpush.msra.mxu0 0.0
    %3728 = vmatpush.msra.mxu0 0.0
    %3729 = vmatpush.msra.mxu0 0.0
    %3730 = vmatpush.msra.mxu0 0.0
    %3731 = vmatpush.msra.mxu0 0.0
    %3732 = vmatpush.msra.mxu0 0.0
    %3733 = vmatpush.msra.mxu0 0.0
    %3734 = vmatpush.msra.mxu0 0.0
    %3735 = vmatpush.msra.mxu0 0.0
    %3736 = vmatpush.msra.mxu0 0.0
    %3737 = vmatpush.msra.mxu0 0.0
    %3738 = vmatpush.msra.mxu0 %v3282
    %3739 = vmatmul.f32.gmra.mxu0 %v3721
    %v3740 = vpop.f32.mrf.mxu0
    %v3741 = vadd.f32 0.0, %v3740
    %3742 = vdwg.mxu0
    %v3744 = vsel %vm433, %v3581, 0
    %3746 = vmatpush.msra.mxu0 0.0
    %3747 = vmatpush.msra.mxu0 0.0
    %3748 = vmatpush.msra.mxu0 0.0
    %3749 = vmatpush.msra.mxu0 0.0
    %3750 = vmatpush.msra.mxu0 0.0
    %3751 = vmatpush.msra.mxu0 0.0
    %3752 = vmatpush.msra.mxu0 0.0
    %3753 = vmatpush.msra.mxu0 0.0
    %3754 = vmatpush.msra.mxu0 0.0
    %3755 = vmatpush.msra.mxu0 0.0
    %3756 = vmatpush.msra.mxu0 0.0
    %3757 = vmatpush.msra.mxu0 0.0
    %3758 = vmatpush.msra.mxu0 0.0
    %3759 = vmatpush.msra.mxu0 0.0
    %3760 = vmatpush.msra.mxu0 0.0
    %3761 = vmatpush.msra.mxu0 %v3284
    %3762 = vmatmul.f32.gmra.mxu0 %v3744
    %v3763 = vpop.f32.mrf.mxu0
    %v3764 = vadd.f32 0.0, %v3763
    %3765 = vdwg.mxu0
    %3766 = vrot.lane.b32.xlu0 %v3209, 96
    %v3767 = vpop.permute.xlu0 %3766
    %3768 = vrot.lane.b32.xlu0 %v3238, 96
    %v3769 = vpop.permute.xlu0 %3768
    %v3770 = vsel %vm125, %v3767, 0
    %v3772 = vsel %vm125, %v3769, 0
    %3774 = vmatpush.xpose.msra.mxu0 0.0
    %3775 = vmatpush.xpose.msra.mxu0 0.0
    %3776 = vmatpush.xpose.msra.mxu0 0.0
    %3777 = vmatpush.xpose.msra.mxu0 0.0
    %3778 = vmatpush.xpose.msra.mxu0 0.0
    %3779 = vmatpush.xpose.msra.mxu0 0.0
    %3780 = vmatpush.xpose.msra.mxu0 0.0
    %3781 = vmatpush.xpose.msra.mxu0 0.0
    %3782 = vmatpush.xpose.msra.mxu0 0.0
    %3783 = vmatpush.xpose.msra.mxu0 0.0
    %3784 = vmatpush.xpose.msra.mxu0 0.0
    %3785 = vmatpush.xpose.msra.mxu0 0.0
    %3786 = vmatpush.xpose.msra.mxu0 0.0
    %3787 = vmatpush.xpose.msra.mxu0 0.0
    %3788 = vmatpush.xpose.msra.mxu0 0.0
    %3789 = vmatpush.xpose.msra.mxu0 %v3772
    %3790 = vmatmul.f32.gmra.mxu0 %v3770
    %v3791 = vpop.f32.mrf.mxu0
    %v3792 = vadd.f32 0.0, %v3791
    %3793 = vdwg.mxu0
    %3794 = vrot.lane.b32.xlu0 %v3211, 96
    %v3795 = vpop.permute.xlu0 %3794
    %3796 = vrot.lane.b32.xlu0 %v3240, 96
    %v3797 = vpop.permute.xlu0 %3796
    %v3798 = vsel %vm125, %v3795, 0
    %v3800 = vsel %vm125, %v3797, 0
    %3802 = vmatpush.xpose.msra.mxu0 0.0
    %3803 = vmatpush.xpose.msra.mxu0 0.0
    %3804 = vmatpush.xpose.msra.mxu0 0.0
    %3805 = vmatpush.xpose.msra.mxu0 0.0
    %3806 = vmatpush.xpose.msra.mxu0 0.0
    %3807 = vmatpush.xpose.msra.mxu0 0.0
    %3808 = vmatpush.xpose.msra.mxu0 0.0
    %3809 = vmatpush.xpose.msra.mxu0 0.0
    %3810 = vmatpush.xpose.msra.mxu0 0.0
    %3811 = vmatpush.xpose.msra.mxu0 0.0
    %3812 = vmatpush.xpose.msra.mxu0 0.0
    %3813 = vmatpush.xpose.msra.mxu0 0.0
    %3814 = vmatpush.xpose.msra.mxu0 0.0
    %3815 = vmatpush.xpose.msra.mxu0 0.0
    %3816 = vmatpush.xpose.msra.mxu0 0.0
    %3817 = vmatpush.xpose.msra.mxu0 %v3800
    %3818 = vmatmul.f32.gmra.mxu0 %v3798
    %v3819 = vpop.f32.mrf.mxu0
    %v3820 = vadd.f32 0.0, %v3819
    %3821 = vdwg.mxu0
    %3822 = vrot.lane.b32.xlu0 %v3214, 96
    %v3823 = vpop.permute.xlu0 %3822
    %3824 = vrot.lane.b32.xlu0 %v3243, 96
    %v3825 = vpop.permute.xlu0 %3824
    %v3826 = vsel %vm125, %v3823, 0
    %v3828 = vsel %vm125, %v3825, 0
    %3830 = vmatpush.xpose.msra.mxu0 0.0
    %3831 = vmatpush.xpose.msra.mxu0 0.0
    %3832 = vmatpush.xpose.msra.mxu0 0.0
    %3833 = vmatpush.xpose.msra.mxu0 0.0
    %3834 = vmatpush.xpose.msra.mxu0 0.0
    %3835 = vmatpush.xpose.msra.mxu0 0.0
    %3836 = vmatpush.xpose.msra.mxu0 0.0
    %3837 = vmatpush.xpose.msra.mxu0 0.0
    %3838 = vmatpush.xpose.msra.mxu0 0.0
    %3839 = vmatpush.xpose.msra.mxu0 0.0
    %3840 = vmatpush.xpose.msra.mxu0 0.0
    %3841 = vmatpush.xpose.msra.mxu0 0.0
    %3842 = vmatpush.xpose.msra.mxu0 0.0
    %3843 = vmatpush.xpose.msra.mxu0 0.0
    %3844 = vmatpush.xpose.msra.mxu0 0.0
    %3845 = vmatpush.xpose.msra.mxu0 %v3828
    %3846 = vmatmul.f32.gmra.mxu0 %v3826
    %v3847 = vpop.f32.mrf.mxu0
    %v3848 = vadd.f32 0.0, %v3847
    %3849 = vdwg.mxu0
    %3850 = vrot.lane.b32.xlu0 %v3216, 96
    %v3851 = vpop.permute.xlu0 %3850
    %3852 = vrot.lane.b32.xlu0 %v3245, 96
    %v3853 = vpop.permute.xlu0 %3852
    %v3854 = vsel %vm125, %v3851, 0
    %v3856 = vsel %vm125, %v3853, 0
    %3858 = vmatpush.xpose.msra.mxu0 0.0
    %3859 = vmatpush.xpose.msra.mxu0 0.0
    %3860 = vmatpush.xpose.msra.mxu0 0.0
    %3861 = vmatpush.xpose.msra.mxu0 0.0
    %3862 = vmatpush.xpose.msra.mxu0 0.0
    %3863 = vmatpush.xpose.msra.mxu0 0.0
    %3864 = vmatpush.xpose.msra.mxu0 0.0
    %3865 = vmatpush.xpose.msra.mxu0 0.0
    %3866 = vmatpush.xpose.msra.mxu0 0.0
    %3867 = vmatpush.xpose.msra.mxu0 0.0
    %3868 = vmatpush.xpose.msra.mxu0 0.0
    %3869 = vmatpush.xpose.msra.mxu0 0.0
    %3870 = vmatpush.xpose.msra.mxu0 0.0
    %3871 = vmatpush.xpose.msra.mxu0 0.0
    %3872 = vmatpush.xpose.msra.mxu0 0.0
    %3873 = vmatpush.xpose.msra.mxu0 %v3856
    %3874 = vmatmul.f32.gmra.mxu0 %v3854
    %v3875 = vpop.f32.mrf.mxu0
    %v3876 = vadd.f32 0.0, %v3875
    %3877 = vdwg.mxu0
    %3878 = vrot.lane.b32.xlu0 %v3219, 96
    %v3879 = vpop.permute.xlu0 %3878
    %3880 = vrot.lane.b32.xlu0 %v3248, 96
    %v3881 = vpop.permute.xlu0 %3880
    %v3882 = vsel %vm125, %v3879, 0
    %v3884 = vsel %vm125, %v3881, 0
    %3886 = vmatpush.xpose.msra.mxu0 0.0
    %3887 = vmatpush.xpose.msra.mxu0 0.0
    %3888 = vmatpush.xpose.msra.mxu0 0.0
    %3889 = vmatpush.xpose.msra.mxu0 0.0
    %3890 = vmatpush.xpose.msra.mxu0 0.0
    %3891 = vmatpush.xpose.msra.mxu0 0.0
    %3892 = vmatpush.xpose.msra.mxu0 0.0
    %3893 = vmatpush.xpose.msra.mxu0 0.0
    %3894 = vmatpush.xpose.msra.mxu0 0.0
    %3895 = vmatpush.xpose.msra.mxu0 0.0
    %3896 = vmatpush.xpose.msra.mxu0 0.0
    %3897 = vmatpush.xpose.msra.mxu0 0.0
    %3898 = vmatpush.xpose.msra.mxu0 0.0
    %3899 = vmatpush.xpose.msra.mxu0 0.0
    %3900 = vmatpush.xpose.msra.mxu0 0.0
    %3901 = vmatpush.xpose.msra.mxu0 %v3884
    %3902 = vmatmul.f32.gmra.mxu0 %v3882
    %v3903 = vpop.f32.mrf.mxu0
    %v3904 = vadd.f32 0.0, %v3903
    %3905 = vdwg.mxu0
    %3906 = vrot.lane.b32.xlu0 %v3221, 96
    %v3907 = vpop.permute.xlu0 %3906
    %3908 = vrot.lane.b32.xlu0 %v3250, 96
    %v3909 = vpop.permute.xlu0 %3908
    %v3910 = vsel %vm125, %v3907, 0
    %v3912 = vsel %vm125, %v3909, 0
    %3914 = vmatpush.xpose.msra.mxu0 0.0
    %3915 = vmatpush.xpose.msra.mxu0 0.0
    %3916 = vmatpush.xpose.msra.mxu0 0.0
    %3917 = vmatpush.xpose.msra.mxu0 0.0
    %3918 = vmatpush.xpose.msra.mxu0 0.0
    %3919 = vmatpush.xpose.msra.mxu0 0.0
    %3920 = vmatpush.xpose.msra.mxu0 0.0
    %3921 = vmatpush.xpose.msra.mxu0 0.0
    %3922 = vmatpush.xpose.msra.mxu0 0.0
    %3923 = vmatpush.xpose.msra.mxu0 0.0
    %3924 = vmatpush.xpose.msra.mxu0 0.0
    %3925 = vmatpush.xpose.msra.mxu0 0.0
    %3926 = vmatpush.xpose.msra.mxu0 0.0
    %3927 = vmatpush.xpose.msra.mxu0 0.0
    %3928 = vmatpush.xpose.msra.mxu0 0.0
    %3929 = vmatpush.xpose.msra.mxu0 %v3912
    %3930 = vmatmul.f32.gmra.mxu0 %v3910
    %v3931 = vpop.f32.mrf.mxu0
    %v3932 = vadd.f32 0.0, %v3931
    %3933 = vdwg.mxu0
    %3934 = vrot.lane.b32.xlu0 %v3224, 96
    %v3935 = vpop.permute.xlu0 %3934
    %3936 = vrot.lane.b32.xlu0 %v3253, 96
    %v3937 = vpop.permute.xlu0 %3936
    %v3938 = vsel %vm125, %v3935, 0
    %v3940 = vsel %vm125, %v3937, 0
    %3942 = vmatpush.xpose.msra.mxu0 0.0
    %3943 = vmatpush.xpose.msra.mxu0 0.0
    %3944 = vmatpush.xpose.msra.mxu0 0.0
    %3945 = vmatpush.xpose.msra.mxu0 0.0
    %3946 = vmatpush.xpose.msra.mxu0 0.0
    %3947 = vmatpush.xpose.msra.mxu0 0.0
    %3948 = vmatpush.xpose.msra.mxu0 0.0
    %3949 = vmatpush.xpose.msra.mxu0 0.0
    %3950 = vmatpush.xpose.msra.mxu0 0.0
    %3951 = vmatpush.xpose.msra.mxu0 0.0
    %3952 = vmatpush.xpose.msra.mxu0 0.0
    %3953 = vmatpush.xpose.msra.mxu0 0.0
    %3954 = vmatpush.xpose.msra.mxu0 0.0
    %3955 = vmatpush.xpose.msra.mxu0 0.0
    %3956 = vmatpush.xpose.msra.mxu0 0.0
    %3957 = vmatpush.xpose.msra.mxu0 %v3940
    %3958 = vmatmul.f32.gmra.mxu0 %v3938
    %v3959 = vpop.f32.mrf.mxu0
    %v3960 = vadd.f32 0.0, %v3959
    %3961 = vdwg.mxu0
    %3962 = vrot.lane.b32.xlu0 %v3226, 96
    %v3963 = vpop.permute.xlu0 %3962
    %3964 = vrot.lane.b32.xlu0 %v3255, 96
    %v3965 = vpop.permute.xlu0 %3964
    %v3966 = vsel %vm125, %v3963, 0
    %v3968 = vsel %vm125, %v3965, 0
    %3970 = vmatpush.xpose.msra.mxu0 0.0
    %3971 = vmatpush.xpose.msra.mxu0 0.0
    %3972 = vmatpush.xpose.msra.mxu0 0.0
    %3973 = vmatpush.xpose.msra.mxu0 0.0
    %3974 = vmatpush.xpose.msra.mxu0 0.0
    %3975 = vmatpush.xpose.msra.mxu0 0.0
    %3976 = vmatpush.xpose.msra.mxu0 0.0
    %3977 = vmatpush.xpose.msra.mxu0 0.0
    %3978 = vmatpush.xpose.msra.mxu0 0.0
    %3979 = vmatpush.xpose.msra.mxu0 0.0
    %3980 = vmatpush.xpose.msra.mxu0 0.0
    %3981 = vmatpush.xpose.msra.mxu0 0.0
    %3982 = vmatpush.xpose.msra.mxu0 0.0
    %3983 = vmatpush.xpose.msra.mxu0 0.0
    %3984 = vmatpush.xpose.msra.mxu0 0.0
    %3985 = vmatpush.xpose.msra.mxu0 %v3968
    %3986 = vmatmul.f32.gmra.mxu0 %v3966
    %v3987 = vpop.f32.mrf.mxu0
    %v3988 = vadd.f32 0.0, %v3987
    %3989 = vdwg.mxu0
    %v3990 = vsel %vm433, %v3792, -inf
    %3991 = vmax.xlane.f32.xlu0 %v3990
    %v3992 = vpop.xlane.xlu0 %3991
    %v3993 = vsel %vm433, %v3820, -inf
    %3994 = vmax.xlane.f32.xlu0 %v3993
    %v3995 = vpop.xlane.xlu0 %3994
    %v3996 = vsel %vm433, %v3848, -inf
    %3997 = vmax.xlane.f32.xlu0 %v3996
    %v3998 = vpop.xlane.xlu0 %3997
    %v3999 = vsel %vm433, %v3876, -inf
    %4000 = vmax.xlane.f32.xlu0 %v3999
    %v4001 = vpop.xlane.xlu0 %4000
    %v4002 = vsel %vm433, %v3904, -inf
    %4003 = vmax.xlane.f32.xlu0 %v4002
    %v4004 = vpop.xlane.xlu0 %4003
    %v4005 = vsel %vm433, %v3932, -inf
    %4006 = vmax.xlane.f32.xlu0 %v4005
    %v4007 = vpop.xlane.xlu0 %4006
    %v4008 = vsel %vm433, %v3960, -inf
    %4009 = vmax.xlane.f32.xlu0 %v4008
    %v4010 = vpop.xlane.xlu0 %4009
    %v4011 = vsel %vm433, %v3988, -inf
    %4012 = vmax.xlane.f32.xlu0 %v4011
    %v4013 = vpop.xlane.xlu0 %4012
    %v4014 = vsub.f32 %v3792, %v3992
    %v4015 = vsub.f32 %v3820, %v3995
    %v4016 = vsub.f32 %v3848, %v3998
    %v4017 = vsub.f32 %v3876, %v4001
    %v4018 = vsub.f32 %v3904, %v4004
    %v4019 = vsub.f32 %v3932, %v4007
    %v4020 = vsub.f32 %v3960, %v4010
    %v4021 = vsub.f32 %v3988, %v4013
    %v4022 = vmul.f32 %v4014, 1.442695
    %v4023 = vpow.pop %v4022
    %v4024 = vmul.f32 %v4015, 1.442695
    %v4025 = vpow.pop %v4024
    %v4026 = vmul.f32 %v4016, 1.442695
    %v4027 = vpow.pop %v4026
    %v4028 = vmul.f32 %v4017, 1.442695
    %v4029 = vpow.pop %v4028
    %v4030 = vmul.f32 %v4018, 1.442695
    %v4031 = vpow.pop %v4030
    %v4032 = vmul.f32 %v4019, 1.442695
    %v4033 = vpow.pop %v4032
    %v4034 = vmul.f32 %v4020, 1.442695
    %v4035 = vpow.pop %v4034
    %v4036 = vmul.f32 %v4021, 1.442695
    %v4037 = vpow.pop %v4036
    %v4038 = vsel %vm433, %v4023, 0.0
    %4039 = vadd.xlane.f32.xlu0 %v4038
    %v4040 = vpop.xlane.xlu0 %4039
    %v4041 = vsel %vm433, %v4025, 0.0
    %4042 = vadd.xlane.f32.xlu0 %v4041
    %v4043 = vpop.xlane.xlu0 %4042
    %v4044 = vsel %vm433, %v4027, 0.0
    %4045 = vadd.xlane.f32.xlu0 %v4044
    %v4046 = vpop.xlane.xlu0 %4045
    %v4047 = vsel %vm433, %v4029, 0.0
    %4048 = vadd.xlane.f32.xlu0 %v4047
    %v4049 = vpop.xlane.xlu0 %4048
    %v4050 = vsel %vm433, %v4031, 0.0
    %4051 = vadd.xlane.f32.xlu0 %v4050
    %v4052 = vpop.xlane.xlu0 %4051
    %v4053 = vsel %vm433, %v4033, 0.0
    %4054 = vadd.xlane.f32.xlu0 %v4053
    %v4055 = vpop.xlane.xlu0 %4054
    %v4056 = vsel %vm433, %v4035, 0.0
    %4057 = vadd.xlane.f32.xlu0 %v4056
    %v4058 = vpop.xlane.xlu0 %4057
    %v4059 = vsel %vm433, %v4037, 0.0
    %4060 = vadd.xlane.f32.xlu0 %v4059
    %v4061 = vpop.xlane.xlu0 %4060
    %v4062 = vrcp.pop %v4040
    %v4063 = vrcp.pop %v4043
    %v4064 = vrcp.pop %v4046
    %v4065 = vrcp.pop %v4049
    %v4066 = vrcp.pop %v4052
    %v4067 = vrcp.pop %v4055
    %v4068 = vrcp.pop %v4058
    %v4069 = vrcp.pop %v4061
    %v4070 = vmul.f32 %v4023, %v4062
    %v4071 = vmul.f32 %v4025, %v4063
    %v4072 = vmul.f32 %v4027, %v4064
    %v4073 = vmul.f32 %v4029, %v4065
    %v4074 = vmul.f32 %v4031, %v4066
    %v4075 = vmul.f32 %v4033, %v4067
    %v4076 = vmul.f32 %v4035, %v4068
    %v4077 = vmul.f32 %v4037, %v4069
    %4079 = vrot.lane.b32.xlu0 %v3267, 96
    %v4080 = vpop.permute.xlu0 %4079
    %v4083 = vsel %vm433, %v4070, 0
    %4085 = vmatpush.msra.mxu0 0.0
    %4086 = vmatpush.msra.mxu0 0.0
    %4087 = vmatpush.msra.mxu0 0.0
    %4088 = vmatpush.msra.mxu0 0.0
    %4089 = vmatpush.msra.mxu0 0.0
    %4090 = vmatpush.msra.mxu0 0.0
    %4091 = vmatpush.msra.mxu0 0.0
    %4092 = vmatpush.msra.mxu0 0.0
    %4093 = vmatpush.msra.mxu0 0.0
    %4094 = vmatpush.msra.mxu0 0.0
    %4095 = vmatpush.msra.mxu0 0.0
    %4096 = vmatpush.msra.mxu0 0.0
    %4097 = vmatpush.msra.mxu0 0.0
    %4098 = vmatpush.msra.mxu0 0.0
    %4099 = vmatpush.msra.mxu0 0.0
    %4100 = vmatpush.msra.mxu0 %v4080
    %4101 = vmatmul.f32.gmra.mxu0 %v4083
    %v4102 = vpop.f32.mrf.mxu0
    %v4103 = vadd.f32 0.0, %v4102
    %4104 = vdwg.mxu0
    %4106 = vrot.lane.b32.xlu0 %v3269, 96
    %v4107 = vpop.permute.xlu0 %4106
    %v4110 = vsel %vm433, %v4071, 0
    %4112 = vmatpush.msra.mxu0 0.0
    %4113 = vmatpush.msra.mxu0 0.0
    %4114 = vmatpush.msra.mxu0 0.0
    %4115 = vmatpush.msra.mxu0 0.0
    %4116 = vmatpush.msra.mxu0 0.0
    %4117 = vmatpush.msra.mxu0 0.0
    %4118 = vmatpush.msra.mxu0 0.0
    %4119 = vmatpush.msra.mxu0 0.0
    %4120 = vmatpush.msra.mxu0 0.0
    %4121 = vmatpush.msra.mxu0 0.0
    %4122 = vmatpush.msra.mxu0 0.0
    %4123 = vmatpush.msra.mxu0 0.0
    %4124 = vmatpush.msra.mxu0 0.0
    %4125 = vmatpush.msra.mxu0 0.0
    %4126 = vmatpush.msra.mxu0 0.0
    %4127 = vmatpush.msra.mxu0 %v4107
    %4128 = vmatmul.f32.gmra.mxu0 %v4110
    %v4129 = vpop.f32.mrf.mxu0
    %v4130 = vadd.f32 0.0, %v4129
    %4131 = vdwg.mxu0
    %4133 = vrot.lane.b32.xlu0 %v3272, 96
    %v4134 = vpop.permute.xlu0 %4133
    %v4137 = vsel %vm433, %v4072, 0
    %4139 = vmatpush.msra.mxu0 0.0
    %4140 = vmatpush.msra.mxu0 0.0
    %4141 = vmatpush.msra.mxu0 0.0
    %4142 = vmatpush.msra.mxu0 0.0
    %4143 = vmatpush.msra.mxu0 0.0
    %4144 = vmatpush.msra.mxu0 0.0
    %4145 = vmatpush.msra.mxu0 0.0
    %4146 = vmatpush.msra.mxu0 0.0
    %4147 = vmatpush.msra.mxu0 0.0
    %4148 = vmatpush.msra.mxu0 0.0
    %4149 = vmatpush.msra.mxu0 0.0
    %4150 = vmatpush.msra.mxu0 0.0
    %4151 = vmatpush.msra.mxu0 0.0
    %4152 = vmatpush.msra.mxu0 0.0
    %4153 = vmatpush.msra.mxu0 0.0
    %4154 = vmatpush.msra.mxu0 %v4134
    %4155 = vmatmul.f32.gmra.mxu0 %v4137
    %v4156 = vpop.f32.mrf.mxu0
    %v4157 = vadd.f32 0.0, %v4156
    %4158 = vdwg.mxu0
    %4160 = vrot.lane.b32.xlu0 %v3274, 96
    %v4161 = vpop.permute.xlu0 %4160
    %v4164 = vsel %vm433, %v4073, 0
    %4166 = vmatpush.msra.mxu0 0.0
    %4167 = vmatpush.msra.mxu0 0.0
    %4168 = vmatpush.msra.mxu0 0.0
    %4169 = vmatpush.msra.mxu0 0.0
    %4170 = vmatpush.msra.mxu0 0.0
    %4171 = vmatpush.msra.mxu0 0.0
    %4172 = vmatpush.msra.mxu0 0.0
    %4173 = vmatpush.msra.mxu0 0.0
    %4174 = vmatpush.msra.mxu0 0.0
    %4175 = vmatpush.msra.mxu0 0.0
    %4176 = vmatpush.msra.mxu0 0.0
    %4177 = vmatpush.msra.mxu0 0.0
    %4178 = vmatpush.msra.mxu0 0.0
    %4179 = vmatpush.msra.mxu0 0.0
    %4180 = vmatpush.msra.mxu0 0.0
    %4181 = vmatpush.msra.mxu0 %v4161
    %4182 = vmatmul.f32.gmra.mxu0 %v4164
    %v4183 = vpop.f32.mrf.mxu0
    %v4184 = vadd.f32 0.0, %v4183
    %4185 = vdwg.mxu0
    %4187 = vrot.lane.b32.xlu0 %v3277, 96
    %v4188 = vpop.permute.xlu0 %4187
    %v4191 = vsel %vm433, %v4074, 0
    %4193 = vmatpush.msra.mxu0 0.0
    %4194 = vmatpush.msra.mxu0 0.0
    %4195 = vmatpush.msra.mxu0 0.0
    %4196 = vmatpush.msra.mxu0 0.0
    %4197 = vmatpush.msra.mxu0 0.0
    %4198 = vmatpush.msra.mxu0 0.0
    %4199 = vmatpush.msra.mxu0 0.0
    %4200 = vmatpush.msra.mxu0 0.0
    %4201 = vmatpush.msra.mxu0 0.0
    %4202 = vmatpush.msra.mxu0 0.0
    %4203 = vmatpush.msra.mxu0 0.0
    %4204 = vmatpush.msra.mxu0 0.0
    %4205 = vmatpush.msra.mxu0 0.0
    %4206 = vmatpush.msra.mxu0 0.0
    %4207 = vmatpush.msra.mxu0 0.0
    %4208 = vmatpush.msra.mxu0 %v4188
    %4209 = vmatmul.f32.gmra.mxu0 %v4191
    %v4210 = vpop.f32.mrf.mxu0
    %v4211 = vadd.f32 0.0, %v4210
    %4212 = vdwg.mxu0
    %4214 = vrot.lane.b32.xlu0 %v3279, 96
    %v4215 = vpop.permute.xlu0 %4214
    %v4218 = vsel %vm433, %v4075, 0
    %4220 = vmatpush.msra.mxu0 0.0
    %4221 = vmatpush.msra.mxu0 0.0
    %4222 = vmatpush.msra.mxu0 0.0
    %4223 = vmatpush.msra.mxu0 0.0
    %4224 = vmatpush.msra.mxu0 0.0
    %4225 = vmatpush.msra.mxu0 0.0
    %4226 = vmatpush.msra.mxu0 0.0
    %4227 = vmatpush.msra.mxu0 0.0
    %4228 = vmatpush.msra.mxu0 0.0
    %4229 = vmatpush.msra.mxu0 0.0
    %4230 = vmatpush.msra.mxu0 0.0
    %4231 = vmatpush.msra.mxu0 0.0
    %4232 = vmatpush.msra.mxu0 0.0
    %4233 = vmatpush.msra.mxu0 0.0
    %4234 = vmatpush.msra.mxu0 0.0
    %4235 = vmatpush.msra.mxu0 %v4215
    %4236 = vmatmul.f32.gmra.mxu0 %v4218
    %v4237 = vpop.f32.mrf.mxu0
    %v4238 = vadd.f32 0.0, %v4237
    %4239 = vdwg.mxu0
    %4241 = vrot.lane.b32.xlu0 %v3282, 96
    %v4242 = vpop.permute.xlu0 %4241
    %v4245 = vsel %vm433, %v4076, 0
    %4247 = vmatpush.msra.mxu0 0.0
    %4248 = vmatpush.msra.mxu0 0.0
    %4249 = vmatpush.msra.mxu0 0.0
    %4250 = vmatpush.msra.mxu0 0.0
    %4251 = vmatpush.msra.mxu0 0.0
    %4252 = vmatpush.msra.mxu0 0.0
    %4253 = vmatpush.msra.mxu0 0.0
    %4254 = vmatpush.msra.mxu0 0.0
    %4255 = vmatpush.msra.mxu0 0.0
    %4256 = vmatpush.msra.mxu0 0.0
    %4257 = vmatpush.msra.mxu0 0.0
    %4258 = vmatpush.msra.mxu0 0.0
    %4259 = vmatpush.msra.mxu0 0.0
    %4260 = vmatpush.msra.mxu0 0.0
    %4261 = vmatpush.msra.mxu0 0.0
    %4262 = vmatpush.msra.mxu0 %v4242
    %4263 = vmatmul.f32.gmra.mxu0 %v4245
    %v4264 = vpop.f32.mrf.mxu0
    %v4265 = vadd.f32 0.0, %v4264
    %4266 = vdwg.mxu0
    %4268 = vrot.lane.b32.xlu0 %v3284, 96
    %v4269 = vpop.permute.xlu0 %4268
    %v4272 = vsel %vm433, %v4077, 0
    %4274 = vmatpush.msra.mxu0 0.0
    %4275 = vmatpush.msra.mxu0 0.0
    %4276 = vmatpush.msra.mxu0 0.0
    %4277 = vmatpush.msra.mxu0 0.0
    %4278 = vmatpush.msra.mxu0 0.0
    %4279 = vmatpush.msra.mxu0 0.0
    %4280 = vmatpush.msra.mxu0 0.0
    %4281 = vmatpush.msra.mxu0 0.0
    %4282 = vmatpush.msra.mxu0 0.0
    %4283 = vmatpush.msra.mxu0 0.0
    %4284 = vmatpush.msra.mxu0 0.0
    %4285 = vmatpush.msra.mxu0 0.0
    %4286 = vmatpush.msra.mxu0 0.0
    %4287 = vmatpush.msra.mxu0 0.0
    %4288 = vmatpush.msra.mxu0 0.0
    %4289 = vmatpush.msra.mxu0 %v4269
    %4290 = vmatmul.f32.gmra.mxu0 %v4272
    %v4291 = vpop.f32.mrf.mxu0
    %v4292 = vadd.f32 0.0, %v4291
    %4293 = vdwg.mxu0
    %4294 = vrot.lane.b32.xlu0 %v3209, 64
    %v4295 = vpop.permute.xlu0 %4294
    %4296 = vrot.lane.b32.xlu0 %v3238, 64
    %v4297 = vpop.permute.xlu0 %4296
    %v4298 = vsel %vm125, %v4295, 0
    %v4300 = vsel %vm125, %v4297, 0
    %4302 = vmatpush.xpose.msra.mxu0 0.0
    %4303 = vmatpush.xpose.msra.mxu0 0.0
    %4304 = vmatpush.xpose.msra.mxu0 0.0
    %4305 = vmatpush.xpose.msra.mxu0 0.0
    %4306 = vmatpush.xpose.msra.mxu0 0.0
    %4307 = vmatpush.xpose.msra.mxu0 0.0
    %4308 = vmatpush.xpose.msra.mxu0 0.0
    %4309 = vmatpush.xpose.msra.mxu0 0.0
    %4310 = vmatpush.xpose.msra.mxu0 0.0
    %4311 = vmatpush.xpose.msra.mxu0 0.0
    %4312 = vmatpush.xpose.msra.mxu0 0.0
    %4313 = vmatpush.xpose.msra.mxu0 0.0
    %4314 = vmatpush.xpose.msra.mxu0 0.0
    %4315 = vmatpush.xpose.msra.mxu0 0.0
    %4316 = vmatpush.xpose.msra.mxu0 0.0
    %4317 = vmatpush.xpose.msra.mxu0 %v4300
    %4318 = vmatmul.f32.gmra.mxu0 %v4298
    %v4319 = vpop.f32.mrf.mxu0
    %v4320 = vadd.f32 0.0, %v4319
    %4321 = vdwg.mxu0
    %4322 = vrot.lane.b32.xlu0 %v3211, 64
    %v4323 = vpop.permute.xlu0 %4322
    %4324 = vrot.lane.b32.xlu0 %v3240, 64
    %v4325 = vpop.permute.xlu0 %4324
    %v4326 = vsel %vm125, %v4323, 0
    %v4328 = vsel %vm125, %v4325, 0
    %4330 = vmatpush.xpose.msra.mxu0 0.0
    %4331 = vmatpush.xpose.msra.mxu0 0.0
    %4332 = vmatpush.xpose.msra.mxu0 0.0
    %4333 = vmatpush.xpose.msra.mxu0 0.0
    %4334 = vmatpush.xpose.msra.mxu0 0.0
    %4335 = vmatpush.xpose.msra.mxu0 0.0
    %4336 = vmatpush.xpose.msra.mxu0 0.0
    %4337 = vmatpush.xpose.msra.mxu0 0.0
    %4338 = vmatpush.xpose.msra.mxu0 0.0
    %4339 = vmatpush.xpose.msra.mxu0 0.0
    %4340 = vmatpush.xpose.msra.mxu0 0.0
    %4341 = vmatpush.xpose.msra.mxu0 0.0
    %4342 = vmatpush.xpose.msra.mxu0 0.0
    %4343 = vmatpush.xpose.msra.mxu0 0.0
    %4344 = vmatpush.xpose.msra.mxu0 0.0
    %4345 = vmatpush.xpose.msra.mxu0 %v4328
    %4346 = vmatmul.f32.gmra.mxu0 %v4326
    %v4347 = vpop.f32.mrf.mxu0
    %v4348 = vadd.f32 0.0, %v4347
    %4349 = vdwg.mxu0
    %4350 = vrot.lane.b32.xlu0 %v3214, 64
    %v4351 = vpop.permute.xlu0 %4350
    %4352 = vrot.lane.b32.xlu0 %v3243, 64
    %v4353 = vpop.permute.xlu0 %4352
    %v4354 = vsel %vm125, %v4351, 0
    %v4356 = vsel %vm125, %v4353, 0
    %4358 = vmatpush.xpose.msra.mxu0 0.0
    %4359 = vmatpush.xpose.msra.mxu0 0.0
    %4360 = vmatpush.xpose.msra.mxu0 0.0
    %4361 = vmatpush.xpose.msra.mxu0 0.0
    %4362 = vmatpush.xpose.msra.mxu0 0.0
    %4363 = vmatpush.xpose.msra.mxu0 0.0
    %4364 = vmatpush.xpose.msra.mxu0 0.0
    %4365 = vmatpush.xpose.msra.mxu0 0.0
    %4366 = vmatpush.xpose.msra.mxu0 0.0
    %4367 = vmatpush.xpose.msra.mxu0 0.0
    %4368 = vmatpush.xpose.msra.mxu0 0.0
    %4369 = vmatpush.xpose.msra.mxu0 0.0
    %4370 = vmatpush.xpose.msra.mxu0 0.0
    %4371 = vmatpush.xpose.msra.mxu0 0.0
    %4372 = vmatpush.xpose.msra.mxu0 0.0
    %4373 = vmatpush.xpose.msra.mxu0 %v4356
    %4374 = vmatmul.f32.gmra.mxu0 %v4354
    %v4375 = vpop.f32.mrf.mxu0
    %v4376 = vadd.f32 0.0, %v4375
    %4377 = vdwg.mxu0
    %4378 = vrot.lane.b32.xlu0 %v3216, 64
    %v4379 = vpop.permute.xlu0 %4378
    %4380 = vrot.lane.b32.xlu0 %v3245, 64
    %v4381 = vpop.permute.xlu0 %4380
    %v4382 = vsel %vm125, %v4379, 0
    %v4384 = vsel %vm125, %v4381, 0
    %4386 = vmatpush.xpose.msra.mxu0 0.0
    %4387 = vmatpush.xpose.msra.mxu0 0.0
    %4388 = vmatpush.xpose.msra.mxu0 0.0
    %4389 = vmatpush.xpose.msra.mxu0 0.0
    %4390 = vmatpush.xpose.msra.mxu0 0.0
    %4391 = vmatpush.xpose.msra.mxu0 0.0
    %4392 = vmatpush.xpose.msra.mxu0 0.0
    %4393 = vmatpush.xpose.msra.mxu0 0.0
    %4394 = vmatpush.xpose.msra.mxu0 0.0
    %4395 = vmatpush.xpose.msra.mxu0 0.0
    %4396 = vmatpush.xpose.msra.mxu0 0.0
    %4397 = vmatpush.xpose.msra.mxu0 0.0
    %4398 = vmatpush.xpose.msra.mxu0 0.0
    %4399 = vmatpush.xpose.msra.mxu0 0.0
    %4400 = vmatpush.xpose.msra.mxu0 0.0
    %4401 = vmatpush.xpose.msra.mxu0 %v4384
    %4402 = vmatmul.f32.gmra.mxu0 %v4382
    %v4403 = vpop.f32.mrf.mxu0
    %v4404 = vadd.f32 0.0, %v4403
    %4405 = vdwg.mxu0
    %4406 = vrot.lane.b32.xlu0 %v3219, 64
    %v4407 = vpop.permute.xlu0 %4406
    %4408 = vrot.lane.b32.xlu0 %v3248, 64
    %v4409 = vpop.permute.xlu0 %4408
    %v4410 = vsel %vm125, %v4407, 0
    %v4412 = vsel %vm125, %v4409, 0
    %4414 = vmatpush.xpose.msra.mxu0 0.0
    %4415 = vmatpush.xpose.msra.mxu0 0.0
    %4416 = vmatpush.xpose.msra.mxu0 0.0
    %4417 = vmatpush.xpose.msra.mxu0 0.0
    %4418 = vmatpush.xpose.msra.mxu0 0.0
    %4419 = vmatpush.xpose.msra.mxu0 0.0
    %4420 = vmatpush.xpose.msra.mxu0 0.0
    %4421 = vmatpush.xpose.msra.mxu0 0.0
    %4422 = vmatpush.xpose.msra.mxu0 0.0
    %4423 = vmatpush.xpose.msra.mxu0 0.0
    %4424 = vmatpush.xpose.msra.mxu0 0.0
    %4425 = vmatpush.xpose.msra.mxu0 0.0
    %4426 = vmatpush.xpose.msra.mxu0 0.0
    %4427 = vmatpush.xpose.msra.mxu0 0.0
    %4428 = vmatpush.xpose.msra.mxu0 0.0
    %4429 = vmatpush.xpose.msra.mxu0 %v4412
    %4430 = vmatmul.f32.gmra.mxu0 %v4410
    %v4431 = vpop.f32.mrf.mxu0
    %v4432 = vadd.f32 0.0, %v4431
    %4433 = vdwg.mxu0
    %4434 = vrot.lane.b32.xlu0 %v3221, 64
    %v4435 = vpop.permute.xlu0 %4434
    %4436 = vrot.lane.b32.xlu0 %v3250, 64
    %v4437 = vpop.permute.xlu0 %4436
    %v4438 = vsel %vm125, %v4435, 0
    %v4440 = vsel %vm125, %v4437, 0
    %4442 = vmatpush.xpose.msra.mxu0 0.0
    %4443 = vmatpush.xpose.msra.mxu0 0.0
    %4444 = vmatpush.xpose.msra.mxu0 0.0
    %4445 = vmatpush.xpose.msra.mxu0 0.0
    %4446 = vmatpush.xpose.msra.mxu0 0.0
    %4447 = vmatpush.xpose.msra.mxu0 0.0
    %4448 = vmatpush.xpose.msra.mxu0 0.0
    %4449 = vmatpush.xpose.msra.mxu0 0.0
    %4450 = vmatpush.xpose.msra.mxu0 0.0
    %4451 = vmatpush.xpose.msra.mxu0 0.0
    %4452 = vmatpush.xpose.msra.mxu0 0.0
    %4453 = vmatpush.xpose.msra.mxu0 0.0
    %4454 = vmatpush.xpose.msra.mxu0 0.0
    %4455 = vmatpush.xpose.msra.mxu0 0.0
    %4456 = vmatpush.xpose.msra.mxu0 0.0
    %4457 = vmatpush.xpose.msra.mxu0 %v4440
    %4458 = vmatmul.f32.gmra.mxu0 %v4438
    %v4459 = vpop.f32.mrf.mxu0
    %v4460 = vadd.f32 0.0, %v4459
    %4461 = vdwg.mxu0
    %4462 = vrot.lane.b32.xlu0 %v3224, 64
    %v4463 = vpop.permute.xlu0 %4462
    %4464 = vrot.lane.b32.xlu0 %v3253, 64
    %v4465 = vpop.permute.xlu0 %4464
    %v4466 = vsel %vm125, %v4463, 0
    %v4468 = vsel %vm125, %v4465, 0
    %4470 = vmatpush.xpose.msra.mxu0 0.0
    %4471 = vmatpush.xpose.msra.mxu0 0.0
    %4472 = vmatpush.xpose.msra.mxu0 0.0
    %4473 = vmatpush.xpose.msra.mxu0 0.0
    %4474 = vmatpush.xpose.msra.mxu0 0.0
    %4475 = vmatpush.xpose.msra.mxu0 0.0
    %4476 = vmatpush.xpose.msra.mxu0 0.0
    %4477 = vmatpush.xpose.msra.mxu0 0.0
    %4478 = vmatpush.xpose.msra.mxu0 0.0
    %4479 = vmatpush.xpose.msra.mxu0 0.0
    %4480 = vmatpush.xpose.msra.mxu0 0.0
    %4481 = vmatpush.xpose.msra.mxu0 0.0
    %4482 = vmatpush.xpose.msra.mxu0 0.0
    %4483 = vmatpush.xpose.msra.mxu0 0.0
    %4484 = vmatpush.xpose.msra.mxu0 0.0
    %4485 = vmatpush.xpose.msra.mxu0 %v4468
    %4486 = vmatmul.f32.gmra.mxu0 %v4466
    %v4487 = vpop.f32.mrf.mxu0
    %v4488 = vadd.f32 0.0, %v4487
    %4489 = vdwg.mxu0
    %4490 = vrot.lane.b32.xlu0 %v3226, 64
    %v4491 = vpop.permute.xlu0 %4490
    %4492 = vrot.lane.b32.xlu0 %v3255, 64
    %v4493 = vpop.permute.xlu0 %4492
    %v4494 = vsel %vm125, %v4491, 0
    %v4496 = vsel %vm125, %v4493, 0
    %4498 = vmatpush.xpose.msra.mxu0 0.0
    %4499 = vmatpush.xpose.msra.mxu0 0.0
    %4500 = vmatpush.xpose.msra.mxu0 0.0
    %4501 = vmatpush.xpose.msra.mxu0 0.0
    %4502 = vmatpush.xpose.msra.mxu0 0.0
    %4503 = vmatpush.xpose.msra.mxu0 0.0
    %4504 = vmatpush.xpose.msra.mxu0 0.0
    %4505 = vmatpush.xpose.msra.mxu0 0.0
    %4506 = vmatpush.xpose.msra.mxu0 0.0
    %4507 = vmatpush.xpose.msra.mxu0 0.0
    %4508 = vmatpush.xpose.msra.mxu0 0.0
    %4509 = vmatpush.xpose.msra.mxu0 0.0
    %4510 = vmatpush.xpose.msra.mxu0 0.0
    %4511 = vmatpush.xpose.msra.mxu0 0.0
    %4512 = vmatpush.xpose.msra.mxu0 0.0
    %4513 = vmatpush.xpose.msra.mxu0 %v4496
    %4514 = vmatmul.f32.gmra.mxu0 %v4494
    %v4515 = vpop.f32.mrf.mxu0
    %v4516 = vadd.f32 0.0, %v4515
    %4517 = vdwg.mxu0
    %v4518 = vsel %vm433, %v4320, -inf
    %4519 = vmax.xlane.f32.xlu0 %v4518
    %v4520 = vpop.xlane.xlu0 %4519
    %v4521 = vsel %vm433, %v4348, -inf
    %4522 = vmax.xlane.f32.xlu0 %v4521
    %v4523 = vpop.xlane.xlu0 %4522
    %v4524 = vsel %vm433, %v4376, -inf
    %4525 = vmax.xlane.f32.xlu0 %v4524
    %v4526 = vpop.xlane.xlu0 %4525
    %v4527 = vsel %vm433, %v4404, -inf
    %4528 = vmax.xlane.f32.xlu0 %v4527
    %v4529 = vpop.xlane.xlu0 %4528
    %v4530 = vsel %vm433, %v4432, -inf
    %4531 = vmax.xlane.f32.xlu0 %v4530
    %v4532 = vpop.xlane.xlu0 %4531
    %v4533 = vsel %vm433, %v4460, -inf
    %4534 = vmax.xlane.f32.xlu0 %v4533
    %v4535 = vpop.xlane.xlu0 %4534
    %v4536 = vsel %vm433, %v4488, -inf
    %4537 = vmax.xlane.f32.xlu0 %v4536
    %v4538 = vpop.xlane.xlu0 %4537
    %v4539 = vsel %vm433, %v4516, -inf
    %4540 = vmax.xlane.f32.xlu0 %v4539
    %v4541 = vpop.xlane.xlu0 %4540
    %v4542 = vsub.f32 %v4320, %v4520
    %v4543 = vsub.f32 %v4348, %v4523
    %v4544 = vsub.f32 %v4376, %v4526
    %v4545 = vsub.f32 %v4404, %v4529
    %v4546 = vsub.f32 %v4432, %v4532
    %v4547 = vsub.f32 %v4460, %v4535
    %v4548 = vsub.f32 %v4488, %v4538
    %v4549 = vsub.f32 %v4516, %v4541
    %v4550 = vmul.f32 %v4542, 1.442695
    %v4551 = vpow.pop %v4550
    %v4552 = vmul.f32 %v4543, 1.442695
    %v4553 = vpow.pop %v4552
    %v4554 = vmul.f32 %v4544, 1.442695
    %v4555 = vpow.pop %v4554
    %v4556 = vmul.f32 %v4545, 1.442695
    %v4557 = vpow.pop %v4556
    %v4558 = vmul.f32 %v4546, 1.442695
    %v4559 = vpow.pop %v4558
    %v4560 = vmul.f32 %v4547, 1.442695
    %v4561 = vpow.pop %v4560
    %v4562 = vmul.f32 %v4548, 1.442695
    %v4563 = vpow.pop %v4562
    %v4564 = vmul.f32 %v4549, 1.442695
    %v4565 = vpow.pop %v4564
    %v4566 = vsel %vm433, %v4551, 0.0
    %4567 = vadd.xlane.f32.xlu0 %v4566
    %v4568 = vpop.xlane.xlu0 %4567
    %v4569 = vsel %vm433, %v4553, 0.0
    %4570 = vadd.xlane.f32.xlu0 %v4569
    %v4571 = vpop.xlane.xlu0 %4570
    %v4572 = vsel %vm433, %v4555, 0.0
    %4573 = vadd.xlane.f32.xlu0 %v4572
    %v4574 = vpop.xlane.xlu0 %4573
    %v4575 = vsel %vm433, %v4557, 0.0
    %4576 = vadd.xlane.f32.xlu0 %v4575
    %v4577 = vpop.xlane.xlu0 %4576
    %v4578 = vsel %vm433, %v4559, 0.0
    %4579 = vadd.xlane.f32.xlu0 %v4578
    %v4580 = vpop.xlane.xlu0 %4579
    %v4581 = vsel %vm433, %v4561, 0.0
    %4582 = vadd.xlane.f32.xlu0 %v4581
    %v4583 = vpop.xlane.xlu0 %4582
    %v4584 = vsel %vm433, %v4563, 0.0
    %4585 = vadd.xlane.f32.xlu0 %v4584
    %v4586 = vpop.xlane.xlu0 %4585
    %v4587 = vsel %vm433, %v4565, 0.0
    %4588 = vadd.xlane.f32.xlu0 %v4587
    %v4589 = vpop.xlane.xlu0 %4588
    %v4590 = vrcp.pop %v4568
    %v4591 = vrcp.pop %v4571
    %v4592 = vrcp.pop %v4574
    %v4593 = vrcp.pop %v4577
    %v4594 = vrcp.pop %v4580
    %v4595 = vrcp.pop %v4583
    %v4596 = vrcp.pop %v4586
    %v4597 = vrcp.pop %v4589
    %v4598 = vmul.f32 %v4551, %v4590
    %v4599 = vmul.f32 %v4553, %v4591
    %v4600 = vmul.f32 %v4555, %v4592
    %v4601 = vmul.f32 %v4557, %v4593
    %v4602 = vmul.f32 %v4559, %v4594
    %v4603 = vmul.f32 %v4561, %v4595
    %v4604 = vmul.f32 %v4563, %v4596
    %v4605 = vmul.f32 %v4565, %v4597
    %4606 = vrot.lane.b32.xlu0 %v3267, 64
    %v4607 = vpop.permute.xlu0 %4606
    %v4610 = vsel %vm433, %v4598, 0
    %4612 = vmatpush.msra.mxu0 0.0
    %4613 = vmatpush.msra.mxu0 0.0
    %4614 = vmatpush.msra.mxu0 0.0
    %4615 = vmatpush.msra.mxu0 0.0
    %4616 = vmatpush.msra.mxu0 0.0
    %4617 = vmatpush.msra.mxu0 0.0
    %4618 = vmatpush.msra.mxu0 0.0
    %4619 = vmatpush.msra.mxu0 0.0
    %4620 = vmatpush.msra.mxu0 0.0
    %4621 = vmatpush.msra.mxu0 0.0
    %4622 = vmatpush.msra.mxu0 0.0
    %4623 = vmatpush.msra.mxu0 0.0
    %4624 = vmatpush.msra.mxu0 0.0
    %4625 = vmatpush.msra.mxu0 0.0
    %4626 = vmatpush.msra.mxu0 0.0
    %4627 = vmatpush.msra.mxu0 %v4607
    %4628 = vmatmul.f32.gmra.mxu0 %v4610
    %v4629 = vpop.f32.mrf.mxu0
    %v4630 = vadd.f32 0.0, %v4629
    %4631 = vdwg.mxu0
    %4632 = vrot.lane.b32.xlu0 %v3269, 64
    %v4633 = vpop.permute.xlu0 %4632
    %v4636 = vsel %vm433, %v4599, 0
    %4638 = vmatpush.msra.mxu0 0.0
    %4639 = vmatpush.msra.mxu0 0.0
    %4640 = vmatpush.msra.mxu0 0.0
    %4641 = vmatpush.msra.mxu0 0.0
    %4642 = vmatpush.msra.mxu0 0.0
    %4643 = vmatpush.msra.mxu0 0.0
    %4644 = vmatpush.msra.mxu0 0.0
    %4645 = vmatpush.msra.mxu0 0.0
    %4646 = vmatpush.msra.mxu0 0.0
    %4647 = vmatpush.msra.mxu0 0.0
    %4648 = vmatpush.msra.mxu0 0.0
    %4649 = vmatpush.msra.mxu0 0.0
    %4650 = vmatpush.msra.mxu0 0.0
    %4651 = vmatpush.msra.mxu0 0.0
    %4652 = vmatpush.msra.mxu0 0.0
    %4653 = vmatpush.msra.mxu0 %v4633
    %4654 = vmatmul.f32.gmra.mxu0 %v4636
    %v4655 = vpop.f32.mrf.mxu0
    %v4656 = vadd.f32 0.0, %v4655
    %4657 = vdwg.mxu0
    %4658 = vrot.lane.b32.xlu0 %v3272, 64
    %v4659 = vpop.permute.xlu0 %4658
    %v4662 = vsel %vm433, %v4600, 0
    %4664 = vmatpush.msra.mxu0 0.0
    %4665 = vmatpush.msra.mxu0 0.0
    %4666 = vmatpush.msra.mxu0 0.0
    %4667 = vmatpush.msra.mxu0 0.0
    %4668 = vmatpush.msra.mxu0 0.0
    %4669 = vmatpush.msra.mxu0 0.0
    %4670 = vmatpush.msra.mxu0 0.0
    %4671 = vmatpush.msra.mxu0 0.0
    %4672 = vmatpush.msra.mxu0 0.0
    %4673 = vmatpush.msra.mxu0 0.0
    %4674 = vmatpush.msra.mxu0 0.0
    %4675 = vmatpush.msra.mxu0 0.0
    %4676 = vmatpush.msra.mxu0 0.0
    %4677 = vmatpush.msra.mxu0 0.0
    %4678 = vmatpush.msra.mxu0 0.0
    %4679 = vmatpush.msra.mxu0 %v4659
    %4680 = vmatmul.f32.gmra.mxu0 %v4662
    %v4681 = vpop.f32.mrf.mxu0
    %v4682 = vadd.f32 0.0, %v4681
    %4683 = vdwg.mxu0
    %4684 = vrot.lane.b32.xlu0 %v3274, 64
    %v4685 = vpop.permute.xlu0 %4684
    %v4688 = vsel %vm433, %v4601, 0
    %4690 = vmatpush.msra.mxu0 0.0
    %4691 = vmatpush.msra.mxu0 0.0
    %4692 = vmatpush.msra.mxu0 0.0
    %4693 = vmatpush.msra.mxu0 0.0
    %4694 = vmatpush.msra.mxu0 0.0
    %4695 = vmatpush.msra.mxu0 0.0
    %4696 = vmatpush.msra.mxu0 0.0
    %4697 = vmatpush.msra.mxu0 0.0
    %4698 = vmatpush.msra.mxu0 0.0
    %4699 = vmatpush.msra.mxu0 0.0
    %4700 = vmatpush.msra.mxu0 0.0
    %4701 = vmatpush.msra.mxu0 0.0
    %4702 = vmatpush.msra.mxu0 0.0
    %4703 = vmatpush.msra.mxu0 0.0
    %4704 = vmatpush.msra.mxu0 0.0
    %4705 = vmatpush.msra.mxu0 %v4685
    %4706 = vmatmul.f32.gmra.mxu0 %v4688
    %v4707 = vpop.f32.mrf.mxu0
    %v4708 = vadd.f32 0.0, %v4707
    %4709 = vdwg.mxu0
    %4710 = vrot.lane.b32.xlu0 %v3277, 64
    %v4711 = vpop.permute.xlu0 %4710
    %v4714 = vsel %vm433, %v4602, 0
    %4716 = vmatpush.msra.mxu0 0.0
    %4717 = vmatpush.msra.mxu0 0.0
    %4718 = vmatpush.msra.mxu0 0.0
    %4719 = vmatpush.msra.mxu0 0.0
    %4720 = vmatpush.msra.mxu0 0.0
    %4721 = vmatpush.msra.mxu0 0.0
    %4722 = vmatpush.msra.mxu0 0.0
    %4723 = vmatpush.msra.mxu0 0.0
    %4724 = vmatpush.msra.mxu0 0.0
    %4725 = vmatpush.msra.mxu0 0.0
    %4726 = vmatpush.msra.mxu0 0.0
    %4727 = vmatpush.msra.mxu0 0.0
    %4728 = vmatpush.msra.mxu0 0.0
    %4729 = vmatpush.msra.mxu0 0.0
    %4730 = vmatpush.msra.mxu0 0.0
    %4731 = vmatpush.msra.mxu0 %v4711
    %4732 = vmatmul.f32.gmra.mxu0 %v4714
    %v4733 = vpop.f32.mrf.mxu0
    %v4734 = vadd.f32 0.0, %v4733
    %4735 = vdwg.mxu0
    %4736 = vrot.lane.b32.xlu0 %v3279, 64
    %v4737 = vpop.permute.xlu0 %4736
    %v4740 = vsel %vm433, %v4603, 0
    %4742 = vmatpush.msra.mxu0 0.0
    %4743 = vmatpush.msra.mxu0 0.0
    %4744 = vmatpush.msra.mxu0 0.0
    %4745 = vmatpush.msra.mxu0 0.0
    %4746 = vmatpush.msra.mxu0 0.0
    %4747 = vmatpush.msra.mxu0 0.0
    %4748 = vmatpush.msra.mxu0 0.0
    %4749 = vmatpush.msra.mxu0 0.0
    %4750 = vmatpush.msra.mxu0 0.0
    %4751 = vmatpush.msra.mxu0 0.0
    %4752 = vmatpush.msra.mxu0 0.0
    %4753 = vmatpush.msra.mxu0 0.0
    %4754 = vmatpush.msra.mxu0 0.0
    %4755 = vmatpush.msra.mxu0 0.0
    %4756 = vmatpush.msra.mxu0 0.0
    %4757 = vmatpush.msra.mxu0 %v4737
    %4758 = vmatmul.f32.gmra.mxu0 %v4740
    %v4759 = vpop.f32.mrf.mxu0
    %v4760 = vadd.f32 0.0, %v4759
    %4761 = vdwg.mxu0
    %4762 = vrot.lane.b32.xlu0 %v3282, 64
    %v4763 = vpop.permute.xlu0 %4762
    %v4766 = vsel %vm433, %v4604, 0
    %4768 = vmatpush.msra.mxu0 0.0
    %4769 = vmatpush.msra.mxu0 0.0
    %4770 = vmatpush.msra.mxu0 0.0
    %4771 = vmatpush.msra.mxu0 0.0
    %4772 = vmatpush.msra.mxu0 0.0
    %4773 = vmatpush.msra.mxu0 0.0
    %4774 = vmatpush.msra.mxu0 0.0
    %4775 = vmatpush.msra.mxu0 0.0
    %4776 = vmatpush.msra.mxu0 0.0
    %4777 = vmatpush.msra.mxu0 0.0
    %4778 = vmatpush.msra.mxu0 0.0
    %4779 = vmatpush.msra.mxu0 0.0
    %4780 = vmatpush.msra.mxu0 0.0
    %4781 = vmatpush.msra.mxu0 0.0
    %4782 = vmatpush.msra.mxu0 0.0
    %4783 = vmatpush.msra.mxu0 %v4763
    %4784 = vmatmul.f32.gmra.mxu0 %v4766
    %v4785 = vpop.f32.mrf.mxu0
    %v4786 = vadd.f32 0.0, %v4785
    %4787 = vdwg.mxu0
    %4788 = vrot.lane.b32.xlu0 %v3284, 64
    %v4789 = vpop.permute.xlu0 %4788
    %v4792 = vsel %vm433, %v4605, 0
    %4794 = vmatpush.msra.mxu0 0.0
    %4795 = vmatpush.msra.mxu0 0.0
    %4796 = vmatpush.msra.mxu0 0.0
    %4797 = vmatpush.msra.mxu0 0.0
    %4798 = vmatpush.msra.mxu0 0.0
    %4799 = vmatpush.msra.mxu0 0.0
    %4800 = vmatpush.msra.mxu0 0.0
    %4801 = vmatpush.msra.mxu0 0.0
    %4802 = vmatpush.msra.mxu0 0.0
    %4803 = vmatpush.msra.mxu0 0.0
    %4804 = vmatpush.msra.mxu0 0.0
    %4805 = vmatpush.msra.mxu0 0.0
    %4806 = vmatpush.msra.mxu0 0.0
    %4807 = vmatpush.msra.mxu0 0.0
    %4808 = vmatpush.msra.mxu0 0.0
    %4809 = vmatpush.msra.mxu0 %v4789
    %4810 = vmatmul.f32.gmra.mxu0 %v4792
    %v4811 = vpop.f32.mrf.mxu0
    %v4812 = vadd.f32 0.0, %v4811
    %4813 = vdwg.mxu0
    %4814 = vrot.lane.b32.xlu0 %v3209, 32
    %v4815 = vpop.permute.xlu0 %4814
    %4816 = vrot.lane.b32.xlu0 %v3238, 32
    %v4817 = vpop.permute.xlu0 %4816
    %v4818 = vsel %vm125, %v4815, 0
    %v4820 = vsel %vm125, %v4817, 0
    %4822 = vmatpush.xpose.msra.mxu0 0.0
    %4823 = vmatpush.xpose.msra.mxu0 0.0
    %4824 = vmatpush.xpose.msra.mxu0 0.0
    %4825 = vmatpush.xpose.msra.mxu0 0.0
    %4826 = vmatpush.xpose.msra.mxu0 0.0
    %4827 = vmatpush.xpose.msra.mxu0 0.0
    %4828 = vmatpush.xpose.msra.mxu0 0.0
    %4829 = vmatpush.xpose.msra.mxu0 0.0
    %4830 = vmatpush.xpose.msra.mxu0 0.0
    %4831 = vmatpush.xpose.msra.mxu0 0.0
    %4832 = vmatpush.xpose.msra.mxu0 0.0
    %4833 = vmatpush.xpose.msra.mxu0 0.0
    %4834 = vmatpush.xpose.msra.mxu0 0.0
    %4835 = vmatpush.xpose.msra.mxu0 0.0
    %4836 = vmatpush.xpose.msra.mxu0 0.0
    %4837 = vmatpush.xpose.msra.mxu0 %v4820
    %4838 = vmatmul.f32.gmra.mxu0 %v4818
    %v4839 = vpop.f32.mrf.mxu0
    %v4840 = vadd.f32 0.0, %v4839
    %4841 = vdwg.mxu0
    %4842 = vrot.lane.b32.xlu0 %v3211, 32
    %v4843 = vpop.permute.xlu0 %4842
    %4844 = vrot.lane.b32.xlu0 %v3240, 32
    %v4845 = vpop.permute.xlu0 %4844
    %v4846 = vsel %vm125, %v4843, 0
    %v4848 = vsel %vm125, %v4845, 0
    %4850 = vmatpush.xpose.msra.mxu0 0.0
    %4851 = vmatpush.xpose.msra.mxu0 0.0
    %4852 = vmatpush.xpose.msra.mxu0 0.0
    %4853 = vmatpush.xpose.msra.mxu0 0.0
    %4854 = vmatpush.xpose.msra.mxu0 0.0
    %4855 = vmatpush.xpose.msra.mxu0 0.0
    %4856 = vmatpush.xpose.msra.mxu0 0.0
    %4857 = vmatpush.xpose.msra.mxu0 0.0
    %4858 = vmatpush.xpose.msra.mxu0 0.0
    %4859 = vmatpush.xpose.msra.mxu0 0.0
    %4860 = vmatpush.xpose.msra.mxu0 0.0
    %4861 = vmatpush.xpose.msra.mxu0 0.0
    %4862 = vmatpush.xpose.msra.mxu0 0.0
    %4863 = vmatpush.xpose.msra.mxu0 0.0
    %4864 = vmatpush.xpose.msra.mxu0 0.0
    %4865 = vmatpush.xpose.msra.mxu0 %v4848
    %4866 = vmatmul.f32.gmra.mxu0 %v4846
    %v4867 = vpop.f32.mrf.mxu0
    %v4868 = vadd.f32 0.0, %v4867
    %4869 = vdwg.mxu0
    %4870 = vrot.lane.b32.xlu0 %v3214, 32
    %v4871 = vpop.permute.xlu0 %4870
    %4872 = vrot.lane.b32.xlu0 %v3243, 32
    %v4873 = vpop.permute.xlu0 %4872
    %v4874 = vsel %vm125, %v4871, 0
    %v4876 = vsel %vm125, %v4873, 0
    %4878 = vmatpush.xpose.msra.mxu0 0.0
    %4879 = vmatpush.xpose.msra.mxu0 0.0
    %4880 = vmatpush.xpose.msra.mxu0 0.0
    %4881 = vmatpush.xpose.msra.mxu0 0.0
    %4882 = vmatpush.xpose.msra.mxu0 0.0
    %4883 = vmatpush.xpose.msra.mxu0 0.0
    %4884 = vmatpush.xpose.msra.mxu0 0.0
    %4885 = vmatpush.xpose.msra.mxu0 0.0
    %4886 = vmatpush.xpose.msra.mxu0 0.0
    %4887 = vmatpush.xpose.msra.mxu0 0.0
    %4888 = vmatpush.xpose.msra.mxu0 0.0
    %4889 = vmatpush.xpose.msra.mxu0 0.0
    %4890 = vmatpush.xpose.msra.mxu0 0.0
    %4891 = vmatpush.xpose.msra.mxu0 0.0
    %4892 = vmatpush.xpose.msra.mxu0 0.0
    %4893 = vmatpush.xpose.msra.mxu0 %v4876
    %4894 = vmatmul.f32.gmra.mxu0 %v4874
    %v4895 = vpop.f32.mrf.mxu0
    %v4896 = vadd.f32 0.0, %v4895
    %4897 = vdwg.mxu0
    %4898 = vrot.lane.b32.xlu0 %v3216, 32
    %v4899 = vpop.permute.xlu0 %4898
    %4900 = vrot.lane.b32.xlu0 %v3245, 32
    %v4901 = vpop.permute.xlu0 %4900
    %v4902 = vsel %vm125, %v4899, 0
    %v4904 = vsel %vm125, %v4901, 0
    %4906 = vmatpush.xpose.msra.mxu0 0.0
    %4907 = vmatpush.xpose.msra.mxu0 0.0
    %4908 = vmatpush.xpose.msra.mxu0 0.0
    %4909 = vmatpush.xpose.msra.mxu0 0.0
    %4910 = vmatpush.xpose.msra.mxu0 0.0
    %4911 = vmatpush.xpose.msra.mxu0 0.0
    %4912 = vmatpush.xpose.msra.mxu0 0.0
    %4913 = vmatpush.xpose.msra.mxu0 0.0
    %4914 = vmatpush.xpose.msra.mxu0 0.0
    %4915 = vmatpush.xpose.msra.mxu0 0.0
    %4916 = vmatpush.xpose.msra.mxu0 0.0
    %4917 = vmatpush.xpose.msra.mxu0 0.0
    %4918 = vmatpush.xpose.msra.mxu0 0.0
    %4919 = vmatpush.xpose.msra.mxu0 0.0
    %4920 = vmatpush.xpose.msra.mxu0 0.0
    %4921 = vmatpush.xpose.msra.mxu0 %v4904
    %4922 = vmatmul.f32.gmra.mxu0 %v4902
    %v4923 = vpop.f32.mrf.mxu0
    %v4924 = vadd.f32 0.0, %v4923
    %4925 = vdwg.mxu0
    %4926 = vrot.lane.b32.xlu0 %v3219, 32
    %v4927 = vpop.permute.xlu0 %4926
    %4928 = vrot.lane.b32.xlu0 %v3248, 32
    %v4929 = vpop.permute.xlu0 %4928
    %v4930 = vsel %vm125, %v4927, 0
    %v4932 = vsel %vm125, %v4929, 0
    %4934 = vmatpush.xpose.msra.mxu0 0.0
    %4935 = vmatpush.xpose.msra.mxu0 0.0
    %4936 = vmatpush.xpose.msra.mxu0 0.0
    %4937 = vmatpush.xpose.msra.mxu0 0.0
    %4938 = vmatpush.xpose.msra.mxu0 0.0
    %4939 = vmatpush.xpose.msra.mxu0 0.0
    %4940 = vmatpush.xpose.msra.mxu0 0.0
    %4941 = vmatpush.xpose.msra.mxu0 0.0
    %4942 = vmatpush.xpose.msra.mxu0 0.0
    %4943 = vmatpush.xpose.msra.mxu0 0.0
    %4944 = vmatpush.xpose.msra.mxu0 0.0
    %4945 = vmatpush.xpose.msra.mxu0 0.0
    %4946 = vmatpush.xpose.msra.mxu0 0.0
    %4947 = vmatpush.xpose.msra.mxu0 0.0
    %4948 = vmatpush.xpose.msra.mxu0 0.0
    %4949 = vmatpush.xpose.msra.mxu0 %v4932
    %4950 = vmatmul.f32.gmra.mxu0 %v4930
    %v4951 = vpop.f32.mrf.mxu0
    %v4952 = vadd.f32 0.0, %v4951
    %4953 = vdwg.mxu0
    %4954 = vrot.lane.b32.xlu0 %v3221, 32
    %v4955 = vpop.permute.xlu0 %4954
    %4956 = vrot.lane.b32.xlu0 %v3250, 32
    %v4957 = vpop.permute.xlu0 %4956
    %v4958 = vsel %vm125, %v4955, 0
    %v4960 = vsel %vm125, %v4957, 0
    %4962 = vmatpush.xpose.msra.mxu0 0.0
    %4963 = vmatpush.xpose.msra.mxu0 0.0
    %4964 = vmatpush.xpose.msra.mxu0 0.0
    %4965 = vmatpush.xpose.msra.mxu0 0.0
    %4966 = vmatpush.xpose.msra.mxu0 0.0
    %4967 = vmatpush.xpose.msra.mxu0 0.0
    %4968 = vmatpush.xpose.msra.mxu0 0.0
    %4969 = vmatpush.xpose.msra.mxu0 0.0
    %4970 = vmatpush.xpose.msra.mxu0 0.0
    %4971 = vmatpush.xpose.msra.mxu0 0.0
    %4972 = vmatpush.xpose.msra.mxu0 0.0
    %4973 = vmatpush.xpose.msra.mxu0 0.0
    %4974 = vmatpush.xpose.msra.mxu0 0.0
    %4975 = vmatpush.xpose.msra.mxu0 0.0
    %4976 = vmatpush.xpose.msra.mxu0 0.0
    %4977 = vmatpush.xpose.msra.mxu0 %v4960
    %4978 = vmatmul.f32.gmra.mxu0 %v4958
    %v4979 = vpop.f32.mrf.mxu0
    %v4980 = vadd.f32 0.0, %v4979
    %4981 = vdwg.mxu0
    %4982 = vrot.lane.b32.xlu0 %v3224, 32
    %v4983 = vpop.permute.xlu0 %4982
    %4984 = vrot.lane.b32.xlu0 %v3253, 32
    %v4985 = vpop.permute.xlu0 %4984
    %v4986 = vsel %vm125, %v4983, 0
    %v4988 = vsel %vm125, %v4985, 0
    %4990 = vmatpush.xpose.msra.mxu0 0.0
    %4991 = vmatpush.xpose.msra.mxu0 0.0
    %4992 = vmatpush.xpose.msra.mxu0 0.0
    %4993 = vmatpush.xpose.msra.mxu0 0.0
    %4994 = vmatpush.xpose.msra.mxu0 0.0
    %4995 = vmatpush.xpose.msra.mxu0 0.0
    %4996 = vmatpush.xpose.msra.mxu0 0.0
    %4997 = vmatpush.xpose.msra.mxu0 0.0
    %4998 = vmatpush.xpose.msra.mxu0 0.0
    %4999 = vmatpush.xpose.msra.mxu0 0.0
    %5000 = vmatpush.xpose.msra.mxu0 0.0
    %5001 = vmatpush.xpose.msra.mxu0 0.0
    %5002 = vmatpush.xpose.msra.mxu0 0.0
    %5003 = vmatpush.xpose.msra.mxu0 0.0
    %5004 = vmatpush.xpose.msra.mxu0 0.0
    %5005 = vmatpush.xpose.msra.mxu0 %v4988
    %5006 = vmatmul.f32.gmra.mxu0 %v4986
    %v5007 = vpop.f32.mrf.mxu0
    %v5008 = vadd.f32 0.0, %v5007
    %5009 = vdwg.mxu0
    %5010 = vrot.lane.b32.xlu0 %v3226, 32
    %v5011 = vpop.permute.xlu0 %5010
    %5012 = vrot.lane.b32.xlu0 %v3255, 32
    %v5013 = vpop.permute.xlu0 %5012
    %v5014 = vsel %vm125, %v5011, 0
    %v5016 = vsel %vm125, %v5013, 0
    %5018 = vmatpush.xpose.msra.mxu0 0.0
    %5019 = vmatpush.xpose.msra.mxu0 0.0
    %5020 = vmatpush.xpose.msra.mxu0 0.0
    %5021 = vmatpush.xpose.msra.mxu0 0.0
    %5022 = vmatpush.xpose.msra.mxu0 0.0
    %5023 = vmatpush.xpose.msra.mxu0 0.0
    %5024 = vmatpush.xpose.msra.mxu0 0.0
    %5025 = vmatpush.xpose.msra.mxu0 0.0
    %5026 = vmatpush.xpose.msra.mxu0 0.0
    %5027 = vmatpush.xpose.msra.mxu0 0.0
    %5028 = vmatpush.xpose.msra.mxu0 0.0
    %5029 = vmatpush.xpose.msra.mxu0 0.0
    %5030 = vmatpush.xpose.msra.mxu0 0.0
    %5031 = vmatpush.xpose.msra.mxu0 0.0
    %5032 = vmatpush.xpose.msra.mxu0 0.0
    %5033 = vmatpush.xpose.msra.mxu0 %v5016
    %5034 = vmatmul.f32.gmra.mxu0 %v5014
    %v5035 = vpop.f32.mrf.mxu0
    %v5036 = vadd.f32 0.0, %v5035
    %5037 = vdwg.mxu0
    %v5038 = vsel %vm433, %v4840, -inf
    %5039 = vmax.xlane.f32.xlu0 %v5038
    %v5040 = vpop.xlane.xlu0 %5039
    %v5041 = vsel %vm433, %v4868, -inf
    %5042 = vmax.xlane.f32.xlu0 %v5041
    %v5043 = vpop.xlane.xlu0 %5042
    %v5044 = vsel %vm433, %v4896, -inf
    %5045 = vmax.xlane.f32.xlu0 %v5044
    %v5046 = vpop.xlane.xlu0 %5045
    %v5047 = vsel %vm433, %v4924, -inf
    %5048 = vmax.xlane.f32.xlu0 %v5047
    %v5049 = vpop.xlane.xlu0 %5048
    %v5050 = vsel %vm433, %v4952, -inf
    %5051 = vmax.xlane.f32.xlu0 %v5050
    %v5052 = vpop.xlane.xlu0 %5051
    %v5053 = vsel %vm433, %v4980, -inf
    %5054 = vmax.xlane.f32.xlu0 %v5053
    %v5055 = vpop.xlane.xlu0 %5054
    %v5056 = vsel %vm433, %v5008, -inf
    %5057 = vmax.xlane.f32.xlu0 %v5056
    %v5058 = vpop.xlane.xlu0 %5057
    %v5059 = vsel %vm433, %v5036, -inf
    %5060 = vmax.xlane.f32.xlu0 %v5059
    %v5061 = vpop.xlane.xlu0 %5060
    %v5062 = vsub.f32 %v4840, %v5040
    %v5063 = vsub.f32 %v4868, %v5043
    %v5064 = vsub.f32 %v4896, %v5046
    %v5065 = vsub.f32 %v4924, %v5049
    %v5066 = vsub.f32 %v4952, %v5052
    %v5067 = vsub.f32 %v4980, %v5055
    %v5068 = vsub.f32 %v5008, %v5058
    %v5069 = vsub.f32 %v5036, %v5061
    %v5070 = vmul.f32 %v5062, 1.442695
    %v5071 = vpow.pop %v5070
    %v5072 = vmul.f32 %v5063, 1.442695
    %v5073 = vpow.pop %v5072
    %v5074 = vmul.f32 %v5064, 1.442695
    %v5075 = vpow.pop %v5074
    %v5076 = vmul.f32 %v5065, 1.442695
    %v5077 = vpow.pop %v5076
    %v5078 = vmul.f32 %v5066, 1.442695
    %v5079 = vpow.pop %v5078
    %v5080 = vmul.f32 %v5067, 1.442695
    %v5081 = vpow.pop %v5080
    %v5082 = vmul.f32 %v5068, 1.442695
    %v5083 = vpow.pop %v5082
    %v5084 = vmul.f32 %v5069, 1.442695
    %v5085 = vpow.pop %v5084
    %v5086 = vsel %vm433, %v5071, 0.0
    %5087 = vadd.xlane.f32.xlu0 %v5086
    %v5088 = vpop.xlane.xlu0 %5087
    %v5089 = vsel %vm433, %v5073, 0.0
    %5090 = vadd.xlane.f32.xlu0 %v5089
    %v5091 = vpop.xlane.xlu0 %5090
    %v5092 = vsel %vm433, %v5075, 0.0
    %5093 = vadd.xlane.f32.xlu0 %v5092
    %v5094 = vpop.xlane.xlu0 %5093
    %v5095 = vsel %vm433, %v5077, 0.0
    %5096 = vadd.xlane.f32.xlu0 %v5095
    %v5097 = vpop.xlane.xlu0 %5096
    %v5098 = vsel %vm433, %v5079, 0.0
    %5099 = vadd.xlane.f32.xlu0 %v5098
    %v5100 = vpop.xlane.xlu0 %5099
    %v5101 = vsel %vm433, %v5081, 0.0
    %5102 = vadd.xlane.f32.xlu0 %v5101
    %v5103 = vpop.xlane.xlu0 %5102
    %v5104 = vsel %vm433, %v5083, 0.0
    %5105 = vadd.xlane.f32.xlu0 %v5104
    %v5106 = vpop.xlane.xlu0 %5105
    %v5107 = vsel %vm433, %v5085, 0.0
    %5108 = vadd.xlane.f32.xlu0 %v5107
    %v5109 = vpop.xlane.xlu0 %5108
    %v5110 = vrcp.pop %v5088
    %v5111 = vrcp.pop %v5091
    %v5112 = vrcp.pop %v5094
    %v5113 = vrcp.pop %v5097
    %v5114 = vrcp.pop %v5100
    %v5115 = vrcp.pop %v5103
    %v5116 = vrcp.pop %v5106
    %v5117 = vrcp.pop %v5109
    %v5118 = vmul.f32 %v5071, %v5110
    %v5119 = vmul.f32 %v5073, %v5111
    %v5120 = vmul.f32 %v5075, %v5112
    %v5121 = vmul.f32 %v5077, %v5113
    %v5122 = vmul.f32 %v5079, %v5114
    %v5123 = vmul.f32 %v5081, %v5115
    %v5124 = vmul.f32 %v5083, %v5116
    %v5125 = vmul.f32 %v5085, %v5117
    %5126 = vrot.lane.b32.xlu0 %v3267, 32
    %v5127 = vpop.permute.xlu0 %5126
    %v5130 = vsel %vm433, %v5118, 0
    %5132 = vmatpush.msra.mxu0 0.0
    %5133 = vmatpush.msra.mxu0 0.0
    %5134 = vmatpush.msra.mxu0 0.0
    %5135 = vmatpush.msra.mxu0 0.0
    %5136 = vmatpush.msra.mxu0 0.0
    %5137 = vmatpush.msra.mxu0 0.0
    %5138 = vmatpush.msra.mxu0 0.0
    %5139 = vmatpush.msra.mxu0 0.0
    %5140 = vmatpush.msra.mxu0 0.0
    %5141 = vmatpush.msra.mxu0 0.0
    %5142 = vmatpush.msra.mxu0 0.0
    %5143 = vmatpush.msra.mxu0 0.0
    %5144 = vmatpush.msra.mxu0 0.0
    %5145 = vmatpush.msra.mxu0 0.0
    %5146 = vmatpush.msra.mxu0 0.0
    %5147 = vmatpush.msra.mxu0 %v5127
    %5148 = vmatmul.f32.gmra.mxu0 %v5130
    %v5149 = vpop.f32.mrf.mxu0
    %v5150 = vadd.f32 0.0, %v5149
    %5151 = vdwg.mxu0
    %5152 = vrot.lane.b32.xlu0 %v3269, 32
    %v5153 = vpop.permute.xlu0 %5152
    %v5156 = vsel %vm433, %v5119, 0
    %5158 = vmatpush.msra.mxu0 0.0
    %5159 = vmatpush.msra.mxu0 0.0
    %5160 = vmatpush.msra.mxu0 0.0
    %5161 = vmatpush.msra.mxu0 0.0
    %5162 = vmatpush.msra.mxu0 0.0
    %5163 = vmatpush.msra.mxu0 0.0
    %5164 = vmatpush.msra.mxu0 0.0
    %5165 = vmatpush.msra.mxu0 0.0
    %5166 = vmatpush.msra.mxu0 0.0
    %5167 = vmatpush.msra.mxu0 0.0
    %5168 = vmatpush.msra.mxu0 0.0
    %5169 = vmatpush.msra.mxu0 0.0
    %5170 = vmatpush.msra.mxu0 0.0
    %5171 = vmatpush.msra.mxu0 0.0
    %5172 = vmatpush.msra.mxu0 0.0
    %5173 = vmatpush.msra.mxu0 %v5153
    %5174 = vmatmul.f32.gmra.mxu0 %v5156
    %v5175 = vpop.f32.mrf.mxu0
    %v5176 = vadd.f32 0.0, %v5175
    %5177 = vdwg.mxu0
    %5178 = vrot.lane.b32.xlu0 %v3272, 32
    %v5179 = vpop.permute.xlu0 %5178
    %v5182 = vsel %vm433, %v5120, 0
    %5184 = vmatpush.msra.mxu0 0.0
    %5185 = vmatpush.msra.mxu0 0.0
    %5186 = vmatpush.msra.mxu0 0.0
    %5187 = vmatpush.msra.mxu0 0.0
    %5188 = vmatpush.msra.mxu0 0.0
    %5189 = vmatpush.msra.mxu0 0.0
    %5190 = vmatpush.msra.mxu0 0.0
    %5191 = vmatpush.msra.mxu0 0.0
    %5192 = vmatpush.msra.mxu0 0.0
    %5193 = vmatpush.msra.mxu0 0.0
    %5194 = vmatpush.msra.mxu0 0.0
    %5195 = vmatpush.msra.mxu0 0.0
    %5196 = vmatpush.msra.mxu0 0.0
    %5197 = vmatpush.msra.mxu0 0.0
    %5198 = vmatpush.msra.mxu0 0.0
    %5199 = vmatpush.msra.mxu0 %v5179
    %5200 = vmatmul.f32.gmra.mxu0 %v5182
    %v5201 = vpop.f32.mrf.mxu0
    %v5202 = vadd.f32 0.0, %v5201
    %5203 = vdwg.mxu0
    %5204 = vrot.lane.b32.xlu0 %v3274, 32
    %v5205 = vpop.permute.xlu0 %5204
    %v5208 = vsel %vm433, %v5121, 0
    %5210 = vmatpush.msra.mxu0 0.0
    %5211 = vmatpush.msra.mxu0 0.0
    %5212 = vmatpush.msra.mxu0 0.0
    %5213 = vmatpush.msra.mxu0 0.0
    %5214 = vmatpush.msra.mxu0 0.0
    %5215 = vmatpush.msra.mxu0 0.0
    %5216 = vmatpush.msra.mxu0 0.0
    %5217 = vmatpush.msra.mxu0 0.0
    %5218 = vmatpush.msra.mxu0 0.0
    %5219 = vmatpush.msra.mxu0 0.0
    %5220 = vmatpush.msra.mxu0 0.0
    %5221 = vmatpush.msra.mxu0 0.0
    %5222 = vmatpush.msra.mxu0 0.0
    %5223 = vmatpush.msra.mxu0 0.0
    %5224 = vmatpush.msra.mxu0 0.0
    %5225 = vmatpush.msra.mxu0 %v5205
    %5226 = vmatmul.f32.gmra.mxu0 %v5208
    %v5227 = vpop.f32.mrf.mxu0
    %v5228 = vadd.f32 0.0, %v5227
    %5229 = vdwg.mxu0
    %5230 = vrot.lane.b32.xlu0 %v3277, 32
    %v5231 = vpop.permute.xlu0 %5230
    %v5234 = vsel %vm433, %v5122, 0
    %5236 = vmatpush.msra.mxu0 0.0
    %5237 = vmatpush.msra.mxu0 0.0
    %5238 = vmatpush.msra.mxu0 0.0
    %5239 = vmatpush.msra.mxu0 0.0
    %5240 = vmatpush.msra.mxu0 0.0
    %5241 = vmatpush.msra.mxu0 0.0
    %5242 = vmatpush.msra.mxu0 0.0
    %5243 = vmatpush.msra.mxu0 0.0
    %5244 = vmatpush.msra.mxu0 0.0
    %5245 = vmatpush.msra.mxu0 0.0
    %5246 = vmatpush.msra.mxu0 0.0
    %5247 = vmatpush.msra.mxu0 0.0
    %5248 = vmatpush.msra.mxu0 0.0
    %5249 = vmatpush.msra.mxu0 0.0
    %5250 = vmatpush.msra.mxu0 0.0
    %5251 = vmatpush.msra.mxu0 %v5231
    %5252 = vmatmul.f32.gmra.mxu0 %v5234
    %v5253 = vpop.f32.mrf.mxu0
    %v5254 = vadd.f32 0.0, %v5253
    %5255 = vdwg.mxu0
    %5256 = vrot.lane.b32.xlu0 %v3279, 32
    %v5257 = vpop.permute.xlu0 %5256
    %v5260 = vsel %vm433, %v5123, 0
    %5262 = vmatpush.msra.mxu0 0.0
    %5263 = vmatpush.msra.mxu0 0.0
    %5264 = vmatpush.msra.mxu0 0.0
    %5265 = vmatpush.msra.mxu0 0.0
    %5266 = vmatpush.msra.mxu0 0.0
    %5267 = vmatpush.msra.mxu0 0.0
    %5268 = vmatpush.msra.mxu0 0.0
    %5269 = vmatpush.msra.mxu0 0.0
    %5270 = vmatpush.msra.mxu0 0.0
    %5271 = vmatpush.msra.mxu0 0.0
    %5272 = vmatpush.msra.mxu0 0.0
    %5273 = vmatpush.msra.mxu0 0.0
    %5274 = vmatpush.msra.mxu0 0.0
    %5275 = vmatpush.msra.mxu0 0.0
    %5276 = vmatpush.msra.mxu0 0.0
    %5277 = vmatpush.msra.mxu0 %v5257
    %5278 = vmatmul.f32.gmra.mxu0 %v5260
    %v5279 = vpop.f32.mrf.mxu0
    %v5280 = vadd.f32 0.0, %v5279
    %5281 = vdwg.mxu0
    %5282 = vrot.lane.b32.xlu0 %v3282, 32
    %v5283 = vpop.permute.xlu0 %5282
    %v5286 = vsel %vm433, %v5124, 0
    %5288 = vmatpush.msra.mxu0 0.0
    %5289 = vmatpush.msra.mxu0 0.0
    %5290 = vmatpush.msra.mxu0 0.0
    %5291 = vmatpush.msra.mxu0 0.0
    %5292 = vmatpush.msra.mxu0 0.0
    %5293 = vmatpush.msra.mxu0 0.0
    %5294 = vmatpush.msra.mxu0 0.0
    %5295 = vmatpush.msra.mxu0 0.0
    %5296 = vmatpush.msra.mxu0 0.0
    %5297 = vmatpush.msra.mxu0 0.0
    %5298 = vmatpush.msra.mxu0 0.0
    %5299 = vmatpush.msra.mxu0 0.0
    %5300 = vmatpush.msra.mxu0 0.0
    %5301 = vmatpush.msra.mxu0 0.0
    %5302 = vmatpush.msra.mxu0 0.0
    %5303 = vmatpush.msra.mxu0 %v5283
    %5304 = vmatmul.f32.gmra.mxu0 %v5286
    %v5305 = vpop.f32.mrf.mxu0
    %v5306 = vadd.f32 0.0, %v5305
    %5307 = vdwg.mxu0
    %5308 = vrot.lane.b32.xlu0 %v3284, 32
    %v5309 = vpop.permute.xlu0 %5308
    %v5312 = vsel %vm433, %v5125, 0
    %5314 = vmatpush.msra.mxu0 0.0
    %5315 = vmatpush.msra.mxu0 0.0
    %5316 = vmatpush.msra.mxu0 0.0
    %5317 = vmatpush.msra.mxu0 0.0
    %5318 = vmatpush.msra.mxu0 0.0
    %5319 = vmatpush.msra.mxu0 0.0
    %5320 = vmatpush.msra.mxu0 0.0
    %5321 = vmatpush.msra.mxu0 0.0
    %5322 = vmatpush.msra.mxu0 0.0
    %5323 = vmatpush.msra.mxu0 0.0
    %5324 = vmatpush.msra.mxu0 0.0
    %5325 = vmatpush.msra.mxu0 0.0
    %5326 = vmatpush.msra.mxu0 0.0
    %5327 = vmatpush.msra.mxu0 0.0
    %5328 = vmatpush.msra.mxu0 0.0
    %5329 = vmatpush.msra.mxu0 %v5309
    %5330 = vmatmul.f32.gmra.mxu0 %v5312
    %v5331 = vpop.f32.mrf.mxu0
    %v5332 = vadd.f32 0.0, %v5331
    %5333 = vdwg.mxu0
    %5342 = vrot.lane.b32.xlu0 %v4103, 32
    %v5343 = vpop.permute.xlu0 %5342
    %5344 = vrot.lane.b32.xlu0 %v4130, 32
    %v5345 = vpop.permute.xlu0 %5344
    %5346 = vrot.lane.b32.xlu0 %v4157, 32
    %v5347 = vpop.permute.xlu0 %5346
    %5348 = vrot.lane.b32.xlu0 %v4184, 32
    %v5349 = vpop.permute.xlu0 %5348
    %5350 = vrot.lane.b32.xlu0 %v4211, 32
    %v5351 = vpop.permute.xlu0 %5350
    %5352 = vrot.lane.b32.xlu0 %v4238, 32
    %v5353 = vpop.permute.xlu0 %5352
    %5354 = vrot.lane.b32.xlu0 %v4265, 32
    %v5355 = vpop.permute.xlu0 %5354
    %5356 = vrot.lane.b32.xlu0 %v4292, 32
    %v5357 = vpop.permute.xlu0 %5356
    %5374 = vrot.lane.b32.xlu0 %v4630, 64
    %v5375 = vpop.permute.xlu0 %5374
    %5376 = vrot.lane.b32.xlu0 %v4656, 64
    %v5377 = vpop.permute.xlu0 %5376
    %5378 = vrot.lane.b32.xlu0 %v4682, 64
    %v5379 = vpop.permute.xlu0 %5378
    %5380 = vrot.lane.b32.xlu0 %v4708, 64
    %v5381 = vpop.permute.xlu0 %5380
    %5382 = vrot.lane.b32.xlu0 %v4734, 64
    %v5383 = vpop.permute.xlu0 %5382
    %5384 = vrot.lane.b32.xlu0 %v4760, 64
    %v5385 = vpop.permute.xlu0 %5384
    %5386 = vrot.lane.b32.xlu0 %v4786, 64
    %v5387 = vpop.permute.xlu0 %5386
    %5388 = vrot.lane.b32.xlu0 %v4812, 64
    %v5389 = vpop.permute.xlu0 %5388
    %5406 = vrot.lane.b32.xlu0 %v5150, 96
    %v5407 = vpop.permute.xlu0 %5406
    %5408 = vrot.lane.b32.xlu0 %v5176, 96
    %v5409 = vpop.permute.xlu0 %5408
    %5410 = vrot.lane.b32.xlu0 %v5202, 96
    %v5411 = vpop.permute.xlu0 %5410
    %5412 = vrot.lane.b32.xlu0 %v5228, 96
    %v5413 = vpop.permute.xlu0 %5412
    %5414 = vrot.lane.b32.xlu0 %v5254, 96
    %v5415 = vpop.permute.xlu0 %5414
    %5416 = vrot.lane.b32.xlu0 %v5280, 96
    %v5417 = vpop.permute.xlu0 %5416
    %5418 = vrot.lane.b32.xlu0 %v5306, 96
    %v5419 = vpop.permute.xlu0 %5418
    %5420 = vrot.lane.b32.xlu0 %v5332, 96
    %v5421 = vpop.permute.xlu0 %5420
    %v5430 = vsel %vm125, %v3603, %v5343
    %v5431 = vsel %vm125, %v3626, %v5345
    %v5432 = vsel %vm125, %v3649, %v5347
    %v5433 = vsel %vm125, %v3672, %v5349
    %v5434 = vsel %vm125, %v3695, %v5351
    %v5435 = vsel %vm125, %v3718, %v5353
    %v5436 = vsel %vm125, %v3741, %v5355
    %v5437 = vsel %vm125, %v3764, %v5357
    %v5438 = vsel %vm2378, %v5430, %v5375
    %v5439 = vsel %vm2378, %v5431, %v5377
    %v5440 = vsel %vm2378, %v5432, %v5379
    %v5441 = vsel %vm2378, %v5433, %v5381
    %v5442 = vsel %vm2378, %v5434, %v5383
    %v5443 = vsel %vm2378, %v5435, %v5385
    %v5444 = vsel %vm2378, %v5436, %v5387
    %v5445 = vsel %vm2378, %v5437, %v5389
    %v5446 = vsel %vm2387, %v5438, %v5407
    %v5447 = vsel %vm2387, %v5439, %v5409
    %v5448 = vsel %vm2387, %v5440, %v5411
    %v5449 = vsel %vm2387, %v5441, %v5413
    %v5450 = vsel %vm2387, %v5442, %v5415
    %v5451 = vsel %vm2387, %v5443, %v5417
    %v5452 = vsel %vm2387, %v5444, %v5419
    %v5453 = vsel %vm2387, %v5445, %v5421
    %v5454 = vpack.c.bf16 %v5447, %v5446
    %v5455 = vpack.c.bf16 %v5449, %v5448
    %v5456 = vpack.c.bf16 %v5451, %v5450
    %v5457 = vpack.c.bf16 %v5453, %v5452
    %s5458 = scalar_lea.vmem %s2, 64
    %v5459 = vld [vmem:[%s5458] sm:$0xf]
    %v5460 = vld [vmem:[%s5458 + $0x4] sm:$0xf]
    %v5461 = vld [vmem:[%s5458 + $0x8] sm:$0xf]
    %v5462 = vld [vmem:[%s5458 + $0xc] sm:$0xf]
    %v5463 = vld [vmem:[%s5458 + $0x10] sm:$0xf]
    %v5464 = vld [vmem:[%s5458 + $0x14] sm:$0xf]
    %v5465 = vld [vmem:[%s5458 + $0x18] sm:$0xf]
    %v5466 = vld [vmem:[%s5458 + $0x1c] sm:$0xf]
    %v5467 = vld [vmem:[%s5458 + $0x20] sm:$0xf]
    %v5468 = vld [vmem:[%s5458 + $0x24] sm:$0xf]
    %v5469 = vld [vmem:[%s5458 + $0x28] sm:$0xf]
    %v5470 = vld [vmem:[%s5458 + $0x2c] sm:$0xf]
    %v5471 = vld [vmem:[%s5458 + $0x30] sm:$0xf]
    %v5472 = vld [vmem:[%s5458 + $0x34] sm:$0xf]
    %v5473 = vld [vmem:[%s5458 + $0x38] sm:$0xf]
    %v5474 = vld [vmem:[%s5458 + $0x3c] sm:$0xf]
    %s5475 = scalar_lea.vmem %s3, 1
    %v5476 = vld [vmem:[%s5475] sm:$0x1]
    %v5478 = vperm.slane %v5476, 0
    %v5496 = vunpack.c.l.b16 %v5459
    %v5497 = vunpack.c.l.b16 %v5460
    %v5498 = vunpack.c.l.b16 %v5461
    %v5499 = vunpack.c.l.b16 %v5462
    %v5500 = vunpack.c.l.b16 %v5463
    %v5501 = vunpack.c.l.b16 %v5464
    %v5502 = vunpack.c.l.b16 %v5465
    %v5503 = vunpack.c.l.b16 %v5466
    %v5504 = vunpack.c.l.b16 %v5467
    %v5505 = vunpack.c.l.b16 %v5468
    %v5506 = vunpack.c.l.b16 %v5469
    %v5507 = vunpack.c.l.b16 %v5470
    %v5508 = vunpack.c.l.b16 %v5471
    %v5509 = vunpack.c.l.b16 %v5472
    %v5510 = vunpack.c.l.b16 %v5473
    %v5511 = vunpack.c.l.b16 %v5474
    %v5512 = vpack.c.b16 %v5497, %v5496
    %v5513 = vpack.c.b16 %v5499, %v5498
    %v5514 = vpack.c.b16 %v5501, %v5500
    %v5515 = vpack.c.b16 %v5503, %v5502
    %v5516 = vpack.c.b16 %v5505, %v5504
    %v5517 = vpack.c.b16 %v5507, %v5506
    %v5518 = vpack.c.b16 %v5509, %v5508
    %v5519 = vpack.c.b16 %v5511, %v5510
    %5528 = vmatpush.bf16.msra.mxu0 %v5519
    %5529 = vmatpush.bf16.msra.mxu0 %v5518
    %5530 = vmatpush.bf16.msra.mxu0 %v5517
    %5531 = vmatpush.bf16.msra.mxu0 %v5516
    %5532 = vmatpush.bf16.msra.mxu0 %v5515
    %5533 = vmatpush.bf16.msra.mxu0 %v5514
    %5534 = vmatpush.bf16.msra.mxu0 %v5513
    %5535 = vmatpush.bf16.msra.mxu0 %v5512
    %5536 = vmatmul.bf16.gmra.mxu0 %v5454
    %v5537 = vpop.f32.mrf.mxu0
    %v5538 = vadd.f32 %v5478, %v5537
    %v5539 = vpop.f32.mrf.mxu0
    %v5540 = vadd.f32 %v5478, %v5539
    %5541 = vmatmul.bf16.gmra.mxu0 %v5455
    %v5542 = vpop.f32.mrf.mxu0
    %v5543 = vadd.f32 %v5478, %v5542
    %v5544 = vpop.f32.mrf.mxu0
    %v5545 = vadd.f32 %v5478, %v5544
    %5546 = vmatmul.bf16.gmra.mxu0 %v5456
    %v5547 = vpop.f32.mrf.mxu0
    %v5548 = vadd.f32 %v5478, %v5547
    %v5549 = vpop.f32.mrf.mxu0
    %v5550 = vadd.f32 %v5478, %v5549
    %5551 = vmatmul.bf16.gmra.mxu0 %v5457
    %v5552 = vpop.f32.mrf.mxu0
    %v5553 = vadd.f32 %v5478, %v5552
    %v5554 = vpop.f32.mrf.mxu0
    %v5555 = vadd.f32 %v5478, %v5554
    %5556 = vdwg.mxu0
    %v5557 = vadd.f32 %v5538, %v3134
    %v5558 = vadd.f32 %v5540, %v3135
    %v5559 = vadd.f32 %v5543, %v3136
    %v5560 = vadd.f32 %v5545, %v3137
    %v5561 = vadd.f32 %v5548, %v3138
    %v5562 = vadd.f32 %v5550, %v3139
    %v5563 = vadd.f32 %v5553, %v3140
    %v5564 = vadd.f32 %v5555, %v3141
    %s5565 = scalar_lea.vmem %s4, 1
    %v5566 = vld [vmem:[%s5565] sm:$0x1]
    %s5567 = scalar_lea.vmem %s5, 1
    %v5568 = vld [vmem:[%s5567] sm:$0x1]
    %v5569 = vsel %vm125, %v5557, 0.0
    %5570 = vadd.xlane.f32.xlu0 %v5569
    %v5571 = vpop.xlane.xlu0 %5570
    %v5572 = vsel %vm125, %v5558, 0.0
    %5573 = vadd.xlane.f32.xlu0 %v5572
    %v5574 = vpop.xlane.xlu0 %5573
    %v5575 = vsel %vm125, %v5559, 0.0
    %5576 = vadd.xlane.f32.xlu0 %v5575
    %v5577 = vpop.xlane.xlu0 %5576
    %v5578 = vsel %vm125, %v5560, 0.0
    %5579 = vadd.xlane.f32.xlu0 %v5578
    %v5580 = vpop.xlane.xlu0 %5579
    %v5581 = vsel %vm125, %v5561, 0.0
    %5582 = vadd.xlane.f32.xlu0 %v5581
    %v5583 = vpop.xlane.xlu0 %5582
    %v5584 = vsel %vm125, %v5562, 0.0
    %5585 = vadd.xlane.f32.xlu0 %v5584
    %v5586 = vpop.xlane.xlu0 %5585
    %v5587 = vsel %vm125, %v5563, 0.0
    %5588 = vadd.xlane.f32.xlu0 %v5587
    %v5589 = vpop.xlane.xlu0 %5588
    %v5590 = vsel %vm125, %v5564, 0.0
    %5591 = vadd.xlane.f32.xlu0 %v5590
    %v5592 = vpop.xlane.xlu0 %5591
    %v5593 = vmul.f32 %v5571, %v2537
    %v5594 = vmul.f32 %v5574, %v2537
    %v5595 = vmul.f32 %v5577, %v2537
    %v5596 = vmul.f32 %v5580, %v2537
    %v5597 = vmul.f32 %v5583, %v2537
    %v5598 = vmul.f32 %v5586, %v2537
    %v5599 = vmul.f32 %v5589, %v2537
    %v5600 = vmul.f32 %v5592, %v2537
    %v5601 = vmul.f32 %v5557, %v5557
    %v5602 = vmul.f32 %v5558, %v5558
    %v5603 = vmul.f32 %v5559, %v5559
    %v5604 = vmul.f32 %v5560, %v5560
    %v5605 = vmul.f32 %v5561, %v5561
    %v5606 = vmul.f32 %v5562, %v5562
    %v5607 = vmul.f32 %v5563, %v5563
    %v5608 = vmul.f32 %v5564, %v5564
    %v5609 = vsel %vm125, %v5601, 0.0
    %5610 = vadd.xlane.f32.xlu0 %v5609
    %v5611 = vpop.xlane.xlu0 %5610
    %v5612 = vsel %vm125, %v5602, 0.0
    %5613 = vadd.xlane.f32.xlu0 %v5612
    %v5614 = vpop.xlane.xlu0 %5613
    %v5615 = vsel %vm125, %v5603, 0.0
    %5616 = vadd.xlane.f32.xlu0 %v5615
    %v5617 = vpop.xlane.xlu0 %5616
    %v5618 = vsel %vm125, %v5604, 0.0
    %5619 = vadd.xlane.f32.xlu0 %v5618
    %v5620 = vpop.xlane.xlu0 %5619
    %v5621 = vsel %vm125, %v5605, 0.0
    %5622 = vadd.xlane.f32.xlu0 %v5621
    %v5623 = vpop.xlane.xlu0 %5622
    %v5624 = vsel %vm125, %v5606, 0.0
    %5625 = vadd.xlane.f32.xlu0 %v5624
    %v5626 = vpop.xlane.xlu0 %5625
    %v5627 = vsel %vm125, %v5607, 0.0
    %5628 = vadd.xlane.f32.xlu0 %v5627
    %v5629 = vpop.xlane.xlu0 %5628
    %v5630 = vsel %vm125, %v5608, 0.0
    %5631 = vadd.xlane.f32.xlu0 %v5630
    %v5632 = vpop.xlane.xlu0 %5631
    %v5633 = vmul.f32 %v5611, %v2537
    %v5634 = vmul.f32 %v5614, %v2537
    %v5635 = vmul.f32 %v5617, %v2537
    %v5636 = vmul.f32 %v5620, %v2537
    %v5637 = vmul.f32 %v5623, %v2537
    %v5638 = vmul.f32 %v5626, %v2537
    %v5639 = vmul.f32 %v5629, %v2537
    %v5640 = vmul.f32 %v5632, %v2537
    %v5641 = vmul.f32 %v5593, %v5593
    %v5642 = vmul.f32 %v5594, %v5594
    %v5643 = vmul.f32 %v5595, %v5595
    %v5644 = vmul.f32 %v5596, %v5596
    %v5645 = vmul.f32 %v5597, %v5597
    %v5646 = vmul.f32 %v5598, %v5598
    %v5647 = vmul.f32 %v5599, %v5599
    %v5648 = vmul.f32 %v5600, %v5600
    %v5649 = vsub.f32 %v5633, %v5641
    %v5650 = vsub.f32 %v5634, %v5642
    %v5651 = vsub.f32 %v5635, %v5643
    %v5652 = vsub.f32 %v5636, %v5644
    %v5653 = vsub.f32 %v5637, %v5645
    %v5654 = vsub.f32 %v5638, %v5646
    %v5655 = vsub.f32 %v5639, %v5647
    %v5656 = vsub.f32 %v5640, %v5648
    %v5657 = vmax.f32 %v5649, 0.0
    %v5658 = vmax.f32 %v5650, 0.0
    %v5659 = vmax.f32 %v5651, 0.0
    %v5660 = vmax.f32 %v5652, 0.0
    %v5661 = vmax.f32 %v5653, 0.0
    %v5662 = vmax.f32 %v5654, 0.0
    %v5663 = vmax.f32 %v5655, 0.0
    %v5664 = vmax.f32 %v5656, 0.0
    %v5665 = vsub.f32 %v5557, %v5593
    %v5666 = vsub.f32 %v5558, %v5594
    %v5667 = vsub.f32 %v5559, %v5595
    %v5668 = vsub.f32 %v5560, %v5596
    %v5669 = vsub.f32 %v5561, %v5597
    %v5670 = vsub.f32 %v5562, %v5598
    %v5671 = vsub.f32 %v5563, %v5599
    %v5672 = vsub.f32 %v5564, %v5600
    %v5673 = vadd.f32 %v5657, 1e-05
    %v5674 = vadd.f32 %v5658, 1e-05
    %v5675 = vadd.f32 %v5659, 1e-05
    %v5676 = vadd.f32 %v5660, 1e-05
    %v5677 = vadd.f32 %v5661, 1e-05
    %v5678 = vadd.f32 %v5662, 1e-05
    %v5679 = vadd.f32 %v5663, 1e-05
    %v5680 = vadd.f32 %v5664, 1e-05
    %v5681 = vrsqrt.pop %v5673
    %v5682 = vmul.f32 %v5681, %v5673
    %v5683 = vmul.f32 %v5682, %v5681
    %v5684 = vmul.f32 0.5, %v5683
    %v5685 = vsub.f32 1.5, %v5684
    %v5686 = vmul.f32 %v5681, %v5685
    %vm5687 = vweird.f32 %v5673
    %vm5688 = vweird.f32 %v5681
    %vm5689 = vmor %vm5687, %vm5688
    %v5690 = vsel %vm5689, %v5681, %v5686
    %v5691 = vrsqrt.pop %v5674
    %v5692 = vmul.f32 %v5691, %v5674
    %v5693 = vmul.f32 %v5692, %v5691
    %v5694 = vmul.f32 0.5, %v5693
    %v5695 = vsub.f32 1.5, %v5694
    %v5696 = vmul.f32 %v5691, %v5695
    %vm5697 = vweird.f32 %v5674
    %vm5698 = vweird.f32 %v5691
    %vm5699 = vmor %vm5697, %vm5698
    %v5700 = vsel %vm5699, %v5691, %v5696
    %v5701 = vrsqrt.pop %v5675
    %v5702 = vmul.f32 %v5701, %v5675
    %v5703 = vmul.f32 %v5702, %v5701
    %v5704 = vmul.f32 0.5, %v5703
    %v5705 = vsub.f32 1.5, %v5704
    %v5706 = vmul.f32 %v5701, %v5705
    %vm5707 = vweird.f32 %v5675
    %vm5708 = vweird.f32 %v5701
    %vm5709 = vmor %vm5707, %vm5708
    %v5710 = vsel %vm5709, %v5701, %v5706
    %v5711 = vrsqrt.pop %v5676
    %v5712 = vmul.f32 %v5711, %v5676
    %v5713 = vmul.f32 %v5712, %v5711
    %v5714 = vmul.f32 0.5, %v5713
    %v5715 = vsub.f32 1.5, %v5714
    %v5716 = vmul.f32 %v5711, %v5715
    %vm5717 = vweird.f32 %v5676
    %vm5718 = vweird.f32 %v5711
    %vm5719 = vmor %vm5717, %vm5718
    %v5720 = vsel %vm5719, %v5711, %v5716
    %v5721 = vrsqrt.pop %v5677
    %v5722 = vmul.f32 %v5721, %v5677
    %v5723 = vmul.f32 %v5722, %v5721
    %v5724 = vmul.f32 0.5, %v5723
    %v5725 = vsub.f32 1.5, %v5724
    %v5726 = vmul.f32 %v5721, %v5725
    %vm5727 = vweird.f32 %v5677
    %vm5728 = vweird.f32 %v5721
    %vm5729 = vmor %vm5727, %vm5728
    %v5730 = vsel %vm5729, %v5721, %v5726
    %v5731 = vrsqrt.pop %v5678
    %v5732 = vmul.f32 %v5731, %v5678
    %v5733 = vmul.f32 %v5732, %v5731
    %v5734 = vmul.f32 0.5, %v5733
    %v5735 = vsub.f32 1.5, %v5734
    %v5736 = vmul.f32 %v5731, %v5735
    %vm5737 = vweird.f32 %v5678
    %vm5738 = vweird.f32 %v5731
    %vm5739 = vmor %vm5737, %vm5738
    %v5740 = vsel %vm5739, %v5731, %v5736
    %v5741 = vrsqrt.pop %v5679
    %v5742 = vmul.f32 %v5741, %v5679
    %v5743 = vmul.f32 %v5742, %v5741
    %v5744 = vmul.f32 0.5, %v5743
    %v5745 = vsub.f32 1.5, %v5744
    %v5746 = vmul.f32 %v5741, %v5745
    %vm5747 = vweird.f32 %v5679
    %vm5748 = vweird.f32 %v5741
    %vm5749 = vmor %vm5747, %vm5748
    %v5750 = vsel %vm5749, %v5741, %v5746
    %v5751 = vrsqrt.pop %v5680
    %v5752 = vmul.f32 %v5751, %v5680
    %v5753 = vmul.f32 %v5752, %v5751
    %v5754 = vmul.f32 0.5, %v5753
    %v5755 = vsub.f32 1.5, %v5754
    %v5756 = vmul.f32 %v5751, %v5755
    %vm5757 = vweird.f32 %v5680
    %vm5758 = vweird.f32 %v5751
    %vm5759 = vmor %vm5757, %vm5758
    %v5760 = vsel %vm5759, %v5751, %v5756
    %v5761 = vmul.f32 %v5665, %v5690
    %v5762 = vmul.f32 %v5666, %v5700
    %v5763 = vmul.f32 %v5667, %v5710
    %v5764 = vmul.f32 %v5668, %v5720
    %v5765 = vmul.f32 %v5669, %v5730
    %v5766 = vmul.f32 %v5670, %v5740
    %v5767 = vmul.f32 %v5671, %v5750
    %v5768 = vmul.f32 %v5672, %v5760
    %v5770 = vperm.slane %v5566, 0
    %v5772 = vmul.f32 %v5761, %v5770
    %v5773 = vmul.f32 %v5762, %v5770
    %v5774 = vmul.f32 %v5763, %v5770
    %v5775 = vmul.f32 %v5764, %v5770
    %v5776 = vmul.f32 %v5765, %v5770
    %v5777 = vmul.f32 %v5766, %v5770
    %v5778 = vmul.f32 %v5767, %v5770
    %v5779 = vmul.f32 %v5768, %v5770
    %v5781 = vperm.slane %v5568, 0
    %v5783 = vadd.f32 %v5772, %v5781
    %v5784 = vadd.f32 %v5773, %v5781
    %v5785 = vadd.f32 %v5774, %v5781
    %v5786 = vadd.f32 %v5775, %v5781
    %v5787 = vadd.f32 %v5776, %v5781
    %v5788 = vadd.f32 %v5777, %v5781
    %v5789 = vadd.f32 %v5778, %v5781
    %v5790 = vadd.f32 %v5779, %v5781
    %v5791 = vpack.c.bf16 %v5784, %v5783
    %v5792 = vpack.c.bf16 %v5786, %v5785
    %v5793 = vpack.c.bf16 %v5788, %v5787
    %v5794 = vpack.c.bf16 %v5790, %v5789
    %s5795 = scalar_lea.vmem %s6, 16
    %v5796 = vld [vmem:[%s5795] sm:$0xf]
    %v5797 = vld [vmem:[%s5795 + $0x4] sm:$0xf]
    %v5798 = vld [vmem:[%s5795 + $0x8] sm:$0xf]
    %v5799 = vld [vmem:[%s5795 + $0xc] sm:$0xf]
    %s5800 = scalar_lea.vmem %s7, 1
    %v5801 = vld [vmem:[%s5800] sm:$0x1]
    %v5803 = vperm.slane %v5801, 0
    %v5809 = vunpack.c.l.b16 %v5796
    %v5810 = vunpack.c.l.b16 %v5797
    %v5811 = vunpack.c.l.b16 %v5798
    %v5812 = vunpack.c.l.b16 %v5799
    %v5813 = vpack.c.b16 %v5810, %v5809
    %v5814 = vpack.c.b16 %v5812, %v5811
    %v5818 = vsel %vm125, %v5791, 0
    %v5821 = vsel %vm125, %v5792, 0
    %v5824 = vsel %vm125, %v5793, 0
    %v5827 = vsel %vm125, %v5794, 0
    %5829 = vmatpush.bf16.msra.mxu0 0
    %5830 = vmatpush.bf16.msra.mxu0 0
    %5831 = vmatpush.bf16.msra.mxu0 0
    %5832 = vmatpush.bf16.msra.mxu0 0
    %5833 = vmatpush.bf16.msra.mxu0 0
    %5834 = vmatpush.bf16.msra.mxu0 0
    %5835 = vmatpush.bf16.msra.mxu0 %v5814
    %5836 = vmatpush.bf16.msra.mxu0 %v5813
    %5837 = vmatmul.bf16.gmra.mxu0 %v5818
    %v5838 = vpop.f32.mrf.mxu0
    %v5839 = vadd.f32 %v5803, %v5838
    %v5840 = vpop.f32.mrf.mxu0
    %v5841 = vadd.f32 %v5803, %v5840
    %5842 = vmatmul.bf16.gmra.mxu0 %v5821
    %v5843 = vpop.f32.mrf.mxu0
    %v5844 = vadd.f32 %v5803, %v5843
    %v5845 = vpop.f32.mrf.mxu0
    %v5846 = vadd.f32 %v5803, %v5845
    %5847 = vmatmul.bf16.gmra.mxu0 %v5824
    %v5848 = vpop.f32.mrf.mxu0
    %v5849 = vadd.f32 %v5803, %v5848
    %v5850 = vpop.f32.mrf.mxu0
    %v5851 = vadd.f32 %v5803, %v5850
    %5852 = vmatmul.bf16.gmra.mxu0 %v5827
    %v5853 = vpop.f32.mrf.mxu0
    %v5854 = vadd.f32 %v5803, %v5853
    %v5855 = vpop.f32.mrf.mxu0
    %v5856 = vadd.f32 %v5803, %v5855
    %5857 = vdwg.mxu0
    %v5858 = vmax.f32 %v5839, 0.0
    %v5859 = vmax.f32 %v5841, 0.0
    %v5860 = vmax.f32 %v5844, 0.0
    %v5861 = vmax.f32 %v5846, 0.0
    %v5862 = vmax.f32 %v5849, 0.0
    %v5863 = vmax.f32 %v5851, 0.0
    %v5864 = vmax.f32 %v5854, 0.0
    %v5865 = vmax.f32 %v5856, 0.0
    %v5866 = vpack.c.bf16 %v5859, %v5858
    %v5867 = vpack.c.bf16 %v5861, %v5860
    %v5868 = vpack.c.bf16 %v5863, %v5862
    %v5869 = vpack.c.bf16 %v5865, %v5864
    %s5870 = scalar_lea.vmem %s8, 64
    %v5871 = vld [vmem:[%s5870] sm:$0xf]
    %v5872 = vld [vmem:[%s5870 + $0x4] sm:$0xf]
    %v5873 = vld [vmem:[%s5870 + $0x8] sm:$0xf]
    %v5874 = vld [vmem:[%s5870 + $0xc] sm:$0xf]
    %v5875 = vld [vmem:[%s5870 + $0x10] sm:$0xf]
    %v5876 = vld [vmem:[%s5870 + $0x14] sm:$0xf]
    %v5877 = vld [vmem:[%s5870 + $0x18] sm:$0xf]
    %v5878 = vld [vmem:[%s5870 + $0x1c] sm:$0xf]
    %v5879 = vld [vmem:[%s5870 + $0x20] sm:$0xf]
    %v5880 = vld [vmem:[%s5870 + $0x24] sm:$0xf]
    %v5881 = vld [vmem:[%s5870 + $0x28] sm:$0xf]
    %v5882 = vld [vmem:[%s5870 + $0x2c] sm:$0xf]
    %v5883 = vld [vmem:[%s5870 + $0x30] sm:$0xf]
    %v5884 = vld [vmem:[%s5870 + $0x34] sm:$0xf]
    %v5885 = vld [vmem:[%s5870 + $0x38] sm:$0xf]
    %v5886 = vld [vmem:[%s5870 + $0x3c] sm:$0xf]
    %s5887 = scalar_lea.vmem %s9, 1
    %v5888 = vld [vmem:[%s5887] sm:$0x1]
    %v5890 = vperm.slane %v5888, 0
    %v5908 = vunpack.c.l.b16 %v5871
    %v5909 = vunpack.c.l.b16 %v5872
    %v5910 = vunpack.c.l.b16 %v5873
    %v5911 = vunpack.c.l.b16 %v5874
    %v5912 = vunpack.c.l.b16 %v5875
    %v5913 = vunpack.c.l.b16 %v5876
    %v5914 = vunpack.c.l.b16 %v5877
    %v5915 = vunpack.c.l.b16 %v5878
    %v5916 = vunpack.c.l.b16 %v5879
    %v5917 = vunpack.c.l.b16 %v5880
    %v5918 = vunpack.c.l.b16 %v5881
    %v5919 = vunpack.c.l.b16 %v5882
    %v5920 = vunpack.c.l.b16 %v5883
    %v5921 = vunpack.c.l.b16 %v5884
    %v5922 = vunpack.c.l.b16 %v5885
    %v5923 = vunpack.c.l.b16 %v5886
    %v5924 = vpack.c.b16 %v5909, %v5908
    %v5925 = vpack.c.b16 %v5911, %v5910
    %v5926 = vpack.c.b16 %v5913, %v5912
    %v5927 = vpack.c.b16 %v5915, %v5914
    %v5928 = vpack.c.b16 %v5917, %v5916
    %v5929 = vpack.c.b16 %v5919, %v5918
    %v5930 = vpack.c.b16 %v5921, %v5920
    %v5931 = vpack.c.b16 %v5923, %v5922
    %5940 = vmatpush.bf16.msra.mxu0 %v5931
    %5941 = vmatpush.bf16.msra.mxu0 %v5930
    %5942 = vmatpush.bf16.msra.mxu0 %v5929
    %5943 = vmatpush.bf16.msra.mxu0 %v5928
    %5944 = vmatpush.bf16.msra.mxu0 %v5927
    %5945 = vmatpush.bf16.msra.mxu0 %v5926
    %5946 = vmatpush.bf16.msra.mxu0 %v5925
    %5947 = vmatpush.bf16.msra.mxu0 %v5924
    %5948 = vmatmul.bf16.gmra.mxu0 %v5866
    %v5949 = vpop.f32.mrf.mxu0
    %v5950 = vadd.f32 %v5890, %v5949
    %v5951 = vpop.f32.mrf.mxu0
    %v5952 = vadd.f32 %v5890, %v5951
    %5953 = vmatmul.bf16.gmra.mxu0 %v5867
    %v5954 = vpop.f32.mrf.mxu0
    %v5955 = vadd.f32 %v5890, %v5954
    %v5956 = vpop.f32.mrf.mxu0
    %v5957 = vadd.f32 %v5890, %v5956
    %5958 = vmatmul.bf16.gmra.mxu0 %v5868
    %v5959 = vpop.f32.mrf.mxu0
    %v5960 = vadd.f32 %v5890, %v5959
    %v5961 = vpop.f32.mrf.mxu0
    %v5962 = vadd.f32 %v5890, %v5961
    %5963 = vmatmul.bf16.gmra.mxu0 %v5869
    %v5964 = vpop.f32.mrf.mxu0
    %v5965 = vadd.f32 %v5890, %v5964
    %v5966 = vpop.f32.mrf.mxu0
    %v5967 = vadd.f32 %v5890, %v5966
    %5968 = vdwg.mxu0
    %v5969 = vadd.f32 %v5950, %v5783
    %v5970 = vadd.f32 %v5952, %v5784
    %v5971 = vadd.f32 %v5955, %v5785
    %v5972 = vadd.f32 %v5957, %v5786
    %v5973 = vadd.f32 %v5960, %v5787
    %v5974 = vadd.f32 %v5962, %v5788
    %v5975 = vadd.f32 %v5965, %v5789
    %v5976 = vadd.f32 %v5967, %v5790
    %s5977 = scalar_lea.vmem %s10, 1
    %v5978 = vld [vmem:[%s5977] sm:$0x1]
    %s5979 = scalar_lea.vmem %s11, 1
    %v5980 = vld [vmem:[%s5979] sm:$0x1]
    %v5981 = vsel %vm125, %v5969, 0.0
    %5982 = vadd.xlane.f32.xlu0 %v5981
    %v5983 = vpop.xlane.xlu0 %5982
    %v5984 = vsel %vm125, %v5970, 0.0
    %5985 = vadd.xlane.f32.xlu0 %v5984
    %v5986 = vpop.xlane.xlu0 %5985
    %v5987 = vsel %vm125, %v5971, 0.0
    %5988 = vadd.xlane.f32.xlu0 %v5987
    %v5989 = vpop.xlane.xlu0 %5988
    %v5990 = vsel %vm125, %v5972, 0.0
    %5991 = vadd.xlane.f32.xlu0 %v5990
    %v5992 = vpop.xlane.xlu0 %5991
    %v5993 = vsel %vm125, %v5973, 0.0
    %5994 = vadd.xlane.f32.xlu0 %v5993
    %v5995 = vpop.xlane.xlu0 %5994
    %v5996 = vsel %vm125, %v5974, 0.0
    %5997 = vadd.xlane.f32.xlu0 %v5996
    %v5998 = vpop.xlane.xlu0 %5997
    %v5999 = vsel %vm125, %v5975, 0.0
    %6000 = vadd.xlane.f32.xlu0 %v5999
    %v6001 = vpop.xlane.xlu0 %6000
    %v6002 = vsel %vm125, %v5976, 0.0
    %6003 = vadd.xlane.f32.xlu0 %v6002
    %v6004 = vpop.xlane.xlu0 %6003
    %v6005 = vmul.f32 %v5983, %v2537
    %v6006 = vmul.f32 %v5986, %v2537
    %v6007 = vmul.f32 %v5989, %v2537
    %v6008 = vmul.f32 %v5992, %v2537
    %v6009 = vmul.f32 %v5995, %v2537
    %v6010 = vmul.f32 %v5998, %v2537
    %v6011 = vmul.f32 %v6001, %v2537
    %v6012 = vmul.f32 %v6004, %v2537
    %v6013 = vmul.f32 %v5969, %v5969
    %v6014 = vmul.f32 %v5970, %v5970
    %v6015 = vmul.f32 %v5971, %v5971
    %v6016 = vmul.f32 %v5972, %v5972
    %v6017 = vmul.f32 %v5973, %v5973
    %v6018 = vmul.f32 %v5974, %v5974
    %v6019 = vmul.f32 %v5975, %v5975
    %v6020 = vmul.f32 %v5976, %v5976
    %v6021 = vsel %vm125, %v6013, 0.0
    %6022 = vadd.xlane.f32.xlu0 %v6021
    %v6023 = vpop.xlane.xlu0 %6022
    %v6024 = vsel %vm125, %v6014, 0.0
    %6025 = vadd.xlane.f32.xlu0 %v6024
    %v6026 = vpop.xlane.xlu0 %6025
    %v6027 = vsel %vm125, %v6015, 0.0
    %6028 = vadd.xlane.f32.xlu0 %v6027
    %v6029 = vpop.xlane.xlu0 %6028
    %v6030 = vsel %vm125, %v6016, 0.0
    %6031 = vadd.xlane.f32.xlu0 %v6030
    %v6032 = vpop.xlane.xlu0 %6031
    %v6033 = vsel %vm125, %v6017, 0.0
    %6034 = vadd.xlane.f32.xlu0 %v6033
    %v6035 = vpop.xlane.xlu0 %6034
    %v6036 = vsel %vm125, %v6018, 0.0
    %6037 = vadd.xlane.f32.xlu0 %v6036
    %v6038 = vpop.xlane.xlu0 %6037
    %v6039 = vsel %vm125, %v6019, 0.0
    %6040 = vadd.xlane.f32.xlu0 %v6039
    %v6041 = vpop.xlane.xlu0 %6040
    %v6042 = vsel %vm125, %v6020, 0.0
    %6043 = vadd.xlane.f32.xlu0 %v6042
    %v6044 = vpop.xlane.xlu0 %6043
    %v6045 = vmul.f32 %v6023, %v2537
    %v6046 = vmul.f32 %v6026, %v2537
    %v6047 = vmul.f32 %v6029, %v2537
    %v6048 = vmul.f32 %v6032, %v2537
    %v6049 = vmul.f32 %v6035, %v2537
    %v6050 = vmul.f32 %v6038, %v2537
    %v6051 = vmul.f32 %v6041, %v2537
    %v6052 = vmul.f32 %v6044, %v2537
    %v6053 = vmul.f32 %v6005, %v6005
    %v6054 = vmul.f32 %v6006, %v6006
    %v6055 = vmul.f32 %v6007, %v6007
    %v6056 = vmul.f32 %v6008, %v6008
    %v6057 = vmul.f32 %v6009, %v6009
    %v6058 = vmul.f32 %v6010, %v6010
    %v6059 = vmul.f32 %v6011, %v6011
    %v6060 = vmul.f32 %v6012, %v6012
    %v6061 = vsub.f32 %v6045, %v6053
    %v6062 = vsub.f32 %v6046, %v6054
    %v6063 = vsub.f32 %v6047, %v6055
    %v6064 = vsub.f32 %v6048, %v6056
    %v6065 = vsub.f32 %v6049, %v6057
    %v6066 = vsub.f32 %v6050, %v6058
    %v6067 = vsub.f32 %v6051, %v6059
    %v6068 = vsub.f32 %v6052, %v6060
    %v6069 = vmax.f32 %v6061, 0.0
    %v6070 = vmax.f32 %v6062, 0.0
    %v6071 = vmax.f32 %v6063, 0.0
    %v6072 = vmax.f32 %v6064, 0.0
    %v6073 = vmax.f32 %v6065, 0.0
    %v6074 = vmax.f32 %v6066, 0.0
    %v6075 = vmax.f32 %v6067, 0.0
    %v6076 = vmax.f32 %v6068, 0.0
    %v6077 = vsub.f32 %v5969, %v6005
    %v6078 = vsub.f32 %v5970, %v6006
    %v6079 = vsub.f32 %v5971, %v6007
    %v6080 = vsub.f32 %v5972, %v6008
    %v6081 = vsub.f32 %v5973, %v6009
    %v6082 = vsub.f32 %v5974, %v6010
    %v6083 = vsub.f32 %v5975, %v6011
    %v6084 = vsub.f32 %v5976, %v6012
    %v6085 = vadd.f32 %v6069, 1e-05
    %v6086 = vadd.f32 %v6070, 1e-05
    %v6087 = vadd.f32 %v6071, 1e-05
    %v6088 = vadd.f32 %v6072, 1e-05
    %v6089 = vadd.f32 %v6073, 1e-05
    %v6090 = vadd.f32 %v6074, 1e-05
    %v6091 = vadd.f32 %v6075, 1e-05
    %v6092 = vadd.f32 %v6076, 1e-05
    %v6093 = vrsqrt.pop %v6085
    %v6094 = vmul.f32 %v6093, %v6085
    %v6095 = vmul.f32 %v6094, %v6093
    %v6096 = vmul.f32 0.5, %v6095
    %v6097 = vsub.f32 1.5, %v6096
    %v6098 = vmul.f32 %v6093, %v6097
    %vm6099 = vweird.f32 %v6085
    %vm6100 = vweird.f32 %v6093
    %vm6101 = vmor %vm6099, %vm6100
    %v6102 = vsel %vm6101, %v6093, %v6098
    %v6103 = vrsqrt.pop %v6086
    %v6104 = vmul.f32 %v6103, %v6086
    %v6105 = vmul.f32 %v6104, %v6103
    %v6106 = vmul.f32 0.5, %v6105
    %v6107 = vsub.f32 1.5, %v6106
    %v6108 = vmul.f32 %v6103, %v6107
    %vm6109 = vweird.f32 %v6086
    %vm6110 = vweird.f32 %v6103
    %vm6111 = vmor %vm6109, %vm6110
    %v6112 = vsel %vm6111, %v6103, %v6108
    %v6113 = vrsqrt.pop %v6087
    %v6114 = vmul.f32 %v6113, %v6087
    %v6115 = vmul.f32 %v6114, %v6113
    %v6116 = vmul.f32 0.5, %v6115
    %v6117 = vsub.f32 1.5, %v6116
    %v6118 = vmul.f32 %v6113, %v6117
    %vm6119 = vweird.f32 %v6087
    %vm6120 = vweird.f32 %v6113
    %vm6121 = vmor %vm6119, %vm6120
    %v6122 = vsel %vm6121, %v6113, %v6118
    %v6123 = vrsqrt.pop %v6088
    %v6124 = vmul.f32 %v6123, %v6088
    %v6125 = vmul.f32 %v6124, %v6123
    %v6126 = vmul.f32 0.5, %v6125
    %v6127 = vsub.f32 1.5, %v6126
    %v6128 = vmul.f32 %v6123, %v6127
    %vm6129 = vweird.f32 %v6088
    %vm6130 = vweird.f32 %v6123
    %vm6131 = vmor %vm6129, %vm6130
    %v6132 = vsel %vm6131, %v6123, %v6128
    %v6133 = vrsqrt.pop %v6089
    %v6134 = vmul.f32 %v6133, %v6089
    %v6135 = vmul.f32 %v6134, %v6133
    %v6136 = vmul.f32 0.5, %v6135
    %v6137 = vsub.f32 1.5, %v6136
    %v6138 = vmul.f32 %v6133, %v6137
    %vm6139 = vweird.f32 %v6089
    %vm6140 = vweird.f32 %v6133
    %vm6141 = vmor %vm6139, %vm6140
    %v6142 = vsel %vm6141, %v6133, %v6138
    %v6143 = vrsqrt.pop %v6090
    %v6144 = vmul.f32 %v6143, %v6090
    %v6145 = vmul.f32 %v6144, %v6143
    %v6146 = vmul.f32 0.5, %v6145
    %v6147 = vsub.f32 1.5, %v6146
    %v6148 = vmul.f32 %v6143, %v6147
    %vm6149 = vweird.f32 %v6090
    %vm6150 = vweird.f32 %v6143
    %vm6151 = vmor %vm6149, %vm6150
    %v6152 = vsel %vm6151, %v6143, %v6148
    %v6153 = vrsqrt.pop %v6091
    %v6154 = vmul.f32 %v6153, %v6091
    %v6155 = vmul.f32 %v6154, %v6153
    %v6156 = vmul.f32 0.5, %v6155
    %v6157 = vsub.f32 1.5, %v6156
    %v6158 = vmul.f32 %v6153, %v6157
    %vm6159 = vweird.f32 %v6091
    %vm6160 = vweird.f32 %v6153
    %vm6161 = vmor %vm6159, %vm6160
    %v6162 = vsel %vm6161, %v6153, %v6158
    %v6163 = vrsqrt.pop %v6092
    %v6164 = vmul.f32 %v6163, %v6092
    %v6165 = vmul.f32 %v6164, %v6163
    %v6166 = vmul.f32 0.5, %v6165
    %v6167 = vsub.f32 1.5, %v6166
    %v6168 = vmul.f32 %v6163, %v6167
    %vm6169 = vweird.f32 %v6092
    %vm6170 = vweird.f32 %v6163
    %vm6171 = vmor %vm6169, %vm6170
    %v6172 = vsel %vm6171, %v6163, %v6168
    %v6173 = vmul.f32 %v6077, %v6102
    %v6174 = vmul.f32 %v6078, %v6112
    %v6175 = vmul.f32 %v6079, %v6122
    %v6176 = vmul.f32 %v6080, %v6132
    %v6177 = vmul.f32 %v6081, %v6142
    %v6178 = vmul.f32 %v6082, %v6152
    %v6179 = vmul.f32 %v6083, %v6162
    %v6180 = vmul.f32 %v6084, %v6172
    %v6182 = vperm.slane %v5978, 0
    %v6184 = vmul.f32 %v6173, %v6182
    %v6185 = vmul.f32 %v6174, %v6182
    %v6186 = vmul.f32 %v6175, %v6182
    %v6187 = vmul.f32 %v6176, %v6182
    %v6188 = vmul.f32 %v6177, %v6182
    %v6189 = vmul.f32 %v6178, %v6182
    %v6190 = vmul.f32 %v6179, %v6182
    %v6191 = vmul.f32 %v6180, %v6182
    %v6193 = vperm.slane %v5980, 0
    %v6195 = vadd.f32 %v6184, %v6193
    %v6196 = vadd.f32 %v6185, %v6193
    %v6197 = vadd.f32 %v6186, %v6193
    %v6198 = vadd.f32 %v6187, %v6193
    %v6199 = vadd.f32 %v6188, %v6193
    %v6200 = vadd.f32 %v6189, %v6193
    %v6201 = vadd.f32 %v6190, %v6193
    %v6202 = vadd.f32 %v6191, %v6193
    %v6203 = vsel %vm125, %v6195, 0.0
    %v6204 = vrot.slane %v6203, 4
    %v6205 = vadd.f32 %v6203, %v6204
    %v6206 = vrot.slane %v6205, 2
    %v6207 = vadd.f32 %v6205, %v6206
    %v6208 = vrot.slane %v6207, 1
    %v6209 = vadd.f32 %v6207, %v6208
    %v6210 = vsel %vm125, %v6196, 0.0
    %v6211 = vrot.slane %v6210, 4
    %v6212 = vadd.f32 %v6210, %v6211
    %v6213 = vrot.slane %v6212, 2
    %v6214 = vadd.f32 %v6212, %v6213
    %v6215 = vrot.slane %v6214, 1
    %v6216 = vadd.f32 %v6214, %v6215
    %v6217 = vsel %vm125, %v6197, 0.0
    %v6218 = vrot.slane %v6217, 4
    %v6219 = vadd.f32 %v6217, %v6218
    %v6220 = vrot.slane %v6219, 2
    %v6221 = vadd.f32 %v6219, %v6220
    %v6222 = vrot.slane %v6221, 1
    %v6223 = vadd.f32 %v6221, %v6222
    %v6224 = vsel %vm125, %v6198, 0.0
    %v6225 = vrot.slane %v6224, 4
    %v6226 = vadd.f32 %v6224, %v6225
    %v6227 = vrot.slane %v6226, 2
    %v6228 = vadd.f32 %v6226, %v6227
    %v6229 = vrot.slane %v6228, 1
    %v6230 = vadd.f32 %v6228, %v6229
    %v6231 = vsel %vm125, %v6199, 0.0
    %v6232 = vrot.slane %v6231, 4
    %v6233 = vadd.f32 %v6231, %v6232
    %v6234 = vrot.slane %v6233, 2
    %v6235 = vadd.f32 %v6233, %v6234
    %v6236 = vrot.slane %v6235, 1
    %v6237 = vadd.f32 %v6235, %v6236
    %v6238 = vsel %vm125, %v6200, 0.0
    %v6239 = vrot.slane %v6238, 4
    %v6240 = vadd.f32 %v6238, %v6239
    %v6241 = vrot.slane %v6240, 2
    %v6242 = vadd.f32 %v6240, %v6241
    %v6243 = vrot.slane %v6242, 1
    %v6244 = vadd.f32 %v6242, %v6243
    %v6245 = vsel %vm125, %v6201, 0.0
    %v6246 = vrot.slane %v6245, 4
    %v6247 = vadd.f32 %v6245, %v6246
    %v6248 = vrot.slane %v6247, 2
    %v6249 = vadd.f32 %v6247, %v6248
    %v6250 = vrot.slane %v6249, 1
    %v6251 = vadd.f32 %v6249, %v6250
    %v6252 = vsel %vm125, %v6202, 0.0
    %v6253 = vrot.slane %v6252, 4
    %v6254 = vadd.f32 %v6252, %v6253
    %v6255 = vrot.slane %v6254, 2
    %v6256 = vadd.f32 %v6254, %v6255
    %v6257 = vrot.slane %v6256, 1
    %v6258 = vadd.f32 %v6256, %v6257
    %v6259 = vrcp.pop 8.0
    %v6260 = vmul.f32 8.0, %v6259
    %v6261 = vsub.f32 1.0, %v6260
    %v6262 = vmul.f32 %v6259, %v6261
    %v6263 = vadd.f32 %v6259, %v6262
    %vm6264 = vweird.f32 %v6259
    %v6265 = vsel %vm6264, %v6259, %v6263
    %v6266 = vmul.f32 %v6209, %v6265
    %v6267 = vmul.f32 %v6216, %v6265
    %v6268 = vmul.f32 %v6223, %v6265
    %v6269 = vmul.f32 %v6230, %v6265
    %v6270 = vmul.f32 %v6237, %v6265
    %v6271 = vmul.f32 %v6244, %v6265
    %v6272 = vmul.f32 %v6251, %v6265
    %v6273 = vmul.f32 %v6258, %v6265
    %v6274 = vpack.c.bf16 %v6266, %v6266
    %v6275 = vpack.c.bf16 %v6267, %v6267
    %v6276 = vpack.c.bf16 %v6268, %v6268
    %v6277 = vpack.c.bf16 %v6269, %v6269
    %v6278 = vpack.c.bf16 %v6270, %v6270
    %v6279 = vpack.c.bf16 %v6271, %v6271
    %v6280 = vpack.c.bf16 %v6272, %v6272
    %v6281 = vpack.c.bf16 %v6273, %v6273
    %v6282 = vld [vmem:[%s12] sm:$0xf]
    %v6283 = vld [vmem:[%s12 + $0x4] sm:$0xf]
    %v6284 = vld [vmem:[%s12 + $0x8] sm:$0xf]
    %v6285 = vld [vmem:[%s12 + $0xc] sm:$0xf]
    %v6286 = vld [vmem:[%s13] sm:$0x1]
    %v6288 = vperm.slane %v6286, 0
    %v6298 = vunpack.c.l.b16 %v6274
    %v6299 = vunpack.c.l.b16 %v6275
    %v6300 = vunpack.c.l.b16 %v6276
    %v6301 = vunpack.c.l.b16 %v6277
    %v6302 = vunpack.c.l.b16 %v6278
    %v6303 = vunpack.c.l.b16 %v6279
    %v6304 = vunpack.c.l.b16 %v6280
    %v6305 = vunpack.c.l.b16 %v6281
    %vm6306 = vcmask 1041409
    %v6307 = vsel %vm6306, %v6299, %v6298
    %vm6308 = vcmask 1042434
    %v6309 = vsel %vm6308, %v6300, %v6307
    %vm6310 = vcmask 1043459
    %v6311 = vsel %vm6310, %v6301, %v6309
    %vm6312 = vcmask 1044484
    %v6313 = vsel %vm6312, %v6302, %v6311
    %vm6314 = vcmask 1045509
    %v6315 = vsel %vm6314, %v6303, %v6313
    %vm6316 = vcmask 1046534
    %v6317 = vsel %vm6316, %v6304, %v6315
    %vm6318 = vcmask 1047559
    %v6319 = vsel %vm6318, %v6305, %v6317
    %v6320 = vpack.c.b16 %v6319, %v6319
    %v6325 = vunpack.c.l.b16 %v6282
    %v6326 = vunpack.c.l.b16 %v6283
    %v6327 = vunpack.c.l.b16 %v6284
    %v6328 = vunpack.c.l.b16 %v6285
    %v6329 = vpack.c.b16 %v6326, %v6325
    %v6330 = vpack.c.b16 %v6328, %v6327
    %v6334 = vsel %vm125, %v6320, 0
    %6336 = vmatpush.bf16.msra.mxu0 0
    %6337 = vmatpush.bf16.msra.mxu0 0
    %6338 = vmatpush.bf16.msra.mxu0 0
    %6339 = vmatpush.bf16.msra.mxu0 0
    %6340 = vmatpush.bf16.msra.mxu0 0
    %6341 = vmatpush.bf16.msra.mxu0 0
    %6342 = vmatpush.bf16.msra.mxu0 %v6330
    %6343 = vmatpush.bf16.msra.mxu0 %v6329
    %6344 = vmatmul.bf16.gmra.mxu0 %v6334
    %v6345 = vpop.f32.mrf.mxu0
    %v6346 = vadd.f32 %v6288, %v6345
    %v6347 = vpop.f32.mrf.mxu0
    %6348 = vdwg.mxu0
    %6349 = vst.msk [vmem:[#allocation2] sm:$0xff] %vm433, %v6346
    // Predicated region
    $region58: #{tpu_custom_call.1} parent=1 // pred_check
      _
    $region59: #{tpu_custom_call.1} parent=1 // pred_check_branch
      %6351 = sbr.rel (0) target = $region61
    $region60: #{tpu_custom_call.1} parent=1 // pred_region
      %6353 = vsyncadd [#allocation3], 0
      %s6355 = sshll.u32 [#allocation2], 4
      %s6356 = int_to_ptr.vmem [resolvable:$true] %s6355
      %s6357 = sshll.u32 %s14, 4
      %s6358 = int_to_ptr.hbm [resolvable:$true] %s6357
      %6360 = dma.vmem_to_hbm [thread:$0]  %s6356, 128, %s6358, [#allocation3]
    $region61: #{tpu_custom_call.1} parent=1 // pred_fallthru
      _
    // Predicated region
    $region62: #{tpu_custom_call.1} parent=1 // pred_check
      _
    $region63: #{tpu_custom_call.1} parent=1 // pred_check_branch
      %6362 = sbr.rel (0) target = $region65
    $region64: #{tpu_custom_call.1} parent=1 // pred_region
      %6364 = dma.done [#allocation3], 128
    $region65: #{tpu_custom_call.1} parent=1 // pred_fallthru
      _
    %6365 = vsyncpa [#allocation3], 1

</llo_original>
